<compile_context>
chip_gen: v5e
topology: v5e:2x2
jax: 0.10.0
libtpu: 0.0.40
codegen_flags: <defaults>
</compile_context>

<pallas_src>
import functools

import jax
import jax.numpy as jnp
from jax.experimental import pallas as pl
from jax.experimental.pallas import tpu as pltpu

# --- small synthetic config (consistent with the module's __init__) -----------
F_INIT   = 32             # nfilters_init (small for the example)
N_HEADS  = F_INIT // 4    # nheads_start = nfilters_init // 4
N_GROUPS = 4              # norm_groups
EPS_GN   = 1e-5
EPS_ATTN = 1e-6


def _feature_kernel(x1_ref, x2_ref, wstem_ref, wattn_ref, vecs_ref,
                    gind_ref, hmask_ref, o_ref, f2_s, attn_s, *, tc, n):
    """Channel-major fused stem + linear cross-attention for TC time steps."""
    F = F_INIT
    Cg = F // N_GROUPS
    inv_ncg = 1.0 / float(n * Cg)

    gind = gind_ref[...]                        # (F, F) same-group indicator, f32
    hmask = hmask_ref[...]                      # (F, F) same-head block mask, f32
    hmask_b = hmask.astype(jnp.bfloat16)

    def mm(a, b):
        # bf16 MXU matmul, f32 accumulation.
        return jnp.dot(a.astype(jnp.bfloat16), b.astype(jnp.bfloat16),
                       preferred_element_type=jnp.float32)

    def elu1(x):
        # elu(x) + 1 with a single select; exp runs on the EUP (free slot).
        return jnp.where(x > 0, x + 1.0, jnp.exp(x))

    def gn_relu(h, g_col, be_col):
        # GroupNorm over (group channels x all n positions) of ONE time step,
        # affine folded into a single per-channel scale/shift, then ReLU.
        csum = jnp.sum(h, axis=1, keepdims=True)                    # (F, 1)
        csum2 = jnp.sum(h * h, axis=1, keepdims=True)               # (F, 1)
        stats = jnp.concatenate([csum, csum2], axis=1)              # (F, 2)
        gstats = jnp.dot(gind, stats,
                         preferred_element_type=jnp.float32) * inv_ncg
        mean = gstats[:, 0:1]
        var = jnp.maximum(gstats[:, 1:2] - mean * mean, 0.0)
        scale = g_col * jax.lax.rsqrt(var + EPS_GN)
        shift = be_col - mean * scale
        return jnp.maximum(h * scale + shift, 0.0)                  # (F, n)

    b1c, g1c, be1c = vecs_ref[:, 0:1], vecs_ref[:, 1:2], vecs_ref[:, 2:3]
    b2c, g2c, be2c = vecs_ref[:, 3:4], vecs_ref[:, 4:5], vecs_ref[:, 5:6]
    boc = vecs_ref[:, 6:7]

    # ---- t1 stream (t-invariant): recomputed per grid step (cheap) -----------
    h1 = mm(wstem_ref[:F], x1_ref[0]) + b1c                         # (F, n)
    f1 = gn_relu(h1, g1c, be1c)                                     # (F, n) f32
    q_phi = elu1(mm(wattn_ref[:F], f1))                             # (F, n) f32
    q_phi_b = q_phi.astype(jnp.bfloat16)

    # ---- t2 stem for all TC time steps in ONE matmul --------------------------
    h2 = mm(wstem_ref[F:], x2_ref[0]) + b2c                         # (F, TC*n)
    for t in range(tc):
        sl = slice(t * n, (t + 1) * n)                              # 128-aligned
        f2_s[:, sl] = gn_relu(h2[:, sl], g2c, be2c).astype(jnp.bfloat16)

    # Fused k|v projection for all TC time steps in one matmul.
    kvp = mm(wattn_ref[F:3 * F], f2_s[...])                         # (2F, TC*n)

    # ---- per-time-step linear cross-attention normalization (f32) -------------
    for t in range(tc):
        sl = slice(t * n, (t + 1) * n)
        k_phi = elu1(kvp[:F, sl])                                   # (F, n) f32
        v_b = kvp[F:, sl].astype(jnp.bfloat16)                      # (F, n) bf16
        # kvT[f, c] = sum_n v[f, n] * k_phi[c, n]
        kvT = jax.lax.dot_general(
            v_b, k_phi.astype(jnp.bfloat16), (((1,), (1,)), ((), ())),
            preferred_element_type=jnp.float32)                     # (F, F)
        ksum = jnp.sum(k_phi, axis=1, keepdims=True)                # (F, 1)
        num = jnp.dot((kvT * hmask).astype(jnp.bfloat16), q_phi_b,
                      preferred_element_type=jnp.float32)           # (F, n)
        den = jnp.dot(hmask_b, (q_phi * ksum).astype(jnp.bfloat16),
                      preferred_element_type=jnp.float32)           # (F, n)
        attn_s[:, sl] = (num / (den + EPS_ATTN)).astype(jnp.bfloat16)

    # ---- output projection for all TC time steps in ONE matmul ----------------
    wo_all = mm(wattn_ref[3 * F:], attn_s[...]) + boc               # (F, TC*n)
    for t in range(tc):
        sl = slice(t * n, (t + 1) * n)
        o_ref[0, :, sl] = (f1 + wo_all[:, sl]).astype(o_ref.dtype)  # lane-dense


def init_params(key, in_channels):
    """Synthetic feature-extractor weights, packed into MXU-friendly operands."""
    F = F_INIT
    ks = jax.random.split(key, 8)
    sc_in = 1.0 / jnp.sqrt(jnp.float32(in_channels))
    sc_f = 1.0 / jnp.sqrt(jnp.float32(F))
    w1 = jax.random.normal(ks[0], (in_channels, F), jnp.float32) * sc_in
    w2 = jax.random.normal(ks[1], (in_channels, F), jnp.float32) * sc_in
    b1 = jax.random.normal(ks[2], (F,), jnp.float32) * 0.01
    b2 = jax.random.normal(ks[3], (F,), jnp.float32) * 0.01
    g1 = jnp.ones((F,), jnp.float32)
    be1 = jnp.zeros((F,), jnp.float32)
    g2 = jnp.ones((F,), jnp.float32)
    be2 = jnp.zeros((F,), jnp.float32)
    wq = jax.random.normal(ks[4], (F, F), jnp.float32) * sc_f
    wk = jax.random.normal(ks[5], (F, F), jnp.float32) * sc_f
    wv = jax.random.normal(ks[6], (F, F), jnp.float32) * sc_f
    wo = jax.random.normal(ks[7], (F, F), jnp.float32) * sc_f
    bo = jnp.zeros((F,), jnp.float32)

    # Pre-transposed & fused weights so the channel-major kernel does plain matmuls.
    w_stem = jnp.concatenate([w1.T, w2.T], axis=0).astype(jnp.bfloat16)    # (2F, Cin)
    w_attn = jnp.concatenate([wq.T, wk.T, wv.T, wo.T],
                             axis=0).astype(jnp.bfloat16)                  # (4F, F)
    # Per-channel vectors as columns: [b1, g1, be1, b2, g2, be2, bo, pad]
    vecs = jnp.stack([b1, g1, be1, b2, g2, be2, bo,
                      jnp.zeros((F,), jnp.float32)], axis=1)               # (F, 8)
    return w_stem, w_attn, vecs


def _make_masks():
    """Same-group indicator and per-head block-diagonal masks, (F, F) each."""
    F = F_INIT
    Cg = F // N_GROUPS
    Dh = F // N_HEADS
    ch = jnp.arange(F)
    gind = (ch[:, None] // Cg == ch[None, :] // Cg).astype(jnp.float32)
    hmask = (ch[:, None] // Dh == ch[None, :] // Dh).astype(jnp.float32)
    return gind, hmask


def _pick_time_chunk(T, N, max_lanes=8192):
    """Largest divisor of T whose chunk (TC*N lanes) stays within a VMEM budget."""
    best = 1
    for tc in range(1, T + 1):
        if T % tc == 0 and tc * N <= max_lanes:
            best = tc
    return best


def ptavitssg2_dn_features_forward(input_t1, input_t2, params):
    """input_t1: (B, Cin, H, W); input_t2: (B, Cin, T, H, W) -> (B, F, T, H, W)."""
    B, Cin, H, W = input_t1.shape
    T = input_t2.shape[2]
    N = H * W
    F = F_INIT
    TC = _pick_time_chunk(T, N)
    n_chunks = T // TC
    M = TC * N

    w_stem, w_attn, vecs = params
    gind, hmask = _make_masks()

    # Native channel-major layouts: both reshapes are metadata-only (no HBM pass,
    # no XLA transpose).  Inputs stay f32; the kernel casts to bf16 at the MXU.
    x1 = input_t1.reshape(B, Cin, N)
    x2 = input_t2.reshape(B, Cin, T * N)

    kernel = functools.partial(_feature_kernel, tc=TC, n=N)

    out = pl.pallas_call(
        kernel,
        out_shape=jax.ShapeDtypeStruct((B, F, T * N), jnp.float32),
        grid=(B, n_chunks),
        in_specs=[
            pl.BlockSpec((1, Cin, N), lambda b, c: (b, 0, 0)),      # t1 (shared over T)
            pl.BlockSpec((1, Cin, M), lambda b, c: (b, 0, c)),      # TC steps of t2
            pl.BlockSpec(w_stem.shape, lambda b, c: (0, 0)),
            pl.BlockSpec(w_attn.shape, lambda b, c: (0, 0)),
            pl.BlockSpec(vecs.shape, lambda b, c: (0, 0)),
            pl.BlockSpec(gind.shape, lambda b, c: (0, 0)),
            pl.BlockSpec(hmask.shape, lambda b, c: (0, 0)),
        ],
        out_specs=pl.BlockSpec((1, F, M), lambda b, c: (b, 0, c)),
        scratch_shapes=[pltpu.VMEM((F, M), jnp.bfloat16),           # GN'd t2 stem
                        pltpu.VMEM((F, M), jnp.bfloat16)],          # attention out
        compiler_params=pltpu.CompilerParams(
            # No cross-grid-step scratch dependence: both axes are parallel so
            # megacore / v7x's 2 TensorCores can split (B x chunk) freely.
            dimension_semantics=("parallel", "parallel")),
    )(x1, x2, w_stem, w_attn, vecs, gind, hmask)

    # (B, F, T*N) -> (B, F, T, H, W)  (free reshape; matches torch.cat(dim=2))
    return out.reshape(B, F, T, H, W)


if __name__ == "__main__":
    B, Cin, T, H, W = 2, 4, 8, 16, 16
    key = jax.random.PRNGKey(0)
    k_t1, k_t2, k_p = jax.random.split(key, 3)

    input_t1 = jax.random.normal(k_t1, (B, Cin, H, W), jnp.float32)
    input_t2 = jax.random.normal(k_t2, (B, Cin, T, H, W), jnp.float32)
    params = init_params(k_p, Cin)

    out = jax.jit(ptavitssg2_dn_features_forward)(input_t1, input_t2, params)
    jax.block_until_ready(out)
    assert out.shape == (B, F_INIT, T, H, W), out.shape
    assert bool(jnp.all(jnp.isfinite(out))), "non-finite output"
    print("KERNEL_OK")
</pallas_src>

<mosaic_0001>
module attributes {stable_mosaic.version = 11 : i64} {
  func.func @_feature_kernel(%arg0: i32, %arg1: i32, %arg2: memref<1x4x256xf32, #tpu.memory_space<vmem>>, %arg3: memref<1x4x2048xf32, #tpu.memory_space<vmem>>, %arg4: memref<64x4xbf16, #tpu.memory_space<vmem>>, %arg5: memref<128x32xbf16, #tpu.memory_space<vmem>>, %arg6: memref<32x8xf32, #tpu.memory_space<vmem>>, %arg7: memref<32x32xf32, #tpu.memory_space<vmem>>, %arg8: memref<32x32xf32, #tpu.memory_space<vmem>>, %arg9: memref<1x32x2048xf32, #tpu.memory_space<vmem>>, %arg10: memref<32x2048xbf16, #tpu.memory_space<vmem>>, %arg11: memref<32x2048xbf16, #tpu.memory_space<vmem>>) attributes {dimension_semantics = [#tpu.dimension_semantics<parallel>, #tpu.dimension_semantics<parallel>], iteration_bounds = array<i64: 2, 1>, scalar_prefetch = 0 : i64, scratch_operands = 2 : i64, tpu.core_type = #tpu.core_type<tc>, window_params = [{transform_indices = @transform_0, window_bounds = array<i64: 1, 4, 256>}, {transform_indices = @transform_1, window_bounds = array<i64: 1, 4, 2048>}, {pipeline_mode = #tpu.pipeline_mode<synchronous>, transform_indices = @transform_2, window_bounds = array<i64: 64, 4>}, {pipeline_mode = #tpu.pipeline_mode<synchronous>, transform_indices = @transform_3, window_bounds = array<i64: 128, 32>}, {pipeline_mode = #tpu.pipeline_mode<synchronous>, transform_indices = @transform_4, window_bounds = array<i64: 32, 8>}, {pipeline_mode = #tpu.pipeline_mode<synchronous>, transform_indices = @transform_5, window_bounds = array<i64: 32, 32>}, {pipeline_mode = #tpu.pipeline_mode<synchronous>, transform_indices = @transform_6, window_bounds = array<i64: 32, 32>}, {transform_indices = @transform_7, window_bounds = array<i64: 1, 32, 2048>}]} {
    %c0 = arith.constant 0 : index
    %c0_0 = arith.constant 0 : index
    %0 = vector.load %arg7[%c0, %c0_0] : memref<32x32xf32, #tpu.memory_space<vmem>>, vector<32x32xf32>
    %c0_1 = arith.constant 0 : index
    %c0_2 = arith.constant 0 : index
    %1 = vector.load %arg8[%c0_1, %c0_2] : memref<32x32xf32, #tpu.memory_space<vmem>>, vector<32x32xf32>
    %2 = arith.truncf %1 : vector<32x32xf32> to vector<32x32xbf16>
    %c0_3 = arith.constant 0 : index
    %c0_4 = arith.constant 0 : index
    %3 = vector.load %arg6[%c0_3, %c0_4] : memref<32x8xf32, #tpu.memory_space<vmem>>, vector<32x1xf32>
    %c0_5 = arith.constant 0 : index
    %c1 = arith.constant 1 : index
    %4 = vector.load %arg6[%c0_5, %c1] : memref<32x8xf32, #tpu.memory_space<vmem>>, vector<32x1xf32>
    %c0_6 = arith.constant 0 : index
    %c2 = arith.constant 2 : index
    %5 = vector.load %arg6[%c0_6, %c2] : memref<32x8xf32, #tpu.memory_space<vmem>>, vector<32x1xf32>
    %c0_7 = arith.constant 0 : index
    %c3 = arith.constant 3 : index
    %6 = vector.load %arg6[%c0_7, %c3] : memref<32x8xf32, #tpu.memory_space<vmem>>, vector<32x1xf32>
    %c0_8 = arith.constant 0 : index
    %c4 = arith.constant 4 : index
    %7 = vector.load %arg6[%c0_8, %c4] : memref<32x8xf32, #tpu.memory_space<vmem>>, vector<32x1xf32>
    %c0_9 = arith.constant 0 : index
    %c5 = arith.constant 5 : index
    %8 = vector.load %arg6[%c0_9, %c5] : memref<32x8xf32, #tpu.memory_space<vmem>>, vector<32x1xf32>
    %c0_10 = arith.constant 0 : index
    %c6 = arith.constant 6 : index
    %9 = vector.load %arg6[%c0_10, %c6] : memref<32x8xf32, #tpu.memory_space<vmem>>, vector<32x1xf32>
    %c0_11 = arith.constant 0 : index
    %c0_12 = arith.constant 0 : index
    %10 = vector.load %arg4[%c0_11, %c0_12] : memref<64x4xbf16, #tpu.memory_space<vmem>>, vector<32x4xbf16>
    %c0_13 = arith.constant 0 : index
    %c0_14 = arith.constant 0 : index
    %c0_15 = arith.constant 0 : index
    %11 = vector.load %arg2[%c0_13, %c0_14, %c0_15] : memref<1x4x256xf32, #tpu.memory_space<vmem>>, vector<1x4x256xf32>
    %12 = vector.shape_cast %11 : vector<1x4x256xf32> to vector<4x256xf32>
    %13 = arith.truncf %12 : vector<4x256xf32> to vector<4x256xbf16>
    %cst = arith.constant dense<0.000000e+00> : vector<32x256xf32>
    %14 = tpu.matmul %10, %13, %cst {dimension_numbers = #tpu.dot_dimension_numbers<[1], [0], [0], [1], [0, 0, 1, 1], [], []>} : vector<32x4xbf16>, vector<4x256xbf16>, vector<32x256xf32> -> vector<32x256xf32>
    %15 = vector.broadcast %3 : vector<32x1xf32> to vector<32x256xf32>
    %16 = arith.addf %14, %15 : vector<32x256xf32>
    %cst_16 = arith.constant dense<0.000000e+00> : vector<32xf32>
    %17 = vector.multi_reduction <add>, %16, %cst_16 [1] : vector<32x256xf32> to vector<32xf32>
    %18 = vector.shape_cast %17 : vector<32xf32> to vector<32x1xf32>
    %19 = arith.mulf %16, %16 : vector<32x256xf32>
    %cst_17 = arith.constant dense<0.000000e+00> : vector<32xf32>
    %20 = vector.multi_reduction <add>, %19, %cst_17 [1] : vector<32x256xf32> to vector<32xf32>
    %21 = vector.shape_cast %20 : vector<32xf32> to vector<32x1xf32>
    %22 = tpu.concatenate %18, %21 in 1 : vector<32x1xf32>, vector<32x1xf32> -> vector<32x2xf32>
    %cst_18 = arith.constant dense<0.000000e+00> : vector<32x2xf32>
    %23 = tpu.matmul %0, %22, %cst_18 {dimension_numbers = #tpu.dot_dimension_numbers<[1], [0], [0], [1], [0, 0, 1, 1], [], []>} : vector<32x32xf32>, vector<32x2xf32>, vector<32x2xf32> -> vector<32x2xf32>
    %cst_19 = arith.constant 4.8828125E-4 : f32
    %24 = vector.broadcast %cst_19 : f32 to vector<32x2xf32>
    %25 = arith.mulf %23, %24 : vector<32x2xf32>
    %26 = vector.extract_strided_slice %25 {offsets = [0, 0], sizes = [32, 1], strides = [1, 1]} : vector<32x2xf32> to vector<32x1xf32>
    %27 = vector.extract_strided_slice %25 {offsets = [0, 1], sizes = [32, 1], strides = [1, 1]} : vector<32x2xf32> to vector<32x1xf32>
    %28 = arith.mulf %26, %26 : vector<32x1xf32>
    %29 = arith.subf %27, %28 : vector<32x1xf32>
    %cst_20 = arith.constant 0.000000e+00 : f32
    %30 = vector.broadcast %cst_20 : f32 to vector<32x1xf32>
    %31 = arith.maximumf %29, %30 : vector<32x1xf32>
    %cst_21 = arith.constant 9.99999974E-6 : f32
    %32 = vector.broadcast %cst_21 : f32 to vector<32x1xf32>
    %33 = arith.addf %31, %32 : vector<32x1xf32>
    %34 = math.rsqrt %33 : vector<32x1xf32>
    %35 = arith.mulf %4, %34 : vector<32x1xf32>
    %36 = arith.mulf %26, %35 : vector<32x1xf32>
    %37 = arith.subf %5, %36 : vector<32x1xf32>
    %38 = vector.broadcast %35 : vector<32x1xf32> to vector<32x256xf32>
    %39 = arith.mulf %16, %38 : vector<32x256xf32>
    %40 = vector.broadcast %37 : vector<32x1xf32> to vector<32x256xf32>
    %41 = arith.addf %39, %40 : vector<32x256xf32>
    %cst_22 = arith.constant 0.000000e+00 : f32
    %42 = vector.broadcast %cst_22 : f32 to vector<32x256xf32>
    %43 = arith.maximumf %41, %42 : vector<32x256xf32>
    %c0_23 = arith.constant 0 : index
    %c0_24 = arith.constant 0 : index
    %44 = vector.load %arg5[%c0_23, %c0_24] : memref<128x32xbf16, #tpu.memory_space<vmem>>, vector<32x32xbf16>
    %45 = arith.truncf %43 : vector<32x256xf32> to vector<32x256xbf16>
    %cst_25 = arith.constant dense<0.000000e+00> : vector<32x256xf32>
    %46 = tpu.matmul %44, %45, %cst_25 {dimension_numbers = #tpu.dot_dimension_numbers<[1], [0], [0], [1], [0, 0, 1, 1], [], []>} : vector<32x32xbf16>, vector<32x256xbf16>, vector<32x256xf32> -> vector<32x256xf32>
    %cst_26 = arith.constant 0.000000e+00 : f32
    %47 = vector.broadcast %cst_26 : f32 to vector<32x256xf32>
    %48 = arith.cmpf ogt, %46, %47 : vector<32x256xf32>
    %cst_27 = arith.constant 1.000000e+00 : f32
    %49 = vector.broadcast %cst_27 : f32 to vector<32x256xf32>
    %50 = arith.addf %46, %49 : vector<32x256xf32>
    %51 = math.exp %46 : vector<32x256xf32>
    %52 = arith.select %48, %50, %51 : vector<32x256xi1>, vector<32x256xf32>
    %53 = arith.truncf %52 : vector<32x256xf32> to vector<32x256xbf16>
    %c32 = arith.constant 32 : index
    %c0_28 = arith.constant 0 : index
    %54 = vector.load %arg4[%c32, %c0_28] : memref<64x4xbf16, #tpu.memory_space<vmem>>, vector<32x4xbf16>
    %c0_29 = arith.constant 0 : index
    %c0_30 = arith.constant 0 : index
    %c0_31 = arith.constant 0 : index
    %55 = vector.load %arg3[%c0_29, %c0_30, %c0_31] : memref<1x4x2048xf32, #tpu.memory_space<vmem>>, vector<1x4x2048xf32>
    %56 = vector.shape_cast %55 : vector<1x4x2048xf32> to vector<4x2048xf32>
    %57 = arith.truncf %56 : vector<4x2048xf32> to vector<4x2048xbf16>
    %cst_32 = arith.constant dense<0.000000e+00> : vector<32x2048xf32>
    %58 = tpu.matmul %54, %57, %cst_32 {dimension_numbers = #tpu.dot_dimension_numbers<[1], [0], [0], [1], [0, 0, 1, 1], [], []>} : vector<32x4xbf16>, vector<4x2048xbf16>, vector<32x2048xf32> -> vector<32x2048xf32>
    %59 = vector.broadcast %6 : vector<32x1xf32> to vector<32x2048xf32>
    %60 = arith.addf %58, %59 : vector<32x2048xf32>
    %61 = vector.extract_strided_slice %60 {offsets = [0, 0], sizes = [32, 256], strides = [1, 1]} : vector<32x2048xf32> to vector<32x256xf32>
    %cst_33 = arith.constant dense<0.000000e+00> : vector<32xf32>
    %62 = vector.multi_reduction <add>, %61, %cst_33 [1] : vector<32x256xf32> to vector<32xf32>
    %63 = vector.shape_cast %62 : vector<32xf32> to vector<32x1xf32>
    %64 = arith.mulf %61, %61 : vector<32x256xf32>
    %cst_34 = arith.constant dense<0.000000e+00> : vector<32xf32>
    %65 = vector.multi_reduction <add>, %64, %cst_34 [1] : vector<32x256xf32> to vector<32xf32>
    %66 = vector.shape_cast %65 : vector<32xf32> to vector<32x1xf32>
    %67 = tpu.concatenate %63, %66 in 1 : vector<32x1xf32>, vector<32x1xf32> -> vector<32x2xf32>
    %cst_35 = arith.constant dense<0.000000e+00> : vector<32x2xf32>
    %68 = tpu.matmul %0, %67, %cst_35 {dimension_numbers = #tpu.dot_dimension_numbers<[1], [0], [0], [1], [0, 0, 1, 1], [], []>} : vector<32x32xf32>, vector<32x2xf32>, vector<32x2xf32> -> vector<32x2xf32>
    %cst_36 = arith.constant 4.8828125E-4 : f32
    %69 = vector.broadcast %cst_36 : f32 to vector<32x2xf32>
    %70 = arith.mulf %68, %69 : vector<32x2xf32>
    %71 = vector.extract_strided_slice %70 {offsets = [0, 0], sizes = [32, 1], strides = [1, 1]} : vector<32x2xf32> to vector<32x1xf32>
    %72 = vector.extract_strided_slice %70 {offsets = [0, 1], sizes = [32, 1], strides = [1, 1]} : vector<32x2xf32> to vector<32x1xf32>
    %73 = arith.mulf %71, %71 : vector<32x1xf32>
    %74 = arith.subf %72, %73 : vector<32x1xf32>
    %cst_37 = arith.constant 0.000000e+00 : f32
    %75 = vector.broadcast %cst_37 : f32 to vector<32x1xf32>
    %76 = arith.maximumf %74, %75 : vector<32x1xf32>
    %cst_38 = arith.constant 9.99999974E-6 : f32
    %77 = vector.broadcast %cst_38 : f32 to vector<32x1xf32>
    %78 = arith.addf %76, %77 : vector<32x1xf32>
    %79 = math.rsqrt %78 : vector<32x1xf32>
    %80 = arith.mulf %7, %79 : vector<32x1xf32>
    %81 = arith.mulf %71, %80 : vector<32x1xf32>
    %82 = arith.subf %8, %81 : vector<32x1xf32>
    %83 = vector.broadcast %80 : vector<32x1xf32> to vector<32x256xf32>
    %84 = arith.mulf %61, %83 : vector<32x256xf32>
    %85 = vector.broadcast %82 : vector<32x1xf32> to vector<32x256xf32>
    %86 = arith.addf %84, %85 : vector<32x256xf32>
    %cst_39 = arith.constant 0.000000e+00 : f32
    %87 = vector.broadcast %cst_39 : f32 to vector<32x256xf32>
    %88 = arith.maximumf %86, %87 : vector<32x256xf32>
    %89 = arith.truncf %88 : vector<32x256xf32> to vector<32x256xbf16>
    %c0_40 = arith.constant 0 : index
    %c0_41 = arith.constant 0 : index
    %90 = vector.load %arg10[%c0_40, %c0_41] : memref<32x2048xbf16, #tpu.memory_space<vmem>>, vector<32x256xbf16>
    tpu.vector_store %arg10[%c0_40, %c0_41], %89 {strides = array<i32>} : memref<32x2048xbf16, #tpu.memory_space<vmem>>, vector<32x256xbf16>,
    %91 = vector.extract_strided_slice %60 {offsets = [0, 256], sizes = [32, 256], strides = [1, 1]} : vector<32x2048xf32> to vector<32x256xf32>
    %cst_42 = arith.constant dense<0.000000e+00> : vector<32xf32>
    %92 = vector.multi_reduction <add>, %91, %cst_42 [1] : vector<32x256xf32> to vector<32xf32>
    %93 = vector.shape_cast %92 : vector<32xf32> to vector<32x1xf32>
    %94 = arith.mulf %91, %91 : vector<32x256xf32>
    %cst_43 = arith.constant dense<0.000000e+00> : vector<32xf32>
    %95 = vector.multi_reduction <add>, %94, %cst_43 [1] : vector<32x256xf32> to vector<32xf32>
    %96 = vector.shape_cast %95 : vector<32xf32> to vector<32x1xf32>
    %97 = tpu.concatenate %93, %96 in 1 : vector<32x1xf32>, vector<32x1xf32> -> vector<32x2xf32>
    %cst_44 = arith.constant dense<0.000000e+00> : vector<32x2xf32>
    %98 = tpu.matmul %0, %97, %cst_44 {dimension_numbers = #tpu.dot_dimension_numbers<[1], [0], [0], [1], [0, 0, 1, 1], [], []>} : vector<32x32xf32>, vector<32x2xf32>, vector<32x2xf32> -> vector<32x2xf32>
    %cst_45 = arith.constant 4.8828125E-4 : f32
    %99 = vector.broadcast %cst_45 : f32 to vector<32x2xf32>
    %100 = arith.mulf %98, %99 : vector<32x2xf32>
    %101 = vector.extract_strided_slice %100 {offsets = [0, 0], sizes = [32, 1], strides = [1, 1]} : vector<32x2xf32> to vector<32x1xf32>
    %102 = vector.extract_strided_slice %100 {offsets = [0, 1], sizes = [32, 1], strides = [1, 1]} : vector<32x2xf32> to vector<32x1xf32>
    %103 = arith.mulf %101, %101 : vector<32x1xf32>
    %104 = arith.subf %102, %103 : vector<32x1xf32>
    %cst_46 = arith.constant 0.000000e+00 : f32
    %105 = vector.broadcast %cst_46 : f32 to vector<32x1xf32>
    %106 = arith.maximumf %104, %105 : vector<32x1xf32>
    %cst_47 = arith.constant 9.99999974E-6 : f32
    %107 = vector.broadcast %cst_47 : f32 to vector<32x1xf32>
    %108 = arith.addf %106, %107 : vector<32x1xf32>
    %109 = math.rsqrt %108 : vector<32x1xf32>
    %110 = arith.mulf %7, %109 : vector<32x1xf32>
    %111 = arith.mulf %101, %110 : vector<32x1xf32>
    %112 = arith.subf %8, %111 : vector<32x1xf32>
    %113 = vector.broadcast %110 : vector<32x1xf32> to vector<32x256xf32>
    %114 = arith.mulf %91, %113 : vector<32x256xf32>
    %115 = vector.broadcast %112 : vector<32x1xf32> to vector<32x256xf32>
    %116 = arith.addf %114, %115 : vector<32x256xf32>
    %cst_48 = arith.constant 0.000000e+00 : f32
    %117 = vector.broadcast %cst_48 : f32 to vector<32x256xf32>
    %118 = arith.maximumf %116, %117 : vector<32x256xf32>
    %119 = arith.truncf %118 : vector<32x256xf32> to vector<32x256xbf16>
    %c0_49 = arith.constant 0 : index
    %c256 = arith.constant 256 : index
    %120 = vector.load %arg10[%c0_49, %c256] : memref<32x2048xbf16, #tpu.memory_space<vmem>>, vector<32x256xbf16>
    tpu.vector_store %arg10[%c0_49, %c256], %119 {strides = array<i32>} : memref<32x2048xbf16, #tpu.memory_space<vmem>>, vector<32x256xbf16>,
    %121 = vector.extract_strided_slice %60 {offsets = [0, 512], sizes = [32, 256], strides = [1, 1]} : vector<32x2048xf32> to vector<32x256xf32>
    %cst_50 = arith.constant dense<0.000000e+00> : vector<32xf32>
    %122 = vector.multi_reduction <add>, %121, %cst_50 [1] : vector<32x256xf32> to vector<32xf32>
    %123 = vector.shape_cast %122 : vector<32xf32> to vector<32x1xf32>
    %124 = arith.mulf %121, %121 : vector<32x256xf32>
    %cst_51 = arith.constant dense<0.000000e+00> : vector<32xf32>
    %125 = vector.multi_reduction <add>, %124, %cst_51 [1] : vector<32x256xf32> to vector<32xf32>
    %126 = vector.shape_cast %125 : vector<32xf32> to vector<32x1xf32>
    %127 = tpu.concatenate %123, %126 in 1 : vector<32x1xf32>, vector<32x1xf32> -> vector<32x2xf32>
    %cst_52 = arith.constant dense<0.000000e+00> : vector<32x2xf32>
    %128 = tpu.matmul %0, %127, %cst_52 {dimension_numbers = #tpu.dot_dimension_numbers<[1], [0], [0], [1], [0, 0, 1, 1], [], []>} : vector<32x32xf32>, vector<32x2xf32>, vector<32x2xf32> -> vector<32x2xf32>
    %cst_53 = arith.constant 4.8828125E-4 : f32
    %129 = vector.broadcast %cst_53 : f32 to vector<32x2xf32>
    %130 = arith.mulf %128, %129 : vector<32x2xf32>
    %131 = vector.extract_strided_slice %130 {offsets = [0, 0], sizes = [32, 1], strides = [1, 1]} : vector<32x2xf32> to vector<32x1xf32>
    %132 = vector.extract_strided_slice %130 {offsets = [0, 1], sizes = [32, 1], strides = [1, 1]} : vector<32x2xf32> to vector<32x1xf32>
    %133 = arith.mulf %131, %131 : vector<32x1xf32>
    %134 = arith.subf %132, %133 : vector<32x1xf32>
    %cst_54 = arith.constant 0.000000e+00 : f32
    %135 = vector.broadcast %cst_54 : f32 to vector<32x1xf32>
    %136 = arith.maximumf %134, %135 : vector<32x1xf32>
    %cst_55 = arith.constant 9.99999974E-6 : f32
    %137 = vector.broadcast %cst_55 : f32 to vector<32x1xf32>
    %138 = arith.addf %136, %137 : vector<32x1xf32>
    %139 = math.rsqrt %138 : vector<32x1xf32>
    %140 = arith.mulf %7, %139 : vector<32x1xf32>
    %141 = arith.mulf %131, %140 : vector<32x1xf32>
    %142 = arith.subf %8, %141 : vector<32x1xf32>
    %143 = vector.broadcast %140 : vector<32x1xf32> to vector<32x256xf32>
    %144 = arith.mulf %121, %143 : vector<32x256xf32>
    %145 = vector.broadcast %142 : vector<32x1xf32> to vector<32x256xf32>
    %146 = arith.addf %144, %145 : vector<32x256xf32>
    %cst_56 = arith.constant 0.000000e+00 : f32
    %147 = vector.broadcast %cst_56 : f32 to vector<32x256xf32>
    %148 = arith.maximumf %146, %147 : vector<32x256xf32>
    %149 = arith.truncf %148 : vector<32x256xf32> to vector<32x256xbf16>
    %c0_57 = arith.constant 0 : index
    %c512 = arith.constant 512 : index
    %150 = vector.load %arg10[%c0_57, %c512] : memref<32x2048xbf16, #tpu.memory_space<vmem>>, vector<32x256xbf16>
    tpu.vector_store %arg10[%c0_57, %c512], %149 {strides = array<i32>} : memref<32x2048xbf16, #tpu.memory_space<vmem>>, vector<32x256xbf16>,
    %151 = vector.extract_strided_slice %60 {offsets = [0, 768], sizes = [32, 256], strides = [1, 1]} : vector<32x2048xf32> to vector<32x256xf32>
    %cst_58 = arith.constant dense<0.000000e+00> : vector<32xf32>
    %152 = vector.multi_reduction <add>, %151, %cst_58 [1] : vector<32x256xf32> to vector<32xf32>
    %153 = vector.shape_cast %152 : vector<32xf32> to vector<32x1xf32>
    %154 = arith.mulf %151, %151 : vector<32x256xf32>
    %cst_59 = arith.constant dense<0.000000e+00> : vector<32xf32>
    %155 = vector.multi_reduction <add>, %154, %cst_59 [1] : vector<32x256xf32> to vector<32xf32>
    %156 = vector.shape_cast %155 : vector<32xf32> to vector<32x1xf32>
    %157 = tpu.concatenate %153, %156 in 1 : vector<32x1xf32>, vector<32x1xf32> -> vector<32x2xf32>
    %cst_60 = arith.constant dense<0.000000e+00> : vector<32x2xf32>
    %158 = tpu.matmul %0, %157, %cst_60 {dimension_numbers = #tpu.dot_dimension_numbers<[1], [0], [0], [1], [0, 0, 1, 1], [], []>} : vector<32x32xf32>, vector<32x2xf32>, vector<32x2xf32> -> vector<32x2xf32>
    %cst_61 = arith.constant 4.8828125E-4 : f32
    %159 = vector.broadcast %cst_61 : f32 to vector<32x2xf32>
    %160 = arith.mulf %158, %159 : vector<32x2xf32>
    %161 = vector.extract_strided_slice %160 {offsets = [0, 0], sizes = [32, 1], strides = [1, 1]} : vector<32x2xf32> to vector<32x1xf32>
    %162 = vector.extract_strided_slice %160 {offsets = [0, 1], sizes = [32, 1], strides = [1, 1]} : vector<32x2xf32> to vector<32x1xf32>
    %163 = arith.mulf %161, %161 : vector<32x1xf32>
    %164 = arith.subf %162, %163 : vector<32x1xf32>
    %cst_62 = arith.constant 0.000000e+00 : f32
    %165 = vector.broadcast %cst_62 : f32 to vector<32x1xf32>
    %166 = arith.maximumf %164, %165 : vector<32x1xf32>
    %cst_63 = arith.constant 9.99999974E-6 : f32
    %167 = vector.broadcast %cst_63 : f32 to vector<32x1xf32>
    %168 = arith.addf %166, %167 : vector<32x1xf32>
    %169 = math.rsqrt %168 : vector<32x1xf32>
    %170 = arith.mulf %7, %169 : vector<32x1xf32>
    %171 = arith.mulf %161, %170 : vector<32x1xf32>
    %172 = arith.subf %8, %171 : vector<32x1xf32>
    %173 = vector.broadcast %170 : vector<32x1xf32> to vector<32x256xf32>
    %174 = arith.mulf %151, %173 : vector<32x256xf32>
    %175 = vector.broadcast %172 : vector<32x1xf32> to vector<32x256xf32>
    %176 = arith.addf %174, %175 : vector<32x256xf32>
    %cst_64 = arith.constant 0.000000e+00 : f32
    %177 = vector.broadcast %cst_64 : f32 to vector<32x256xf32>
    %178 = arith.maximumf %176, %177 : vector<32x256xf32>
    %179 = arith.truncf %178 : vector<32x256xf32> to vector<32x256xbf16>
    %c0_65 = arith.constant 0 : index
    %c768 = arith.constant 768 : index
    %180 = vector.load %arg10[%c0_65, %c768] : memref<32x2048xbf16, #tpu.memory_space<vmem>>, vector<32x256xbf16>
    tpu.vector_store %arg10[%c0_65, %c768], %179 {strides = array<i32>} : memref<32x2048xbf16, #tpu.memory_space<vmem>>, vector<32x256xbf16>,
    %181 = vector.extract_strided_slice %60 {offsets = [0, 1024], sizes = [32, 256], strides = [1, 1]} : vector<32x2048xf32> to vector<32x256xf32>
    %cst_66 = arith.constant dense<0.000000e+00> : vector<32xf32>
    %182 = vector.multi_reduction <add>, %181, %cst_66 [1] : vector<32x256xf32> to vector<32xf32>
    %183 = vector.shape_cast %182 : vector<32xf32> to vector<32x1xf32>
    %184 = arith.mulf %181, %181 : vector<32x256xf32>
    %cst_67 = arith.constant dense<0.000000e+00> : vector<32xf32>
    %185 = vector.multi_reduction <add>, %184, %cst_67 [1] : vector<32x256xf32> to vector<32xf32>
    %186 = vector.shape_cast %185 : vector<32xf32> to vector<32x1xf32>
    %187 = tpu.concatenate %183, %186 in 1 : vector<32x1xf32>, vector<32x1xf32> -> vector<32x2xf32>
    %cst_68 = arith.constant dense<0.000000e+00> : vector<32x2xf32>
    %188 = tpu.matmul %0, %187, %cst_68 {dimension_numbers = #tpu.dot_dimension_numbers<[1], [0], [0], [1], [0, 0, 1, 1], [], []>} : vector<32x32xf32>, vector<32x2xf32>, vector<32x2xf32> -> vector<32x2xf32>
    %cst_69 = arith.constant 4.8828125E-4 : f32
    %189 = vector.broadcast %cst_69 : f32 to vector<32x2xf32>
    %190 = arith.mulf %188, %189 : vector<32x2xf32>
    %191 = vector.extract_strided_slice %190 {offsets = [0, 0], sizes = [32, 1], strides = [1, 1]} : vector<32x2xf32> to vector<32x1xf32>
    %192 = vector.extract_strided_slice %190 {offsets = [0, 1], sizes = [32, 1], strides = [1, 1]} : vector<32x2xf32> to vector<32x1xf32>
    %193 = arith.mulf %191, %191 : vector<32x1xf32>
    %194 = arith.subf %192, %193 : vector<32x1xf32>
    %cst_70 = arith.constant 0.000000e+00 : f32
    %195 = vector.broadcast %cst_70 : f32 to vector<32x1xf32>
    %196 = arith.maximumf %194, %195 : vector<32x1xf32>
    %cst_71 = arith.constant 9.99999974E-6 : f32
    %197 = vector.broadcast %cst_71 : f32 to vector<32x1xf32>
    %198 = arith.addf %196, %197 : vector<32x1xf32>
    %199 = math.rsqrt %198 : vector<32x1xf32>
    %200 = arith.mulf %7, %199 : vector<32x1xf32>
    %201 = arith.mulf %191, %200 : vector<32x1xf32>
    %202 = arith.subf %8, %201 : vector<32x1xf32>
    %203 = vector.broadcast %200 : vector<32x1xf32> to vector<32x256xf32>
    %204 = arith.mulf %181, %203 : vector<32x256xf32>
    %205 = vector.broadcast %202 : vector<32x1xf32> to vector<32x256xf32>
    %206 = arith.addf %204, %205 : vector<32x256xf32>
    %cst_72 = arith.constant 0.000000e+00 : f32
    %207 = vector.broadcast %cst_72 : f32 to vector<32x256xf32>
    %208 = arith.maximumf %206, %207 : vector<32x256xf32>
    %209 = arith.truncf %208 : vector<32x256xf32> to vector<32x256xbf16>
    %c0_73 = arith.constant 0 : index
    %c1024 = arith.constant 1024 : index
    %210 = vector.load %arg10[%c0_73, %c1024] : memref<32x2048xbf16, #tpu.memory_space<vmem>>, vector<32x256xbf16>
    tpu.vector_store %arg10[%c0_73, %c1024], %209 {strides = array<i32>} : memref<32x2048xbf16, #tpu.memory_space<vmem>>, vector<32x256xbf16>,
    %211 = vector.extract_strided_slice %60 {offsets = [0, 1280], sizes = [32, 256], strides = [1, 1]} : vector<32x2048xf32> to vector<32x256xf32>
    %cst_74 = arith.constant dense<0.000000e+00> : vector<32xf32>
    %212 = vector.multi_reduction <add>, %211, %cst_74 [1] : vector<32x256xf32> to vector<32xf32>
    %213 = vector.shape_cast %212 : vector<32xf32> to vector<32x1xf32>
    %214 = arith.mulf %211, %211 : vector<32x256xf32>
    %cst_75 = arith.constant dense<0.000000e+00> : vector<32xf32>
    %215 = vector.multi_reduction <add>, %214, %cst_75 [1] : vector<32x256xf32> to vector<32xf32>
    %216 = vector.shape_cast %215 : vector<32xf32> to vector<32x1xf32>
    %217 = tpu.concatenate %213, %216 in 1 : vector<32x1xf32>, vector<32x1xf32> -> vector<32x2xf32>
    %cst_76 = arith.constant dense<0.000000e+00> : vector<32x2xf32>
    %218 = tpu.matmul %0, %217, %cst_76 {dimension_numbers = #tpu.dot_dimension_numbers<[1], [0], [0], [1], [0, 0, 1, 1], [], []>} : vector<32x32xf32>, vector<32x2xf32>, vector<32x2xf32> -> vector<32x2xf32>
    %cst_77 = arith.constant 4.8828125E-4 : f32
    %219 = vector.broadcast %cst_77 : f32 to vector<32x2xf32>
    %220 = arith.mulf %218, %219 : vector<32x2xf32>
    %221 = vector.extract_strided_slice %220 {offsets = [0, 0], sizes = [32, 1], strides = [1, 1]} : vector<32x2xf32> to vector<32x1xf32>
    %222 = vector.extract_strided_slice %220 {offsets = [0, 1], sizes = [32, 1], strides = [1, 1]} : vector<32x2xf32> to vector<32x1xf32>
    %223 = arith.mulf %221, %221 : vector<32x1xf32>
    %224 = arith.subf %222, %223 : vector<32x1xf32>
    %cst_78 = arith.constant 0.000000e+00 : f32
    %225 = vector.broadcast %cst_78 : f32 to vector<32x1xf32>
    %226 = arith.maximumf %224, %225 : vector<32x1xf32>
    %cst_79 = arith.constant 9.99999974E-6 : f32
    %227 = vector.broadcast %cst_79 : f32 to vector<32x1xf32>
    %228 = arith.addf %226, %227 : vector<32x1xf32>
    %229 = math.rsqrt %228 : vector<32x1xf32>
    %230 = arith.mulf %7, %229 : vector<32x1xf32>
    %231 = arith.mulf %221, %230 : vector<32x1xf32>
    %232 = arith.subf %8, %231 : vector<32x1xf32>
    %233 = vector.broadcast %230 : vector<32x1xf32> to vector<32x256xf32>
    %234 = arith.mulf %211, %233 : vector<32x256xf32>
    %235 = vector.broadcast %232 : vector<32x1xf32> to vector<32x256xf32>
    %236 = arith.addf %234, %235 : vector<32x256xf32>
    %cst_80 = arith.constant 0.000000e+00 : f32
    %237 = vector.broadcast %cst_80 : f32 to vector<32x256xf32>
    %238 = arith.maximumf %236, %237 : vector<32x256xf32>
    %239 = arith.truncf %238 : vector<32x256xf32> to vector<32x256xbf16>
    %c0_81 = arith.constant 0 : index
    %c1280 = arith.constant 1280 : index
    %240 = vector.load %arg10[%c0_81, %c1280] : memref<32x2048xbf16, #tpu.memory_space<vmem>>, vector<32x256xbf16>
    tpu.vector_store %arg10[%c0_81, %c1280], %239 {strides = array<i32>} : memref<32x2048xbf16, #tpu.memory_space<vmem>>, vector<32x256xbf16>,
    %241 = vector.extract_strided_slice %60 {offsets = [0, 1536], sizes = [32, 256], strides = [1, 1]} : vector<32x2048xf32> to vector<32x256xf32>
    %cst_82 = arith.constant dense<0.000000e+00> : vector<32xf32>
    %242 = vector.multi_reduction <add>, %241, %cst_82 [1] : vector<32x256xf32> to vector<32xf32>
    %243 = vector.shape_cast %242 : vector<32xf32> to vector<32x1xf32>
    %244 = arith.mulf %241, %241 : vector<32x256xf32>
    %cst_83 = arith.constant dense<0.000000e+00> : vector<32xf32>
    %245 = vector.multi_reduction <add>, %244, %cst_83 [1] : vector<32x256xf32> to vector<32xf32>
    %246 = vector.shape_cast %245 : vector<32xf32> to vector<32x1xf32>
    %247 = tpu.concatenate %243, %246 in 1 : vector<32x1xf32>, vector<32x1xf32> -> vector<32x2xf32>
    %cst_84 = arith.constant dense<0.000000e+00> : vector<32x2xf32>
    %248 = tpu.matmul %0, %247, %cst_84 {dimension_numbers = #tpu.dot_dimension_numbers<[1], [0], [0], [1], [0, 0, 1, 1], [], []>} : vector<32x32xf32>, vector<32x2xf32>, vector<32x2xf32> -> vector<32x2xf32>
    %cst_85 = arith.constant 4.8828125E-4 : f32
    %249 = vector.broadcast %cst_85 : f32 to vector<32x2xf32>
    %250 = arith.mulf %248, %249 : vector<32x2xf32>
    %251 = vector.extract_strided_slice %250 {offsets = [0, 0], sizes = [32, 1], strides = [1, 1]} : vector<32x2xf32> to vector<32x1xf32>
    %252 = vector.extract_strided_slice %250 {offsets = [0, 1], sizes = [32, 1], strides = [1, 1]} : vector<32x2xf32> to vector<32x1xf32>
    %253 = arith.mulf %251, %251 : vector<32x1xf32>
    %254 = arith.subf %252, %253 : vector<32x1xf32>
    %cst_86 = arith.constant 0.000000e+00 : f32
    %255 = vector.broadcast %cst_86 : f32 to vector<32x1xf32>
    %256 = arith.maximumf %254, %255 : vector<32x1xf32>
    %cst_87 = arith.constant 9.99999974E-6 : f32
    %257 = vector.broadcast %cst_87 : f32 to vector<32x1xf32>
    %258 = arith.addf %256, %257 : vector<32x1xf32>
    %259 = math.rsqrt %258 : vector<32x1xf32>
    %260 = arith.mulf %7, %259 : vector<32x1xf32>
    %261 = arith.mulf %251, %260 : vector<32x1xf32>
    %262 = arith.subf %8, %261 : vector<32x1xf32>
    %263 = vector.broadcast %260 : vector<32x1xf32> to vector<32x256xf32>
    %264 = arith.mulf %241, %263 : vector<32x256xf32>
    %265 = vector.broadcast %262 : vector<32x1xf32> to vector<32x256xf32>
    %266 = arith.addf %264, %265 : vector<32x256xf32>
    %cst_88 = arith.constant 0.000000e+00 : f32
    %267 = vector.broadcast %cst_88 : f32 to vector<32x256xf32>
    %268 = arith.maximumf %266, %267 : vector<32x256xf32>
    %269 = arith.truncf %268 : vector<32x256xf32> to vector<32x256xbf16>
    %c0_89 = arith.constant 0 : index
    %c1536 = arith.constant 1536 : index
    %270 = vector.load %arg10[%c0_89, %c1536] : memref<32x2048xbf16, #tpu.memory_space<vmem>>, vector<32x256xbf16>
    tpu.vector_store %arg10[%c0_89, %c1536], %269 {strides = array<i32>} : memref<32x2048xbf16, #tpu.memory_space<vmem>>, vector<32x256xbf16>,
    %271 = vector.extract_strided_slice %60 {offsets = [0, 1792], sizes = [32, 256], strides = [1, 1]} : vector<32x2048xf32> to vector<32x256xf32>
    %cst_90 = arith.constant dense<0.000000e+00> : vector<32xf32>
    %272 = vector.multi_reduction <add>, %271, %cst_90 [1] : vector<32x256xf32> to vector<32xf32>
    %273 = vector.shape_cast %272 : vector<32xf32> to vector<32x1xf32>
    %274 = arith.mulf %271, %271 : vector<32x256xf32>
    %cst_91 = arith.constant dense<0.000000e+00> : vector<32xf32>
    %275 = vector.multi_reduction <add>, %274, %cst_91 [1] : vector<32x256xf32> to vector<32xf32>
    %276 = vector.shape_cast %275 : vector<32xf32> to vector<32x1xf32>
    %277 = tpu.concatenate %273, %276 in 1 : vector<32x1xf32>, vector<32x1xf32> -> vector<32x2xf32>
    %cst_92 = arith.constant dense<0.000000e+00> : vector<32x2xf32>
    %278 = tpu.matmul %0, %277, %cst_92 {dimension_numbers = #tpu.dot_dimension_numbers<[1], [0], [0], [1], [0, 0, 1, 1], [], []>} : vector<32x32xf32>, vector<32x2xf32>, vector<32x2xf32> -> vector<32x2xf32>
    %cst_93 = arith.constant 4.8828125E-4 : f32
    %279 = vector.broadcast %cst_93 : f32 to vector<32x2xf32>
    %280 = arith.mulf %278, %279 : vector<32x2xf32>
    %281 = vector.extract_strided_slice %280 {offsets = [0, 0], sizes = [32, 1], strides = [1, 1]} : vector<32x2xf32> to vector<32x1xf32>
    %282 = vector.extract_strided_slice %280 {offsets = [0, 1], sizes = [32, 1], strides = [1, 1]} : vector<32x2xf32> to vector<32x1xf32>
    %283 = arith.mulf %281, %281 : vector<32x1xf32>
    %284 = arith.subf %282, %283 : vector<32x1xf32>
    %cst_94 = arith.constant 0.000000e+00 : f32
    %285 = vector.broadcast %cst_94 : f32 to vector<32x1xf32>
    %286 = arith.maximumf %284, %285 : vector<32x1xf32>
    %cst_95 = arith.constant 9.99999974E-6 : f32
    %287 = vector.broadcast %cst_95 : f32 to vector<32x1xf32>
    %288 = arith.addf %286, %287 : vector<32x1xf32>
    %289 = math.rsqrt %288 : vector<32x1xf32>
    %290 = arith.mulf %7, %289 : vector<32x1xf32>
    %291 = arith.mulf %281, %290 : vector<32x1xf32>
    %292 = arith.subf %8, %291 : vector<32x1xf32>
    %293 = vector.broadcast %290 : vector<32x1xf32> to vector<32x256xf32>
    %294 = arith.mulf %271, %293 : vector<32x256xf32>
    %295 = vector.broadcast %292 : vector<32x1xf32> to vector<32x256xf32>
    %296 = arith.addf %294, %295 : vector<32x256xf32>
    %cst_96 = arith.constant 0.000000e+00 : f32
    %297 = vector.broadcast %cst_96 : f32 to vector<32x256xf32>
    %298 = arith.maximumf %296, %297 : vector<32x256xf32>
    %299 = arith.truncf %298 : vector<32x256xf32> to vector<32x256xbf16>
    %c0_97 = arith.constant 0 : index
    %c1792 = arith.constant 1792 : index
    %300 = vector.load %arg10[%c0_97, %c1792] : memref<32x2048xbf16, #tpu.memory_space<vmem>>, vector<32x256xbf16>
    tpu.vector_store %arg10[%c0_97, %c1792], %299 {strides = array<i32>} : memref<32x2048xbf16, #tpu.memory_space<vmem>>, vector<32x256xbf16>,
    %c32_98 = arith.constant 32 : index
    %c0_99 = arith.constant 0 : index
    %301 = vector.load %arg5[%c32_98, %c0_99] : memref<128x32xbf16, #tpu.memory_space<vmem>>, vector<64x32xbf16>
    %c0_100 = arith.constant 0 : index
    %c0_101 = arith.constant 0 : index
    %302 = vector.load %arg10[%c0_100, %c0_101] : memref<32x2048xbf16, #tpu.memory_space<vmem>>, vector<32x2048xbf16>
    %cst_102 = arith.constant dense<0.000000e+00> : vector<64x2048xf32>
    %303 = tpu.matmul %301, %302, %cst_102 {dimension_numbers = #tpu.dot_dimension_numbers<[1], [0], [0], [1], [0, 0, 1, 1], [], []>} : vector<64x32xbf16>, vector<32x2048xbf16>, vector<64x2048xf32> -> vector<64x2048xf32>
    %304 = vector.extract_strided_slice %303 {offsets = [0, 0], sizes = [32, 256], strides = [1, 1]} : vector<64x2048xf32> to vector<32x256xf32>
    %cst_103 = arith.constant 0.000000e+00 : f32
    %305 = vector.broadcast %cst_103 : f32 to vector<32x256xf32>
    %306 = arith.cmpf ogt, %304, %305 : vector<32x256xf32>
    %cst_104 = arith.constant 1.000000e+00 : f32
    %307 = vector.broadcast %cst_104 : f32 to vector<32x256xf32>
    %308 = arith.addf %304, %307 : vector<32x256xf32>
    %309 = math.exp %304 : vector<32x256xf32>
    %310 = arith.select %306, %308, %309 : vector<32x256xi1>, vector<32x256xf32>
    %311 = vector.extract_strided_slice %303 {offsets = [32, 0], sizes = [32, 256], strides = [1, 1]} : vector<64x2048xf32> to vector<32x256xf32>
    %312 = arith.truncf %311 : vector<32x256xf32> to vector<32x256xbf16>
    %313 = arith.truncf %310 : vector<32x256xf32> to vector<32x256xbf16>
    %cst_105 = arith.constant dense<0.000000e+00> : vector<32x32xf32>
    %314 = tpu.matmul %312, %313, %cst_105 {dimension_numbers = #tpu.dot_dimension_numbers<[1], [1], [0], [0], [0, 0, 1, 0], [], []>} : vector<32x256xbf16>, vector<32x256xbf16>, vector<32x32xf32> -> vector<32x32xf32>
    %cst_106 = arith.constant dense<0.000000e+00> : vector<32xf32>
    %315 = vector.multi_reduction <add>, %310, %cst_106 [1] : vector<32x256xf32> to vector<32xf32>
    %316 = vector.shape_cast %315 : vector<32xf32> to vector<32x1xf32>
    %317 = arith.mulf %314, %1 : vector<32x32xf32>
    %318 = arith.truncf %317 : vector<32x32xf32> to vector<32x32xbf16>
    %cst_107 = arith.constant dense<0.000000e+00> : vector<32x256xf32>
    %319 = tpu.matmul %318, %53, %cst_107 {dimension_numbers = #tpu.dot_dimension_numbers<[1], [0], [0], [1], [0, 0, 1, 1], [], []>} : vector<32x32xbf16>, vector<32x256xbf16>, vector<32x256xf32> -> vector<32x256xf32>
    %320 = vector.broadcast %316 : vector<32x1xf32> to vector<32x256xf32>
    %321 = arith.mulf %52, %320 : vector<32x256xf32>
    %322 = arith.truncf %321 : vector<32x256xf32> to vector<32x256xbf16>
    %cst_108 = arith.constant dense<0.000000e+00> : vector<32x256xf32>
    %323 = tpu.matmul %2, %322, %cst_108 {dimension_numbers = #tpu.dot_dimension_numbers<[1], [0], [0], [1], [0, 0, 1, 1], [], []>} : vector<32x32xbf16>, vector<32x256xbf16>, vector<32x256xf32> -> vector<32x256xf32>
    %cst_109 = arith.constant 9.99999997E-7 : f32
    %324 = vector.broadcast %cst_109 : f32 to vector<32x256xf32>
    %325 = arith.addf %323, %324 : vector<32x256xf32>
    %326 = arith.divf %319, %325 : vector<32x256xf32>
    %327 = arith.truncf %326 : vector<32x256xf32> to vector<32x256xbf16>
    %c0_110 = arith.constant 0 : index
    %c0_111 = arith.constant 0 : index
    %328 = vector.load %arg11[%c0_110, %c0_111] : memref<32x2048xbf16, #tpu.memory_space<vmem>>, vector<32x256xbf16>
    tpu.vector_store %arg11[%c0_110, %c0_111], %327 {strides = array<i32>} : memref<32x2048xbf16, #tpu.memory_space<vmem>>, vector<32x256xbf16>,
    %329 = vector.extract_strided_slice %303 {offsets = [0, 256], sizes = [32, 256], strides = [1, 1]} : vector<64x2048xf32> to vector<32x256xf32>
    %cst_112 = arith.constant 0.000000e+00 : f32
    %330 = vector.broadcast %cst_112 : f32 to vector<32x256xf32>
    %331 = arith.cmpf ogt, %329, %330 : vector<32x256xf32>
    %cst_113 = arith.constant 1.000000e+00 : f32
    %332 = vector.broadcast %cst_113 : f32 to vector<32x256xf32>
    %333 = arith.addf %329, %332 : vector<32x256xf32>
    %334 = math.exp %329 : vector<32x256xf32>
    %335 = arith.select %331, %333, %334 : vector<32x256xi1>, vector<32x256xf32>
    %336 = vector.extract_strided_slice %303 {offsets = [32, 256], sizes = [32, 256], strides = [1, 1]} : vector<64x2048xf32> to vector<32x256xf32>
    %337 = arith.truncf %336 : vector<32x256xf32> to vector<32x256xbf16>
    %338 = arith.truncf %335 : vector<32x256xf32> to vector<32x256xbf16>
    %cst_114 = arith.constant dense<0.000000e+00> : vector<32x32xf32>
    %339 = tpu.matmul %337, %338, %cst_114 {dimension_numbers = #tpu.dot_dimension_numbers<[1], [1], [0], [0], [0, 0, 1, 0], [], []>} : vector<32x256xbf16>, vector<32x256xbf16>, vector<32x32xf32> -> vector<32x32xf32>
    %cst_115 = arith.constant dense<0.000000e+00> : vector<32xf32>
    %340 = vector.multi_reduction <add>, %335, %cst_115 [1] : vector<32x256xf32> to vector<32xf32>
    %341 = vector.shape_cast %340 : vector<32xf32> to vector<32x1xf32>
    %342 = arith.mulf %339, %1 : vector<32x32xf32>
    %343 = arith.truncf %342 : vector<32x32xf32> to vector<32x32xbf16>
    %cst_116 = arith.constant dense<0.000000e+00> : vector<32x256xf32>
    %344 = tpu.matmul %343, %53, %cst_116 {dimension_numbers = #tpu.dot_dimension_numbers<[1], [0], [0], [1], [0, 0, 1, 1], [], []>} : vector<32x32xbf16>, vector<32x256xbf16>, vector<32x256xf32> -> vector<32x256xf32>
    %345 = vector.broadcast %341 : vector<32x1xf32> to vector<32x256xf32>
    %346 = arith.mulf %52, %345 : vector<32x256xf32>
    %347 = arith.truncf %346 : vector<32x256xf32> to vector<32x256xbf16>
    %cst_117 = arith.constant dense<0.000000e+00> : vector<32x256xf32>
    %348 = tpu.matmul %2, %347, %cst_117 {dimension_numbers = #tpu.dot_dimension_numbers<[1], [0], [0], [1], [0, 0, 1, 1], [], []>} : vector<32x32xbf16>, vector<32x256xbf16>, vector<32x256xf32> -> vector<32x256xf32>
    %cst_118 = arith.constant 9.99999997E-7 : f32
    %349 = vector.broadcast %cst_118 : f32 to vector<32x256xf32>
    %350 = arith.addf %348, %349 : vector<32x256xf32>
    %351 = arith.divf %344, %350 : vector<32x256xf32>
    %352 = arith.truncf %351 : vector<32x256xf32> to vector<32x256xbf16>
    %c0_119 = arith.constant 0 : index
    %c256_120 = arith.constant 256 : index
    %353 = vector.load %arg11[%c0_119, %c256_120] : memref<32x2048xbf16, #tpu.memory_space<vmem>>, vector<32x256xbf16>
    tpu.vector_store %arg11[%c0_119, %c256_120], %352 {strides = array<i32>} : memref<32x2048xbf16, #tpu.memory_space<vmem>>, vector<32x256xbf16>,
    %354 = vector.extract_strided_slice %303 {offsets = [0, 512], sizes = [32, 256], strides = [1, 1]} : vector<64x2048xf32> to vector<32x256xf32>
    %cst_121 = arith.constant 0.000000e+00 : f32
    %355 = vector.broadcast %cst_121 : f32 to vector<32x256xf32>
    %356 = arith.cmpf ogt, %354, %355 : vector<32x256xf32>
    %cst_122 = arith.constant 1.000000e+00 : f32
    %357 = vector.broadcast %cst_122 : f32 to vector<32x256xf32>
    %358 = arith.addf %354, %357 : vector<32x256xf32>
    %359 = math.exp %354 : vector<32x256xf32>
    %360 = arith.select %356, %358, %359 : vector<32x256xi1>, vector<32x256xf32>
    %361 = vector.extract_strided_slice %303 {offsets = [32, 512], sizes = [32, 256], strides = [1, 1]} : vector<64x2048xf32> to vector<32x256xf32>
    %362 = arith.truncf %361 : vector<32x256xf32> to vector<32x256xbf16>
    %363 = arith.truncf %360 : vector<32x256xf32> to vector<32x256xbf16>
    %cst_123 = arith.constant dense<0.000000e+00> : vector<32x32xf32>
    %364 = tpu.matmul %362, %363, %cst_123 {dimension_numbers = #tpu.dot_dimension_numbers<[1], [1], [0], [0], [0, 0, 1, 0], [], []>} : vector<32x256xbf16>, vector<32x256xbf16>, vector<32x32xf32> -> vector<32x32xf32>
    %cst_124 = arith.constant dense<0.000000e+00> : vector<32xf32>
    %365 = vector.multi_reduction <add>, %360, %cst_124 [1] : vector<32x256xf32> to vector<32xf32>
    %366 = vector.shape_cast %365 : vector<32xf32> to vector<32x1xf32>
    %367 = arith.mulf %364, %1 : vector<32x32xf32>
    %368 = arith.truncf %367 : vector<32x32xf32> to vector<32x32xbf16>
    %cst_125 = arith.constant dense<0.000000e+00> : vector<32x256xf32>
    %369 = tpu.matmul %368, %53, %cst_125 {dimension_numbers = #tpu.dot_dimension_numbers<[1], [0], [0], [1], [0, 0, 1, 1], [], []>} : vector<32x32xbf16>, vector<32x256xbf16>, vector<32x256xf32> -> vector<32x256xf32>
    %370 = vector.broadcast %366 : vector<32x1xf32> to vector<32x256xf32>
    %371 = arith.mulf %52, %370 : vector<32x256xf32>
    %372 = arith.truncf %371 : vector<32x256xf32> to vector<32x256xbf16>
    %cst_126 = arith.constant dense<0.000000e+00> : vector<32x256xf32>
    %373 = tpu.matmul %2, %372, %cst_126 {dimension_numbers = #tpu.dot_dimension_numbers<[1], [0], [0], [1], [0, 0, 1, 1], [], []>} : vector<32x32xbf16>, vector<32x256xbf16>, vector<32x256xf32> -> vector<32x256xf32>
    %cst_127 = arith.constant 9.99999997E-7 : f32
    %374 = vector.broadcast %cst_127 : f32 to vector<32x256xf32>
    %375 = arith.addf %373, %374 : vector<32x256xf32>
    %376 = arith.divf %369, %375 : vector<32x256xf32>
    %377 = arith.truncf %376 : vector<32x256xf32> to vector<32x256xbf16>
    %c0_128 = arith.constant 0 : index
    %c512_129 = arith.constant 512 : index
    %378 = vector.load %arg11[%c0_128, %c512_129] : memref<32x2048xbf16, #tpu.memory_space<vmem>>, vector<32x256xbf16>
    tpu.vector_store %arg11[%c0_128, %c512_129], %377 {strides = array<i32>} : memref<32x2048xbf16, #tpu.memory_space<vmem>>, vector<32x256xbf16>,
    %379 = vector.extract_strided_slice %303 {offsets = [0, 768], sizes = [32, 256], strides = [1, 1]} : vector<64x2048xf32> to vector<32x256xf32>
    %cst_130 = arith.constant 0.000000e+00 : f32
    %380 = vector.broadcast %cst_130 : f32 to vector<32x256xf32>
    %381 = arith.cmpf ogt, %379, %380 : vector<32x256xf32>
    %cst_131 = arith.constant 1.000000e+00 : f32
    %382 = vector.broadcast %cst_131 : f32 to vector<32x256xf32>
    %383 = arith.addf %379, %382 : vector<32x256xf32>
    %384 = math.exp %379 : vector<32x256xf32>
    %385 = arith.select %381, %383, %384 : vector<32x256xi1>, vector<32x256xf32>
    %386 = vector.extract_strided_slice %303 {offsets = [32, 768], sizes = [32, 256], strides = [1, 1]} : vector<64x2048xf32> to vector<32x256xf32>
    %387 = arith.truncf %386 : vector<32x256xf32> to vector<32x256xbf16>
    %388 = arith.truncf %385 : vector<32x256xf32> to vector<32x256xbf16>
    %cst_132 = arith.constant dense<0.000000e+00> : vector<32x32xf32>
    %389 = tpu.matmul %387, %388, %cst_132 {dimension_numbers = #tpu.dot_dimension_numbers<[1], [1], [0], [0], [0, 0, 1, 0], [], []>} : vector<32x256xbf16>, vector<32x256xbf16>, vector<32x32xf32> -> vector<32x32xf32>
    %cst_133 = arith.constant dense<0.000000e+00> : vector<32xf32>
    %390 = vector.multi_reduction <add>, %385, %cst_133 [1] : vector<32x256xf32> to vector<32xf32>
    %391 = vector.shape_cast %390 : vector<32xf32> to vector<32x1xf32>
    %392 = arith.mulf %389, %1 : vector<32x32xf32>
    %393 = arith.truncf %392 : vector<32x32xf32> to vector<32x32xbf16>
    %cst_134 = arith.constant dense<0.000000e+00> : vector<32x256xf32>
    %394 = tpu.matmul %393, %53, %cst_134 {dimension_numbers = #tpu.dot_dimension_numbers<[1], [0], [0], [1], [0, 0, 1, 1], [], []>} : vector<32x32xbf16>, vector<32x256xbf16>, vector<32x256xf32> -> vector<32x256xf32>
    %395 = vector.broadcast %391 : vector<32x1xf32> to vector<32x256xf32>
    %396 = arith.mulf %52, %395 : vector<32x256xf32>
    %397 = arith.truncf %396 : vector<32x256xf32> to vector<32x256xbf16>
    %cst_135 = arith.constant dense<0.000000e+00> : vector<32x256xf32>
    %398 = tpu.matmul %2, %397, %cst_135 {dimension_numbers = #tpu.dot_dimension_numbers<[1], [0], [0], [1], [0, 0, 1, 1], [], []>} : vector<32x32xbf16>, vector<32x256xbf16>, vector<32x256xf32> -> vector<32x256xf32>
    %cst_136 = arith.constant 9.99999997E-7 : f32
    %399 = vector.broadcast %cst_136 : f32 to vector<32x256xf32>
    %400 = arith.addf %398, %399 : vector<32x256xf32>
    %401 = arith.divf %394, %400 : vector<32x256xf32>
    %402 = arith.truncf %401 : vector<32x256xf32> to vector<32x256xbf16>
    %c0_137 = arith.constant 0 : index
    %c768_138 = arith.constant 768 : index
    %403 = vector.load %arg11[%c0_137, %c768_138] : memref<32x2048xbf16, #tpu.memory_space<vmem>>, vector<32x256xbf16>
    tpu.vector_store %arg11[%c0_137, %c768_138], %402 {strides = array<i32>} : memref<32x2048xbf16, #tpu.memory_space<vmem>>, vector<32x256xbf16>,
    %404 = vector.extract_strided_slice %303 {offsets = [0, 1024], sizes = [32, 256], strides = [1, 1]} : vector<64x2048xf32> to vector<32x256xf32>
    %cst_139 = arith.constant 0.000000e+00 : f32
    %405 = vector.broadcast %cst_139 : f32 to vector<32x256xf32>
    %406 = arith.cmpf ogt, %404, %405 : vector<32x256xf32>
    %cst_140 = arith.constant 1.000000e+00 : f32
    %407 = vector.broadcast %cst_140 : f32 to vector<32x256xf32>
    %408 = arith.addf %404, %407 : vector<32x256xf32>
    %409 = math.exp %404 : vector<32x256xf32>
    %410 = arith.select %406, %408, %409 : vector<32x256xi1>, vector<32x256xf32>
    %411 = vector.extract_strided_slice %303 {offsets = [32, 1024], sizes = [32, 256], strides = [1, 1]} : vector<64x2048xf32> to vector<32x256xf32>
    %412 = arith.truncf %411 : vector<32x256xf32> to vector<32x256xbf16>
    %413 = arith.truncf %410 : vector<32x256xf32> to vector<32x256xbf16>
    %cst_141 = arith.constant dense<0.000000e+00> : vector<32x32xf32>
    %414 = tpu.matmul %412, %413, %cst_141 {dimension_numbers = #tpu.dot_dimension_numbers<[1], [1], [0], [0], [0, 0, 1, 0], [], []>} : vector<32x256xbf16>, vector<32x256xbf16>, vector<32x32xf32> -> vector<32x32xf32>
    %cst_142 = arith.constant dense<0.000000e+00> : vector<32xf32>
    %415 = vector.multi_reduction <add>, %410, %cst_142 [1] : vector<32x256xf32> to vector<32xf32>
    %416 = vector.shape_cast %415 : vector<32xf32> to vector<32x1xf32>
    %417 = arith.mulf %414, %1 : vector<32x32xf32>
    %418 = arith.truncf %417 : vector<32x32xf32> to vector<32x32xbf16>
    %cst_143 = arith.constant dense<0.000000e+00> : vector<32x256xf32>
    %419 = tpu.matmul %418, %53, %cst_143 {dimension_numbers = #tpu.dot_dimension_numbers<[1], [0], [0], [1], [0, 0, 1, 1], [], []>} : vector<32x32xbf16>, vector<32x256xbf16>, vector<32x256xf32> -> vector<32x256xf32>
    %420 = vector.broadcast %416 : vector<32x1xf32> to vector<32x256xf32>
    %421 = arith.mulf %52, %420 : vector<32x256xf32>
    %422 = arith.truncf %421 : vector<32x256xf32> to vector<32x256xbf16>
    %cst_144 = arith.constant dense<0.000000e+00> : vector<32x256xf32>
    %423 = tpu.matmul %2, %422, %cst_144 {dimension_numbers = #tpu.dot_dimension_numbers<[1], [0], [0], [1], [0, 0, 1, 1], [], []>} : vector<32x32xbf16>, vector<32x256xbf16>, vector<32x256xf32> -> vector<32x256xf32>
    %cst_145 = arith.constant 9.99999997E-7 : f32
    %424 = vector.broadcast %cst_145 : f32 to vector<32x256xf32>
    %425 = arith.addf %423, %424 : vector<32x256xf32>
    %426 = arith.divf %419, %425 : vector<32x256xf32>
    %427 = arith.truncf %426 : vector<32x256xf32> to vector<32x256xbf16>
    %c0_146 = arith.constant 0 : index
    %c1024_147 = arith.constant 1024 : index
    %428 = vector.load %arg11[%c0_146, %c1024_147] : memref<32x2048xbf16, #tpu.memory_space<vmem>>, vector<32x256xbf16>
    tpu.vector_store %arg11[%c0_146, %c1024_147], %427 {strides = array<i32>} : memref<32x2048xbf16, #tpu.memory_space<vmem>>, vector<32x256xbf16>,
    %429 = vector.extract_strided_slice %303 {offsets = [0, 1280], sizes = [32, 256], strides = [1, 1]} : vector<64x2048xf32> to vector<32x256xf32>
    %cst_148 = arith.constant 0.000000e+00 : f32
    %430 = vector.broadcast %cst_148 : f32 to vector<32x256xf32>
    %431 = arith.cmpf ogt, %429, %430 : vector<32x256xf32>
    %cst_149 = arith.constant 1.000000e+00 : f32
    %432 = vector.broadcast %cst_149 : f32 to vector<32x256xf32>
    %433 = arith.addf %429, %432 : vector<32x256xf32>
    %434 = math.exp %429 : vector<32x256xf32>
    %435 = arith.select %431, %433, %434 : vector<32x256xi1>, vector<32x256xf32>
    %436 = vector.extract_strided_slice %303 {offsets = [32, 1280], sizes = [32, 256], strides = [1, 1]} : vector<64x2048xf32> to vector<32x256xf32>
    %437 = arith.truncf %436 : vector<32x256xf32> to vector<32x256xbf16>
    %438 = arith.truncf %435 : vector<32x256xf32> to vector<32x256xbf16>
    %cst_150 = arith.constant dense<0.000000e+00> : vector<32x32xf32>
    %439 = tpu.matmul %437, %438, %cst_150 {dimension_numbers = #tpu.dot_dimension_numbers<[1], [1], [0], [0], [0, 0, 1, 0], [], []>} : vector<32x256xbf16>, vector<32x256xbf16>, vector<32x32xf32> -> vector<32x32xf32>
    %cst_151 = arith.constant dense<0.000000e+00> : vector<32xf32>
    %440 = vector.multi_reduction <add>, %435, %cst_151 [1] : vector<32x256xf32> to vector<32xf32>
    %441 = vector.shape_cast %440 : vector<32xf32> to vector<32x1xf32>
    %442 = arith.mulf %439, %1 : vector<32x32xf32>
    %443 = arith.truncf %442 : vector<32x32xf32> to vector<32x32xbf16>
    %cst_152 = arith.constant dense<0.000000e+00> : vector<32x256xf32>
    %444 = tpu.matmul %443, %53, %cst_152 {dimension_numbers = #tpu.dot_dimension_numbers<[1], [0], [0], [1], [0, 0, 1, 1], [], []>} : vector<32x32xbf16>, vector<32x256xbf16>, vector<32x256xf32> -> vector<32x256xf32>
    %445 = vector.broadcast %441 : vector<32x1xf32> to vector<32x256xf32>
    %446 = arith.mulf %52, %445 : vector<32x256xf32>
    %447 = arith.truncf %446 : vector<32x256xf32> to vector<32x256xbf16>
    %cst_153 = arith.constant dense<0.000000e+00> : vector<32x256xf32>
    %448 = tpu.matmul %2, %447, %cst_153 {dimension_numbers = #tpu.dot_dimension_numbers<[1], [0], [0], [1], [0, 0, 1, 1], [], []>} : vector<32x32xbf16>, vector<32x256xbf16>, vector<32x256xf32> -> vector<32x256xf32>
    %cst_154 = arith.constant 9.99999997E-7 : f32
    %449 = vector.broadcast %cst_154 : f32 to vector<32x256xf32>
    %450 = arith.addf %448, %449 : vector<32x256xf32>
    %451 = arith.divf %444, %450 : vector<32x256xf32>
    %452 = arith.truncf %451 : vector<32x256xf32> to vector<32x256xbf16>
    %c0_155 = arith.constant 0 : index
    %c1280_156 = arith.constant 1280 : index
    %453 = vector.load %arg11[%c0_155, %c1280_156] : memref<32x2048xbf16, #tpu.memory_space<vmem>>, vector<32x256xbf16>
    tpu.vector_store %arg11[%c0_155, %c1280_156], %452 {strides = array<i32>} : memref<32x2048xbf16, #tpu.memory_space<vmem>>, vector<32x256xbf16>,
    %454 = vector.extract_strided_slice %303 {offsets = [0, 1536], sizes = [32, 256], strides = [1, 1]} : vector<64x2048xf32> to vector<32x256xf32>
    %cst_157 = arith.constant 0.000000e+00 : f32
    %455 = vector.broadcast %cst_157 : f32 to vector<32x256xf32>
    %456 = arith.cmpf ogt, %454, %455 : vector<32x256xf32>
    %cst_158 = arith.constant 1.000000e+00 : f32
    %457 = vector.broadcast %cst_158 : f32 to vector<32x256xf32>
    %458 = arith.addf %454, %457 : vector<32x256xf32>
    %459 = math.exp %454 : vector<32x256xf32>
    %460 = arith.select %456, %458, %459 : vector<32x256xi1>, vector<32x256xf32>
    %461 = vector.extract_strided_slice %303 {offsets = [32, 1536], sizes = [32, 256], strides = [1, 1]} : vector<64x2048xf32> to vector<32x256xf32>
    %462 = arith.truncf %461 : vector<32x256xf32> to vector<32x256xbf16>
    %463 = arith.truncf %460 : vector<32x256xf32> to vector<32x256xbf16>
    %cst_159 = arith.constant dense<0.000000e+00> : vector<32x32xf32>
    %464 = tpu.matmul %462, %463, %cst_159 {dimension_numbers = #tpu.dot_dimension_numbers<[1], [1], [0], [0], [0, 0, 1, 0], [], []>} : vector<32x256xbf16>, vector<32x256xbf16>, vector<32x32xf32> -> vector<32x32xf32>
    %cst_160 = arith.constant dense<0.000000e+00> : vector<32xf32>
    %465 = vector.multi_reduction <add>, %460, %cst_160 [1] : vector<32x256xf32> to vector<32xf32>
    %466 = vector.shape_cast %465 : vector<32xf32> to vector<32x1xf32>
    %467 = arith.mulf %464, %1 : vector<32x32xf32>
    %468 = arith.truncf %467 : vector<32x32xf32> to vector<32x32xbf16>
    %cst_161 = arith.constant dense<0.000000e+00> : vector<32x256xf32>
    %469 = tpu.matmul %468, %53, %cst_161 {dimension_numbers = #tpu.dot_dimension_numbers<[1], [0], [0], [1], [0, 0, 1, 1], [], []>} : vector<32x32xbf16>, vector<32x256xbf16>, vector<32x256xf32> -> vector<32x256xf32>
    %470 = vector.broadcast %466 : vector<32x1xf32> to vector<32x256xf32>
    %471 = arith.mulf %52, %470 : vector<32x256xf32>
    %472 = arith.truncf %471 : vector<32x256xf32> to vector<32x256xbf16>
    %cst_162 = arith.constant dense<0.000000e+00> : vector<32x256xf32>
    %473 = tpu.matmul %2, %472, %cst_162 {dimension_numbers = #tpu.dot_dimension_numbers<[1], [0], [0], [1], [0, 0, 1, 1], [], []>} : vector<32x32xbf16>, vector<32x256xbf16>, vector<32x256xf32> -> vector<32x256xf32>
    %cst_163 = arith.constant 9.99999997E-7 : f32
    %474 = vector.broadcast %cst_163 : f32 to vector<32x256xf32>
    %475 = arith.addf %473, %474 : vector<32x256xf32>
    %476 = arith.divf %469, %475 : vector<32x256xf32>
    %477 = arith.truncf %476 : vector<32x256xf32> to vector<32x256xbf16>
    %c0_164 = arith.constant 0 : index
    %c1536_165 = arith.constant 1536 : index
    %478 = vector.load %arg11[%c0_164, %c1536_165] : memref<32x2048xbf16, #tpu.memory_space<vmem>>, vector<32x256xbf16>
    tpu.vector_store %arg11[%c0_164, %c1536_165], %477 {strides = array<i32>} : memref<32x2048xbf16, #tpu.memory_space<vmem>>, vector<32x256xbf16>,
    %479 = vector.extract_strided_slice %303 {offsets = [0, 1792], sizes = [32, 256], strides = [1, 1]} : vector<64x2048xf32> to vector<32x256xf32>
    %cst_166 = arith.constant 0.000000e+00 : f32
    %480 = vector.broadcast %cst_166 : f32 to vector<32x256xf32>
    %481 = arith.cmpf ogt, %479, %480 : vector<32x256xf32>
    %cst_167 = arith.constant 1.000000e+00 : f32
    %482 = vector.broadcast %cst_167 : f32 to vector<32x256xf32>
    %483 = arith.addf %479, %482 : vector<32x256xf32>
    %484 = math.exp %479 : vector<32x256xf32>
    %485 = arith.select %481, %483, %484 : vector<32x256xi1>, vector<32x256xf32>
    %486 = vector.extract_strided_slice %303 {offsets = [32, 1792], sizes = [32, 256], strides = [1, 1]} : vector<64x2048xf32> to vector<32x256xf32>
    %487 = arith.truncf %486 : vector<32x256xf32> to vector<32x256xbf16>
    %488 = arith.truncf %485 : vector<32x256xf32> to vector<32x256xbf16>
    %cst_168 = arith.constant dense<0.000000e+00> : vector<32x32xf32>
    %489 = tpu.matmul %487, %488, %cst_168 {dimension_numbers = #tpu.dot_dimension_numbers<[1], [1], [0], [0], [0, 0, 1, 0], [], []>} : vector<32x256xbf16>, vector<32x256xbf16>, vector<32x32xf32> -> vector<32x32xf32>
    %cst_169 = arith.constant dense<0.000000e+00> : vector<32xf32>
    %490 = vector.multi_reduction <add>, %485, %cst_169 [1] : vector<32x256xf32> to vector<32xf32>
    %491 = vector.shape_cast %490 : vector<32xf32> to vector<32x1xf32>
    %492 = arith.mulf %489, %1 : vector<32x32xf32>
    %493 = arith.truncf %492 : vector<32x32xf32> to vector<32x32xbf16>
    %cst_170 = arith.constant dense<0.000000e+00> : vector<32x256xf32>
    %494 = tpu.matmul %493, %53, %cst_170 {dimension_numbers = #tpu.dot_dimension_numbers<[1], [0], [0], [1], [0, 0, 1, 1], [], []>} : vector<32x32xbf16>, vector<32x256xbf16>, vector<32x256xf32> -> vector<32x256xf32>
    %495 = vector.broadcast %491 : vector<32x1xf32> to vector<32x256xf32>
    %496 = arith.mulf %52, %495 : vector<32x256xf32>
    %497 = arith.truncf %496 : vector<32x256xf32> to vector<32x256xbf16>
    %cst_171 = arith.constant dense<0.000000e+00> : vector<32x256xf32>
    %498 = tpu.matmul %2, %497, %cst_171 {dimension_numbers = #tpu.dot_dimension_numbers<[1], [0], [0], [1], [0, 0, 1, 1], [], []>} : vector<32x32xbf16>, vector<32x256xbf16>, vector<32x256xf32> -> vector<32x256xf32>
    %cst_172 = arith.constant 9.99999997E-7 : f32
    %499 = vector.broadcast %cst_172 : f32 to vector<32x256xf32>
    %500 = arith.addf %498, %499 : vector<32x256xf32>
    %501 = arith.divf %494, %500 : vector<32x256xf32>
    %502 = arith.truncf %501 : vector<32x256xf32> to vector<32x256xbf16>
    %c0_173 = arith.constant 0 : index
    %c1792_174 = arith.constant 1792 : index
    %503 = vector.load %arg11[%c0_173, %c1792_174] : memref<32x2048xbf16, #tpu.memory_space<vmem>>, vector<32x256xbf16>
    tpu.vector_store %arg11[%c0_173, %c1792_174], %502 {strides = array<i32>} : memref<32x2048xbf16, #tpu.memory_space<vmem>>, vector<32x256xbf16>,
    %c96 = arith.constant 96 : index
    %c0_175 = arith.constant 0 : index
    %504 = vector.load %arg5[%c96, %c0_175] : memref<128x32xbf16, #tpu.memory_space<vmem>>, vector<32x32xbf16>
    %c0_176 = arith.constant 0 : index
    %c0_177 = arith.constant 0 : index
    %505 = vector.load %arg11[%c0_176, %c0_177] : memref<32x2048xbf16, #tpu.memory_space<vmem>>, vector<32x2048xbf16>
    %cst_178 = arith.constant dense<0.000000e+00> : vector<32x2048xf32>
    %506 = tpu.matmul %504, %505, %cst_178 {dimension_numbers = #tpu.dot_dimension_numbers<[1], [0], [0], [1], [0, 0, 1, 1], [], []>} : vector<32x32xbf16>, vector<32x2048xbf16>, vector<32x2048xf32> -> vector<32x2048xf32>
    %507 = vector.broadcast %9 : vector<32x1xf32> to vector<32x2048xf32>
    %508 = arith.addf %506, %507 : vector<32x2048xf32>
    %509 = vector.extract_strided_slice %508 {offsets = [0, 0], sizes = [32, 256], strides = [1, 1]} : vector<32x2048xf32> to vector<32x256xf32>
    %510 = arith.addf %43, %509 : vector<32x256xf32>
    %c0_179 = arith.constant 0 : index
    %c0_180 = arith.constant 0 : index
    %c0_181 = arith.constant 0 : index
    %511 = vector.load %arg9[%c0_179, %c0_180, %c0_181] : memref<1x32x2048xf32, #tpu.memory_space<vmem>>, vector<1x32x256xf32>
    %512 = vector.shape_cast %511 : vector<1x32x256xf32> to vector<32x256xf32>
    %513 = vector.shape_cast %510 : vector<32x256xf32> to vector<1x32x256xf32>
    tpu.vector_store %arg9[%c0_179, %c0_180, %c0_181], %513 {strides = array<i32>} : memref<1x32x2048xf32, #tpu.memory_space<vmem>>, vector<1x32x256xf32>,
    %514 = vector.extract_strided_slice %508 {offsets = [0, 256], sizes = [32, 256], strides = [1, 1]} : vector<32x2048xf32> to vector<32x256xf32>
    %515 = arith.addf %43, %514 : vector<32x256xf32>
    %c0_182 = arith.constant 0 : index
    %c0_183 = arith.constant 0 : index
    %c256_184 = arith.constant 256 : index
    %516 = vector.load %arg9[%c0_182, %c0_183, %c256_184] : memref<1x32x2048xf32, #tpu.memory_space<vmem>>, vector<1x32x256xf32>
    %517 = vector.shape_cast %516 : vector<1x32x256xf32> to vector<32x256xf32>
    %518 = vector.shape_cast %515 : vector<32x256xf32> to vector<1x32x256xf32>
    tpu.vector_store %arg9[%c0_182, %c0_183, %c256_184], %518 {strides = array<i32>} : memref<1x32x2048xf32, #tpu.memory_space<vmem>>, vector<1x32x256xf32>,
    %519 = vector.extract_strided_slice %508 {offsets = [0, 512], sizes = [32, 256], strides = [1, 1]} : vector<32x2048xf32> to vector<32x256xf32>
    %520 = arith.addf %43, %519 : vector<32x256xf32>
    %c0_185 = arith.constant 0 : index
    %c0_186 = arith.constant 0 : index
    %c512_187 = arith.constant 512 : index
    %521 = vector.load %arg9[%c0_185, %c0_186, %c512_187] : memref<1x32x2048xf32, #tpu.memory_space<vmem>>, vector<1x32x256xf32>
    %522 = vector.shape_cast %521 : vector<1x32x256xf32> to vector<32x256xf32>
    %523 = vector.shape_cast %520 : vector<32x256xf32> to vector<1x32x256xf32>
    tpu.vector_store %arg9[%c0_185, %c0_186, %c512_187], %523 {strides = array<i32>} : memref<1x32x2048xf32, #tpu.memory_space<vmem>>, vector<1x32x256xf32>,
    %524 = vector.extract_strided_slice %508 {offsets = [0, 768], sizes = [32, 256], strides = [1, 1]} : vector<32x2048xf32> to vector<32x256xf32>
    %525 = arith.addf %43, %524 : vector<32x256xf32>
    %c0_188 = arith.constant 0 : index
    %c0_189 = arith.constant 0 : index
    %c768_190 = arith.constant 768 : index
    %526 = vector.load %arg9[%c0_188, %c0_189, %c768_190] : memref<1x32x2048xf32, #tpu.memory_space<vmem>>, vector<1x32x256xf32>
    %527 = vector.shape_cast %526 : vector<1x32x256xf32> to vector<32x256xf32>
    %528 = vector.shape_cast %525 : vector<32x256xf32> to vector<1x32x256xf32>
    tpu.vector_store %arg9[%c0_188, %c0_189, %c768_190], %528 {strides = array<i32>} : memref<1x32x2048xf32, #tpu.memory_space<vmem>>, vector<1x32x256xf32>,
    %529 = vector.extract_strided_slice %508 {offsets = [0, 1024], sizes = [32, 256], strides = [1, 1]} : vector<32x2048xf32> to vector<32x256xf32>
    %530 = arith.addf %43, %529 : vector<32x256xf32>
    %c0_191 = arith.constant 0 : index
    %c0_192 = arith.constant 0 : index
    %c1024_193 = arith.constant 1024 : index
    %531 = vector.load %arg9[%c0_191, %c0_192, %c1024_193] : memref<1x32x2048xf32, #tpu.memory_space<vmem>>, vector<1x32x256xf32>
    %532 = vector.shape_cast %531 : vector<1x32x256xf32> to vector<32x256xf32>
    %533 = vector.shape_cast %530 : vector<32x256xf32> to vector<1x32x256xf32>
    tpu.vector_store %arg9[%c0_191, %c0_192, %c1024_193], %533 {strides = array<i32>} : memref<1x32x2048xf32, #tpu.memory_space<vmem>>, vector<1x32x256xf32>,
    %534 = vector.extract_strided_slice %508 {offsets = [0, 1280], sizes = [32, 256], strides = [1, 1]} : vector<32x2048xf32> to vector<32x256xf32>
    %535 = arith.addf %43, %534 : vector<32x256xf32>
    %c0_194 = arith.constant 0 : index
    %c0_195 = arith.constant 0 : index
    %c1280_196 = arith.constant 1280 : index
    %536 = vector.load %arg9[%c0_194, %c0_195, %c1280_196] : memref<1x32x2048xf32, #tpu.memory_space<vmem>>, vector<1x32x256xf32>
    %537 = vector.shape_cast %536 : vector<1x32x256xf32> to vector<32x256xf32>
    %538 = vector.shape_cast %535 : vector<32x256xf32> to vector<1x32x256xf32>
    tpu.vector_store %arg9[%c0_194, %c0_195, %c1280_196], %538 {strides = array<i32>} : memref<1x32x2048xf32, #tpu.memory_space<vmem>>, vector<1x32x256xf32>,
    %539 = vector.extract_strided_slice %508 {offsets = [0, 1536], sizes = [32, 256], strides = [1, 1]} : vector<32x2048xf32> to vector<32x256xf32>
    %540 = arith.addf %43, %539 : vector<32x256xf32>
    %c0_197 = arith.constant 0 : index
    %c0_198 = arith.constant 0 : index
    %c1536_199 = arith.constant 1536 : index
    %541 = vector.load %arg9[%c0_197, %c0_198, %c1536_199] : memref<1x32x2048xf32, #tpu.memory_space<vmem>>, vector<1x32x256xf32>
    %542 = vector.shape_cast %541 : vector<1x32x256xf32> to vector<32x256xf32>
    %543 = vector.shape_cast %540 : vector<32x256xf32> to vector<1x32x256xf32>
    tpu.vector_store %arg9[%c0_197, %c0_198, %c1536_199], %543 {strides = array<i32>} : memref<1x32x2048xf32, #tpu.memory_space<vmem>>, vector<1x32x256xf32>,
    %544 = vector.extract_strided_slice %508 {offsets = [0, 1792], sizes = [32, 256], strides = [1, 1]} : vector<32x2048xf32> to vector<32x256xf32>
    %545 = arith.addf %43, %544 : vector<32x256xf32>
    %c0_200 = arith.constant 0 : index
    %c0_201 = arith.constant 0 : index
    %c1792_202 = arith.constant 1792 : index
    %546 = vector.load %arg9[%c0_200, %c0_201, %c1792_202] : memref<1x32x2048xf32, #tpu.memory_space<vmem>>, vector<1x32x256xf32>
    %547 = vector.shape_cast %546 : vector<1x32x256xf32> to vector<32x256xf32>
    %548 = vector.shape_cast %545 : vector<32x256xf32> to vector<1x32x256xf32>
    tpu.vector_store %arg9[%c0_200, %c0_201, %c1792_202], %548 {strides = array<i32>} : memref<1x32x2048xf32, #tpu.memory_space<vmem>>, vector<1x32x256xf32>,
    return
  }
  func.func @transform_0(%arg0: i32, %arg1: i32) -> (i32, i32, i32) {
    %c0_i32 = arith.constant 0 : i32
    %c0_i32_0 = arith.constant 0 : i32
    %c0_i32_1 = arith.constant 0 : i32
    return %arg0, %c0_i32, %c0_i32_0 : i32, i32, i32
  }
  func.func @transform_1(%arg0: i32, %arg1: i32) -> (i32, i32, i32) {
    %c0_i32 = arith.constant 0 : i32
    %c0_i32_0 = arith.constant 0 : i32
    return %arg0, %c0_i32, %arg1 : i32, i32, i32
  }
  func.func @transform_2(%arg0: i32, %arg1: i32) -> (i32, i32) {
    %c0_i32 = arith.constant 0 : i32
    %c0_i32_0 = arith.constant 0 : i32
    %c0_i32_1 = arith.constant 0 : i32
    return %c0_i32, %c0_i32_0 : i32, i32
  }
  func.func @transform_3(%arg0: i32, %arg1: i32) -> (i32, i32) {
    %c0_i32 = arith.constant 0 : i32
    %c0_i32_0 = arith.constant 0 : i32
    %c0_i32_1 = arith.constant 0 : i32
    return %c0_i32, %c0_i32_0 : i32, i32
  }
  func.func @transform_4(%arg0: i32, %arg1: i32) -> (i32, i32) {
    %c0_i32 = arith.constant 0 : i32
    %c0_i32_0 = arith.constant 0 : i32
    %c0_i32_1 = arith.constant 0 : i32
    return %c0_i32, %c0_i32_0 : i32, i32
  }
  func.func @transform_5(%arg0: i32, %arg1: i32) -> (i32, i32) {
    %c0_i32 = arith.constant 0 : i32
    %c0_i32_0 = arith.constant 0 : i32
    %c0_i32_1 = arith.constant 0 : i32
    return %c0_i32, %c0_i32_0 : i32, i32
  }
  func.func @transform_6(%arg0: i32, %arg1: i32) -> (i32, i32) {
    %c0_i32 = arith.constant 0 : i32
    %c0_i32_0 = arith.constant 0 : i32
    %c0_i32_1 = arith.constant 0 : i32
    return %c0_i32, %c0_i32_0 : i32, i32
  }
  func.func @transform_7(%arg0: i32, %arg1: i32) -> (i32, i32, i32) {
    %c0_i32 = arith.constant 0 : i32
    %c0_i32_0 = arith.constant 0 : i32
    return %arg0, %c0_i32, %arg1 : i32, i32, i32
  }
}

</mosaic_0001>

<llo_original>
// kernel: ptavitssg2_dn_features_forward.1
$region0: #{ptavitssg2_dn_features_forward.1}
  #allocation0 [shape = 'u32[]', space=smem, size = 0x4, offset = 0x4, fixed_abs, tag = 'smem constant byte address 0x4 - core index']
  #allocation1 [shape = 'u32[72,128]{1,0:T(1,128)}', space=vmem, size = 0x9000, scoped, tag = 'internal scratch']
  #allocation2 [shape = 'bf16[32,2048]{1,0:T(8,128)(2,1)}', space=vmem, size = 0x20000, scoped, tag = 'scratch operand']
  #allocation3 [shape = 'bf16[32,2048]{1,0:T(8,128)(2,1)}', space=vmem, size = 0x20000, scoped, tag = 'scratch operand']
  %s0 = inlined_call_operand.vmem [shape: f32[2,4,256], index: 0, kind: input, shape index: {}]
  %s1 = inlined_call_operand.vmem [shape: f32[2,4,2048], index: 1, kind: input, shape index: {}]
  %s2 = inlined_call_operand.vmem [shape: bf16[64,4], index: 2, kind: input, shape index: {}]
  %s3 = inlined_call_operand.vmem [shape: bf16[128,32], index: 3, kind: input, shape index: {}]
  %s4 = inlined_call_operand.vmem [shape: f32[32,8], index: 4, kind: input, shape index: {}]
  %s5 = inlined_call_operand.vmem [shape: f32[32,32], index: 5, kind: input, shape index: {}]
  %s6 = inlined_call_operand.vmem [shape: f32[32,32], index: 6, kind: input, shape index: {}]
  %s7 = inlined_call_operand.vmem [shape: f32[2,32,2048], index: 7, kind: output, shape index: {}]
  %s8 = sld [smem:[#allocation0]]
  $region61: #{ptavitssg2_dn_features_forward.1} parent=0
    _
  %s10 = ssub.s32 1, %s8
  %s11 = scalar_select 0, %s10, %s8
  loop: start=0, step=1, limit=4
  $region2: #{ptavitssg2_dn_features_forward.1} parent=0 // loop_pre_header
    _
  $region3: #{ptavitssg2_dn_features_forward.1} parent=0 // loop_header
    %s13 = sphi 0, %s17
    %p14 = scmp.ge.s32.totalorder %s13, 4
    %s20 = sphi 0, %s32
    %s21 = sphi 0, %s28
    %s22 = sphi 0, %s20
    %s23 = sphi 0, %s21
    %s24 = sphi 0, %s22
    %s25 = sphi 0, %s23
    %s35 = sphi 0, %s37
    %s38 = sphi 0, %s35
    %s39 = sphi 0, %s38
    %s55 = sphi 0, %s39
    %s63 = sphi 0, %s65
    %s66 = sphi 0, %s63
    %s67 = sphi 0, %s66
    %s83 = sphi 0, %s67
    %s87 = sphi 0, %s87
    %s89 = sphi 0, %s87
    %s90 = sphi 0, %s89
    %s104 = sphi 0, %s90
    %s108 = sphi 0, %s108
    %s110 = sphi 0, %s108
    %s111 = sphi 0, %s110
    %s125 = sphi 0, %s111
    %s129 = sphi 0, %s129
    %s131 = sphi 0, %s129
    %s132 = sphi 0, %s131
    %s146 = sphi 0, %s132
    %s150 = sphi 0, %s150
    %s152 = sphi 0, %s150
    %s153 = sphi 0, %s152
    %s167 = sphi 0, %s153
    %s171 = sphi 0, %s171
    %s173 = sphi 0, %s171
    %s174 = sphi 0, %s173
    %s188 = sphi 0, %s174
    %s196 = sphi 0, %s198
    %s199 = sphi 0, %s196
    %s200 = sphi 0, %s199
    %s216 = sphi 0, %s200
  $region4: #{ptavitssg2_dn_features_forward.1} parent=0 // loop_header_branch
    %16 = sbr.rel (%p14) target = $region8
  $region5: #{ptavitssg2_dn_features_forward.1} parent=0 // loop_body
    %s18 = ssub.s32 %s13, 1
    %s19 = ssub.s32 %s13, 2
    %s26 = sadd.s32 1, %s21
    %p27 = scmp.ge.s32.totalorder %s26, 1
    %s28 = scalar_select %p27, 0, %s26
    %s29 = sadd.s32 1, %s20
    %s30 = scalar_select %p27, %s29, %s20
    %p31 = scmp.ge.s32.totalorder %s30, 2
    %s32 = scalar_select %p31, 0, %s30
    %s33 = ssub.s32 %s20, %s32
    %p34 = scmp.eq.s32.totalorder %s33, 0
    %s36 = sadd.s32 %s35, 1
    %s37 = scalar_select %p34, %s35, %s36
    %p40 = pneg %p34
    %p41 = scmp.eq.s32.totalorder %s13, 1
    %p42 = por %p40, %p41
    %p43 = scmp.ne.s32.totalorder %s35, %s38
    %p44 = scmp.eq.s32.totalorder %s13, 0
    %p45 = por %p43, %p44
    %p46 = scmp.ne.s32.totalorder %s35, %s38
    %p47 = scmp.eq.s32.totalorder %s18, 1
    %p48 = por %p46, %p47
    %p49 = scmp.ne.s32.totalorder %s38, %s39
    %p50 = scmp.eq.s32.totalorder %s18, 0
    %p51 = por %p49, %p50
    %p52 = scmp.ne.s32.totalorder %s38, %s39
    %p53 = scmp.eq.s32.totalorder %s19, 1
    %p54 = por %p52, %p53
    %p56 = scmp.ne.s32.totalorder %s39, %s55
    %p57 = scmp.eq.s32.totalorder %s19, 0
    %p58 = por %p56, %p57
    %s59 = ssub.s32 %s20, %s32
    %s60 = ssub.s32 %s21, %s28
    %s61 = sor.u32 %s59, %s60
    %p62 = scmp.eq.s32.totalorder %s61, 0
    %s64 = sadd.s32 %s63, 1
    %s65 = scalar_select %p62, %s63, %s64
    %p68 = pneg %p62
    %p69 = scmp.eq.s32.totalorder %s13, 1
    %p70 = por %p68, %p69
    %p71 = scmp.ne.s32.totalorder %s63, %s66
    %p72 = scmp.eq.s32.totalorder %s13, 0
    %p73 = por %p71, %p72
    %p74 = scmp.ne.s32.totalorder %s63, %s66
    %p75 = scmp.eq.s32.totalorder %s18, 1
    %p76 = por %p74, %p75
    %p77 = scmp.ne.s32.totalorder %s66, %s67
    %p78 = scmp.eq.s32.totalorder %s18, 0
    %p79 = por %p77, %p78
    %p80 = scmp.ne.s32.totalorder %s66, %s67
    %p81 = scmp.eq.s32.totalorder %s19, 1
    %p82 = por %p80, %p81
    %p84 = scmp.ne.s32.totalorder %s67, %s83
    %p85 = scmp.eq.s32.totalorder %s19, 0
    %p86 = por %p84, %p85
    %s88 = sadd.s32 %s87, 1
    %p91 = scmp.eq.s32.totalorder %s13, 1
    %p92 = scmp.ne.s32.totalorder %s87, %s89
    %p93 = scmp.eq.s32.totalorder %s13, 0
    %p94 = por %p92, %p93
    %p95 = scmp.ne.s32.totalorder %s87, %s89
    %p96 = scmp.eq.s32.totalorder %s18, 1
    %p97 = por %p95, %p96
    %p98 = scmp.ne.s32.totalorder %s89, %s90
    %p99 = scmp.eq.s32.totalorder %s18, 0
    %p100 = por %p98, %p99
    %p101 = scmp.ne.s32.totalorder %s89, %s90
    %p102 = scmp.eq.s32.totalorder %s19, 1
    %p103 = por %p101, %p102
    %p105 = scmp.ne.s32.totalorder %s90, %s104
    %p106 = scmp.eq.s32.totalorder %s19, 0
    %p107 = por %p105, %p106
    %s109 = sadd.s32 %s108, 1
    %p112 = scmp.eq.s32.totalorder %s13, 1
    %p113 = scmp.ne.s32.totalorder %s108, %s110
    %p114 = scmp.eq.s32.totalorder %s13, 0
    %p115 = por %p113, %p114
    %p116 = scmp.ne.s32.totalorder %s108, %s110
    %p117 = scmp.eq.s32.totalorder %s18, 1
    %p118 = por %p116, %p117
    %p119 = scmp.ne.s32.totalorder %s110, %s111
    %p120 = scmp.eq.s32.totalorder %s18, 0
    %p121 = por %p119, %p120
    %p122 = scmp.ne.s32.totalorder %s110, %s111
    %p123 = scmp.eq.s32.totalorder %s19, 1
    %p124 = por %p122, %p123
    %p126 = scmp.ne.s32.totalorder %s111, %s125
    %p127 = scmp.eq.s32.totalorder %s19, 0
    %p128 = por %p126, %p127
    %s130 = sadd.s32 %s129, 1
    %p133 = scmp.eq.s32.totalorder %s13, 1
    %p134 = scmp.ne.s32.totalorder %s129, %s131
    %p135 = scmp.eq.s32.totalorder %s13, 0
    %p136 = por %p134, %p135
    %p137 = scmp.ne.s32.totalorder %s129, %s131
    %p138 = scmp.eq.s32.totalorder %s18, 1
    %p139 = por %p137, %p138
    %p140 = scmp.ne.s32.totalorder %s131, %s132
    %p141 = scmp.eq.s32.totalorder %s18, 0
    %p142 = por %p140, %p141
    %p143 = scmp.ne.s32.totalorder %s131, %s132
    %p144 = scmp.eq.s32.totalorder %s19, 1
    %p145 = por %p143, %p144
    %p147 = scmp.ne.s32.totalorder %s132, %s146
    %p148 = scmp.eq.s32.totalorder %s19, 0
    %p149 = por %p147, %p148
    %s151 = sadd.s32 %s150, 1
    %p154 = scmp.eq.s32.totalorder %s13, 1
    %p155 = scmp.ne.s32.totalorder %s150, %s152
    %p156 = scmp.eq.s32.totalorder %s13, 0
    %p157 = por %p155, %p156
    %p158 = scmp.ne.s32.totalorder %s150, %s152
    %p159 = scmp.eq.s32.totalorder %s18, 1
    %p160 = por %p158, %p159
    %p161 = scmp.ne.s32.totalorder %s152, %s153
    %p162 = scmp.eq.s32.totalorder %s18, 0
    %p163 = por %p161, %p162
    %p164 = scmp.ne.s32.totalorder %s152, %s153
    %p165 = scmp.eq.s32.totalorder %s19, 1
    %p166 = por %p164, %p165
    %p168 = scmp.ne.s32.totalorder %s153, %s167
    %p169 = scmp.eq.s32.totalorder %s19, 0
    %p170 = por %p168, %p169
    %s172 = sadd.s32 %s171, 1
    %p175 = scmp.eq.s32.totalorder %s13, 1
    %p176 = scmp.ne.s32.totalorder %s171, %s173
    %p177 = scmp.eq.s32.totalorder %s13, 0
    %p178 = por %p176, %p177
    %p179 = scmp.ne.s32.totalorder %s171, %s173
    %p180 = scmp.eq.s32.totalorder %s18, 1
    %p181 = por %p179, %p180
    %p182 = scmp.ne.s32.totalorder %s173, %s174
    %p183 = scmp.eq.s32.totalorder %s18, 0
    %p184 = por %p182, %p183
    %p185 = scmp.ne.s32.totalorder %s173, %s174
    %p186 = scmp.eq.s32.totalorder %s19, 1
    %p187 = por %p185, %p186
    %p189 = scmp.ne.s32.totalorder %s174, %s188
    %p190 = scmp.eq.s32.totalorder %s19, 0
    %p191 = por %p189, %p190
    %s192 = ssub.s32 %s20, %s32
    %s193 = ssub.s32 %s21, %s28
    %s194 = sor.u32 %s192, %s193
    %p195 = scmp.eq.s32.totalorder %s194, 0
    %s197 = sadd.s32 %s196, 1
    %s198 = scalar_select %p195, %s196, %s197
    %p201 = pneg %p195
    %p202 = scmp.eq.s32.totalorder %s13, 1
    %p203 = por %p201, %p202
    %p204 = scmp.ne.s32.totalorder %s196, %s199
    %p205 = scmp.eq.s32.totalorder %s13, 0
    %p206 = por %p204, %p205
    %p207 = scmp.ne.s32.totalorder %s196, %s199
    %p208 = scmp.eq.s32.totalorder %s18, 1
    %p209 = por %p207, %p208
    %p210 = scmp.ne.s32.totalorder %s199, %s200
    %p211 = scmp.eq.s32.totalorder %s18, 0
    %p212 = por %p210, %p211
    %p213 = scmp.ne.s32.totalorder %s199, %s200
    %p214 = scmp.eq.s32.totalorder %s19, 1
    %p215 = por %p213, %p214
    %p217 = scmp.ne.s32.totalorder %s200, %s216
    %p218 = scmp.eq.s32.totalorder %s19, 0
    %p219 = por %p217, %p218
    %p220 = scmp.le.s32.totalorder 1, %s13
    %p221 = scmp.lt.s32.totalorder %s13, 3
    %p222 = pnand %p220, %p221
    %p223 = pneg %p222
    // Predicated region
    $region9: #{ptavitssg2_dn_features_forward.1} parent=5 // pred_check
      _
    $region10: #{ptavitssg2_dn_features_forward.1} parent=5 // pred_check_branch
      %225 = sbr.rel (%p222) target = $region12
    $region11: #{ptavitssg2_dn_features_forward.1} parent=5 // pred_region
      %s226 = ssub.s32 %s13, 1
      // Predicated region
      $region13: #{ptavitssg2_dn_features_forward.1} parent=11 // pred_check
        %p227 = pneg %p100
      $region14: #{ptavitssg2_dn_features_forward.1} parent=11 // pred_check_branch
        %229 = sbr.rel (%p227) target = $region16
      $region15: #{ptavitssg2_dn_features_forward.1} parent=11 // pred_region
        _
      $region16: #{ptavitssg2_dn_features_forward.1} parent=11 // pred_fallthru
        _
      // Predicated region
      $region17: #{ptavitssg2_dn_features_forward.1} parent=11 // pred_check
        %p230 = pneg %p121
      $region18: #{ptavitssg2_dn_features_forward.1} parent=11 // pred_check_branch
        %232 = sbr.rel (%p230) target = $region20
      $region19: #{ptavitssg2_dn_features_forward.1} parent=11 // pred_region
        _
      $region20: #{ptavitssg2_dn_features_forward.1} parent=11 // pred_fallthru
        _
      // Predicated region
      $region21: #{ptavitssg2_dn_features_forward.1} parent=11 // pred_check
        %p233 = pneg %p142
      $region22: #{ptavitssg2_dn_features_forward.1} parent=11 // pred_check_branch
        %235 = sbr.rel (%p233) target = $region24
      $region23: #{ptavitssg2_dn_features_forward.1} parent=11 // pred_region
        _
      $region24: #{ptavitssg2_dn_features_forward.1} parent=11 // pred_fallthru
        _
      // Predicated region
      $region25: #{ptavitssg2_dn_features_forward.1} parent=11 // pred_check
        %p236 = pneg %p163
      $region26: #{ptavitssg2_dn_features_forward.1} parent=11 // pred_check_branch
        %238 = sbr.rel (%p236) target = $region28
      $region27: #{ptavitssg2_dn_features_forward.1} parent=11 // pred_region
        _
      $region28: #{ptavitssg2_dn_features_forward.1} parent=11 // pred_fallthru
        _
      // Predicated region
      $region29: #{ptavitssg2_dn_features_forward.1} parent=11 // pred_check
        %p239 = pneg %p184
      $region30: #{ptavitssg2_dn_features_forward.1} parent=11 // pred_check_branch
        %241 = sbr.rel (%p239) target = $region32
      $region31: #{ptavitssg2_dn_features_forward.1} parent=11 // pred_region
        _
      $region32: #{ptavitssg2_dn_features_forward.1} parent=11 // pred_fallthru
        _
    $region12: #{ptavitssg2_dn_features_forward.1} parent=5 // pred_fallthru
      _
    %p242 = scmp.lt.s32.totalorder %s13, 2
    // Predicated region
    $region33: #{ptavitssg2_dn_features_forward.1} parent=5 // pred_check
      %p243 = pneg %p242
    $region34: #{ptavitssg2_dn_features_forward.1} parent=5 // pred_check_branch
      %245 = sbr.rel (%p243) target = $region36
    $region35: #{ptavitssg2_dn_features_forward.1} parent=5 // pred_region
      // Predicated region
      $region37: #{ptavitssg2_dn_features_forward.1} parent=35 // pred_check
        %p246 = pneg %p45
      $region38: #{ptavitssg2_dn_features_forward.1} parent=35 // pred_check_branch
        %248 = sbr.rel (%p246) target = $region40
      $region39: #{ptavitssg2_dn_features_forward.1} parent=35 // pred_region
        %p249 = scmp.lt.s32.totalorder %s20, 1
        %s250 = scalar_select %p249, %s20, 1
        %s251 = smul.addr %s250, 2
        %s252 = smul.addr %s251, 4
        %s253 = scalar_lea.vmem %s0, %s252
      $region40: #{ptavitssg2_dn_features_forward.1} parent=35 // pred_fallthru
        _
      // Predicated region
      $region41: #{ptavitssg2_dn_features_forward.1} parent=35 // pred_check
        %p254 = pneg %p73
      $region42: #{ptavitssg2_dn_features_forward.1} parent=35 // pred_check_branch
        %256 = sbr.rel (%p254) target = $region44
      $region43: #{ptavitssg2_dn_features_forward.1} parent=35 // pred_region
        %s257 = smul.u32 16, %s21
        %p258 = scmp.lt.s32.totalorder %s20, 1
        %s259 = scalar_select %p258, %s20, 1
        %p260 = scmp.lt.s32.totalorder %s257, 15
        %s261 = scalar_select %p260, %s257, 15
        %s262 = smul.addr %s259, 16
        %s263 = sadd.s32 %s261, %s262
        %s264 = smul.addr %s263, 4
        %s265 = scalar_lea.vmem %s1, %s264
        %s266 = smul.u32 16, %s21
      $region44: #{ptavitssg2_dn_features_forward.1} parent=35 // pred_fallthru
        _
    $region36: #{ptavitssg2_dn_features_forward.1} parent=5 // pred_fallthru
      _
    %p267 = scmp.le.s32.totalorder 1, %s13
    %p268 = scmp.lt.s32.totalorder %s13, 3
    %p269 = pnand %p267, %p268
    %p270 = pneg %p269
    // Predicated region
    $region45: #{ptavitssg2_dn_features_forward.1} parent=5 // pred_check
      _
    $region46: #{ptavitssg2_dn_features_forward.1} parent=5 // pred_check_branch
      %272 = sbr.rel (%p269) target = $region48
    $region47: #{ptavitssg2_dn_features_forward.1} parent=5 // pred_region
      %s273 = ssub.s32 %s13, 1
      %p274 = scmp.lt.s32.totalorder %s22, 1
      %s275 = scalar_select %p274, %s22, 1
      %s276 = smul.addr %s275, 2
      %s277 = smul.addr %s276, 4
      %s278 = scalar_lea.vmem %s0, %s277
      %p279 = pneg %p51
      %p280 = pneg %p48
      %s281 = smul.u32 16, %s23
      %p282 = scmp.lt.s32.totalorder %s22, 1
      %s283 = scalar_select %p282, %s22, 1
      %p284 = scmp.lt.s32.totalorder %s281, 15
      %s285 = scalar_select %p284, %s281, 15
      %s286 = smul.addr %s283, 16
      %s287 = sadd.s32 %s285, %s286
      %s288 = smul.addr %s287, 4
      %s289 = scalar_lea.vmem %s1, %s288
      %p290 = pneg %p79
      %p291 = pneg %p76
      %p292 = pneg %p100
      %p293 = pneg %p97
      %p294 = pneg %p121
      %p295 = pneg %p118
      %p296 = pneg %p142
      %p297 = pneg %p139
      %p298 = pneg %p163
      %p299 = pneg %p160
      %p300 = pneg %p184
      %p301 = pneg %p181
      %p302 = pneg %p212
      %p303 = pneg %p209
      %s304 = smul.u32 16, %s23
      %p305 = scmp.lt.s32.totalorder %s22, 1
      %s306 = scalar_select %p305, %s22, 1
      %p307 = scmp.lt.s32.totalorder %s304, 15
      %s308 = scalar_select %p307, %s304, 15
      %s309 = smul.addr %s306, 64
      %s310 = sadd.s32 %s308, %s309
      %s311 = smul.addr %s310, 8
      %s312 = scalar_lea.vmem %s7, %s311
      %p313 = scmp.lt.s32.totalorder %s22, 1
      %s314 = scalar_select %p313, %s22, 1
      %s315 = smul.addr %s314, 2
      %s316 = smul.addr %s315, 4
      %s317 = scalar_lea.vmem %s0, %s316
      %s318 = smul.u32 16, %s23
      %p319 = scmp.lt.s32.totalorder %s22, 1
      %s320 = scalar_select %p319, %s22, 1
      %p321 = scmp.lt.s32.totalorder %s318, 15
      %s322 = scalar_select %p321, %s318, 15
      %s323 = smul.addr %s320, 16
      %s324 = sadd.s32 %s322, %s323
      %s325 = smul.addr %s324, 4
      %s326 = scalar_lea.vmem %s1, %s325
      %s327 = smul.u32 16, %s23
      %s328 = smul.u32 16, %s23
      %p329 = scmp.lt.s32.totalorder %s22, 1
      %s330 = scalar_select %p329, %s22, 1
      %p331 = scmp.lt.s32.totalorder %s328, 15
      %s332 = scalar_select %p331, %s328, 15
      %s333 = smul.addr %s330, 64
      %s334 = sadd.s32 %s332, %s333
      %s335 = smul.addr %s334, 8
      %s336 = scalar_lea.vmem %s7, %s335
      %s337 = smul.u32 16, %s23
      %v339 = vld [vmem:[%s5] sm:$0xff]
      %v340 = vld [vmem:[%s5 + $0x8] sm:$0xff]
      %v341 = vld [vmem:[%s5 + $0x10] sm:$0xff]
      %v342 = vld [vmem:[%s5 + $0x18] sm:$0xff]
      %v343 = vld [vmem:[%s6] sm:$0xff]
      %v344 = vld [vmem:[%s6 + $0x8] sm:$0xff]
      %v345 = vld [vmem:[%s6 + $0x10] sm:$0xff]
      %v346 = vld [vmem:[%s6 + $0x18] sm:$0xff]
      %v347 = vpack.c.bf16 %v344, %v343
      %v348 = vpack.c.bf16 %v346, %v345
      %v349 = vld [vmem:[%s4] sm:$0xff]
      %v350 = vld [vmem:[%s4 + $0x8] sm:$0xff]
      %v351 = vld [vmem:[%s4 + $0x10] sm:$0xff]
      %v352 = vld [vmem:[%s4 + $0x18] sm:$0xff]
      %v353 = vld [vmem:[%s2] sm:$0xf]
      %v354 = vld [vmem:[%s2 + $0x4] sm:$0xf]
      %v355 = vld [vmem:[%s2 + $0x8] sm:$0xf]
      %v356 = vld [vmem:[%s2 + $0xc] sm:$0xf]
      %v357 = vld [vmem:[%s317] sm:$0xff]
      %359 = vst [vmem:[#allocation1] ss:$2 sm:$0xff] %v357
      %v360 = vld.sshfl [vmem:[#allocation1] sm:$0xff pattern:$0x75316420]
      %v361 = vld.sshfl [vmem:[#allocation1 + $0x8] sm:$0xff pattern:$0x75316420]
      %v364 = vpack.c.bf16 %v360, %v360
      %v365 = vpack.c.bf16 %v361, %v361
      %367 = vset.pattern.permute.xlu0 0
      %368 = vperm.xlu0 %367, %v349
      %v369 = vpop.permute.xlu0 %368
      %372 = vset.pattern.permute.xlu0 0
      %373 = vperm.xlu0 %372, %v350
      %v374 = vpop.permute.xlu0 %373
      %377 = vset.pattern.permute.xlu0 0
      %378 = vperm.xlu0 %377, %v351
      %v379 = vpop.permute.xlu0 %378
      %382 = vset.pattern.permute.xlu0 0
      %383 = vperm.xlu0 %382, %v352
      %v384 = vpop.permute.xlu0 %383
      %v390 = vunpack.c.l.b16 %v353
      %v391 = vunpack.c.l.b16 %v354
      %v392 = vunpack.c.l.b16 %v355
      %v393 = vunpack.c.l.b16 %v356
      %v394 = vpack.c.b16 %v391, %v390
      %v395 = vpack.c.b16 %v393, %v392
      %vm396 = vcmask 31744
      %v398 = vsel %vm396, %v394, 0
      %v401 = vsel %vm396, %v395, 0
      %vm403 = vcmask 1041408
      %v405 = vsel %vm403, %v364, 0
      %v408 = vsel %vm403, %v365, 0
      %410 = vmatpush.bf16.msra.mxu0 0
      %411 = vmatpush.bf16.msra.mxu0 0
      %412 = vmatpush.bf16.msra.mxu0 0
      %413 = vmatpush.bf16.msra.mxu0 0
      %414 = vmatpush.bf16.msra.mxu0 0
      %415 = vmatpush.bf16.msra.mxu0 0
      %416 = vmatpush.bf16.msra.mxu0 0
      %417 = vmatpush.bf16.msra.mxu0 %v405
      %418 = vmatmul.bf16.gmra.mxu0 %v398
      %v419 = vpop.f32.mrf.mxu0
      %v420 = vadd.f32 %v369, %v419
      %v421 = vpop.f32.mrf.mxu0
      %v422 = vadd.f32 %v374, %v421
      %423 = vmatmul.bf16.gmra.mxu0 %v401
      %v424 = vpop.f32.mrf.mxu0
      %v425 = vadd.f32 %v379, %v424
      %v426 = vpop.f32.mrf.mxu0
      %v427 = vadd.f32 %v384, %v426
      %428 = vdwg.mxu0
      %429 = vmatpush.bf16.msra.mxu0 0
      %430 = vmatpush.bf16.msra.mxu0 0
      %431 = vmatpush.bf16.msra.mxu0 0
      %432 = vmatpush.bf16.msra.mxu0 0
      %433 = vmatpush.bf16.msra.mxu0 0
      %434 = vmatpush.bf16.msra.mxu0 0
      %435 = vmatpush.bf16.msra.mxu0 0
      %436 = vmatpush.bf16.msra.mxu0 %v408
      %437 = vmatmul.bf16.gmra.mxu0 %v398
      %v438 = vpop.f32.mrf.mxu0
      %v439 = vadd.f32 %v369, %v438
      %v440 = vpop.f32.mrf.mxu0
      %v441 = vadd.f32 %v374, %v440
      %442 = vmatmul.bf16.gmra.mxu0 %v401
      %v443 = vpop.f32.mrf.mxu0
      %v444 = vadd.f32 %v379, %v443
      %v445 = vpop.f32.mrf.mxu0
      %v446 = vadd.f32 %v384, %v445
      %447 = vdwg.mxu0
      %v448 = vadd.f32 %v420, %v439
      %449 = vadd.xlane.f32.xlu0 %v448
      %v450 = vpop.xlane.xlu0 %449
      %v451 = vadd.f32 %v422, %v441
      %452 = vadd.xlane.f32.xlu0 %v451
      %v453 = vpop.xlane.xlu0 %452
      %v454 = vadd.f32 %v425, %v444
      %455 = vadd.xlane.f32.xlu0 %v454
      %v456 = vpop.xlane.xlu0 %455
      %v457 = vadd.f32 %v427, %v446
      %458 = vadd.xlane.f32.xlu0 %v457
      %v459 = vpop.xlane.xlu0 %458
      %v460 = vmul.f32 %v420, %v420
      %v461 = vmul.f32 %v439, %v439
      %v462 = vmul.f32 %v422, %v422
      %v463 = vmul.f32 %v441, %v441
      %v464 = vmul.f32 %v425, %v425
      %v465 = vmul.f32 %v444, %v444
      %v466 = vmul.f32 %v427, %v427
      %v467 = vmul.f32 %v446, %v446
      %v468 = vadd.f32 %v460, %v461
      %469 = vadd.xlane.f32.xlu0 %v468
      %v470 = vpop.xlane.xlu0 %469
      %v471 = vadd.f32 %v462, %v463
      %472 = vadd.xlane.f32.xlu0 %v471
      %v473 = vpop.xlane.xlu0 %472
      %v474 = vadd.f32 %v464, %v465
      %475 = vadd.xlane.f32.xlu0 %v474
      %v476 = vpop.xlane.xlu0 %475
      %v477 = vadd.f32 %v466, %v467
      %478 = vadd.xlane.f32.xlu0 %v477
      %v479 = vpop.xlane.xlu0 %478
      %vm480 = vcmask 7168
      %v481 = vsel %vm480, %v450, %v470
      %v482 = vsel %vm480, %v453, %v473
      %v483 = vsel %vm480, %v456, %v476
      %v484 = vsel %vm480, %v459, %v479
      %vm485 = vcmask 261120
      %v487 = vsel %vm485, %v339, 0
      %v490 = vsel %vm485, %v340, 0
      %v493 = vsel %vm485, %v341, 0
      %v496 = vsel %vm485, %v342, 0
      %498 = vmatpush.msra.mxu0 0.0
      %499 = vmatpush.msra.mxu0 0.0
      %500 = vmatpush.msra.mxu0 0.0
      %501 = vmatpush.msra.mxu0 0.0
      %502 = vmatpush.msra.mxu0 0.0
      %503 = vmatpush.msra.mxu0 0.0
      %504 = vmatpush.msra.mxu0 0.0
      %505 = vmatpush.msra.mxu0 0.0
      %506 = vmatpush.msra.mxu0 0.0
      %507 = vmatpush.msra.mxu0 0.0
      %508 = vmatpush.msra.mxu0 0.0
      %509 = vmatpush.msra.mxu0 0.0
      %510 = vmatpush.msra.mxu0 %v484
      %511 = vmatpush.msra.mxu0 %v483
      %512 = vmatpush.msra.mxu0 %v482
      %513 = vmatpush.msra.mxu0 %v481
      %514 = vmatmul.f32.gmra.mxu0 %v487
      %v515 = vpop.f32.mrf.mxu0
      %v516 = vadd.f32 0.0, %v515
      %517 = vmatmul.f32.gmra.mxu0 %v490
      %v518 = vpop.f32.mrf.mxu0
      %v519 = vadd.f32 0.0, %v518
      %520 = vmatmul.f32.gmra.mxu0 %v493
      %v521 = vpop.f32.mrf.mxu0
      %v522 = vadd.f32 0.0, %v521
      %523 = vmatmul.f32.gmra.mxu0 %v496
      %v524 = vpop.f32.mrf.mxu0
      %v525 = vadd.f32 0.0, %v524
      %526 = vdwg.mxu0
      %v527 = vmul.f32 %v516, 0.00048828125
      %v528 = vmul.f32 %v519, 0.00048828125
      %v529 = vmul.f32 %v522, 0.00048828125
      %v530 = vmul.f32 %v525, 0.00048828125
      %v531 = vmul.f32 %v527, %v527
      %v532 = vmul.f32 %v528, %v528
      %v533 = vmul.f32 %v529, %v529
      %v534 = vmul.f32 %v530, %v530
      %539 = vrot.lane.b32.xlu0 %v531, 1
      %v540 = vpop.permute.xlu0 %539
      %541 = vrot.lane.b32.xlu0 %v532, 1
      %v542 = vpop.permute.xlu0 %541
      %543 = vrot.lane.b32.xlu0 %v533, 1
      %v544 = vpop.permute.xlu0 %543
      %545 = vrot.lane.b32.xlu0 %v534, 1
      %v546 = vpop.permute.xlu0 %545
      %v551 = vsub.f32 %v527, %v540
      %v552 = vsub.f32 %v528, %v542
      %v553 = vsub.f32 %v529, %v544
      %v554 = vsub.f32 %v530, %v546
      %v555 = vmax.f32 %v551, 0.0
      %v556 = vmax.f32 %v552, 0.0
      %v557 = vmax.f32 %v553, 0.0
      %v558 = vmax.f32 %v554, 0.0
      %v559 = vadd.f32 %v555, 1e-05
      %v560 = vadd.f32 %v556, 1e-05
      %v561 = vadd.f32 %v557, 1e-05
      %v562 = vadd.f32 %v558, 1e-05
      %v563 = vrsqrt.pop %v559
      %v564 = vmul.f32 %v563, %v559
      %v565 = vmul.f32 %v564, %v563
      %v566 = vmul.f32 0.5, %v565
      %v567 = vsub.f32 1.5, %v566
      %v568 = vmul.f32 %v563, %v567
      %vm569 = vweird.f32 %v559
      %vm570 = vweird.f32 %v563
      %vm571 = vmor %vm569, %vm570
      %v572 = vsel %vm571, %v563, %v568
      %v573 = vrsqrt.pop %v560
      %v574 = vmul.f32 %v573, %v560
      %v575 = vmul.f32 %v574, %v573
      %v576 = vmul.f32 0.5, %v575
      %v577 = vsub.f32 1.5, %v576
      %v578 = vmul.f32 %v573, %v577
      %vm579 = vweird.f32 %v560
      %vm580 = vweird.f32 %v573
      %vm581 = vmor %vm579, %vm580
      %v582 = vsel %vm581, %v573, %v578
      %v583 = vrsqrt.pop %v561
      %v584 = vmul.f32 %v583, %v561
      %v585 = vmul.f32 %v584, %v583
      %v586 = vmul.f32 0.5, %v585
      %v587 = vsub.f32 1.5, %v586
      %v588 = vmul.f32 %v583, %v587
      %vm589 = vweird.f32 %v561
      %vm590 = vweird.f32 %v583
      %vm591 = vmor %vm589, %vm590
      %v592 = vsel %vm591, %v583, %v588
      %v593 = vrsqrt.pop %v562
      %v594 = vmul.f32 %v593, %v562
      %v595 = vmul.f32 %v594, %v593
      %v596 = vmul.f32 0.5, %v595
      %v597 = vsub.f32 1.5, %v596
      %v598 = vmul.f32 %v593, %v597
      %vm599 = vweird.f32 %v562
      %vm600 = vweird.f32 %v593
      %vm601 = vmor %vm599, %vm600
      %v602 = vsel %vm601, %v593, %v598
      %v603 = vmul.f32 %v349, %v572
      %v604 = vmul.f32 %v350, %v582
      %v605 = vmul.f32 %v351, %v592
      %v606 = vmul.f32 %v352, %v602
      %611 = vrot.lane.b32.xlu0 %v603, 127
      %v612 = vpop.permute.xlu0 %611
      %613 = vrot.lane.b32.xlu0 %v604, 127
      %v614 = vpop.permute.xlu0 %613
      %615 = vrot.lane.b32.xlu0 %v605, 127
      %v616 = vpop.permute.xlu0 %615
      %617 = vrot.lane.b32.xlu0 %v606, 127
      %v618 = vpop.permute.xlu0 %617
      %v623 = vmul.f32 %v527, %v612
      %v624 = vmul.f32 %v528, %v614
      %v625 = vmul.f32 %v529, %v616
      %v626 = vmul.f32 %v530, %v618
      %631 = vrot.lane.b32.xlu0 %v623, 2
      %v632 = vpop.permute.xlu0 %631
      %633 = vrot.lane.b32.xlu0 %v624, 2
      %v634 = vpop.permute.xlu0 %633
      %635 = vrot.lane.b32.xlu0 %v625, 2
      %v636 = vpop.permute.xlu0 %635
      %637 = vrot.lane.b32.xlu0 %v626, 2
      %v638 = vpop.permute.xlu0 %637
      %v643 = vsub.f32 %v349, %v632
      %v644 = vsub.f32 %v350, %v634
      %v645 = vsub.f32 %v351, %v636
      %v646 = vsub.f32 %v352, %v638
      %647 = vset.pattern.permute.xlu0 1
      %648 = vperm.xlu0 %647, %v603
      %v649 = vpop.permute.xlu0 %648
      %651 = vset.pattern.permute.xlu0 1
      %652 = vperm.xlu0 %651, %v604
      %v653 = vpop.permute.xlu0 %652
      %655 = vset.pattern.permute.xlu0 1
      %656 = vperm.xlu0 %655, %v605
      %v657 = vpop.permute.xlu0 %656
      %659 = vset.pattern.permute.xlu0 1
      %660 = vperm.xlu0 %659, %v606
      %v661 = vpop.permute.xlu0 %660
      %v663 = vmul.f32 %v420, %v649
      %v664 = vmul.f32 %v439, %v649
      %v665 = vmul.f32 %v422, %v653
      %v666 = vmul.f32 %v441, %v653
      %v667 = vmul.f32 %v425, %v657
      %v668 = vmul.f32 %v444, %v657
      %v669 = vmul.f32 %v427, %v661
      %v670 = vmul.f32 %v446, %v661
      %672 = vset.pattern.permute.xlu0 2
      %673 = vperm.xlu0 %672, %v643
      %v674 = vpop.permute.xlu0 %673
      %677 = vset.pattern.permute.xlu0 2
      %678 = vperm.xlu0 %677, %v644
      %v679 = vpop.permute.xlu0 %678
      %682 = vset.pattern.permute.xlu0 2
      %683 = vperm.xlu0 %682, %v645
      %v684 = vpop.permute.xlu0 %683
      %687 = vset.pattern.permute.xlu0 2
      %688 = vperm.xlu0 %687, %v646
      %v689 = vpop.permute.xlu0 %688
      %v691 = vadd.f32 %v663, %v674
      %v692 = vadd.f32 %v664, %v674
      %v693 = vadd.f32 %v665, %v679
      %v694 = vadd.f32 %v666, %v679
      %v695 = vadd.f32 %v667, %v684
      %v696 = vadd.f32 %v668, %v684
      %v697 = vadd.f32 %v669, %v689
      %v698 = vadd.f32 %v670, %v689
      %v699 = vmax.f32 %v691, 0.0
      %v700 = vmax.f32 %v692, 0.0
      %v701 = vmax.f32 %v693, 0.0
      %v702 = vmax.f32 %v694, 0.0
      %v703 = vmax.f32 %v695, 0.0
      %v704 = vmax.f32 %v696, 0.0
      %v705 = vmax.f32 %v697, 0.0
      %v706 = vmax.f32 %v698, 0.0
      %v707 = vld [vmem:[%s3] sm:$0xf]
      %v708 = vld [vmem:[%s3 + $0x4] sm:$0xf]
      %v709 = vld [vmem:[%s3 + $0x8] sm:$0xf]
      %v710 = vld [vmem:[%s3 + $0xc] sm:$0xf]
      %v711 = vpack.c.bf16 %v701, %v699
      %v712 = vpack.c.bf16 %v702, %v700
      %v713 = vpack.c.bf16 %v705, %v703
      %v714 = vpack.c.bf16 %v706, %v704
      %v719 = vunpack.c.l.b16 %v707
      %v720 = vunpack.c.l.b16 %v708
      %v721 = vunpack.c.l.b16 %v709
      %v722 = vunpack.c.l.b16 %v710
      %v723 = vpack.c.b16 %v720, %v719
      %v724 = vpack.c.b16 %v722, %v721
      %v726 = vsel %vm485, %v723, 0
      %v729 = vsel %vm485, %v724, 0
      %731 = vmatpush.bf16.msra.mxu0 0
      %732 = vmatpush.bf16.msra.mxu0 0
      %733 = vmatpush.bf16.msra.mxu0 0
      %734 = vmatpush.bf16.msra.mxu0 0
      %735 = vmatpush.bf16.msra.mxu0 0
      %736 = vmatpush.bf16.msra.mxu0 0
      %737 = vmatpush.bf16.msra.mxu0 %v713
      %738 = vmatpush.bf16.msra.mxu0 %v711
      %739 = vmatmul.bf16.gmra.mxu0 %v726
      %v740 = vpop.f32.mrf.mxu0
      %v741 = vadd.f32 0.0, %v740
      %v742 = vpop.f32.mrf.mxu0
      %v743 = vadd.f32 0.0, %v742
      %744 = vmatmul.bf16.gmra.mxu0 %v729
      %v745 = vpop.f32.mrf.mxu0
      %v746 = vadd.f32 0.0, %v745
      %v747 = vpop.f32.mrf.mxu0
      %v748 = vadd.f32 0.0, %v747
      %749 = vdwg.mxu0
      %750 = vmatpush.bf16.msra.mxu0 0
      %751 = vmatpush.bf16.msra.mxu0 0
      %752 = vmatpush.bf16.msra.mxu0 0
      %753 = vmatpush.bf16.msra.mxu0 0
      %754 = vmatpush.bf16.msra.mxu0 0
      %755 = vmatpush.bf16.msra.mxu0 0
      %756 = vmatpush.bf16.msra.mxu0 %v714
      %757 = vmatpush.bf16.msra.mxu0 %v712
      %758 = vmatmul.bf16.gmra.mxu0 %v726
      %v759 = vpop.f32.mrf.mxu0
      %v760 = vadd.f32 0.0, %v759
      %v761 = vpop.f32.mrf.mxu0
      %v762 = vadd.f32 0.0, %v761
      %763 = vmatmul.bf16.gmra.mxu0 %v729
      %v764 = vpop.f32.mrf.mxu0
      %v765 = vadd.f32 0.0, %v764
      %v766 = vpop.f32.mrf.mxu0
      %v767 = vadd.f32 0.0, %v766
      %768 = vdwg.mxu0
      %vm769 = vcmp.gt.f32.partialorder %v741, 0.0
      %vm770 = vcmp.gt.f32.partialorder %v760, 0.0
      %vm771 = vcmp.gt.f32.partialorder %v743, 0.0
      %vm772 = vcmp.gt.f32.partialorder %v762, 0.0
      %vm773 = vcmp.gt.f32.partialorder %v746, 0.0
      %vm774 = vcmp.gt.f32.partialorder %v765, 0.0
      %vm775 = vcmp.gt.f32.partialorder %v748, 0.0
      %vm776 = vcmp.gt.f32.partialorder %v767, 0.0
      %v777 = vadd.f32 %v741, 1.0
      %v778 = vadd.f32 %v760, 1.0
      %v779 = vadd.f32 %v743, 1.0
      %v780 = vadd.f32 %v762, 1.0
      %v781 = vadd.f32 %v746, 1.0
      %v782 = vadd.f32 %v765, 1.0
      %v783 = vadd.f32 %v748, 1.0
      %v784 = vadd.f32 %v767, 1.0
      %v785 = vmul.f32 %v741, 1.442695
      %v786 = vpow.pop %v785
      %v787 = vmul.f32 %v760, 1.442695
      %v788 = vpow.pop %v787
      %v789 = vmul.f32 %v743, 1.442695
      %v790 = vpow.pop %v789
      %v791 = vmul.f32 %v762, 1.442695
      %v792 = vpow.pop %v791
      %v793 = vmul.f32 %v746, 1.442695
      %v794 = vpow.pop %v793
      %v795 = vmul.f32 %v765, 1.442695
      %v796 = vpow.pop %v795
      %v797 = vmul.f32 %v748, 1.442695
      %v798 = vpow.pop %v797
      %v799 = vmul.f32 %v767, 1.442695
      %v800 = vpow.pop %v799
      %v801 = vsel %vm769, %v777, %v786
      %v802 = vsel %vm770, %v778, %v788
      %v803 = vsel %vm771, %v779, %v790
      %v804 = vsel %vm772, %v780, %v792
      %v805 = vsel %vm773, %v781, %v794
      %v806 = vsel %vm774, %v782, %v796
      %v807 = vsel %vm775, %v783, %v798
      %v808 = vsel %vm776, %v784, %v800
      %v809 = vpack.c.bf16 %v803, %v801
      %v810 = vpack.c.bf16 %v804, %v802
      %v811 = vpack.c.bf16 %v807, %v805
      %v812 = vpack.c.bf16 %v808, %v806
      %v813 = vld [vmem:[%s2 + $0x10] sm:$0xf]
      %v814 = vld [vmem:[%s2 + $0x14] sm:$0xf]
      %v815 = vld [vmem:[%s2 + $0x18] sm:$0xf]
      %v816 = vld [vmem:[%s2 + $0x1c] sm:$0xf]
      %v817 = vld [vmem:[%s326] sm:$0xff]
      %v818 = vld [vmem:[%s326 + $0x8] sm:$0xff]
      %v819 = vld [vmem:[%s326 + $0x10] sm:$0xff]
      %v820 = vld [vmem:[%s326 + $0x18] sm:$0xff]
      %v821 = vld [vmem:[%s326 + $0x20] sm:$0xff]
      %v822 = vld [vmem:[%s326 + $0x28] sm:$0xff]
      %v823 = vld [vmem:[%s326 + $0x30] sm:$0xff]
      %v824 = vld [vmem:[%s326 + $0x38] sm:$0xff]
      %833 = vst [vmem:[#allocation1] ss:$2 sm:$0xff] %v817
      %s834 = scalar_lea.vmem [#allocation1], 16
      %835 = vst [vmem:[%s834] ss:$2 sm:$0xff] %v818
      %s836 = scalar_lea.vmem [#allocation1], 32
      %837 = vst [vmem:[%s836] ss:$2 sm:$0xff] %v819
      %s838 = scalar_lea.vmem [#allocation1], 48
      %839 = vst [vmem:[%s838] ss:$2 sm:$0xff] %v820
      %v840 = vld.sshfl [vmem:[#allocation1] sm:$0xff pattern:$0x75316420]
      %v841 = vld.sshfl [vmem:[#allocation1 + $0x8] sm:$0xff pattern:$0x75316420]
      %v842 = vld.sshfl [vmem:[#allocation1 + $0x10] sm:$0xff pattern:$0x75316420]
      %v843 = vld.sshfl [vmem:[#allocation1 + $0x18] sm:$0xff pattern:$0x75316420]
      %v844 = vld.sshfl [vmem:[#allocation1 + $0x20] sm:$0xff pattern:$0x75316420]
      %v845 = vld.sshfl [vmem:[#allocation1 + $0x28] sm:$0xff pattern:$0x75316420]
      %v846 = vld.sshfl [vmem:[#allocation1 + $0x30] sm:$0xff pattern:$0x75316420]
      %v847 = vld.sshfl [vmem:[#allocation1 + $0x38] sm:$0xff pattern:$0x75316420]
      %848 = vst [vmem:[#allocation1] ss:$2 sm:$0xff] %v821
      %849 = vst [vmem:[%s834] ss:$2 sm:$0xff] %v822
      %850 = vst [vmem:[%s836] ss:$2 sm:$0xff] %v823
      %851 = vst [vmem:[%s838] ss:$2 sm:$0xff] %v824
      %v852 = vld.sshfl [vmem:[#allocation1] sm:$0xff pattern:$0x75316420]
      %v853 = vld.sshfl [vmem:[#allocation1 + $0x8] sm:$0xff pattern:$0x75316420]
      %v854 = vld.sshfl [vmem:[#allocation1 + $0x10] sm:$0xff pattern:$0x75316420]
      %v855 = vld.sshfl [vmem:[#allocation1 + $0x18] sm:$0xff pattern:$0x75316420]
      %v856 = vld.sshfl [vmem:[#allocation1 + $0x20] sm:$0xff pattern:$0x75316420]
      %v857 = vld.sshfl [vmem:[#allocation1 + $0x28] sm:$0xff pattern:$0x75316420]
      %v858 = vld.sshfl [vmem:[#allocation1 + $0x30] sm:$0xff pattern:$0x75316420]
      %v859 = vld.sshfl [vmem:[#allocation1 + $0x38] sm:$0xff pattern:$0x75316420]
      %v876 = vpack.c.bf16 %v840, %v840
      %v877 = vpack.c.bf16 %v841, %v841
      %v878 = vpack.c.bf16 %v842, %v842
      %v879 = vpack.c.bf16 %v843, %v843
      %v880 = vpack.c.bf16 %v844, %v844
      %v881 = vpack.c.bf16 %v845, %v845
      %v882 = vpack.c.bf16 %v846, %v846
      %v883 = vpack.c.bf16 %v847, %v847
      %v884 = vpack.c.bf16 %v852, %v852
      %v885 = vpack.c.bf16 %v853, %v853
      %v886 = vpack.c.bf16 %v854, %v854
      %v887 = vpack.c.bf16 %v855, %v855
      %v888 = vpack.c.bf16 %v856, %v856
      %v889 = vpack.c.bf16 %v857, %v857
      %v890 = vpack.c.bf16 %v858, %v858
      %v891 = vpack.c.bf16 %v859, %v859
      %892 = vset.pattern.permute.xlu0 3
      %893 = vperm.xlu0 %892, %v349
      %v894 = vpop.permute.xlu0 %893
      %896 = vset.pattern.permute.xlu0 3
      %897 = vperm.xlu0 %896, %v350
      %v898 = vpop.permute.xlu0 %897
      %900 = vset.pattern.permute.xlu0 3
      %901 = vperm.xlu0 %900, %v351
      %v902 = vpop.permute.xlu0 %901
      %904 = vset.pattern.permute.xlu0 3
      %905 = vperm.xlu0 %904, %v352
      %v906 = vpop.permute.xlu0 %905
      %v912 = vunpack.c.l.b16 %v813
      %v913 = vunpack.c.l.b16 %v814
      %v914 = vunpack.c.l.b16 %v815
      %v915 = vunpack.c.l.b16 %v816
      %v916 = vpack.c.b16 %v913, %v912
      %v917 = vpack.c.b16 %v915, %v914
      %v919 = vsel %vm396, %v916, 0
      %v922 = vsel %vm396, %v917, 0
      %v925 = vsel %vm403, %v876, 0
      %v928 = vsel %vm403, %v877, 0
      %v931 = vsel %vm403, %v878, 0
      %v934 = vsel %vm403, %v879, 0
      %v937 = vsel %vm403, %v880, 0
      %v940 = vsel %vm403, %v881, 0
      %v943 = vsel %vm403, %v882, 0
      %v946 = vsel %vm403, %v883, 0
      %v949 = vsel %vm403, %v884, 0
      %v952 = vsel %vm403, %v885, 0
      %v955 = vsel %vm403, %v886, 0
      %v958 = vsel %vm403, %v887, 0
      %v961 = vsel %vm403, %v888, 0
      %v964 = vsel %vm403, %v889, 0
      %v967 = vsel %vm403, %v890, 0
      %v970 = vsel %vm403, %v891, 0
      %972 = vmatpush.bf16.msra.mxu0 0
      %973 = vmatpush.bf16.msra.mxu0 0
      %974 = vmatpush.bf16.msra.mxu0 0
      %975 = vmatpush.bf16.msra.mxu0 0
      %976 = vmatpush.bf16.msra.mxu0 0
      %977 = vmatpush.bf16.msra.mxu0 0
      %978 = vmatpush.bf16.msra.mxu0 0
      %979 = vmatpush.bf16.msra.mxu0 %v925
      %980 = vmatmul.bf16.gmra.mxu0 %v919
      %v981 = vpop.f32.mrf.mxu0
      %v982 = vadd.f32 %v894, %v981
      %v983 = vpop.f32.mrf.mxu0
      %v984 = vadd.f32 %v898, %v983
      %985 = vmatmul.bf16.gmra.mxu0 %v922
      %v986 = vpop.f32.mrf.mxu0
      %v987 = vadd.f32 %v902, %v986
      %v988 = vpop.f32.mrf.mxu0
      %v989 = vadd.f32 %v906, %v988
      %990 = vdwg.mxu0
      %991 = vmatpush.bf16.msra.mxu0 0
      %992 = vmatpush.bf16.msra.mxu0 0
      %993 = vmatpush.bf16.msra.mxu0 0
      %994 = vmatpush.bf16.msra.mxu0 0
      %995 = vmatpush.bf16.msra.mxu0 0
      %996 = vmatpush.bf16.msra.mxu0 0
      %997 = vmatpush.bf16.msra.mxu0 0
      %998 = vmatpush.bf16.msra.mxu0 %v928
      %999 = vmatmul.bf16.gmra.mxu0 %v919
      %v1000 = vpop.f32.mrf.mxu0
      %v1001 = vadd.f32 %v894, %v1000
      %v1002 = vpop.f32.mrf.mxu0
      %v1003 = vadd.f32 %v898, %v1002
      %1004 = vmatmul.bf16.gmra.mxu0 %v922
      %v1005 = vpop.f32.mrf.mxu0
      %v1006 = vadd.f32 %v902, %v1005
      %v1007 = vpop.f32.mrf.mxu0
      %v1008 = vadd.f32 %v906, %v1007
      %1009 = vdwg.mxu0
      %1010 = vmatpush.bf16.msra.mxu0 0
      %1011 = vmatpush.bf16.msra.mxu0 0
      %1012 = vmatpush.bf16.msra.mxu0 0
      %1013 = vmatpush.bf16.msra.mxu0 0
      %1014 = vmatpush.bf16.msra.mxu0 0
      %1015 = vmatpush.bf16.msra.mxu0 0
      %1016 = vmatpush.bf16.msra.mxu0 0
      %1017 = vmatpush.bf16.msra.mxu0 %v931
      %1018 = vmatmul.bf16.gmra.mxu0 %v919
      %v1019 = vpop.f32.mrf.mxu0
      %v1020 = vadd.f32 %v894, %v1019
      %v1021 = vpop.f32.mrf.mxu0
      %v1022 = vadd.f32 %v898, %v1021
      %1023 = vmatmul.bf16.gmra.mxu0 %v922
      %v1024 = vpop.f32.mrf.mxu0
      %v1025 = vadd.f32 %v902, %v1024
      %v1026 = vpop.f32.mrf.mxu0
      %v1027 = vadd.f32 %v906, %v1026
      %1028 = vdwg.mxu0
      %1029 = vmatpush.bf16.msra.mxu0 0
      %1030 = vmatpush.bf16.msra.mxu0 0
      %1031 = vmatpush.bf16.msra.mxu0 0
      %1032 = vmatpush.bf16.msra.mxu0 0
      %1033 = vmatpush.bf16.msra.mxu0 0
      %1034 = vmatpush.bf16.msra.mxu0 0
      %1035 = vmatpush.bf16.msra.mxu0 0
      %1036 = vmatpush.bf16.msra.mxu0 %v934
      %1037 = vmatmul.bf16.gmra.mxu0 %v919
      %v1038 = vpop.f32.mrf.mxu0
      %v1039 = vadd.f32 %v894, %v1038
      %v1040 = vpop.f32.mrf.mxu0
      %v1041 = vadd.f32 %v898, %v1040
      %1042 = vmatmul.bf16.gmra.mxu0 %v922
      %v1043 = vpop.f32.mrf.mxu0
      %v1044 = vadd.f32 %v902, %v1043
      %v1045 = vpop.f32.mrf.mxu0
      %v1046 = vadd.f32 %v906, %v1045
      %1047 = vdwg.mxu0
      %1048 = vmatpush.bf16.msra.mxu0 0
      %1049 = vmatpush.bf16.msra.mxu0 0
      %1050 = vmatpush.bf16.msra.mxu0 0
      %1051 = vmatpush.bf16.msra.mxu0 0
      %1052 = vmatpush.bf16.msra.mxu0 0
      %1053 = vmatpush.bf16.msra.mxu0 0
      %1054 = vmatpush.bf16.msra.mxu0 0
      %1055 = vmatpush.bf16.msra.mxu0 %v937
      %1056 = vmatmul.bf16.gmra.mxu0 %v919
      %v1057 = vpop.f32.mrf.mxu0
      %v1058 = vadd.f32 %v894, %v1057
      %v1059 = vpop.f32.mrf.mxu0
      %v1060 = vadd.f32 %v898, %v1059
      %1061 = vmatmul.bf16.gmra.mxu0 %v922
      %v1062 = vpop.f32.mrf.mxu0
      %v1063 = vadd.f32 %v902, %v1062
      %v1064 = vpop.f32.mrf.mxu0
      %v1065 = vadd.f32 %v906, %v1064
      %1066 = vdwg.mxu0
      %1067 = vmatpush.bf16.msra.mxu0 0
      %1068 = vmatpush.bf16.msra.mxu0 0
      %1069 = vmatpush.bf16.msra.mxu0 0
      %1070 = vmatpush.bf16.msra.mxu0 0
      %1071 = vmatpush.bf16.msra.mxu0 0
      %1072 = vmatpush.bf16.msra.mxu0 0
      %1073 = vmatpush.bf16.msra.mxu0 0
      %1074 = vmatpush.bf16.msra.mxu0 %v940
      %1075 = vmatmul.bf16.gmra.mxu0 %v919
      %v1076 = vpop.f32.mrf.mxu0
      %v1077 = vadd.f32 %v894, %v1076
      %v1078 = vpop.f32.mrf.mxu0
      %v1079 = vadd.f32 %v898, %v1078
      %1080 = vmatmul.bf16.gmra.mxu0 %v922
      %v1081 = vpop.f32.mrf.mxu0
      %v1082 = vadd.f32 %v902, %v1081
      %v1083 = vpop.f32.mrf.mxu0
      %v1084 = vadd.f32 %v906, %v1083
      %1085 = vdwg.mxu0
      %1086 = vmatpush.bf16.msra.mxu0 0
      %1087 = vmatpush.bf16.msra.mxu0 0
      %1088 = vmatpush.bf16.msra.mxu0 0
      %1089 = vmatpush.bf16.msra.mxu0 0
      %1090 = vmatpush.bf16.msra.mxu0 0
      %1091 = vmatpush.bf16.msra.mxu0 0
      %1092 = vmatpush.bf16.msra.mxu0 0
      %1093 = vmatpush.bf16.msra.mxu0 %v943
      %1094 = vmatmul.bf16.gmra.mxu0 %v919
      %v1095 = vpop.f32.mrf.mxu0
      %v1096 = vadd.f32 %v894, %v1095
      %v1097 = vpop.f32.mrf.mxu0
      %v1098 = vadd.f32 %v898, %v1097
      %1099 = vmatmul.bf16.gmra.mxu0 %v922
      %v1100 = vpop.f32.mrf.mxu0
      %v1101 = vadd.f32 %v902, %v1100
      %v1102 = vpop.f32.mrf.mxu0
      %v1103 = vadd.f32 %v906, %v1102
      %1104 = vdwg.mxu0
      %1105 = vmatpush.bf16.msra.mxu0 0
      %1106 = vmatpush.bf16.msra.mxu0 0
      %1107 = vmatpush.bf16.msra.mxu0 0
      %1108 = vmatpush.bf16.msra.mxu0 0
      %1109 = vmatpush.bf16.msra.mxu0 0
      %1110 = vmatpush.bf16.msra.mxu0 0
      %1111 = vmatpush.bf16.msra.mxu0 0
      %1112 = vmatpush.bf16.msra.mxu0 %v946
      %1113 = vmatmul.bf16.gmra.mxu0 %v919
      %v1114 = vpop.f32.mrf.mxu0
      %v1115 = vadd.f32 %v894, %v1114
      %v1116 = vpop.f32.mrf.mxu0
      %v1117 = vadd.f32 %v898, %v1116
      %1118 = vmatmul.bf16.gmra.mxu0 %v922
      %v1119 = vpop.f32.mrf.mxu0
      %v1120 = vadd.f32 %v902, %v1119
      %v1121 = vpop.f32.mrf.mxu0
      %v1122 = vadd.f32 %v906, %v1121
      %1123 = vdwg.mxu0
      %1124 = vmatpush.bf16.msra.mxu0 0
      %1125 = vmatpush.bf16.msra.mxu0 0
      %1126 = vmatpush.bf16.msra.mxu0 0
      %1127 = vmatpush.bf16.msra.mxu0 0
      %1128 = vmatpush.bf16.msra.mxu0 0
      %1129 = vmatpush.bf16.msra.mxu0 0
      %1130 = vmatpush.bf16.msra.mxu0 0
      %1131 = vmatpush.bf16.msra.mxu0 %v949
      %1132 = vmatmul.bf16.gmra.mxu0 %v919
      %v1133 = vpop.f32.mrf.mxu0
      %v1134 = vadd.f32 %v894, %v1133
      %v1135 = vpop.f32.mrf.mxu0
      %v1136 = vadd.f32 %v898, %v1135
      %1137 = vmatmul.bf16.gmra.mxu0 %v922
      %v1138 = vpop.f32.mrf.mxu0
      %v1139 = vadd.f32 %v902, %v1138
      %v1140 = vpop.f32.mrf.mxu0
      %v1141 = vadd.f32 %v906, %v1140
      %1142 = vdwg.mxu0
      %1143 = vmatpush.bf16.msra.mxu0 0
      %1144 = vmatpush.bf16.msra.mxu0 0
      %1145 = vmatpush.bf16.msra.mxu0 0
      %1146 = vmatpush.bf16.msra.mxu0 0
      %1147 = vmatpush.bf16.msra.mxu0 0
      %1148 = vmatpush.bf16.msra.mxu0 0
      %1149 = vmatpush.bf16.msra.mxu0 0
      %1150 = vmatpush.bf16.msra.mxu0 %v952
      %1151 = vmatmul.bf16.gmra.mxu0 %v919
      %v1152 = vpop.f32.mrf.mxu0
      %v1153 = vadd.f32 %v894, %v1152
      %v1154 = vpop.f32.mrf.mxu0
      %v1155 = vadd.f32 %v898, %v1154
      %1156 = vmatmul.bf16.gmra.mxu0 %v922
      %v1157 = vpop.f32.mrf.mxu0
      %v1158 = vadd.f32 %v902, %v1157
      %v1159 = vpop.f32.mrf.mxu0
      %v1160 = vadd.f32 %v906, %v1159
      %1161 = vdwg.mxu0
      %1162 = vmatpush.bf16.msra.mxu0 0
      %1163 = vmatpush.bf16.msra.mxu0 0
      %1164 = vmatpush.bf16.msra.mxu0 0
      %1165 = vmatpush.bf16.msra.mxu0 0
      %1166 = vmatpush.bf16.msra.mxu0 0
      %1167 = vmatpush.bf16.msra.mxu0 0
      %1168 = vmatpush.bf16.msra.mxu0 0
      %1169 = vmatpush.bf16.msra.mxu0 %v955
      %1170 = vmatmul.bf16.gmra.mxu0 %v919
      %v1171 = vpop.f32.mrf.mxu0
      %v1172 = vadd.f32 %v894, %v1171
      %v1173 = vpop.f32.mrf.mxu0
      %v1174 = vadd.f32 %v898, %v1173
      %1175 = vmatmul.bf16.gmra.mxu0 %v922
      %v1176 = vpop.f32.mrf.mxu0
      %v1177 = vadd.f32 %v902, %v1176
      %v1178 = vpop.f32.mrf.mxu0
      %v1179 = vadd.f32 %v906, %v1178
      %1180 = vdwg.mxu0
      %1181 = vmatpush.bf16.msra.mxu0 0
      %1182 = vmatpush.bf16.msra.mxu0 0
      %1183 = vmatpush.bf16.msra.mxu0 0
      %1184 = vmatpush.bf16.msra.mxu0 0
      %1185 = vmatpush.bf16.msra.mxu0 0
      %1186 = vmatpush.bf16.msra.mxu0 0
      %1187 = vmatpush.bf16.msra.mxu0 0
      %1188 = vmatpush.bf16.msra.mxu0 %v958
      %1189 = vmatmul.bf16.gmra.mxu0 %v919
      %v1190 = vpop.f32.mrf.mxu0
      %v1191 = vadd.f32 %v894, %v1190
      %v1192 = vpop.f32.mrf.mxu0
      %v1193 = vadd.f32 %v898, %v1192
      %1194 = vmatmul.bf16.gmra.mxu0 %v922
      %v1195 = vpop.f32.mrf.mxu0
      %v1196 = vadd.f32 %v902, %v1195
      %v1197 = vpop.f32.mrf.mxu0
      %v1198 = vadd.f32 %v906, %v1197
      %1199 = vdwg.mxu0
      %1200 = vmatpush.bf16.msra.mxu0 0
      %1201 = vmatpush.bf16.msra.mxu0 0
      %1202 = vmatpush.bf16.msra.mxu0 0
      %1203 = vmatpush.bf16.msra.mxu0 0
      %1204 = vmatpush.bf16.msra.mxu0 0
      %1205 = vmatpush.bf16.msra.mxu0 0
      %1206 = vmatpush.bf16.msra.mxu0 0
      %1207 = vmatpush.bf16.msra.mxu0 %v961
      %1208 = vmatmul.bf16.gmra.mxu0 %v919
      %v1209 = vpop.f32.mrf.mxu0
      %v1210 = vadd.f32 %v894, %v1209
      %v1211 = vpop.f32.mrf.mxu0
      %v1212 = vadd.f32 %v898, %v1211
      %1213 = vmatmul.bf16.gmra.mxu0 %v922
      %v1214 = vpop.f32.mrf.mxu0
      %v1215 = vadd.f32 %v902, %v1214
      %v1216 = vpop.f32.mrf.mxu0
      %v1217 = vadd.f32 %v906, %v1216
      %1218 = vdwg.mxu0
      %1219 = vmatpush.bf16.msra.mxu0 0
      %1220 = vmatpush.bf16.msra.mxu0 0
      %1221 = vmatpush.bf16.msra.mxu0 0
      %1222 = vmatpush.bf16.msra.mxu0 0
      %1223 = vmatpush.bf16.msra.mxu0 0
      %1224 = vmatpush.bf16.msra.mxu0 0
      %1225 = vmatpush.bf16.msra.mxu0 0
      %1226 = vmatpush.bf16.msra.mxu0 %v964
      %1227 = vmatmul.bf16.gmra.mxu0 %v919
      %v1228 = vpop.f32.mrf.mxu0
      %v1229 = vadd.f32 %v894, %v1228
      %v1230 = vpop.f32.mrf.mxu0
      %v1231 = vadd.f32 %v898, %v1230
      %1232 = vmatmul.bf16.gmra.mxu0 %v922
      %v1233 = vpop.f32.mrf.mxu0
      %v1234 = vadd.f32 %v902, %v1233
      %v1235 = vpop.f32.mrf.mxu0
      %v1236 = vadd.f32 %v906, %v1235
      %1237 = vdwg.mxu0
      %1238 = vmatpush.bf16.msra.mxu0 0
      %1239 = vmatpush.bf16.msra.mxu0 0
      %1240 = vmatpush.bf16.msra.mxu0 0
      %1241 = vmatpush.bf16.msra.mxu0 0
      %1242 = vmatpush.bf16.msra.mxu0 0
      %1243 = vmatpush.bf16.msra.mxu0 0
      %1244 = vmatpush.bf16.msra.mxu0 0
      %1245 = vmatpush.bf16.msra.mxu0 %v967
      %1246 = vmatmul.bf16.gmra.mxu0 %v919
      %v1247 = vpop.f32.mrf.mxu0
      %v1248 = vadd.f32 %v894, %v1247
      %v1249 = vpop.f32.mrf.mxu0
      %v1250 = vadd.f32 %v898, %v1249
      %1251 = vmatmul.bf16.gmra.mxu0 %v922
      %v1252 = vpop.f32.mrf.mxu0
      %v1253 = vadd.f32 %v902, %v1252
      %v1254 = vpop.f32.mrf.mxu0
      %v1255 = vadd.f32 %v906, %v1254
      %1256 = vdwg.mxu0
      %1257 = vmatpush.bf16.msra.mxu0 0
      %1258 = vmatpush.bf16.msra.mxu0 0
      %1259 = vmatpush.bf16.msra.mxu0 0
      %1260 = vmatpush.bf16.msra.mxu0 0
      %1261 = vmatpush.bf16.msra.mxu0 0
      %1262 = vmatpush.bf16.msra.mxu0 0
      %1263 = vmatpush.bf16.msra.mxu0 0
      %1264 = vmatpush.bf16.msra.mxu0 %v970
      %1265 = vmatmul.bf16.gmra.mxu0 %v919
      %v1266 = vpop.f32.mrf.mxu0
      %v1267 = vadd.f32 %v894, %v1266
      %v1268 = vpop.f32.mrf.mxu0
      %v1269 = vadd.f32 %v898, %v1268
      %1270 = vmatmul.bf16.gmra.mxu0 %v922
      %v1271 = vpop.f32.mrf.mxu0
      %v1272 = vadd.f32 %v902, %v1271
      %v1273 = vpop.f32.mrf.mxu0
      %v1274 = vadd.f32 %v906, %v1273
      %1275 = vdwg.mxu0
      %v1276 = vadd.f32 %v982, %v1001
      %1277 = vadd.xlane.f32.xlu0 %v1276
      %v1278 = vpop.xlane.xlu0 %1277
      %v1279 = vadd.f32 %v984, %v1003
      %1280 = vadd.xlane.f32.xlu0 %v1279
      %v1281 = vpop.xlane.xlu0 %1280
      %v1282 = vadd.f32 %v987, %v1006
      %1283 = vadd.xlane.f32.xlu0 %v1282
      %v1284 = vpop.xlane.xlu0 %1283
      %v1285 = vadd.f32 %v989, %v1008
      %1286 = vadd.xlane.f32.xlu0 %v1285
      %v1287 = vpop.xlane.xlu0 %1286
      %v1288 = vmul.f32 %v982, %v982
      %v1289 = vmul.f32 %v1001, %v1001
      %v1290 = vmul.f32 %v984, %v984
      %v1291 = vmul.f32 %v1003, %v1003
      %v1292 = vmul.f32 %v987, %v987
      %v1293 = vmul.f32 %v1006, %v1006
      %v1294 = vmul.f32 %v989, %v989
      %v1295 = vmul.f32 %v1008, %v1008
      %v1296 = vadd.f32 %v1288, %v1289
      %1297 = vadd.xlane.f32.xlu0 %v1296
      %v1298 = vpop.xlane.xlu0 %1297
      %v1299 = vadd.f32 %v1290, %v1291
      %1300 = vadd.xlane.f32.xlu0 %v1299
      %v1301 = vpop.xlane.xlu0 %1300
      %v1302 = vadd.f32 %v1292, %v1293
      %1303 = vadd.xlane.f32.xlu0 %v1302
      %v1304 = vpop.xlane.xlu0 %1303
      %v1305 = vadd.f32 %v1294, %v1295
      %1306 = vadd.xlane.f32.xlu0 %v1305
      %v1307 = vpop.xlane.xlu0 %1306
      %v1308 = vsel %vm480, %v1278, %v1298
      %v1309 = vsel %vm480, %v1281, %v1301
      %v1310 = vsel %vm480, %v1284, %v1304
      %v1311 = vsel %vm480, %v1287, %v1307
      %1312 = vmatpush.msra.mxu0 0.0
      %1313 = vmatpush.msra.mxu0 0.0
      %1314 = vmatpush.msra.mxu0 0.0
      %1315 = vmatpush.msra.mxu0 0.0
      %1316 = vmatpush.msra.mxu0 0.0
      %1317 = vmatpush.msra.mxu0 0.0
      %1318 = vmatpush.msra.mxu0 0.0
      %1319 = vmatpush.msra.mxu0 0.0
      %1320 = vmatpush.msra.mxu0 0.0
      %1321 = vmatpush.msra.mxu0 0.0
      %1322 = vmatpush.msra.mxu0 0.0
      %1323 = vmatpush.msra.mxu0 0.0
      %1324 = vmatpush.msra.mxu0 %v1311
      %1325 = vmatpush.msra.mxu0 %v1310
      %1326 = vmatpush.msra.mxu0 %v1309
      %1327 = vmatpush.msra.mxu0 %v1308
      %1328 = vmatmul.f32.gmra.mxu0 %v487
      %v1329 = vpop.f32.mrf.mxu0
      %v1330 = vadd.f32 0.0, %v1329
      %1331 = vmatmul.f32.gmra.mxu0 %v490
      %v1332 = vpop.f32.mrf.mxu0
      %v1333 = vadd.f32 0.0, %v1332
      %1334 = vmatmul.f32.gmra.mxu0 %v493
      %v1335 = vpop.f32.mrf.mxu0
      %v1336 = vadd.f32 0.0, %v1335
      %1337 = vmatmul.f32.gmra.mxu0 %v496
      %v1338 = vpop.f32.mrf.mxu0
      %v1339 = vadd.f32 0.0, %v1338
      %1340 = vdwg.mxu0
      %v1341 = vmul.f32 %v1330, 0.00048828125
      %v1342 = vmul.f32 %v1333, 0.00048828125
      %v1343 = vmul.f32 %v1336, 0.00048828125
      %v1344 = vmul.f32 %v1339, 0.00048828125
      %v1345 = vmul.f32 %v1341, %v1341
      %v1346 = vmul.f32 %v1342, %v1342
      %v1347 = vmul.f32 %v1343, %v1343
      %v1348 = vmul.f32 %v1344, %v1344
      %1353 = vrot.lane.b32.xlu0 %v1345, 1
      %v1354 = vpop.permute.xlu0 %1353
      %1355 = vrot.lane.b32.xlu0 %v1346, 1
      %v1356 = vpop.permute.xlu0 %1355
      %1357 = vrot.lane.b32.xlu0 %v1347, 1
      %v1358 = vpop.permute.xlu0 %1357
      %1359 = vrot.lane.b32.xlu0 %v1348, 1
      %v1360 = vpop.permute.xlu0 %1359
      %v1365 = vsub.f32 %v1341, %v1354
      %v1366 = vsub.f32 %v1342, %v1356
      %v1367 = vsub.f32 %v1343, %v1358
      %v1368 = vsub.f32 %v1344, %v1360
      %v1369 = vmax.f32 %v1365, 0.0
      %v1370 = vmax.f32 %v1366, 0.0
      %v1371 = vmax.f32 %v1367, 0.0
      %v1372 = vmax.f32 %v1368, 0.0
      %v1373 = vadd.f32 %v1369, 1e-05
      %v1374 = vadd.f32 %v1370, 1e-05
      %v1375 = vadd.f32 %v1371, 1e-05
      %v1376 = vadd.f32 %v1372, 1e-05
      %v1377 = vrsqrt.pop %v1373
      %v1378 = vmul.f32 %v1377, %v1373
      %v1379 = vmul.f32 %v1378, %v1377
      %v1380 = vmul.f32 0.5, %v1379
      %v1381 = vsub.f32 1.5, %v1380
      %v1382 = vmul.f32 %v1377, %v1381
      %vm1383 = vweird.f32 %v1373
      %vm1384 = vweird.f32 %v1377
      %vm1385 = vmor %vm1383, %vm1384
      %v1386 = vsel %vm1385, %v1377, %v1382
      %v1387 = vrsqrt.pop %v1374
      %v1388 = vmul.f32 %v1387, %v1374
      %v1389 = vmul.f32 %v1388, %v1387
      %v1390 = vmul.f32 0.5, %v1389
      %v1391 = vsub.f32 1.5, %v1390
      %v1392 = vmul.f32 %v1387, %v1391
      %vm1393 = vweird.f32 %v1374
      %vm1394 = vweird.f32 %v1387
      %vm1395 = vmor %vm1393, %vm1394
      %v1396 = vsel %vm1395, %v1387, %v1392
      %v1397 = vrsqrt.pop %v1375
      %v1398 = vmul.f32 %v1397, %v1375
      %v1399 = vmul.f32 %v1398, %v1397
      %v1400 = vmul.f32 0.5, %v1399
      %v1401 = vsub.f32 1.5, %v1400
      %v1402 = vmul.f32 %v1397, %v1401
      %vm1403 = vweird.f32 %v1375
      %vm1404 = vweird.f32 %v1397
      %vm1405 = vmor %vm1403, %vm1404
      %v1406 = vsel %vm1405, %v1397, %v1402
      %v1407 = vrsqrt.pop %v1376
      %v1408 = vmul.f32 %v1407, %v1376
      %v1409 = vmul.f32 %v1408, %v1407
      %v1410 = vmul.f32 0.5, %v1409
      %v1411 = vsub.f32 1.5, %v1410
      %v1412 = vmul.f32 %v1407, %v1411
      %vm1413 = vweird.f32 %v1376
      %vm1414 = vweird.f32 %v1407
      %vm1415 = vmor %vm1413, %vm1414
      %v1416 = vsel %vm1415, %v1407, %v1412
      %1421 = vrot.lane.b32.xlu0 %v1386, 3
      %v1422 = vpop.permute.xlu0 %1421
      %1423 = vrot.lane.b32.xlu0 %v1396, 3
      %v1424 = vpop.permute.xlu0 %1423
      %1425 = vrot.lane.b32.xlu0 %v1406, 3
      %v1426 = vpop.permute.xlu0 %1425
      %1427 = vrot.lane.b32.xlu0 %v1416, 3
      %v1428 = vpop.permute.xlu0 %1427
      %v1433 = vmul.f32 %v349, %v1422
      %v1434 = vmul.f32 %v350, %v1424
      %v1435 = vmul.f32 %v351, %v1426
      %v1436 = vmul.f32 %v352, %v1428
      %1441 = vrot.lane.b32.xlu0 %v1433, 124
      %v1442 = vpop.permute.xlu0 %1441
      %1443 = vrot.lane.b32.xlu0 %v1434, 124
      %v1444 = vpop.permute.xlu0 %1443
      %1445 = vrot.lane.b32.xlu0 %v1435, 124
      %v1446 = vpop.permute.xlu0 %1445
      %1447 = vrot.lane.b32.xlu0 %v1436, 124
      %v1448 = vpop.permute.xlu0 %1447
      %v1453 = vmul.f32 %v1341, %v1442
      %v1454 = vmul.f32 %v1342, %v1444
      %v1455 = vmul.f32 %v1343, %v1446
      %v1456 = vmul.f32 %v1344, %v1448
      %1461 = vrot.lane.b32.xlu0 %v1453, 5
      %v1462 = vpop.permute.xlu0 %1461
      %1463 = vrot.lane.b32.xlu0 %v1454, 5
      %v1464 = vpop.permute.xlu0 %1463
      %1465 = vrot.lane.b32.xlu0 %v1455, 5
      %v1466 = vpop.permute.xlu0 %1465
      %1467 = vrot.lane.b32.xlu0 %v1456, 5
      %v1468 = vpop.permute.xlu0 %1467
      %v1473 = vsub.f32 %v349, %v1462
      %v1474 = vsub.f32 %v350, %v1464
      %v1475 = vsub.f32 %v351, %v1466
      %v1476 = vsub.f32 %v352, %v1468
      %1477 = vset.pattern.permute.xlu0 4
      %1478 = vperm.xlu0 %1477, %v1433
      %v1479 = vpop.permute.xlu0 %1478
      %1481 = vset.pattern.permute.xlu0 4
      %1482 = vperm.xlu0 %1481, %v1434
      %v1483 = vpop.permute.xlu0 %1482
      %1485 = vset.pattern.permute.xlu0 4
      %1486 = vperm.xlu0 %1485, %v1435
      %v1487 = vpop.permute.xlu0 %1486
      %1489 = vset.pattern.permute.xlu0 4
      %1490 = vperm.xlu0 %1489, %v1436
      %v1491 = vpop.permute.xlu0 %1490
      %v1493 = vmul.f32 %v982, %v1479
      %v1494 = vmul.f32 %v1001, %v1479
      %v1495 = vmul.f32 %v984, %v1483
      %v1496 = vmul.f32 %v1003, %v1483
      %v1497 = vmul.f32 %v987, %v1487
      %v1498 = vmul.f32 %v1006, %v1487
      %v1499 = vmul.f32 %v989, %v1491
      %v1500 = vmul.f32 %v1008, %v1491
      %1502 = vset.pattern.permute.xlu0 5
      %1503 = vperm.xlu0 %1502, %v1473
      %v1504 = vpop.permute.xlu0 %1503
      %1507 = vset.pattern.permute.xlu0 5
      %1508 = vperm.xlu0 %1507, %v1474
      %v1509 = vpop.permute.xlu0 %1508
      %1512 = vset.pattern.permute.xlu0 5
      %1513 = vperm.xlu0 %1512, %v1475
      %v1514 = vpop.permute.xlu0 %1513
      %1517 = vset.pattern.permute.xlu0 5
      %1518 = vperm.xlu0 %1517, %v1476
      %v1519 = vpop.permute.xlu0 %1518
      %v1521 = vadd.f32 %v1493, %v1504
      %v1522 = vadd.f32 %v1494, %v1504
      %v1523 = vadd.f32 %v1495, %v1509
      %v1524 = vadd.f32 %v1496, %v1509
      %v1525 = vadd.f32 %v1497, %v1514
      %v1526 = vadd.f32 %v1498, %v1514
      %v1527 = vadd.f32 %v1499, %v1519
      %v1528 = vadd.f32 %v1500, %v1519
      %v1529 = vmax.f32 %v1521, 0.0
      %v1530 = vmax.f32 %v1522, 0.0
      %v1531 = vmax.f32 %v1523, 0.0
      %v1532 = vmax.f32 %v1524, 0.0
      %v1533 = vmax.f32 %v1525, 0.0
      %v1534 = vmax.f32 %v1526, 0.0
      %v1535 = vmax.f32 %v1527, 0.0
      %v1536 = vmax.f32 %v1528, 0.0
      %v1537 = vpack.c.bf16 %v1530, %v1529
      %v1538 = vpack.c.bf16 %v1532, %v1531
      %v1539 = vpack.c.bf16 %v1534, %v1533
      %v1540 = vpack.c.bf16 %v1536, %v1535
      %1541 = vst [vmem:[#allocation2] sm:$0xff] %v1537
      %1542 = vst [vmem:[#allocation2 + $0x40] sm:$0xff] %v1538
      %1543 = vst [vmem:[#allocation2 + $0x80] sm:$0xff] %v1539
      %1544 = vst [vmem:[#allocation2 + $0xc0] sm:$0xff] %v1540
      %v1545 = vadd.f32 %v1020, %v1039
      %1546 = vadd.xlane.f32.xlu0 %v1545
      %v1547 = vpop.xlane.xlu0 %1546
      %v1548 = vadd.f32 %v1022, %v1041
      %1549 = vadd.xlane.f32.xlu0 %v1548
      %v1550 = vpop.xlane.xlu0 %1549
      %v1551 = vadd.f32 %v1025, %v1044
      %1552 = vadd.xlane.f32.xlu0 %v1551
      %v1553 = vpop.xlane.xlu0 %1552
      %v1554 = vadd.f32 %v1027, %v1046
      %1555 = vadd.xlane.f32.xlu0 %v1554
      %v1556 = vpop.xlane.xlu0 %1555
      %v1557 = vmul.f32 %v1020, %v1020
      %v1558 = vmul.f32 %v1039, %v1039
      %v1559 = vmul.f32 %v1022, %v1022
      %v1560 = vmul.f32 %v1041, %v1041
      %v1561 = vmul.f32 %v1025, %v1025
      %v1562 = vmul.f32 %v1044, %v1044
      %v1563 = vmul.f32 %v1027, %v1027
      %v1564 = vmul.f32 %v1046, %v1046
      %v1565 = vadd.f32 %v1557, %v1558
      %1566 = vadd.xlane.f32.xlu0 %v1565
      %v1567 = vpop.xlane.xlu0 %1566
      %v1568 = vadd.f32 %v1559, %v1560
      %1569 = vadd.xlane.f32.xlu0 %v1568
      %v1570 = vpop.xlane.xlu0 %1569
      %v1571 = vadd.f32 %v1561, %v1562
      %1572 = vadd.xlane.f32.xlu0 %v1571
      %v1573 = vpop.xlane.xlu0 %1572
      %v1574 = vadd.f32 %v1563, %v1564
      %1575 = vadd.xlane.f32.xlu0 %v1574
      %v1576 = vpop.xlane.xlu0 %1575
      %v1577 = vsel %vm480, %v1547, %v1567
      %v1578 = vsel %vm480, %v1550, %v1570
      %v1579 = vsel %vm480, %v1553, %v1573
      %v1580 = vsel %vm480, %v1556, %v1576
      %1581 = vmatpush.msra.mxu0 0.0
      %1582 = vmatpush.msra.mxu0 0.0
      %1583 = vmatpush.msra.mxu0 0.0
      %1584 = vmatpush.msra.mxu0 0.0
      %1585 = vmatpush.msra.mxu0 0.0
      %1586 = vmatpush.msra.mxu0 0.0
      %1587 = vmatpush.msra.mxu0 0.0
      %1588 = vmatpush.msra.mxu0 0.0
      %1589 = vmatpush.msra.mxu0 0.0
      %1590 = vmatpush.msra.mxu0 0.0
      %1591 = vmatpush.msra.mxu0 0.0
      %1592 = vmatpush.msra.mxu0 0.0
      %1593 = vmatpush.msra.mxu0 %v1580
      %1594 = vmatpush.msra.mxu0 %v1579
      %1595 = vmatpush.msra.mxu0 %v1578
      %1596 = vmatpush.msra.mxu0 %v1577
      %1597 = vmatmul.f32.gmra.mxu0 %v487
      %v1598 = vpop.f32.mrf.mxu0
      %v1599 = vadd.f32 0.0, %v1598
      %1600 = vmatmul.f32.gmra.mxu0 %v490
      %v1601 = vpop.f32.mrf.mxu0
      %v1602 = vadd.f32 0.0, %v1601
      %1603 = vmatmul.f32.gmra.mxu0 %v493
      %v1604 = vpop.f32.mrf.mxu0
      %v1605 = vadd.f32 0.0, %v1604
      %1606 = vmatmul.f32.gmra.mxu0 %v496
      %v1607 = vpop.f32.mrf.mxu0
      %v1608 = vadd.f32 0.0, %v1607
      %1609 = vdwg.mxu0
      %v1610 = vmul.f32 %v1599, 0.00048828125
      %v1611 = vmul.f32 %v1602, 0.00048828125
      %v1612 = vmul.f32 %v1605, 0.00048828125
      %v1613 = vmul.f32 %v1608, 0.00048828125
      %v1614 = vmul.f32 %v1610, %v1610
      %v1615 = vmul.f32 %v1611, %v1611
      %v1616 = vmul.f32 %v1612, %v1612
      %v1617 = vmul.f32 %v1613, %v1613
      %1622 = vrot.lane.b32.xlu0 %v1614, 1
      %v1623 = vpop.permute.xlu0 %1622
      %1624 = vrot.lane.b32.xlu0 %v1615, 1
      %v1625 = vpop.permute.xlu0 %1624
      %1626 = vrot.lane.b32.xlu0 %v1616, 1
      %v1627 = vpop.permute.xlu0 %1626
      %1628 = vrot.lane.b32.xlu0 %v1617, 1
      %v1629 = vpop.permute.xlu0 %1628
      %v1634 = vsub.f32 %v1610, %v1623
      %v1635 = vsub.f32 %v1611, %v1625
      %v1636 = vsub.f32 %v1612, %v1627
      %v1637 = vsub.f32 %v1613, %v1629
      %v1638 = vmax.f32 %v1634, 0.0
      %v1639 = vmax.f32 %v1635, 0.0
      %v1640 = vmax.f32 %v1636, 0.0
      %v1641 = vmax.f32 %v1637, 0.0
      %v1642 = vadd.f32 %v1638, 1e-05
      %v1643 = vadd.f32 %v1639, 1e-05
      %v1644 = vadd.f32 %v1640, 1e-05
      %v1645 = vadd.f32 %v1641, 1e-05
      %v1646 = vrsqrt.pop %v1642
      %v1647 = vmul.f32 %v1646, %v1642
      %v1648 = vmul.f32 %v1647, %v1646
      %v1649 = vmul.f32 0.5, %v1648
      %v1650 = vsub.f32 1.5, %v1649
      %v1651 = vmul.f32 %v1646, %v1650
      %vm1652 = vweird.f32 %v1642
      %vm1653 = vweird.f32 %v1646
      %vm1654 = vmor %vm1652, %vm1653
      %v1655 = vsel %vm1654, %v1646, %v1651
      %v1656 = vrsqrt.pop %v1643
      %v1657 = vmul.f32 %v1656, %v1643
      %v1658 = vmul.f32 %v1657, %v1656
      %v1659 = vmul.f32 0.5, %v1658
      %v1660 = vsub.f32 1.5, %v1659
      %v1661 = vmul.f32 %v1656, %v1660
      %vm1662 = vweird.f32 %v1643
      %vm1663 = vweird.f32 %v1656
      %vm1664 = vmor %vm1662, %vm1663
      %v1665 = vsel %vm1664, %v1656, %v1661
      %v1666 = vrsqrt.pop %v1644
      %v1667 = vmul.f32 %v1666, %v1644
      %v1668 = vmul.f32 %v1667, %v1666
      %v1669 = vmul.f32 0.5, %v1668
      %v1670 = vsub.f32 1.5, %v1669
      %v1671 = vmul.f32 %v1666, %v1670
      %vm1672 = vweird.f32 %v1644
      %vm1673 = vweird.f32 %v1666
      %vm1674 = vmor %vm1672, %vm1673
      %v1675 = vsel %vm1674, %v1666, %v1671
      %v1676 = vrsqrt.pop %v1645
      %v1677 = vmul.f32 %v1676, %v1645
      %v1678 = vmul.f32 %v1677, %v1676
      %v1679 = vmul.f32 0.5, %v1678
      %v1680 = vsub.f32 1.5, %v1679
      %v1681 = vmul.f32 %v1676, %v1680
      %vm1682 = vweird.f32 %v1645
      %vm1683 = vweird.f32 %v1676
      %vm1684 = vmor %vm1682, %vm1683
      %v1685 = vsel %vm1684, %v1676, %v1681
      %1690 = vrot.lane.b32.xlu0 %v1655, 3
      %v1691 = vpop.permute.xlu0 %1690
      %1692 = vrot.lane.b32.xlu0 %v1665, 3
      %v1693 = vpop.permute.xlu0 %1692
      %1694 = vrot.lane.b32.xlu0 %v1675, 3
      %v1695 = vpop.permute.xlu0 %1694
      %1696 = vrot.lane.b32.xlu0 %v1685, 3
      %v1697 = vpop.permute.xlu0 %1696
      %v1702 = vmul.f32 %v349, %v1691
      %v1703 = vmul.f32 %v350, %v1693
      %v1704 = vmul.f32 %v351, %v1695
      %v1705 = vmul.f32 %v352, %v1697
      %1710 = vrot.lane.b32.xlu0 %v1702, 124
      %v1711 = vpop.permute.xlu0 %1710
      %1712 = vrot.lane.b32.xlu0 %v1703, 124
      %v1713 = vpop.permute.xlu0 %1712
      %1714 = vrot.lane.b32.xlu0 %v1704, 124
      %v1715 = vpop.permute.xlu0 %1714
      %1716 = vrot.lane.b32.xlu0 %v1705, 124
      %v1717 = vpop.permute.xlu0 %1716
      %v1722 = vmul.f32 %v1610, %v1711
      %v1723 = vmul.f32 %v1611, %v1713
      %v1724 = vmul.f32 %v1612, %v1715
      %v1725 = vmul.f32 %v1613, %v1717
      %1730 = vrot.lane.b32.xlu0 %v1722, 5
      %v1731 = vpop.permute.xlu0 %1730
      %1732 = vrot.lane.b32.xlu0 %v1723, 5
      %v1733 = vpop.permute.xlu0 %1732
      %1734 = vrot.lane.b32.xlu0 %v1724, 5
      %v1735 = vpop.permute.xlu0 %1734
      %1736 = vrot.lane.b32.xlu0 %v1725, 5
      %v1737 = vpop.permute.xlu0 %1736
      %v1742 = vsub.f32 %v349, %v1731
      %v1743 = vsub.f32 %v350, %v1733
      %v1744 = vsub.f32 %v351, %v1735
      %v1745 = vsub.f32 %v352, %v1737
      %1746 = vset.pattern.permute.xlu0 4
      %1747 = vperm.xlu0 %1746, %v1702
      %v1748 = vpop.permute.xlu0 %1747
      %1750 = vset.pattern.permute.xlu0 4
      %1751 = vperm.xlu0 %1750, %v1703
      %v1752 = vpop.permute.xlu0 %1751
      %1754 = vset.pattern.permute.xlu0 4
      %1755 = vperm.xlu0 %1754, %v1704
      %v1756 = vpop.permute.xlu0 %1755
      %1758 = vset.pattern.permute.xlu0 4
      %1759 = vperm.xlu0 %1758, %v1705
      %v1760 = vpop.permute.xlu0 %1759
      %v1762 = vmul.f32 %v1020, %v1748
      %v1763 = vmul.f32 %v1039, %v1748
      %v1764 = vmul.f32 %v1022, %v1752
      %v1765 = vmul.f32 %v1041, %v1752
      %v1766 = vmul.f32 %v1025, %v1756
      %v1767 = vmul.f32 %v1044, %v1756
      %v1768 = vmul.f32 %v1027, %v1760
      %v1769 = vmul.f32 %v1046, %v1760
      %1771 = vset.pattern.permute.xlu0 5
      %1772 = vperm.xlu0 %1771, %v1742
      %v1773 = vpop.permute.xlu0 %1772
      %1776 = vset.pattern.permute.xlu0 5
      %1777 = vperm.xlu0 %1776, %v1743
      %v1778 = vpop.permute.xlu0 %1777
      %1781 = vset.pattern.permute.xlu0 5
      %1782 = vperm.xlu0 %1781, %v1744
      %v1783 = vpop.permute.xlu0 %1782
      %1786 = vset.pattern.permute.xlu0 5
      %1787 = vperm.xlu0 %1786, %v1745
      %v1788 = vpop.permute.xlu0 %1787
      %v1790 = vadd.f32 %v1762, %v1773
      %v1791 = vadd.f32 %v1763, %v1773
      %v1792 = vadd.f32 %v1764, %v1778
      %v1793 = vadd.f32 %v1765, %v1778
      %v1794 = vadd.f32 %v1766, %v1783
      %v1795 = vadd.f32 %v1767, %v1783
      %v1796 = vadd.f32 %v1768, %v1788
      %v1797 = vadd.f32 %v1769, %v1788
      %v1798 = vmax.f32 %v1790, 0.0
      %v1799 = vmax.f32 %v1791, 0.0
      %v1800 = vmax.f32 %v1792, 0.0
      %v1801 = vmax.f32 %v1793, 0.0
      %v1802 = vmax.f32 %v1794, 0.0
      %v1803 = vmax.f32 %v1795, 0.0
      %v1804 = vmax.f32 %v1796, 0.0
      %v1805 = vmax.f32 %v1797, 0.0
      %v1806 = vpack.c.bf16 %v1799, %v1798
      %v1807 = vpack.c.bf16 %v1801, %v1800
      %v1808 = vpack.c.bf16 %v1803, %v1802
      %v1809 = vpack.c.bf16 %v1805, %v1804
      %1810 = vst [vmem:[#allocation2 + $0x8] sm:$0xff] %v1806
      %1811 = vst [vmem:[#allocation2 + $0x48] sm:$0xff] %v1807
      %1812 = vst [vmem:[#allocation2 + $0x88] sm:$0xff] %v1808
      %1813 = vst [vmem:[#allocation2 + $0xc8] sm:$0xff] %v1809
      %v1814 = vadd.f32 %v1058, %v1077
      %1815 = vadd.xlane.f32.xlu0 %v1814
      %v1816 = vpop.xlane.xlu0 %1815
      %v1817 = vadd.f32 %v1060, %v1079
      %1818 = vadd.xlane.f32.xlu0 %v1817
      %v1819 = vpop.xlane.xlu0 %1818
      %v1820 = vadd.f32 %v1063, %v1082
      %1821 = vadd.xlane.f32.xlu0 %v1820
      %v1822 = vpop.xlane.xlu0 %1821
      %v1823 = vadd.f32 %v1065, %v1084
      %1824 = vadd.xlane.f32.xlu0 %v1823
      %v1825 = vpop.xlane.xlu0 %1824
      %v1826 = vmul.f32 %v1058, %v1058
      %v1827 = vmul.f32 %v1077, %v1077
      %v1828 = vmul.f32 %v1060, %v1060
      %v1829 = vmul.f32 %v1079, %v1079
      %v1830 = vmul.f32 %v1063, %v1063
      %v1831 = vmul.f32 %v1082, %v1082
      %v1832 = vmul.f32 %v1065, %v1065
      %v1833 = vmul.f32 %v1084, %v1084
      %v1834 = vadd.f32 %v1826, %v1827
      %1835 = vadd.xlane.f32.xlu0 %v1834
      %v1836 = vpop.xlane.xlu0 %1835
      %v1837 = vadd.f32 %v1828, %v1829
      %1838 = vadd.xlane.f32.xlu0 %v1837
      %v1839 = vpop.xlane.xlu0 %1838
      %v1840 = vadd.f32 %v1830, %v1831
      %1841 = vadd.xlane.f32.xlu0 %v1840
      %v1842 = vpop.xlane.xlu0 %1841
      %v1843 = vadd.f32 %v1832, %v1833
      %1844 = vadd.xlane.f32.xlu0 %v1843
      %v1845 = vpop.xlane.xlu0 %1844
      %v1846 = vsel %vm480, %v1816, %v1836
      %v1847 = vsel %vm480, %v1819, %v1839
      %v1848 = vsel %vm480, %v1822, %v1842
      %v1849 = vsel %vm480, %v1825, %v1845
      %1850 = vmatpush.msra.mxu0 0.0
      %1851 = vmatpush.msra.mxu0 0.0
      %1852 = vmatpush.msra.mxu0 0.0
      %1853 = vmatpush.msra.mxu0 0.0
      %1854 = vmatpush.msra.mxu0 0.0
      %1855 = vmatpush.msra.mxu0 0.0
      %1856 = vmatpush.msra.mxu0 0.0
      %1857 = vmatpush.msra.mxu0 0.0
      %1858 = vmatpush.msra.mxu0 0.0
      %1859 = vmatpush.msra.mxu0 0.0
      %1860 = vmatpush.msra.mxu0 0.0
      %1861 = vmatpush.msra.mxu0 0.0
      %1862 = vmatpush.msra.mxu0 %v1849
      %1863 = vmatpush.msra.mxu0 %v1848
      %1864 = vmatpush.msra.mxu0 %v1847
      %1865 = vmatpush.msra.mxu0 %v1846
      %1866 = vmatmul.f32.gmra.mxu0 %v487
      %v1867 = vpop.f32.mrf.mxu0
      %v1868 = vadd.f32 0.0, %v1867
      %1869 = vmatmul.f32.gmra.mxu0 %v490
      %v1870 = vpop.f32.mrf.mxu0
      %v1871 = vadd.f32 0.0, %v1870
      %1872 = vmatmul.f32.gmra.mxu0 %v493
      %v1873 = vpop.f32.mrf.mxu0
      %v1874 = vadd.f32 0.0, %v1873
      %1875 = vmatmul.f32.gmra.mxu0 %v496
      %v1876 = vpop.f32.mrf.mxu0
      %v1877 = vadd.f32 0.0, %v1876
      %1878 = vdwg.mxu0
      %v1879 = vmul.f32 %v1868, 0.00048828125
      %v1880 = vmul.f32 %v1871, 0.00048828125
      %v1881 = vmul.f32 %v1874, 0.00048828125
      %v1882 = vmul.f32 %v1877, 0.00048828125
      %v1883 = vmul.f32 %v1879, %v1879
      %v1884 = vmul.f32 %v1880, %v1880
      %v1885 = vmul.f32 %v1881, %v1881
      %v1886 = vmul.f32 %v1882, %v1882
      %1891 = vrot.lane.b32.xlu0 %v1883, 1
      %v1892 = vpop.permute.xlu0 %1891
      %1893 = vrot.lane.b32.xlu0 %v1884, 1
      %v1894 = vpop.permute.xlu0 %1893
      %1895 = vrot.lane.b32.xlu0 %v1885, 1
      %v1896 = vpop.permute.xlu0 %1895
      %1897 = vrot.lane.b32.xlu0 %v1886, 1
      %v1898 = vpop.permute.xlu0 %1897
      %v1903 = vsub.f32 %v1879, %v1892
      %v1904 = vsub.f32 %v1880, %v1894
      %v1905 = vsub.f32 %v1881, %v1896
      %v1906 = vsub.f32 %v1882, %v1898
      %v1907 = vmax.f32 %v1903, 0.0
      %v1908 = vmax.f32 %v1904, 0.0
      %v1909 = vmax.f32 %v1905, 0.0
      %v1910 = vmax.f32 %v1906, 0.0
      %v1911 = vadd.f32 %v1907, 1e-05
      %v1912 = vadd.f32 %v1908, 1e-05
      %v1913 = vadd.f32 %v1909, 1e-05
      %v1914 = vadd.f32 %v1910, 1e-05
      %v1915 = vrsqrt.pop %v1911
      %v1916 = vmul.f32 %v1915, %v1911
      %v1917 = vmul.f32 %v1916, %v1915
      %v1918 = vmul.f32 0.5, %v1917
      %v1919 = vsub.f32 1.5, %v1918
      %v1920 = vmul.f32 %v1915, %v1919
      %vm1921 = vweird.f32 %v1911
      %vm1922 = vweird.f32 %v1915
      %vm1923 = vmor %vm1921, %vm1922
      %v1924 = vsel %vm1923, %v1915, %v1920
      %v1925 = vrsqrt.pop %v1912
      %v1926 = vmul.f32 %v1925, %v1912
      %v1927 = vmul.f32 %v1926, %v1925
      %v1928 = vmul.f32 0.5, %v1927
      %v1929 = vsub.f32 1.5, %v1928
      %v1930 = vmul.f32 %v1925, %v1929
      %vm1931 = vweird.f32 %v1912
      %vm1932 = vweird.f32 %v1925
      %vm1933 = vmor %vm1931, %vm1932
      %v1934 = vsel %vm1933, %v1925, %v1930
      %v1935 = vrsqrt.pop %v1913
      %v1936 = vmul.f32 %v1935, %v1913
      %v1937 = vmul.f32 %v1936, %v1935
      %v1938 = vmul.f32 0.5, %v1937
      %v1939 = vsub.f32 1.5, %v1938
      %v1940 = vmul.f32 %v1935, %v1939
      %vm1941 = vweird.f32 %v1913
      %vm1942 = vweird.f32 %v1935
      %vm1943 = vmor %vm1941, %vm1942
      %v1944 = vsel %vm1943, %v1935, %v1940
      %v1945 = vrsqrt.pop %v1914
      %v1946 = vmul.f32 %v1945, %v1914
      %v1947 = vmul.f32 %v1946, %v1945
      %v1948 = vmul.f32 0.5, %v1947
      %v1949 = vsub.f32 1.5, %v1948
      %v1950 = vmul.f32 %v1945, %v1949
      %vm1951 = vweird.f32 %v1914
      %vm1952 = vweird.f32 %v1945
      %vm1953 = vmor %vm1951, %vm1952
      %v1954 = vsel %vm1953, %v1945, %v1950
      %1959 = vrot.lane.b32.xlu0 %v1924, 3
      %v1960 = vpop.permute.xlu0 %1959
      %1961 = vrot.lane.b32.xlu0 %v1934, 3
      %v1962 = vpop.permute.xlu0 %1961
      %1963 = vrot.lane.b32.xlu0 %v1944, 3
      %v1964 = vpop.permute.xlu0 %1963
      %1965 = vrot.lane.b32.xlu0 %v1954, 3
      %v1966 = vpop.permute.xlu0 %1965
      %v1971 = vmul.f32 %v349, %v1960
      %v1972 = vmul.f32 %v350, %v1962
      %v1973 = vmul.f32 %v351, %v1964
      %v1974 = vmul.f32 %v352, %v1966
      %1979 = vrot.lane.b32.xlu0 %v1971, 124
      %v1980 = vpop.permute.xlu0 %1979
      %1981 = vrot.lane.b32.xlu0 %v1972, 124
      %v1982 = vpop.permute.xlu0 %1981
      %1983 = vrot.lane.b32.xlu0 %v1973, 124
      %v1984 = vpop.permute.xlu0 %1983
      %1985 = vrot.lane.b32.xlu0 %v1974, 124
      %v1986 = vpop.permute.xlu0 %1985
      %v1991 = vmul.f32 %v1879, %v1980
      %v1992 = vmul.f32 %v1880, %v1982
      %v1993 = vmul.f32 %v1881, %v1984
      %v1994 = vmul.f32 %v1882, %v1986
      %1999 = vrot.lane.b32.xlu0 %v1991, 5
      %v2000 = vpop.permute.xlu0 %1999
      %2001 = vrot.lane.b32.xlu0 %v1992, 5
      %v2002 = vpop.permute.xlu0 %2001
      %2003 = vrot.lane.b32.xlu0 %v1993, 5
      %v2004 = vpop.permute.xlu0 %2003
      %2005 = vrot.lane.b32.xlu0 %v1994, 5
      %v2006 = vpop.permute.xlu0 %2005
      %v2011 = vsub.f32 %v349, %v2000
      %v2012 = vsub.f32 %v350, %v2002
      %v2013 = vsub.f32 %v351, %v2004
      %v2014 = vsub.f32 %v352, %v2006
      %2015 = vset.pattern.permute.xlu0 4
      %2016 = vperm.xlu0 %2015, %v1971
      %v2017 = vpop.permute.xlu0 %2016
      %2019 = vset.pattern.permute.xlu0 4
      %2020 = vperm.xlu0 %2019, %v1972
      %v2021 = vpop.permute.xlu0 %2020
      %2023 = vset.pattern.permute.xlu0 4
      %2024 = vperm.xlu0 %2023, %v1973
      %v2025 = vpop.permute.xlu0 %2024
      %2027 = vset.pattern.permute.xlu0 4
      %2028 = vperm.xlu0 %2027, %v1974
      %v2029 = vpop.permute.xlu0 %2028
      %v2031 = vmul.f32 %v1058, %v2017
      %v2032 = vmul.f32 %v1077, %v2017
      %v2033 = vmul.f32 %v1060, %v2021
      %v2034 = vmul.f32 %v1079, %v2021
      %v2035 = vmul.f32 %v1063, %v2025
      %v2036 = vmul.f32 %v1082, %v2025
      %v2037 = vmul.f32 %v1065, %v2029
      %v2038 = vmul.f32 %v1084, %v2029
      %2040 = vset.pattern.permute.xlu0 5
      %2041 = vperm.xlu0 %2040, %v2011
      %v2042 = vpop.permute.xlu0 %2041
      %2045 = vset.pattern.permute.xlu0 5
      %2046 = vperm.xlu0 %2045, %v2012
      %v2047 = vpop.permute.xlu0 %2046
      %2050 = vset.pattern.permute.xlu0 5
      %2051 = vperm.xlu0 %2050, %v2013
      %v2052 = vpop.permute.xlu0 %2051
      %2055 = vset.pattern.permute.xlu0 5
      %2056 = vperm.xlu0 %2055, %v2014
      %v2057 = vpop.permute.xlu0 %2056
      %v2059 = vadd.f32 %v2031, %v2042
      %v2060 = vadd.f32 %v2032, %v2042
      %v2061 = vadd.f32 %v2033, %v2047
      %v2062 = vadd.f32 %v2034, %v2047
      %v2063 = vadd.f32 %v2035, %v2052
      %v2064 = vadd.f32 %v2036, %v2052
      %v2065 = vadd.f32 %v2037, %v2057
      %v2066 = vadd.f32 %v2038, %v2057
      %v2067 = vmax.f32 %v2059, 0.0
      %v2068 = vmax.f32 %v2060, 0.0
      %v2069 = vmax.f32 %v2061, 0.0
      %v2070 = vmax.f32 %v2062, 0.0
      %v2071 = vmax.f32 %v2063, 0.0
      %v2072 = vmax.f32 %v2064, 0.0
      %v2073 = vmax.f32 %v2065, 0.0
      %v2074 = vmax.f32 %v2066, 0.0
      %v2075 = vpack.c.bf16 %v2068, %v2067
      %v2076 = vpack.c.bf16 %v2070, %v2069
      %v2077 = vpack.c.bf16 %v2072, %v2071
      %v2078 = vpack.c.bf16 %v2074, %v2073
      %2079 = vst [vmem:[#allocation2 + $0x10] sm:$0xff] %v2075
      %2080 = vst [vmem:[#allocation2 + $0x50] sm:$0xff] %v2076
      %2081 = vst [vmem:[#allocation2 + $0x90] sm:$0xff] %v2077
      %2082 = vst [vmem:[#allocation2 + $0xd0] sm:$0xff] %v2078
      %v2083 = vadd.f32 %v1096, %v1115
      %2084 = vadd.xlane.f32.xlu0 %v2083
      %v2085 = vpop.xlane.xlu0 %2084
      %v2086 = vadd.f32 %v1098, %v1117
      %2087 = vadd.xlane.f32.xlu0 %v2086
      %v2088 = vpop.xlane.xlu0 %2087
      %v2089 = vadd.f32 %v1101, %v1120
      %2090 = vadd.xlane.f32.xlu0 %v2089
      %v2091 = vpop.xlane.xlu0 %2090
      %v2092 = vadd.f32 %v1103, %v1122
      %2093 = vadd.xlane.f32.xlu0 %v2092
      %v2094 = vpop.xlane.xlu0 %2093
      %v2095 = vmul.f32 %v1096, %v1096
      %v2096 = vmul.f32 %v1115, %v1115
      %v2097 = vmul.f32 %v1098, %v1098
      %v2098 = vmul.f32 %v1117, %v1117
      %v2099 = vmul.f32 %v1101, %v1101
      %v2100 = vmul.f32 %v1120, %v1120
      %v2101 = vmul.f32 %v1103, %v1103
      %v2102 = vmul.f32 %v1122, %v1122
      %v2103 = vadd.f32 %v2095, %v2096
      %2104 = vadd.xlane.f32.xlu0 %v2103
      %v2105 = vpop.xlane.xlu0 %2104
      %v2106 = vadd.f32 %v2097, %v2098
      %2107 = vadd.xlane.f32.xlu0 %v2106
      %v2108 = vpop.xlane.xlu0 %2107
      %v2109 = vadd.f32 %v2099, %v2100
      %2110 = vadd.xlane.f32.xlu0 %v2109
      %v2111 = vpop.xlane.xlu0 %2110
      %v2112 = vadd.f32 %v2101, %v2102
      %2113 = vadd.xlane.f32.xlu0 %v2112
      %v2114 = vpop.xlane.xlu0 %2113
      %v2115 = vsel %vm480, %v2085, %v2105
      %v2116 = vsel %vm480, %v2088, %v2108
      %v2117 = vsel %vm480, %v2091, %v2111
      %v2118 = vsel %vm480, %v2094, %v2114
      %2119 = vmatpush.msra.mxu0 0.0
      %2120 = vmatpush.msra.mxu0 0.0
      %2121 = vmatpush.msra.mxu0 0.0
      %2122 = vmatpush.msra.mxu0 0.0
      %2123 = vmatpush.msra.mxu0 0.0
      %2124 = vmatpush.msra.mxu0 0.0
      %2125 = vmatpush.msra.mxu0 0.0
      %2126 = vmatpush.msra.mxu0 0.0
      %2127 = vmatpush.msra.mxu0 0.0
      %2128 = vmatpush.msra.mxu0 0.0
      %2129 = vmatpush.msra.mxu0 0.0
      %2130 = vmatpush.msra.mxu0 0.0
      %2131 = vmatpush.msra.mxu0 %v2118
      %2132 = vmatpush.msra.mxu0 %v2117
      %2133 = vmatpush.msra.mxu0 %v2116
      %2134 = vmatpush.msra.mxu0 %v2115
      %2135 = vmatmul.f32.gmra.mxu0 %v487
      %v2136 = vpop.f32.mrf.mxu0
      %v2137 = vadd.f32 0.0, %v2136
      %2138 = vmatmul.f32.gmra.mxu0 %v490
      %v2139 = vpop.f32.mrf.mxu0
      %v2140 = vadd.f32 0.0, %v2139
      %2141 = vmatmul.f32.gmra.mxu0 %v493
      %v2142 = vpop.f32.mrf.mxu0
      %v2143 = vadd.f32 0.0, %v2142
      %2144 = vmatmul.f32.gmra.mxu0 %v496
      %v2145 = vpop.f32.mrf.mxu0
      %v2146 = vadd.f32 0.0, %v2145
      %2147 = vdwg.mxu0
      %v2148 = vmul.f32 %v2137, 0.00048828125
      %v2149 = vmul.f32 %v2140, 0.00048828125
      %v2150 = vmul.f32 %v2143, 0.00048828125
      %v2151 = vmul.f32 %v2146, 0.00048828125
      %v2152 = vmul.f32 %v2148, %v2148
      %v2153 = vmul.f32 %v2149, %v2149
      %v2154 = vmul.f32 %v2150, %v2150
      %v2155 = vmul.f32 %v2151, %v2151
      %2160 = vrot.lane.b32.xlu0 %v2152, 1
      %v2161 = vpop.permute.xlu0 %2160
      %2162 = vrot.lane.b32.xlu0 %v2153, 1
      %v2163 = vpop.permute.xlu0 %2162
      %2164 = vrot.lane.b32.xlu0 %v2154, 1
      %v2165 = vpop.permute.xlu0 %2164
      %2166 = vrot.lane.b32.xlu0 %v2155, 1
      %v2167 = vpop.permute.xlu0 %2166
      %v2172 = vsub.f32 %v2148, %v2161
      %v2173 = vsub.f32 %v2149, %v2163
      %v2174 = vsub.f32 %v2150, %v2165
      %v2175 = vsub.f32 %v2151, %v2167
      %v2176 = vmax.f32 %v2172, 0.0
      %v2177 = vmax.f32 %v2173, 0.0
      %v2178 = vmax.f32 %v2174, 0.0
      %v2179 = vmax.f32 %v2175, 0.0
      %v2180 = vadd.f32 %v2176, 1e-05
      %v2181 = vadd.f32 %v2177, 1e-05
      %v2182 = vadd.f32 %v2178, 1e-05
      %v2183 = vadd.f32 %v2179, 1e-05
      %v2184 = vrsqrt.pop %v2180
      %v2185 = vmul.f32 %v2184, %v2180
      %v2186 = vmul.f32 %v2185, %v2184
      %v2187 = vmul.f32 0.5, %v2186
      %v2188 = vsub.f32 1.5, %v2187
      %v2189 = vmul.f32 %v2184, %v2188
      %vm2190 = vweird.f32 %v2180
      %vm2191 = vweird.f32 %v2184
      %vm2192 = vmor %vm2190, %vm2191
      %v2193 = vsel %vm2192, %v2184, %v2189
      %v2194 = vrsqrt.pop %v2181
      %v2195 = vmul.f32 %v2194, %v2181
      %v2196 = vmul.f32 %v2195, %v2194
      %v2197 = vmul.f32 0.5, %v2196
      %v2198 = vsub.f32 1.5, %v2197
      %v2199 = vmul.f32 %v2194, %v2198
      %vm2200 = vweird.f32 %v2181
      %vm2201 = vweird.f32 %v2194
      %vm2202 = vmor %vm2200, %vm2201
      %v2203 = vsel %vm2202, %v2194, %v2199
      %v2204 = vrsqrt.pop %v2182
      %v2205 = vmul.f32 %v2204, %v2182
      %v2206 = vmul.f32 %v2205, %v2204
      %v2207 = vmul.f32 0.5, %v2206
      %v2208 = vsub.f32 1.5, %v2207
      %v2209 = vmul.f32 %v2204, %v2208
      %vm2210 = vweird.f32 %v2182
      %vm2211 = vweird.f32 %v2204
      %vm2212 = vmor %vm2210, %vm2211
      %v2213 = vsel %vm2212, %v2204, %v2209
      %v2214 = vrsqrt.pop %v2183
      %v2215 = vmul.f32 %v2214, %v2183
      %v2216 = vmul.f32 %v2215, %v2214
      %v2217 = vmul.f32 0.5, %v2216
      %v2218 = vsub.f32 1.5, %v2217
      %v2219 = vmul.f32 %v2214, %v2218
      %vm2220 = vweird.f32 %v2183
      %vm2221 = vweird.f32 %v2214
      %vm2222 = vmor %vm2220, %vm2221
      %v2223 = vsel %vm2222, %v2214, %v2219
      %2228 = vrot.lane.b32.xlu0 %v2193, 3
      %v2229 = vpop.permute.xlu0 %2228
      %2230 = vrot.lane.b32.xlu0 %v2203, 3
      %v2231 = vpop.permute.xlu0 %2230
      %2232 = vrot.lane.b32.xlu0 %v2213, 3
      %v2233 = vpop.permute.xlu0 %2232
      %2234 = vrot.lane.b32.xlu0 %v2223, 3
      %v2235 = vpop.permute.xlu0 %2234
      %v2240 = vmul.f32 %v349, %v2229
      %v2241 = vmul.f32 %v350, %v2231
      %v2242 = vmul.f32 %v351, %v2233
      %v2243 = vmul.f32 %v352, %v2235
      %2248 = vrot.lane.b32.xlu0 %v2240, 124
      %v2249 = vpop.permute.xlu0 %2248
      %2250 = vrot.lane.b32.xlu0 %v2241, 124
      %v2251 = vpop.permute.xlu0 %2250
      %2252 = vrot.lane.b32.xlu0 %v2242, 124
      %v2253 = vpop.permute.xlu0 %2252
      %2254 = vrot.lane.b32.xlu0 %v2243, 124
      %v2255 = vpop.permute.xlu0 %2254
      %v2260 = vmul.f32 %v2148, %v2249
      %v2261 = vmul.f32 %v2149, %v2251
      %v2262 = vmul.f32 %v2150, %v2253
      %v2263 = vmul.f32 %v2151, %v2255
      %2268 = vrot.lane.b32.xlu0 %v2260, 5
      %v2269 = vpop.permute.xlu0 %2268
      %2270 = vrot.lane.b32.xlu0 %v2261, 5
      %v2271 = vpop.permute.xlu0 %2270
      %2272 = vrot.lane.b32.xlu0 %v2262, 5
      %v2273 = vpop.permute.xlu0 %2272
      %2274 = vrot.lane.b32.xlu0 %v2263, 5
      %v2275 = vpop.permute.xlu0 %2274
      %v2280 = vsub.f32 %v349, %v2269
      %v2281 = vsub.f32 %v350, %v2271
      %v2282 = vsub.f32 %v351, %v2273
      %v2283 = vsub.f32 %v352, %v2275
      %2284 = vset.pattern.permute.xlu0 4
      %2285 = vperm.xlu0 %2284, %v2240
      %v2286 = vpop.permute.xlu0 %2285
      %2288 = vset.pattern.permute.xlu0 4
      %2289 = vperm.xlu0 %2288, %v2241
      %v2290 = vpop.permute.xlu0 %2289
      %2292 = vset.pattern.permute.xlu0 4
      %2293 = vperm.xlu0 %2292, %v2242
      %v2294 = vpop.permute.xlu0 %2293
      %2296 = vset.pattern.permute.xlu0 4
      %2297 = vperm.xlu0 %2296, %v2243
      %v2298 = vpop.permute.xlu0 %2297
      %v2300 = vmul.f32 %v1096, %v2286
      %v2301 = vmul.f32 %v1115, %v2286
      %v2302 = vmul.f32 %v1098, %v2290
      %v2303 = vmul.f32 %v1117, %v2290
      %v2304 = vmul.f32 %v1101, %v2294
      %v2305 = vmul.f32 %v1120, %v2294
      %v2306 = vmul.f32 %v1103, %v2298
      %v2307 = vmul.f32 %v1122, %v2298
      %2309 = vset.pattern.permute.xlu0 5
      %2310 = vperm.xlu0 %2309, %v2280
      %v2311 = vpop.permute.xlu0 %2310
      %2314 = vset.pattern.permute.xlu0 5
      %2315 = vperm.xlu0 %2314, %v2281
      %v2316 = vpop.permute.xlu0 %2315
      %2319 = vset.pattern.permute.xlu0 5
      %2320 = vperm.xlu0 %2319, %v2282
      %v2321 = vpop.permute.xlu0 %2320
      %2324 = vset.pattern.permute.xlu0 5
      %2325 = vperm.xlu0 %2324, %v2283
      %v2326 = vpop.permute.xlu0 %2325
      %v2328 = vadd.f32 %v2300, %v2311
      %v2329 = vadd.f32 %v2301, %v2311
      %v2330 = vadd.f32 %v2302, %v2316
      %v2331 = vadd.f32 %v2303, %v2316
      %v2332 = vadd.f32 %v2304, %v2321
      %v2333 = vadd.f32 %v2305, %v2321
      %v2334 = vadd.f32 %v2306, %v2326
      %v2335 = vadd.f32 %v2307, %v2326
      %v2336 = vmax.f32 %v2328, 0.0
      %v2337 = vmax.f32 %v2329, 0.0
      %v2338 = vmax.f32 %v2330, 0.0
      %v2339 = vmax.f32 %v2331, 0.0
      %v2340 = vmax.f32 %v2332, 0.0
      %v2341 = vmax.f32 %v2333, 0.0
      %v2342 = vmax.f32 %v2334, 0.0
      %v2343 = vmax.f32 %v2335, 0.0
      %v2344 = vpack.c.bf16 %v2337, %v2336
      %v2345 = vpack.c.bf16 %v2339, %v2338
      %v2346 = vpack.c.bf16 %v2341, %v2340
      %v2347 = vpack.c.bf16 %v2343, %v2342
      %2348 = vst [vmem:[#allocation2 + $0x18] sm:$0xff] %v2344
      %2349 = vst [vmem:[#allocation2 + $0x58] sm:$0xff] %v2345
      %2350 = vst [vmem:[#allocation2 + $0x98] sm:$0xff] %v2346
      %2351 = vst [vmem:[#allocation2 + $0xd8] sm:$0xff] %v2347
      %v2352 = vadd.f32 %v1134, %v1153
      %2353 = vadd.xlane.f32.xlu0 %v2352
      %v2354 = vpop.xlane.xlu0 %2353
      %v2355 = vadd.f32 %v1136, %v1155
      %2356 = vadd.xlane.f32.xlu0 %v2355
      %v2357 = vpop.xlane.xlu0 %2356
      %v2358 = vadd.f32 %v1139, %v1158
      %2359 = vadd.xlane.f32.xlu0 %v2358
      %v2360 = vpop.xlane.xlu0 %2359
      %v2361 = vadd.f32 %v1141, %v1160
      %2362 = vadd.xlane.f32.xlu0 %v2361
      %v2363 = vpop.xlane.xlu0 %2362
      %v2364 = vmul.f32 %v1134, %v1134
      %v2365 = vmul.f32 %v1153, %v1153
      %v2366 = vmul.f32 %v1136, %v1136
      %v2367 = vmul.f32 %v1155, %v1155
      %v2368 = vmul.f32 %v1139, %v1139
      %v2369 = vmul.f32 %v1158, %v1158
      %v2370 = vmul.f32 %v1141, %v1141
      %v2371 = vmul.f32 %v1160, %v1160
      %v2372 = vadd.f32 %v2364, %v2365
      %2373 = vadd.xlane.f32.xlu0 %v2372
      %v2374 = vpop.xlane.xlu0 %2373
      %v2375 = vadd.f32 %v2366, %v2367
      %2376 = vadd.xlane.f32.xlu0 %v2375
      %v2377 = vpop.xlane.xlu0 %2376
      %v2378 = vadd.f32 %v2368, %v2369
      %2379 = vadd.xlane.f32.xlu0 %v2378
      %v2380 = vpop.xlane.xlu0 %2379
      %v2381 = vadd.f32 %v2370, %v2371
      %2382 = vadd.xlane.f32.xlu0 %v2381
      %v2383 = vpop.xlane.xlu0 %2382
      %v2384 = vsel %vm480, %v2354, %v2374
      %v2385 = vsel %vm480, %v2357, %v2377
      %v2386 = vsel %vm480, %v2360, %v2380
      %v2387 = vsel %vm480, %v2363, %v2383
      %2388 = vmatpush.msra.mxu0 0.0
      %2389 = vmatpush.msra.mxu0 0.0
      %2390 = vmatpush.msra.mxu0 0.0
      %2391 = vmatpush.msra.mxu0 0.0
      %2392 = vmatpush.msra.mxu0 0.0
      %2393 = vmatpush.msra.mxu0 0.0
      %2394 = vmatpush.msra.mxu0 0.0
      %2395 = vmatpush.msra.mxu0 0.0
      %2396 = vmatpush.msra.mxu0 0.0
      %2397 = vmatpush.msra.mxu0 0.0
      %2398 = vmatpush.msra.mxu0 0.0
      %2399 = vmatpush.msra.mxu0 0.0
      %2400 = vmatpush.msra.mxu0 %v2387
      %2401 = vmatpush.msra.mxu0 %v2386
      %2402 = vmatpush.msra.mxu0 %v2385
      %2403 = vmatpush.msra.mxu0 %v2384
      %2404 = vmatmul.f32.gmra.mxu0 %v487
      %v2405 = vpop.f32.mrf.mxu0
      %v2406 = vadd.f32 0.0, %v2405
      %2407 = vmatmul.f32.gmra.mxu0 %v490
      %v2408 = vpop.f32.mrf.mxu0
      %v2409 = vadd.f32 0.0, %v2408
      %2410 = vmatmul.f32.gmra.mxu0 %v493
      %v2411 = vpop.f32.mrf.mxu0
      %v2412 = vadd.f32 0.0, %v2411
      %2413 = vmatmul.f32.gmra.mxu0 %v496
      %v2414 = vpop.f32.mrf.mxu0
      %v2415 = vadd.f32 0.0, %v2414
      %2416 = vdwg.mxu0
      %v2417 = vmul.f32 %v2406, 0.00048828125
      %v2418 = vmul.f32 %v2409, 0.00048828125
      %v2419 = vmul.f32 %v2412, 0.00048828125
      %v2420 = vmul.f32 %v2415, 0.00048828125
      %v2421 = vmul.f32 %v2417, %v2417
      %v2422 = vmul.f32 %v2418, %v2418
      %v2423 = vmul.f32 %v2419, %v2419
      %v2424 = vmul.f32 %v2420, %v2420
      %2429 = vrot.lane.b32.xlu0 %v2421, 1
      %v2430 = vpop.permute.xlu0 %2429
      %2431 = vrot.lane.b32.xlu0 %v2422, 1
      %v2432 = vpop.permute.xlu0 %2431
      %2433 = vrot.lane.b32.xlu0 %v2423, 1
      %v2434 = vpop.permute.xlu0 %2433
      %2435 = vrot.lane.b32.xlu0 %v2424, 1
      %v2436 = vpop.permute.xlu0 %2435
      %v2441 = vsub.f32 %v2417, %v2430
      %v2442 = vsub.f32 %v2418, %v2432
      %v2443 = vsub.f32 %v2419, %v2434
      %v2444 = vsub.f32 %v2420, %v2436
      %v2445 = vmax.f32 %v2441, 0.0
      %v2446 = vmax.f32 %v2442, 0.0
      %v2447 = vmax.f32 %v2443, 0.0
      %v2448 = vmax.f32 %v2444, 0.0
      %v2449 = vadd.f32 %v2445, 1e-05
      %v2450 = vadd.f32 %v2446, 1e-05
      %v2451 = vadd.f32 %v2447, 1e-05
      %v2452 = vadd.f32 %v2448, 1e-05
      %v2453 = vrsqrt.pop %v2449
      %v2454 = vmul.f32 %v2453, %v2449
      %v2455 = vmul.f32 %v2454, %v2453
      %v2456 = vmul.f32 0.5, %v2455
      %v2457 = vsub.f32 1.5, %v2456
      %v2458 = vmul.f32 %v2453, %v2457
      %vm2459 = vweird.f32 %v2449
      %vm2460 = vweird.f32 %v2453
      %vm2461 = vmor %vm2459, %vm2460
      %v2462 = vsel %vm2461, %v2453, %v2458
      %v2463 = vrsqrt.pop %v2450
      %v2464 = vmul.f32 %v2463, %v2450
      %v2465 = vmul.f32 %v2464, %v2463
      %v2466 = vmul.f32 0.5, %v2465
      %v2467 = vsub.f32 1.5, %v2466
      %v2468 = vmul.f32 %v2463, %v2467
      %vm2469 = vweird.f32 %v2450
      %vm2470 = vweird.f32 %v2463
      %vm2471 = vmor %vm2469, %vm2470
      %v2472 = vsel %vm2471, %v2463, %v2468
      %v2473 = vrsqrt.pop %v2451
      %v2474 = vmul.f32 %v2473, %v2451
      %v2475 = vmul.f32 %v2474, %v2473
      %v2476 = vmul.f32 0.5, %v2475
      %v2477 = vsub.f32 1.5, %v2476
      %v2478 = vmul.f32 %v2473, %v2477
      %vm2479 = vweird.f32 %v2451
      %vm2480 = vweird.f32 %v2473
      %vm2481 = vmor %vm2479, %vm2480
      %v2482 = vsel %vm2481, %v2473, %v2478
      %v2483 = vrsqrt.pop %v2452
      %v2484 = vmul.f32 %v2483, %v2452
      %v2485 = vmul.f32 %v2484, %v2483
      %v2486 = vmul.f32 0.5, %v2485
      %v2487 = vsub.f32 1.5, %v2486
      %v2488 = vmul.f32 %v2483, %v2487
      %vm2489 = vweird.f32 %v2452
      %vm2490 = vweird.f32 %v2483
      %vm2491 = vmor %vm2489, %vm2490
      %v2492 = vsel %vm2491, %v2483, %v2488
      %2497 = vrot.lane.b32.xlu0 %v2462, 3
      %v2498 = vpop.permute.xlu0 %2497
      %2499 = vrot.lane.b32.xlu0 %v2472, 3
      %v2500 = vpop.permute.xlu0 %2499
      %2501 = vrot.lane.b32.xlu0 %v2482, 3
      %v2502 = vpop.permute.xlu0 %2501
      %2503 = vrot.lane.b32.xlu0 %v2492, 3
      %v2504 = vpop.permute.xlu0 %2503
      %v2509 = vmul.f32 %v349, %v2498
      %v2510 = vmul.f32 %v350, %v2500
      %v2511 = vmul.f32 %v351, %v2502
      %v2512 = vmul.f32 %v352, %v2504
      %2517 = vrot.lane.b32.xlu0 %v2509, 124
      %v2518 = vpop.permute.xlu0 %2517
      %2519 = vrot.lane.b32.xlu0 %v2510, 124
      %v2520 = vpop.permute.xlu0 %2519
      %2521 = vrot.lane.b32.xlu0 %v2511, 124
      %v2522 = vpop.permute.xlu0 %2521
      %2523 = vrot.lane.b32.xlu0 %v2512, 124
      %v2524 = vpop.permute.xlu0 %2523
      %v2529 = vmul.f32 %v2417, %v2518
      %v2530 = vmul.f32 %v2418, %v2520
      %v2531 = vmul.f32 %v2419, %v2522
      %v2532 = vmul.f32 %v2420, %v2524
      %2537 = vrot.lane.b32.xlu0 %v2529, 5
      %v2538 = vpop.permute.xlu0 %2537
      %2539 = vrot.lane.b32.xlu0 %v2530, 5
      %v2540 = vpop.permute.xlu0 %2539
      %2541 = vrot.lane.b32.xlu0 %v2531, 5
      %v2542 = vpop.permute.xlu0 %2541
      %2543 = vrot.lane.b32.xlu0 %v2532, 5
      %v2544 = vpop.permute.xlu0 %2543
      %v2549 = vsub.f32 %v349, %v2538
      %v2550 = vsub.f32 %v350, %v2540
      %v2551 = vsub.f32 %v351, %v2542
      %v2552 = vsub.f32 %v352, %v2544
      %2553 = vset.pattern.permute.xlu0 4
      %2554 = vperm.xlu0 %2553, %v2509
      %v2555 = vpop.permute.xlu0 %2554
      %2557 = vset.pattern.permute.xlu0 4
      %2558 = vperm.xlu0 %2557, %v2510
      %v2559 = vpop.permute.xlu0 %2558
      %2561 = vset.pattern.permute.xlu0 4
      %2562 = vperm.xlu0 %2561, %v2511
      %v2563 = vpop.permute.xlu0 %2562
      %2565 = vset.pattern.permute.xlu0 4
      %2566 = vperm.xlu0 %2565, %v2512
      %v2567 = vpop.permute.xlu0 %2566
      %v2569 = vmul.f32 %v1134, %v2555
      %v2570 = vmul.f32 %v1153, %v2555
      %v2571 = vmul.f32 %v1136, %v2559
      %v2572 = vmul.f32 %v1155, %v2559
      %v2573 = vmul.f32 %v1139, %v2563
      %v2574 = vmul.f32 %v1158, %v2563
      %v2575 = vmul.f32 %v1141, %v2567
      %v2576 = vmul.f32 %v1160, %v2567
      %2578 = vset.pattern.permute.xlu0 5
      %2579 = vperm.xlu0 %2578, %v2549
      %v2580 = vpop.permute.xlu0 %2579
      %2583 = vset.pattern.permute.xlu0 5
      %2584 = vperm.xlu0 %2583, %v2550
      %v2585 = vpop.permute.xlu0 %2584
      %2588 = vset.pattern.permute.xlu0 5
      %2589 = vperm.xlu0 %2588, %v2551
      %v2590 = vpop.permute.xlu0 %2589
      %2593 = vset.pattern.permute.xlu0 5
      %2594 = vperm.xlu0 %2593, %v2552
      %v2595 = vpop.permute.xlu0 %2594
      %v2597 = vadd.f32 %v2569, %v2580
      %v2598 = vadd.f32 %v2570, %v2580
      %v2599 = vadd.f32 %v2571, %v2585
      %v2600 = vadd.f32 %v2572, %v2585
      %v2601 = vadd.f32 %v2573, %v2590
      %v2602 = vadd.f32 %v2574, %v2590
      %v2603 = vadd.f32 %v2575, %v2595
      %v2604 = vadd.f32 %v2576, %v2595
      %v2605 = vmax.f32 %v2597, 0.0
      %v2606 = vmax.f32 %v2598, 0.0
      %v2607 = vmax.f32 %v2599, 0.0
      %v2608 = vmax.f32 %v2600, 0.0
      %v2609 = vmax.f32 %v2601, 0.0
      %v2610 = vmax.f32 %v2602, 0.0
      %v2611 = vmax.f32 %v2603, 0.0
      %v2612 = vmax.f32 %v2604, 0.0
      %v2613 = vpack.c.bf16 %v2606, %v2605
      %v2614 = vpack.c.bf16 %v2608, %v2607
      %v2615 = vpack.c.bf16 %v2610, %v2609
      %v2616 = vpack.c.bf16 %v2612, %v2611
      %2617 = vst [vmem:[#allocation2 + $0x20] sm:$0xff] %v2613
      %2618 = vst [vmem:[#allocation2 + $0x60] sm:$0xff] %v2614
      %2619 = vst [vmem:[#allocation2 + $0xa0] sm:$0xff] %v2615
      %2620 = vst [vmem:[#allocation2 + $0xe0] sm:$0xff] %v2616
      %v2621 = vadd.f32 %v1172, %v1191
      %2622 = vadd.xlane.f32.xlu0 %v2621
      %v2623 = vpop.xlane.xlu0 %2622
      %v2624 = vadd.f32 %v1174, %v1193
      %2625 = vadd.xlane.f32.xlu0 %v2624
      %v2626 = vpop.xlane.xlu0 %2625
      %v2627 = vadd.f32 %v1177, %v1196
      %2628 = vadd.xlane.f32.xlu0 %v2627
      %v2629 = vpop.xlane.xlu0 %2628
      %v2630 = vadd.f32 %v1179, %v1198
      %2631 = vadd.xlane.f32.xlu0 %v2630
      %v2632 = vpop.xlane.xlu0 %2631
      %v2633 = vmul.f32 %v1172, %v1172
      %v2634 = vmul.f32 %v1191, %v1191
      %v2635 = vmul.f32 %v1174, %v1174
      %v2636 = vmul.f32 %v1193, %v1193
      %v2637 = vmul.f32 %v1177, %v1177
      %v2638 = vmul.f32 %v1196, %v1196
      %v2639 = vmul.f32 %v1179, %v1179
      %v2640 = vmul.f32 %v1198, %v1198
      %v2641 = vadd.f32 %v2633, %v2634
      %2642 = vadd.xlane.f32.xlu0 %v2641
      %v2643 = vpop.xlane.xlu0 %2642
      %v2644 = vadd.f32 %v2635, %v2636
      %2645 = vadd.xlane.f32.xlu0 %v2644
      %v2646 = vpop.xlane.xlu0 %2645
      %v2647 = vadd.f32 %v2637, %v2638
      %2648 = vadd.xlane.f32.xlu0 %v2647
      %v2649 = vpop.xlane.xlu0 %2648
      %v2650 = vadd.f32 %v2639, %v2640
      %2651 = vadd.xlane.f32.xlu0 %v2650
      %v2652 = vpop.xlane.xlu0 %2651
      %v2653 = vsel %vm480, %v2623, %v2643
      %v2654 = vsel %vm480, %v2626, %v2646
      %v2655 = vsel %vm480, %v2629, %v2649
      %v2656 = vsel %vm480, %v2632, %v2652
      %2657 = vmatpush.msra.mxu0 0.0
      %2658 = vmatpush.msra.mxu0 0.0
      %2659 = vmatpush.msra.mxu0 0.0
      %2660 = vmatpush.msra.mxu0 0.0
      %2661 = vmatpush.msra.mxu0 0.0
      %2662 = vmatpush.msra.mxu0 0.0
      %2663 = vmatpush.msra.mxu0 0.0
      %2664 = vmatpush.msra.mxu0 0.0
      %2665 = vmatpush.msra.mxu0 0.0
      %2666 = vmatpush.msra.mxu0 0.0
      %2667 = vmatpush.msra.mxu0 0.0
      %2668 = vmatpush.msra.mxu0 0.0
      %2669 = vmatpush.msra.mxu0 %v2656
      %2670 = vmatpush.msra.mxu0 %v2655
      %2671 = vmatpush.msra.mxu0 %v2654
      %2672 = vmatpush.msra.mxu0 %v2653
      %2673 = vmatmul.f32.gmra.mxu0 %v487
      %v2674 = vpop.f32.mrf.mxu0
      %v2675 = vadd.f32 0.0, %v2674
      %2676 = vmatmul.f32.gmra.mxu0 %v490
      %v2677 = vpop.f32.mrf.mxu0
      %v2678 = vadd.f32 0.0, %v2677
      %2679 = vmatmul.f32.gmra.mxu0 %v493
      %v2680 = vpop.f32.mrf.mxu0
      %v2681 = vadd.f32 0.0, %v2680
      %2682 = vmatmul.f32.gmra.mxu0 %v496
      %v2683 = vpop.f32.mrf.mxu0
      %v2684 = vadd.f32 0.0, %v2683
      %2685 = vdwg.mxu0
      %v2686 = vmul.f32 %v2675, 0.00048828125
      %v2687 = vmul.f32 %v2678, 0.00048828125
      %v2688 = vmul.f32 %v2681, 0.00048828125
      %v2689 = vmul.f32 %v2684, 0.00048828125
      %v2690 = vmul.f32 %v2686, %v2686
      %v2691 = vmul.f32 %v2687, %v2687
      %v2692 = vmul.f32 %v2688, %v2688
      %v2693 = vmul.f32 %v2689, %v2689
      %2698 = vrot.lane.b32.xlu0 %v2690, 1
      %v2699 = vpop.permute.xlu0 %2698
      %2700 = vrot.lane.b32.xlu0 %v2691, 1
      %v2701 = vpop.permute.xlu0 %2700
      %2702 = vrot.lane.b32.xlu0 %v2692, 1
      %v2703 = vpop.permute.xlu0 %2702
      %2704 = vrot.lane.b32.xlu0 %v2693, 1
      %v2705 = vpop.permute.xlu0 %2704
      %v2710 = vsub.f32 %v2686, %v2699
      %v2711 = vsub.f32 %v2687, %v2701
      %v2712 = vsub.f32 %v2688, %v2703
      %v2713 = vsub.f32 %v2689, %v2705
      %v2714 = vmax.f32 %v2710, 0.0
      %v2715 = vmax.f32 %v2711, 0.0
      %v2716 = vmax.f32 %v2712, 0.0
      %v2717 = vmax.f32 %v2713, 0.0
      %v2718 = vadd.f32 %v2714, 1e-05
      %v2719 = vadd.f32 %v2715, 1e-05
      %v2720 = vadd.f32 %v2716, 1e-05
      %v2721 = vadd.f32 %v2717, 1e-05
      %v2722 = vrsqrt.pop %v2718
      %v2723 = vmul.f32 %v2722, %v2718
      %v2724 = vmul.f32 %v2723, %v2722
      %v2725 = vmul.f32 0.5, %v2724
      %v2726 = vsub.f32 1.5, %v2725
      %v2727 = vmul.f32 %v2722, %v2726
      %vm2728 = vweird.f32 %v2718
      %vm2729 = vweird.f32 %v2722
      %vm2730 = vmor %vm2728, %vm2729
      %v2731 = vsel %vm2730, %v2722, %v2727
      %v2732 = vrsqrt.pop %v2719
      %v2733 = vmul.f32 %v2732, %v2719
      %v2734 = vmul.f32 %v2733, %v2732
      %v2735 = vmul.f32 0.5, %v2734
      %v2736 = vsub.f32 1.5, %v2735
      %v2737 = vmul.f32 %v2732, %v2736
      %vm2738 = vweird.f32 %v2719
      %vm2739 = vweird.f32 %v2732
      %vm2740 = vmor %vm2738, %vm2739
      %v2741 = vsel %vm2740, %v2732, %v2737
      %v2742 = vrsqrt.pop %v2720
      %v2743 = vmul.f32 %v2742, %v2720
      %v2744 = vmul.f32 %v2743, %v2742
      %v2745 = vmul.f32 0.5, %v2744
      %v2746 = vsub.f32 1.5, %v2745
      %v2747 = vmul.f32 %v2742, %v2746
      %vm2748 = vweird.f32 %v2720
      %vm2749 = vweird.f32 %v2742
      %vm2750 = vmor %vm2748, %vm2749
      %v2751 = vsel %vm2750, %v2742, %v2747
      %v2752 = vrsqrt.pop %v2721
      %v2753 = vmul.f32 %v2752, %v2721
      %v2754 = vmul.f32 %v2753, %v2752
      %v2755 = vmul.f32 0.5, %v2754
      %v2756 = vsub.f32 1.5, %v2755
      %v2757 = vmul.f32 %v2752, %v2756
      %vm2758 = vweird.f32 %v2721
      %vm2759 = vweird.f32 %v2752
      %vm2760 = vmor %vm2758, %vm2759
      %v2761 = vsel %vm2760, %v2752, %v2757
      %2766 = vrot.lane.b32.xlu0 %v2731, 3
      %v2767 = vpop.permute.xlu0 %2766
      %2768 = vrot.lane.b32.xlu0 %v2741, 3
      %v2769 = vpop.permute.xlu0 %2768
      %2770 = vrot.lane.b32.xlu0 %v2751, 3
      %v2771 = vpop.permute.xlu0 %2770
      %2772 = vrot.lane.b32.xlu0 %v2761, 3
      %v2773 = vpop.permute.xlu0 %2772
      %v2778 = vmul.f32 %v349, %v2767
      %v2779 = vmul.f32 %v350, %v2769
      %v2780 = vmul.f32 %v351, %v2771
      %v2781 = vmul.f32 %v352, %v2773
      %2786 = vrot.lane.b32.xlu0 %v2778, 124
      %v2787 = vpop.permute.xlu0 %2786
      %2788 = vrot.lane.b32.xlu0 %v2779, 124
      %v2789 = vpop.permute.xlu0 %2788
      %2790 = vrot.lane.b32.xlu0 %v2780, 124
      %v2791 = vpop.permute.xlu0 %2790
      %2792 = vrot.lane.b32.xlu0 %v2781, 124
      %v2793 = vpop.permute.xlu0 %2792
      %v2798 = vmul.f32 %v2686, %v2787
      %v2799 = vmul.f32 %v2687, %v2789
      %v2800 = vmul.f32 %v2688, %v2791
      %v2801 = vmul.f32 %v2689, %v2793
      %2806 = vrot.lane.b32.xlu0 %v2798, 5
      %v2807 = vpop.permute.xlu0 %2806
      %2808 = vrot.lane.b32.xlu0 %v2799, 5
      %v2809 = vpop.permute.xlu0 %2808
      %2810 = vrot.lane.b32.xlu0 %v2800, 5
      %v2811 = vpop.permute.xlu0 %2810
      %2812 = vrot.lane.b32.xlu0 %v2801, 5
      %v2813 = vpop.permute.xlu0 %2812
      %v2818 = vsub.f32 %v349, %v2807
      %v2819 = vsub.f32 %v350, %v2809
      %v2820 = vsub.f32 %v351, %v2811
      %v2821 = vsub.f32 %v352, %v2813
      %2822 = vset.pattern.permute.xlu0 4
      %2823 = vperm.xlu0 %2822, %v2778
      %v2824 = vpop.permute.xlu0 %2823
      %2826 = vset.pattern.permute.xlu0 4
      %2827 = vperm.xlu0 %2826, %v2779
      %v2828 = vpop.permute.xlu0 %2827
      %2830 = vset.pattern.permute.xlu0 4
      %2831 = vperm.xlu0 %2830, %v2780
      %v2832 = vpop.permute.xlu0 %2831
      %2834 = vset.pattern.permute.xlu0 4
      %2835 = vperm.xlu0 %2834, %v2781
      %v2836 = vpop.permute.xlu0 %2835
      %v2838 = vmul.f32 %v1172, %v2824
      %v2839 = vmul.f32 %v1191, %v2824
      %v2840 = vmul.f32 %v1174, %v2828
      %v2841 = vmul.f32 %v1193, %v2828
      %v2842 = vmul.f32 %v1177, %v2832
      %v2843 = vmul.f32 %v1196, %v2832
      %v2844 = vmul.f32 %v1179, %v2836
      %v2845 = vmul.f32 %v1198, %v2836
      %2847 = vset.pattern.permute.xlu0 5
      %2848 = vperm.xlu0 %2847, %v2818
      %v2849 = vpop.permute.xlu0 %2848
      %2852 = vset.pattern.permute.xlu0 5
      %2853 = vperm.xlu0 %2852, %v2819
      %v2854 = vpop.permute.xlu0 %2853
      %2857 = vset.pattern.permute.xlu0 5
      %2858 = vperm.xlu0 %2857, %v2820
      %v2859 = vpop.permute.xlu0 %2858
      %2862 = vset.pattern.permute.xlu0 5
      %2863 = vperm.xlu0 %2862, %v2821
      %v2864 = vpop.permute.xlu0 %2863
      %v2866 = vadd.f32 %v2838, %v2849
      %v2867 = vadd.f32 %v2839, %v2849
      %v2868 = vadd.f32 %v2840, %v2854
      %v2869 = vadd.f32 %v2841, %v2854
      %v2870 = vadd.f32 %v2842, %v2859
      %v2871 = vadd.f32 %v2843, %v2859
      %v2872 = vadd.f32 %v2844, %v2864
      %v2873 = vadd.f32 %v2845, %v2864
      %v2874 = vmax.f32 %v2866, 0.0
      %v2875 = vmax.f32 %v2867, 0.0
      %v2876 = vmax.f32 %v2868, 0.0
      %v2877 = vmax.f32 %v2869, 0.0
      %v2878 = vmax.f32 %v2870, 0.0
      %v2879 = vmax.f32 %v2871, 0.0
      %v2880 = vmax.f32 %v2872, 0.0
      %v2881 = vmax.f32 %v2873, 0.0
      %v2882 = vpack.c.bf16 %v2875, %v2874
      %v2883 = vpack.c.bf16 %v2877, %v2876
      %v2884 = vpack.c.bf16 %v2879, %v2878
      %v2885 = vpack.c.bf16 %v2881, %v2880
      %2886 = vst [vmem:[#allocation2 + $0x28] sm:$0xff] %v2882
      %2887 = vst [vmem:[#allocation2 + $0x68] sm:$0xff] %v2883
      %2888 = vst [vmem:[#allocation2 + $0xa8] sm:$0xff] %v2884
      %2889 = vst [vmem:[#allocation2 + $0xe8] sm:$0xff] %v2885
      %v2890 = vadd.f32 %v1210, %v1229
      %2891 = vadd.xlane.f32.xlu0 %v2890
      %v2892 = vpop.xlane.xlu0 %2891
      %v2893 = vadd.f32 %v1212, %v1231
      %2894 = vadd.xlane.f32.xlu0 %v2893
      %v2895 = vpop.xlane.xlu0 %2894
      %v2896 = vadd.f32 %v1215, %v1234
      %2897 = vadd.xlane.f32.xlu0 %v2896
      %v2898 = vpop.xlane.xlu0 %2897
      %v2899 = vadd.f32 %v1217, %v1236
      %2900 = vadd.xlane.f32.xlu0 %v2899
      %v2901 = vpop.xlane.xlu0 %2900
      %v2902 = vmul.f32 %v1210, %v1210
      %v2903 = vmul.f32 %v1229, %v1229
      %v2904 = vmul.f32 %v1212, %v1212
      %v2905 = vmul.f32 %v1231, %v1231
      %v2906 = vmul.f32 %v1215, %v1215
      %v2907 = vmul.f32 %v1234, %v1234
      %v2908 = vmul.f32 %v1217, %v1217
      %v2909 = vmul.f32 %v1236, %v1236
      %v2910 = vadd.f32 %v2902, %v2903
      %2911 = vadd.xlane.f32.xlu0 %v2910
      %v2912 = vpop.xlane.xlu0 %2911
      %v2913 = vadd.f32 %v2904, %v2905
      %2914 = vadd.xlane.f32.xlu0 %v2913
      %v2915 = vpop.xlane.xlu0 %2914
      %v2916 = vadd.f32 %v2906, %v2907
      %2917 = vadd.xlane.f32.xlu0 %v2916
      %v2918 = vpop.xlane.xlu0 %2917
      %v2919 = vadd.f32 %v2908, %v2909
      %2920 = vadd.xlane.f32.xlu0 %v2919
      %v2921 = vpop.xlane.xlu0 %2920
      %v2922 = vsel %vm480, %v2892, %v2912
      %v2923 = vsel %vm480, %v2895, %v2915
      %v2924 = vsel %vm480, %v2898, %v2918
      %v2925 = vsel %vm480, %v2901, %v2921
      %2926 = vmatpush.msra.mxu0 0.0
      %2927 = vmatpush.msra.mxu0 0.0
      %2928 = vmatpush.msra.mxu0 0.0
      %2929 = vmatpush.msra.mxu0 0.0
      %2930 = vmatpush.msra.mxu0 0.0
      %2931 = vmatpush.msra.mxu0 0.0
      %2932 = vmatpush.msra.mxu0 0.0
      %2933 = vmatpush.msra.mxu0 0.0
      %2934 = vmatpush.msra.mxu0 0.0
      %2935 = vmatpush.msra.mxu0 0.0
      %2936 = vmatpush.msra.mxu0 0.0
      %2937 = vmatpush.msra.mxu0 0.0
      %2938 = vmatpush.msra.mxu0 %v2925
      %2939 = vmatpush.msra.mxu0 %v2924
      %2940 = vmatpush.msra.mxu0 %v2923
      %2941 = vmatpush.msra.mxu0 %v2922
      %2942 = vmatmul.f32.gmra.mxu0 %v487
      %v2943 = vpop.f32.mrf.mxu0
      %v2944 = vadd.f32 0.0, %v2943
      %2945 = vmatmul.f32.gmra.mxu0 %v490
      %v2946 = vpop.f32.mrf.mxu0
      %v2947 = vadd.f32 0.0, %v2946
      %2948 = vmatmul.f32.gmra.mxu0 %v493
      %v2949 = vpop.f32.mrf.mxu0
      %v2950 = vadd.f32 0.0, %v2949
      %2951 = vmatmul.f32.gmra.mxu0 %v496
      %v2952 = vpop.f32.mrf.mxu0
      %v2953 = vadd.f32 0.0, %v2952
      %2954 = vdwg.mxu0
      %v2955 = vmul.f32 %v2944, 0.00048828125
      %v2956 = vmul.f32 %v2947, 0.00048828125
      %v2957 = vmul.f32 %v2950, 0.00048828125
      %v2958 = vmul.f32 %v2953, 0.00048828125
      %v2959 = vmul.f32 %v2955, %v2955
      %v2960 = vmul.f32 %v2956, %v2956
      %v2961 = vmul.f32 %v2957, %v2957
      %v2962 = vmul.f32 %v2958, %v2958
      %2967 = vrot.lane.b32.xlu0 %v2959, 1
      %v2968 = vpop.permute.xlu0 %2967
      %2969 = vrot.lane.b32.xlu0 %v2960, 1
      %v2970 = vpop.permute.xlu0 %2969
      %2971 = vrot.lane.b32.xlu0 %v2961, 1
      %v2972 = vpop.permute.xlu0 %2971
      %2973 = vrot.lane.b32.xlu0 %v2962, 1
      %v2974 = vpop.permute.xlu0 %2973
      %v2979 = vsub.f32 %v2955, %v2968
      %v2980 = vsub.f32 %v2956, %v2970
      %v2981 = vsub.f32 %v2957, %v2972
      %v2982 = vsub.f32 %v2958, %v2974
      %v2983 = vmax.f32 %v2979, 0.0
      %v2984 = vmax.f32 %v2980, 0.0
      %v2985 = vmax.f32 %v2981, 0.0
      %v2986 = vmax.f32 %v2982, 0.0
      %v2987 = vadd.f32 %v2983, 1e-05
      %v2988 = vadd.f32 %v2984, 1e-05
      %v2989 = vadd.f32 %v2985, 1e-05
      %v2990 = vadd.f32 %v2986, 1e-05
      %v2991 = vrsqrt.pop %v2987
      %v2992 = vmul.f32 %v2991, %v2987
      %v2993 = vmul.f32 %v2992, %v2991
      %v2994 = vmul.f32 0.5, %v2993
      %v2995 = vsub.f32 1.5, %v2994
      %v2996 = vmul.f32 %v2991, %v2995
      %vm2997 = vweird.f32 %v2987
      %vm2998 = vweird.f32 %v2991
      %vm2999 = vmor %vm2997, %vm2998
      %v3000 = vsel %vm2999, %v2991, %v2996
      %v3001 = vrsqrt.pop %v2988
      %v3002 = vmul.f32 %v3001, %v2988
      %v3003 = vmul.f32 %v3002, %v3001
      %v3004 = vmul.f32 0.5, %v3003
      %v3005 = vsub.f32 1.5, %v3004
      %v3006 = vmul.f32 %v3001, %v3005
      %vm3007 = vweird.f32 %v2988
      %vm3008 = vweird.f32 %v3001
      %vm3009 = vmor %vm3007, %vm3008
      %v3010 = vsel %vm3009, %v3001, %v3006
      %v3011 = vrsqrt.pop %v2989
      %v3012 = vmul.f32 %v3011, %v2989
      %v3013 = vmul.f32 %v3012, %v3011
      %v3014 = vmul.f32 0.5, %v3013
      %v3015 = vsub.f32 1.5, %v3014
      %v3016 = vmul.f32 %v3011, %v3015
      %vm3017 = vweird.f32 %v2989
      %vm3018 = vweird.f32 %v3011
      %vm3019 = vmor %vm3017, %vm3018
      %v3020 = vsel %vm3019, %v3011, %v3016
      %v3021 = vrsqrt.pop %v2990
      %v3022 = vmul.f32 %v3021, %v2990
      %v3023 = vmul.f32 %v3022, %v3021
      %v3024 = vmul.f32 0.5, %v3023
      %v3025 = vsub.f32 1.5, %v3024
      %v3026 = vmul.f32 %v3021, %v3025
      %vm3027 = vweird.f32 %v2990
      %vm3028 = vweird.f32 %v3021
      %vm3029 = vmor %vm3027, %vm3028
      %v3030 = vsel %vm3029, %v3021, %v3026
      %3035 = vrot.lane.b32.xlu0 %v3000, 3
      %v3036 = vpop.permute.xlu0 %3035
      %3037 = vrot.lane.b32.xlu0 %v3010, 3
      %v3038 = vpop.permute.xlu0 %3037
      %3039 = vrot.lane.b32.xlu0 %v3020, 3
      %v3040 = vpop.permute.xlu0 %3039
      %3041 = vrot.lane.b32.xlu0 %v3030, 3
      %v3042 = vpop.permute.xlu0 %3041
      %v3047 = vmul.f32 %v349, %v3036
      %v3048 = vmul.f32 %v350, %v3038
      %v3049 = vmul.f32 %v351, %v3040
      %v3050 = vmul.f32 %v352, %v3042
      %3055 = vrot.lane.b32.xlu0 %v3047, 124
      %v3056 = vpop.permute.xlu0 %3055
      %3057 = vrot.lane.b32.xlu0 %v3048, 124
      %v3058 = vpop.permute.xlu0 %3057
      %3059 = vrot.lane.b32.xlu0 %v3049, 124
      %v3060 = vpop.permute.xlu0 %3059
      %3061 = vrot.lane.b32.xlu0 %v3050, 124
      %v3062 = vpop.permute.xlu0 %3061
      %v3067 = vmul.f32 %v2955, %v3056
      %v3068 = vmul.f32 %v2956, %v3058
      %v3069 = vmul.f32 %v2957, %v3060
      %v3070 = vmul.f32 %v2958, %v3062
      %3075 = vrot.lane.b32.xlu0 %v3067, 5
      %v3076 = vpop.permute.xlu0 %3075
      %3077 = vrot.lane.b32.xlu0 %v3068, 5
      %v3078 = vpop.permute.xlu0 %3077
      %3079 = vrot.lane.b32.xlu0 %v3069, 5
      %v3080 = vpop.permute.xlu0 %3079
      %3081 = vrot.lane.b32.xlu0 %v3070, 5
      %v3082 = vpop.permute.xlu0 %3081
      %v3087 = vsub.f32 %v349, %v3076
      %v3088 = vsub.f32 %v350, %v3078
      %v3089 = vsub.f32 %v351, %v3080
      %v3090 = vsub.f32 %v352, %v3082
      %3091 = vset.pattern.permute.xlu0 4
      %3092 = vperm.xlu0 %3091, %v3047
      %v3093 = vpop.permute.xlu0 %3092
      %3095 = vset.pattern.permute.xlu0 4
      %3096 = vperm.xlu0 %3095, %v3048
      %v3097 = vpop.permute.xlu0 %3096
      %3099 = vset.pattern.permute.xlu0 4
      %3100 = vperm.xlu0 %3099, %v3049
      %v3101 = vpop.permute.xlu0 %3100
      %3103 = vset.pattern.permute.xlu0 4
      %3104 = vperm.xlu0 %3103, %v3050
      %v3105 = vpop.permute.xlu0 %3104
      %v3107 = vmul.f32 %v1210, %v3093
      %v3108 = vmul.f32 %v1229, %v3093
      %v3109 = vmul.f32 %v1212, %v3097
      %v3110 = vmul.f32 %v1231, %v3097
      %v3111 = vmul.f32 %v1215, %v3101
      %v3112 = vmul.f32 %v1234, %v3101
      %v3113 = vmul.f32 %v1217, %v3105
      %v3114 = vmul.f32 %v1236, %v3105
      %3116 = vset.pattern.permute.xlu0 5
      %3117 = vperm.xlu0 %3116, %v3087
      %v3118 = vpop.permute.xlu0 %3117
      %3121 = vset.pattern.permute.xlu0 5
      %3122 = vperm.xlu0 %3121, %v3088
      %v3123 = vpop.permute.xlu0 %3122
      %3126 = vset.pattern.permute.xlu0 5
      %3127 = vperm.xlu0 %3126, %v3089
      %v3128 = vpop.permute.xlu0 %3127
      %3131 = vset.pattern.permute.xlu0 5
      %3132 = vperm.xlu0 %3131, %v3090
      %v3133 = vpop.permute.xlu0 %3132
      %v3135 = vadd.f32 %v3107, %v3118
      %v3136 = vadd.f32 %v3108, %v3118
      %v3137 = vadd.f32 %v3109, %v3123
      %v3138 = vadd.f32 %v3110, %v3123
      %v3139 = vadd.f32 %v3111, %v3128
      %v3140 = vadd.f32 %v3112, %v3128
      %v3141 = vadd.f32 %v3113, %v3133
      %v3142 = vadd.f32 %v3114, %v3133
      %v3143 = vmax.f32 %v3135, 0.0
      %v3144 = vmax.f32 %v3136, 0.0
      %v3145 = vmax.f32 %v3137, 0.0
      %v3146 = vmax.f32 %v3138, 0.0
      %v3147 = vmax.f32 %v3139, 0.0
      %v3148 = vmax.f32 %v3140, 0.0
      %v3149 = vmax.f32 %v3141, 0.0
      %v3150 = vmax.f32 %v3142, 0.0
      %v3151 = vpack.c.bf16 %v3144, %v3143
      %v3152 = vpack.c.bf16 %v3146, %v3145
      %v3153 = vpack.c.bf16 %v3148, %v3147
      %v3154 = vpack.c.bf16 %v3150, %v3149
      %3155 = vst [vmem:[#allocation2 + $0x30] sm:$0xff] %v3151
      %3156 = vst [vmem:[#allocation2 + $0x70] sm:$0xff] %v3152
      %3157 = vst [vmem:[#allocation2 + $0xb0] sm:$0xff] %v3153
      %3158 = vst [vmem:[#allocation2 + $0xf0] sm:$0xff] %v3154
      %v3159 = vadd.f32 %v1248, %v1267
      %3160 = vadd.xlane.f32.xlu0 %v3159
      %v3161 = vpop.xlane.xlu0 %3160
      %v3162 = vadd.f32 %v1250, %v1269
      %3163 = vadd.xlane.f32.xlu0 %v3162
      %v3164 = vpop.xlane.xlu0 %3163
      %v3165 = vadd.f32 %v1253, %v1272
      %3166 = vadd.xlane.f32.xlu0 %v3165
      %v3167 = vpop.xlane.xlu0 %3166
      %v3168 = vadd.f32 %v1255, %v1274
      %3169 = vadd.xlane.f32.xlu0 %v3168
      %v3170 = vpop.xlane.xlu0 %3169
      %v3171 = vmul.f32 %v1248, %v1248
      %v3172 = vmul.f32 %v1267, %v1267
      %v3173 = vmul.f32 %v1250, %v1250
      %v3174 = vmul.f32 %v1269, %v1269
      %v3175 = vmul.f32 %v1253, %v1253
      %v3176 = vmul.f32 %v1272, %v1272
      %v3177 = vmul.f32 %v1255, %v1255
      %v3178 = vmul.f32 %v1274, %v1274
      %v3179 = vadd.f32 %v3171, %v3172
      %3180 = vadd.xlane.f32.xlu0 %v3179
      %v3181 = vpop.xlane.xlu0 %3180
      %v3182 = vadd.f32 %v3173, %v3174
      %3183 = vadd.xlane.f32.xlu0 %v3182
      %v3184 = vpop.xlane.xlu0 %3183
      %v3185 = vadd.f32 %v3175, %v3176
      %3186 = vadd.xlane.f32.xlu0 %v3185
      %v3187 = vpop.xlane.xlu0 %3186
      %v3188 = vadd.f32 %v3177, %v3178
      %3189 = vadd.xlane.f32.xlu0 %v3188
      %v3190 = vpop.xlane.xlu0 %3189
      %v3191 = vsel %vm480, %v3161, %v3181
      %v3192 = vsel %vm480, %v3164, %v3184
      %v3193 = vsel %vm480, %v3167, %v3187
      %v3194 = vsel %vm480, %v3170, %v3190
      %3195 = vmatpush.msra.mxu0 0.0
      %3196 = vmatpush.msra.mxu0 0.0
      %3197 = vmatpush.msra.mxu0 0.0
      %3198 = vmatpush.msra.mxu0 0.0
      %3199 = vmatpush.msra.mxu0 0.0
      %3200 = vmatpush.msra.mxu0 0.0
      %3201 = vmatpush.msra.mxu0 0.0
      %3202 = vmatpush.msra.mxu0 0.0
      %3203 = vmatpush.msra.mxu0 0.0
      %3204 = vmatpush.msra.mxu0 0.0
      %3205 = vmatpush.msra.mxu0 0.0
      %3206 = vmatpush.msra.mxu0 0.0
      %3207 = vmatpush.msra.mxu0 %v3194
      %3208 = vmatpush.msra.mxu0 %v3193
      %3209 = vmatpush.msra.mxu0 %v3192
      %3210 = vmatpush.msra.mxu0 %v3191
      %3211 = vmatmul.f32.gmra.mxu0 %v487
      %v3212 = vpop.f32.mrf.mxu0
      %v3213 = vadd.f32 0.0, %v3212
      %3214 = vmatmul.f32.gmra.mxu0 %v490
      %v3215 = vpop.f32.mrf.mxu0
      %v3216 = vadd.f32 0.0, %v3215
      %3217 = vmatmul.f32.gmra.mxu0 %v493
      %v3218 = vpop.f32.mrf.mxu0
      %v3219 = vadd.f32 0.0, %v3218
      %3220 = vmatmul.f32.gmra.mxu0 %v496
      %v3221 = vpop.f32.mrf.mxu0
      %v3222 = vadd.f32 0.0, %v3221
      %3223 = vdwg.mxu0
      %v3224 = vmul.f32 %v3213, 0.00048828125
      %v3225 = vmul.f32 %v3216, 0.00048828125
      %v3226 = vmul.f32 %v3219, 0.00048828125
      %v3227 = vmul.f32 %v3222, 0.00048828125
      %v3228 = vmul.f32 %v3224, %v3224
      %v3229 = vmul.f32 %v3225, %v3225
      %v3230 = vmul.f32 %v3226, %v3226
      %v3231 = vmul.f32 %v3227, %v3227
      %3236 = vrot.lane.b32.xlu0 %v3228, 1
      %v3237 = vpop.permute.xlu0 %3236
      %3238 = vrot.lane.b32.xlu0 %v3229, 1
      %v3239 = vpop.permute.xlu0 %3238
      %3240 = vrot.lane.b32.xlu0 %v3230, 1
      %v3241 = vpop.permute.xlu0 %3240
      %3242 = vrot.lane.b32.xlu0 %v3231, 1
      %v3243 = vpop.permute.xlu0 %3242
      %v3248 = vsub.f32 %v3224, %v3237
      %v3249 = vsub.f32 %v3225, %v3239
      %v3250 = vsub.f32 %v3226, %v3241
      %v3251 = vsub.f32 %v3227, %v3243
      %v3252 = vmax.f32 %v3248, 0.0
      %v3253 = vmax.f32 %v3249, 0.0
      %v3254 = vmax.f32 %v3250, 0.0
      %v3255 = vmax.f32 %v3251, 0.0
      %v3256 = vadd.f32 %v3252, 1e-05
      %v3257 = vadd.f32 %v3253, 1e-05
      %v3258 = vadd.f32 %v3254, 1e-05
      %v3259 = vadd.f32 %v3255, 1e-05
      %v3260 = vrsqrt.pop %v3256
      %v3261 = vmul.f32 %v3260, %v3256
      %v3262 = vmul.f32 %v3261, %v3260
      %v3263 = vmul.f32 0.5, %v3262
      %v3264 = vsub.f32 1.5, %v3263
      %v3265 = vmul.f32 %v3260, %v3264
      %vm3266 = vweird.f32 %v3256
      %vm3267 = vweird.f32 %v3260
      %vm3268 = vmor %vm3266, %vm3267
      %v3269 = vsel %vm3268, %v3260, %v3265
      %v3270 = vrsqrt.pop %v3257
      %v3271 = vmul.f32 %v3270, %v3257
      %v3272 = vmul.f32 %v3271, %v3270
      %v3273 = vmul.f32 0.5, %v3272
      %v3274 = vsub.f32 1.5, %v3273
      %v3275 = vmul.f32 %v3270, %v3274
      %vm3276 = vweird.f32 %v3257
      %vm3277 = vweird.f32 %v3270
      %vm3278 = vmor %vm3276, %vm3277
      %v3279 = vsel %vm3278, %v3270, %v3275
      %v3280 = vrsqrt.pop %v3258
      %v3281 = vmul.f32 %v3280, %v3258
      %v3282 = vmul.f32 %v3281, %v3280
      %v3283 = vmul.f32 0.5, %v3282
      %v3284 = vsub.f32 1.5, %v3283
      %v3285 = vmul.f32 %v3280, %v3284
      %vm3286 = vweird.f32 %v3258
      %vm3287 = vweird.f32 %v3280
      %vm3288 = vmor %vm3286, %vm3287
      %v3289 = vsel %vm3288, %v3280, %v3285
      %v3290 = vrsqrt.pop %v3259
      %v3291 = vmul.f32 %v3290, %v3259
      %v3292 = vmul.f32 %v3291, %v3290
      %v3293 = vmul.f32 0.5, %v3292
      %v3294 = vsub.f32 1.5, %v3293
      %v3295 = vmul.f32 %v3290, %v3294
      %vm3296 = vweird.f32 %v3259
      %vm3297 = vweird.f32 %v3290
      %vm3298 = vmor %vm3296, %vm3297
      %v3299 = vsel %vm3298, %v3290, %v3295
      %3304 = vrot.lane.b32.xlu0 %v3269, 3
      %v3305 = vpop.permute.xlu0 %3304
      %3306 = vrot.lane.b32.xlu0 %v3279, 3
      %v3307 = vpop.permute.xlu0 %3306
      %3308 = vrot.lane.b32.xlu0 %v3289, 3
      %v3309 = vpop.permute.xlu0 %3308
      %3310 = vrot.lane.b32.xlu0 %v3299, 3
      %v3311 = vpop.permute.xlu0 %3310
      %v3316 = vmul.f32 %v349, %v3305
      %v3317 = vmul.f32 %v350, %v3307
      %v3318 = vmul.f32 %v351, %v3309
      %v3319 = vmul.f32 %v352, %v3311
      %3324 = vrot.lane.b32.xlu0 %v3316, 124
      %v3325 = vpop.permute.xlu0 %3324
      %3326 = vrot.lane.b32.xlu0 %v3317, 124
      %v3327 = vpop.permute.xlu0 %3326
      %3328 = vrot.lane.b32.xlu0 %v3318, 124
      %v3329 = vpop.permute.xlu0 %3328
      %3330 = vrot.lane.b32.xlu0 %v3319, 124
      %v3331 = vpop.permute.xlu0 %3330
      %v3336 = vmul.f32 %v3224, %v3325
      %v3337 = vmul.f32 %v3225, %v3327
      %v3338 = vmul.f32 %v3226, %v3329
      %v3339 = vmul.f32 %v3227, %v3331
      %3344 = vrot.lane.b32.xlu0 %v3336, 5
      %v3345 = vpop.permute.xlu0 %3344
      %3346 = vrot.lane.b32.xlu0 %v3337, 5
      %v3347 = vpop.permute.xlu0 %3346
      %3348 = vrot.lane.b32.xlu0 %v3338, 5
      %v3349 = vpop.permute.xlu0 %3348
      %3350 = vrot.lane.b32.xlu0 %v3339, 5
      %v3351 = vpop.permute.xlu0 %3350
      %v3356 = vsub.f32 %v349, %v3345
      %v3357 = vsub.f32 %v350, %v3347
      %v3358 = vsub.f32 %v351, %v3349
      %v3359 = vsub.f32 %v352, %v3351
      %3360 = vset.pattern.permute.xlu0 4
      %3361 = vperm.xlu0 %3360, %v3316
      %v3362 = vpop.permute.xlu0 %3361
      %3364 = vset.pattern.permute.xlu0 4
      %3365 = vperm.xlu0 %3364, %v3317
      %v3366 = vpop.permute.xlu0 %3365
      %3368 = vset.pattern.permute.xlu0 4
      %3369 = vperm.xlu0 %3368, %v3318
      %v3370 = vpop.permute.xlu0 %3369
      %3372 = vset.pattern.permute.xlu0 4
      %3373 = vperm.xlu0 %3372, %v3319
      %v3374 = vpop.permute.xlu0 %3373
      %v3376 = vmul.f32 %v1248, %v3362
      %v3377 = vmul.f32 %v1267, %v3362
      %v3378 = vmul.f32 %v1250, %v3366
      %v3379 = vmul.f32 %v1269, %v3366
      %v3380 = vmul.f32 %v1253, %v3370
      %v3381 = vmul.f32 %v1272, %v3370
      %v3382 = vmul.f32 %v1255, %v3374
      %v3383 = vmul.f32 %v1274, %v3374
      %3385 = vset.pattern.permute.xlu0 5
      %3386 = vperm.xlu0 %3385, %v3356
      %v3387 = vpop.permute.xlu0 %3386
      %3390 = vset.pattern.permute.xlu0 5
      %3391 = vperm.xlu0 %3390, %v3357
      %v3392 = vpop.permute.xlu0 %3391
      %3395 = vset.pattern.permute.xlu0 5
      %3396 = vperm.xlu0 %3395, %v3358
      %v3397 = vpop.permute.xlu0 %3396
      %3400 = vset.pattern.permute.xlu0 5
      %3401 = vperm.xlu0 %3400, %v3359
      %v3402 = vpop.permute.xlu0 %3401
      %v3404 = vadd.f32 %v3376, %v3387
      %v3405 = vadd.f32 %v3377, %v3387
      %v3406 = vadd.f32 %v3378, %v3392
      %v3407 = vadd.f32 %v3379, %v3392
      %v3408 = vadd.f32 %v3380, %v3397
      %v3409 = vadd.f32 %v3381, %v3397
      %v3410 = vadd.f32 %v3382, %v3402
      %v3411 = vadd.f32 %v3383, %v3402
      %v3412 = vmax.f32 %v3404, 0.0
      %v3413 = vmax.f32 %v3405, 0.0
      %v3414 = vmax.f32 %v3406, 0.0
      %v3415 = vmax.f32 %v3407, 0.0
      %v3416 = vmax.f32 %v3408, 0.0
      %v3417 = vmax.f32 %v3409, 0.0
      %v3418 = vmax.f32 %v3410, 0.0
      %v3419 = vmax.f32 %v3411, 0.0
      %v3420 = vpack.c.bf16 %v3413, %v3412
      %v3421 = vpack.c.bf16 %v3415, %v3414
      %v3422 = vpack.c.bf16 %v3417, %v3416
      %v3423 = vpack.c.bf16 %v3419, %v3418
      %3424 = vst [vmem:[#allocation2 + $0x38] sm:$0xff] %v3420
      %3425 = vst [vmem:[#allocation2 + $0x78] sm:$0xff] %v3421
      %3426 = vst [vmem:[#allocation2 + $0xb8] sm:$0xff] %v3422
      %3427 = vst [vmem:[#allocation2 + $0xf8] sm:$0xff] %v3423
      %v3428 = vld [vmem:[%s3 + $0x10] sm:$0xf]
      %v3429 = vld [vmem:[%s3 + $0x14] sm:$0xf]
      %v3430 = vld [vmem:[%s3 + $0x18] sm:$0xf]
      %v3431 = vld [vmem:[%s3 + $0x1c] sm:$0xf]
      %v3432 = vld [vmem:[%s3 + $0x20] sm:$0xf]
      %v3433 = vld [vmem:[%s3 + $0x24] sm:$0xf]
      %v3434 = vld [vmem:[%s3 + $0x28] sm:$0xf]
      %v3435 = vld [vmem:[%s3 + $0x2c] sm:$0xf]
      %v3436 = vld [vmem:[#allocation2] sm:$0xff]
      %v3437 = vld [vmem:[#allocation2 + $0x8] sm:$0xff]
      %v3438 = vld [vmem:[#allocation2 + $0x10] sm:$0xff]
      %v3439 = vld [vmem:[#allocation2 + $0x18] sm:$0xff]
      %v3440 = vld [vmem:[#allocation2 + $0x20] sm:$0xff]
      %v3441 = vld [vmem:[#allocation2 + $0x28] sm:$0xff]
      %v3442 = vld [vmem:[#allocation2 + $0x30] sm:$0xff]
      %v3443 = vld [vmem:[#allocation2 + $0x38] sm:$0xff]
      %v3444 = vld [vmem:[#allocation2 + $0x40] sm:$0xff]
      %v3445 = vld [vmem:[#allocation2 + $0x48] sm:$0xff]
      %v3446 = vld [vmem:[#allocation2 + $0x50] sm:$0xff]
      %v3447 = vld [vmem:[#allocation2 + $0x58] sm:$0xff]
      %v3448 = vld [vmem:[#allocation2 + $0x60] sm:$0xff]
      %v3449 = vld [vmem:[#allocation2 + $0x68] sm:$0xff]
      %v3450 = vld [vmem:[#allocation2 + $0x70] sm:$0xff]
      %v3451 = vld [vmem:[#allocation2 + $0x78] sm:$0xff]
      %v3452 = vld [vmem:[#allocation2 + $0x80] sm:$0xff]
      %v3453 = vld [vmem:[#allocation2 + $0x88] sm:$0xff]
      %v3454 = vld [vmem:[#allocation2 + $0x90] sm:$0xff]
      %v3455 = vld [vmem:[#allocation2 + $0x98] sm:$0xff]
      %v3456 = vld [vmem:[#allocation2 + $0xa0] sm:$0xff]
      %v3457 = vld [vmem:[#allocation2 + $0xa8] sm:$0xff]
      %v3458 = vld [vmem:[#allocation2 + $0xb0] sm:$0xff]
      %v3459 = vld [vmem:[#allocation2 + $0xb8] sm:$0xff]
      %v3460 = vld [vmem:[#allocation2 + $0xc0] sm:$0xff]
      %v3461 = vld [vmem:[#allocation2 + $0xc8] sm:$0xff]
      %v3462 = vld [vmem:[#allocation2 + $0xd0] sm:$0xff]
      %v3463 = vld [vmem:[#allocation2 + $0xd8] sm:$0xff]
      %v3464 = vld [vmem:[#allocation2 + $0xe0] sm:$0xff]
      %v3465 = vld [vmem:[#allocation2 + $0xe8] sm:$0xff]
      %v3466 = vld [vmem:[#allocation2 + $0xf0] sm:$0xff]
      %v3467 = vld [vmem:[#allocation2 + $0xf8] sm:$0xff]
      %v3476 = vunpack.c.l.b16 %v3428
      %v3477 = vunpack.c.l.b16 %v3429
      %v3478 = vunpack.c.l.b16 %v3430
      %v3479 = vunpack.c.l.b16 %v3431
      %v3480 = vunpack.c.l.b16 %v3432
      %v3481 = vunpack.c.l.b16 %v3433
      %v3482 = vunpack.c.l.b16 %v3434
      %v3483 = vunpack.c.l.b16 %v3435
      %v3484 = vpack.c.b16 %v3477, %v3476
      %v3485 = vpack.c.b16 %v3479, %v3478
      %v3486 = vpack.c.b16 %v3481, %v3480
      %v3487 = vpack.c.b16 %v3483, %v3482
      %v3520 = vunpack.c.l.b16 %v3436
      %v3521 = vunpack.c.h.b16 %v3436
      %v3522 = vunpack.c.l.b16 %v3437
      %v3523 = vunpack.c.h.b16 %v3437
      %v3524 = vunpack.c.l.b16 %v3438
      %v3525 = vunpack.c.h.b16 %v3438
      %v3526 = vunpack.c.l.b16 %v3439
      %v3527 = vunpack.c.h.b16 %v3439
      %v3528 = vunpack.c.l.b16 %v3440
      %v3529 = vunpack.c.h.b16 %v3440
      %v3530 = vunpack.c.l.b16 %v3441
      %v3531 = vunpack.c.h.b16 %v3441
      %v3532 = vunpack.c.l.b16 %v3442
      %v3533 = vunpack.c.h.b16 %v3442
      %v3534 = vunpack.c.l.b16 %v3443
      %v3535 = vunpack.c.h.b16 %v3443
      %v3536 = vunpack.c.l.b16 %v3444
      %v3537 = vunpack.c.h.b16 %v3444
      %v3538 = vunpack.c.l.b16 %v3445
      %v3539 = vunpack.c.h.b16 %v3445
      %v3540 = vunpack.c.l.b16 %v3446
      %v3541 = vunpack.c.h.b16 %v3446
      %v3542 = vunpack.c.l.b16 %v3447
      %v3543 = vunpack.c.h.b16 %v3447
      %v3544 = vunpack.c.l.b16 %v3448
      %v3545 = vunpack.c.h.b16 %v3448
      %v3546 = vunpack.c.l.b16 %v3449
      %v3547 = vunpack.c.h.b16 %v3449
      %v3548 = vunpack.c.l.b16 %v3450
      %v3549 = vunpack.c.h.b16 %v3450
      %v3550 = vunpack.c.l.b16 %v3451
      %v3551 = vunpack.c.h.b16 %v3451
      %v3552 = vunpack.c.l.b16 %v3452
      %v3553 = vunpack.c.h.b16 %v3452
      %v3554 = vunpack.c.l.b16 %v3453
      %v3555 = vunpack.c.h.b16 %v3453
      %v3556 = vunpack.c.l.b16 %v3454
      %v3557 = vunpack.c.h.b16 %v3454
      %v3558 = vunpack.c.l.b16 %v3455
      %v3559 = vunpack.c.h.b16 %v3455
      %v3560 = vunpack.c.l.b16 %v3456
      %v3561 = vunpack.c.h.b16 %v3456
      %v3562 = vunpack.c.l.b16 %v3457
      %v3563 = vunpack.c.h.b16 %v3457
      %v3564 = vunpack.c.l.b16 %v3458
      %v3565 = vunpack.c.h.b16 %v3458
      %v3566 = vunpack.c.l.b16 %v3459
      %v3567 = vunpack.c.h.b16 %v3459
      %v3568 = vunpack.c.l.b16 %v3460
      %v3569 = vunpack.c.h.b16 %v3460
      %v3570 = vunpack.c.l.b16 %v3461
      %v3571 = vunpack.c.h.b16 %v3461
      %v3572 = vunpack.c.l.b16 %v3462
      %v3573 = vunpack.c.h.b16 %v3462
      %v3574 = vunpack.c.l.b16 %v3463
      %v3575 = vunpack.c.h.b16 %v3463
      %v3576 = vunpack.c.l.b16 %v3464
      %v3577 = vunpack.c.h.b16 %v3464
      %v3578 = vunpack.c.l.b16 %v3465
      %v3579 = vunpack.c.h.b16 %v3465
      %v3580 = vunpack.c.l.b16 %v3466
      %v3581 = vunpack.c.h.b16 %v3466
      %v3582 = vunpack.c.l.b16 %v3467
      %v3583 = vunpack.c.h.b16 %v3467
      %v3584 = vpack.c.b16 %v3536, %v3520
      %v3585 = vpack.c.b16 %v3537, %v3521
      %v3586 = vpack.c.b16 %v3538, %v3522
      %v3587 = vpack.c.b16 %v3539, %v3523
      %v3588 = vpack.c.b16 %v3540, %v3524
      %v3589 = vpack.c.b16 %v3541, %v3525
      %v3590 = vpack.c.b16 %v3542, %v3526
      %v3591 = vpack.c.b16 %v3543, %v3527
      %v3592 = vpack.c.b16 %v3544, %v3528
      %v3593 = vpack.c.b16 %v3545, %v3529
      %v3594 = vpack.c.b16 %v3546, %v3530
      %v3595 = vpack.c.b16 %v3547, %v3531
      %v3596 = vpack.c.b16 %v3548, %v3532
      %v3597 = vpack.c.b16 %v3549, %v3533
      %v3598 = vpack.c.b16 %v3550, %v3534
      %v3599 = vpack.c.b16 %v3551, %v3535
      %v3600 = vpack.c.b16 %v3568, %v3552
      %v3601 = vpack.c.b16 %v3569, %v3553
      %v3602 = vpack.c.b16 %v3570, %v3554
      %v3603 = vpack.c.b16 %v3571, %v3555
      %v3604 = vpack.c.b16 %v3572, %v3556
      %v3605 = vpack.c.b16 %v3573, %v3557
      %v3606 = vpack.c.b16 %v3574, %v3558
      %v3607 = vpack.c.b16 %v3575, %v3559
      %v3608 = vpack.c.b16 %v3576, %v3560
      %v3609 = vpack.c.b16 %v3577, %v3561
      %v3610 = vpack.c.b16 %v3578, %v3562
      %v3611 = vpack.c.b16 %v3579, %v3563
      %v3612 = vpack.c.b16 %v3580, %v3564
      %v3613 = vpack.c.b16 %v3581, %v3565
      %v3614 = vpack.c.b16 %v3582, %v3566
      %v3615 = vpack.c.b16 %v3583, %v3567
      %v3649 = vsel %vm485, %v3484, 0
      %v3652 = vsel %vm485, %v3485, 0
      %v3655 = vsel %vm485, %v3486, 0
      %v3658 = vsel %vm485, %v3487, 0
      %3660 = vmatpush.bf16.msra.mxu0 0
      %3661 = vmatpush.bf16.msra.mxu0 0
      %3662 = vmatpush.bf16.msra.mxu0 0
      %3663 = vmatpush.bf16.msra.mxu0 0
      %3664 = vmatpush.bf16.msra.mxu0 0
      %3665 = vmatpush.bf16.msra.mxu0 0
      %3666 = vmatpush.bf16.msra.mxu0 %v3600
      %3667 = vmatpush.bf16.msra.mxu0 %v3584
      %3668 = vmatmul.bf16.gmra.mxu0 %v3649
      %v3669 = vpop.f32.mrf.mxu0
      %v3670 = vadd.f32 0.0, %v3669
      %v3671 = vpop.f32.mrf.mxu0
      %v3672 = vadd.f32 0.0, %v3671
      %3673 = vmatmul.bf16.gmra.mxu0 %v3652
      %v3674 = vpop.f32.mrf.mxu0
      %v3675 = vadd.f32 0.0, %v3674
      %v3676 = vpop.f32.mrf.mxu0
      %v3677 = vadd.f32 0.0, %v3676
      %3678 = vmatmul.bf16.gmra.mxu0 %v3655
      %v3679 = vpop.f32.mrf.mxu0
      %v3680 = vadd.f32 0.0, %v3679
      %v3681 = vpop.f32.mrf.mxu0
      %v3682 = vadd.f32 0.0, %v3681
      %3683 = vmatmul.bf16.gmra.mxu0 %v3658
      %v3684 = vpop.f32.mrf.mxu0
      %v3685 = vadd.f32 0.0, %v3684
      %v3686 = vpop.f32.mrf.mxu0
      %v3687 = vadd.f32 0.0, %v3686
      %3688 = vdwg.mxu0
      %3689 = vmatpush.bf16.msra.mxu0 0
      %3690 = vmatpush.bf16.msra.mxu0 0
      %3691 = vmatpush.bf16.msra.mxu0 0
      %3692 = vmatpush.bf16.msra.mxu0 0
      %3693 = vmatpush.bf16.msra.mxu0 0
      %3694 = vmatpush.bf16.msra.mxu0 0
      %3695 = vmatpush.bf16.msra.mxu0 %v3601
      %3696 = vmatpush.bf16.msra.mxu0 %v3585
      %3697 = vmatmul.bf16.gmra.mxu0 %v3649
      %v3698 = vpop.f32.mrf.mxu0
      %v3699 = vadd.f32 0.0, %v3698
      %v3700 = vpop.f32.mrf.mxu0
      %v3701 = vadd.f32 0.0, %v3700
      %3702 = vmatmul.bf16.gmra.mxu0 %v3652
      %v3703 = vpop.f32.mrf.mxu0
      %v3704 = vadd.f32 0.0, %v3703
      %v3705 = vpop.f32.mrf.mxu0
      %v3706 = vadd.f32 0.0, %v3705
      %3707 = vmatmul.bf16.gmra.mxu0 %v3655
      %v3708 = vpop.f32.mrf.mxu0
      %v3709 = vadd.f32 0.0, %v3708
      %v3710 = vpop.f32.mrf.mxu0
      %v3711 = vadd.f32 0.0, %v3710
      %3712 = vmatmul.bf16.gmra.mxu0 %v3658
      %v3713 = vpop.f32.mrf.mxu0
      %v3714 = vadd.f32 0.0, %v3713
      %v3715 = vpop.f32.mrf.mxu0
      %v3716 = vadd.f32 0.0, %v3715
      %3717 = vdwg.mxu0
      %3718 = vmatpush.bf16.msra.mxu0 0
      %3719 = vmatpush.bf16.msra.mxu0 0
      %3720 = vmatpush.bf16.msra.mxu0 0
      %3721 = vmatpush.bf16.msra.mxu0 0
      %3722 = vmatpush.bf16.msra.mxu0 0
      %3723 = vmatpush.bf16.msra.mxu0 0
      %3724 = vmatpush.bf16.msra.mxu0 %v3602
      %3725 = vmatpush.bf16.msra.mxu0 %v3586
      %3726 = vmatmul.bf16.gmra.mxu0 %v3649
      %v3727 = vpop.f32.mrf.mxu0
      %v3728 = vadd.f32 0.0, %v3727
      %v3729 = vpop.f32.mrf.mxu0
      %v3730 = vadd.f32 0.0, %v3729
      %3731 = vmatmul.bf16.gmra.mxu0 %v3652
      %v3732 = vpop.f32.mrf.mxu0
      %v3733 = vadd.f32 0.0, %v3732
      %v3734 = vpop.f32.mrf.mxu0
      %v3735 = vadd.f32 0.0, %v3734
      %3736 = vmatmul.bf16.gmra.mxu0 %v3655
      %v3737 = vpop.f32.mrf.mxu0
      %v3738 = vadd.f32 0.0, %v3737
      %v3739 = vpop.f32.mrf.mxu0
      %v3740 = vadd.f32 0.0, %v3739
      %3741 = vmatmul.bf16.gmra.mxu0 %v3658
      %v3742 = vpop.f32.mrf.mxu0
      %v3743 = vadd.f32 0.0, %v3742
      %v3744 = vpop.f32.mrf.mxu0
      %v3745 = vadd.f32 0.0, %v3744
      %3746 = vdwg.mxu0
      %3747 = vmatpush.bf16.msra.mxu0 0
      %3748 = vmatpush.bf16.msra.mxu0 0
      %3749 = vmatpush.bf16.msra.mxu0 0
      %3750 = vmatpush.bf16.msra.mxu0 0
      %3751 = vmatpush.bf16.msra.mxu0 0
      %3752 = vmatpush.bf16.msra.mxu0 0
      %3753 = vmatpush.bf16.msra.mxu0 %v3603
      %3754 = vmatpush.bf16.msra.mxu0 %v3587
      %3755 = vmatmul.bf16.gmra.mxu0 %v3649
      %v3756 = vpop.f32.mrf.mxu0
      %v3757 = vadd.f32 0.0, %v3756
      %v3758 = vpop.f32.mrf.mxu0
      %v3759 = vadd.f32 0.0, %v3758
      %3760 = vmatmul.bf16.gmra.mxu0 %v3652
      %v3761 = vpop.f32.mrf.mxu0
      %v3762 = vadd.f32 0.0, %v3761
      %v3763 = vpop.f32.mrf.mxu0
      %v3764 = vadd.f32 0.0, %v3763
      %3765 = vmatmul.bf16.gmra.mxu0 %v3655
      %v3766 = vpop.f32.mrf.mxu0
      %v3767 = vadd.f32 0.0, %v3766
      %v3768 = vpop.f32.mrf.mxu0
      %v3769 = vadd.f32 0.0, %v3768
      %3770 = vmatmul.bf16.gmra.mxu0 %v3658
      %v3771 = vpop.f32.mrf.mxu0
      %v3772 = vadd.f32 0.0, %v3771
      %v3773 = vpop.f32.mrf.mxu0
      %v3774 = vadd.f32 0.0, %v3773
      %3775 = vdwg.mxu0
      %3776 = vmatpush.bf16.msra.mxu0 0
      %3777 = vmatpush.bf16.msra.mxu0 0
      %3778 = vmatpush.bf16.msra.mxu0 0
      %3779 = vmatpush.bf16.msra.mxu0 0
      %3780 = vmatpush.bf16.msra.mxu0 0
      %3781 = vmatpush.bf16.msra.mxu0 0
      %3782 = vmatpush.bf16.msra.mxu0 %v3604
      %3783 = vmatpush.bf16.msra.mxu0 %v3588
      %3784 = vmatmul.bf16.gmra.mxu0 %v3649
      %v3785 = vpop.f32.mrf.mxu0
      %v3786 = vadd.f32 0.0, %v3785
      %v3787 = vpop.f32.mrf.mxu0
      %v3788 = vadd.f32 0.0, %v3787
      %3789 = vmatmul.bf16.gmra.mxu0 %v3652
      %v3790 = vpop.f32.mrf.mxu0
      %v3791 = vadd.f32 0.0, %v3790
      %v3792 = vpop.f32.mrf.mxu0
      %v3793 = vadd.f32 0.0, %v3792
      %3794 = vmatmul.bf16.gmra.mxu0 %v3655
      %v3795 = vpop.f32.mrf.mxu0
      %v3796 = vadd.f32 0.0, %v3795
      %v3797 = vpop.f32.mrf.mxu0
      %v3798 = vadd.f32 0.0, %v3797
      %3799 = vmatmul.bf16.gmra.mxu0 %v3658
      %v3800 = vpop.f32.mrf.mxu0
      %v3801 = vadd.f32 0.0, %v3800
      %v3802 = vpop.f32.mrf.mxu0
      %v3803 = vadd.f32 0.0, %v3802
      %3804 = vdwg.mxu0
      %3805 = vmatpush.bf16.msra.mxu0 0
      %3806 = vmatpush.bf16.msra.mxu0 0
      %3807 = vmatpush.bf16.msra.mxu0 0
      %3808 = vmatpush.bf16.msra.mxu0 0
      %3809 = vmatpush.bf16.msra.mxu0 0
      %3810 = vmatpush.bf16.msra.mxu0 0
      %3811 = vmatpush.bf16.msra.mxu0 %v3605
      %3812 = vmatpush.bf16.msra.mxu0 %v3589
      %3813 = vmatmul.bf16.gmra.mxu0 %v3649
      %v3814 = vpop.f32.mrf.mxu0
      %v3815 = vadd.f32 0.0, %v3814
      %v3816 = vpop.f32.mrf.mxu0
      %v3817 = vadd.f32 0.0, %v3816
      %3818 = vmatmul.bf16.gmra.mxu0 %v3652
      %v3819 = vpop.f32.mrf.mxu0
      %v3820 = vadd.f32 0.0, %v3819
      %v3821 = vpop.f32.mrf.mxu0
      %v3822 = vadd.f32 0.0, %v3821
      %3823 = vmatmul.bf16.gmra.mxu0 %v3655
      %v3824 = vpop.f32.mrf.mxu0
      %v3825 = vadd.f32 0.0, %v3824
      %v3826 = vpop.f32.mrf.mxu0
      %v3827 = vadd.f32 0.0, %v3826
      %3828 = vmatmul.bf16.gmra.mxu0 %v3658
      %v3829 = vpop.f32.mrf.mxu0
      %v3830 = vadd.f32 0.0, %v3829
      %v3831 = vpop.f32.mrf.mxu0
      %v3832 = vadd.f32 0.0, %v3831
      %3833 = vdwg.mxu0
      %3834 = vmatpush.bf16.msra.mxu0 0
      %3835 = vmatpush.bf16.msra.mxu0 0
      %3836 = vmatpush.bf16.msra.mxu0 0
      %3837 = vmatpush.bf16.msra.mxu0 0
      %3838 = vmatpush.bf16.msra.mxu0 0
      %3839 = vmatpush.bf16.msra.mxu0 0
      %3840 = vmatpush.bf16.msra.mxu0 %v3606
      %3841 = vmatpush.bf16.msra.mxu0 %v3590
      %3842 = vmatmul.bf16.gmra.mxu0 %v3649
      %v3843 = vpop.f32.mrf.mxu0
      %v3844 = vadd.f32 0.0, %v3843
      %v3845 = vpop.f32.mrf.mxu0
      %v3846 = vadd.f32 0.0, %v3845
      %3847 = vmatmul.bf16.gmra.mxu0 %v3652
      %v3848 = vpop.f32.mrf.mxu0
      %v3849 = vadd.f32 0.0, %v3848
      %v3850 = vpop.f32.mrf.mxu0
      %v3851 = vadd.f32 0.0, %v3850
      %3852 = vmatmul.bf16.gmra.mxu0 %v3655
      %v3853 = vpop.f32.mrf.mxu0
      %v3854 = vadd.f32 0.0, %v3853
      %v3855 = vpop.f32.mrf.mxu0
      %v3856 = vadd.f32 0.0, %v3855
      %3857 = vmatmul.bf16.gmra.mxu0 %v3658
      %v3858 = vpop.f32.mrf.mxu0
      %v3859 = vadd.f32 0.0, %v3858
      %v3860 = vpop.f32.mrf.mxu0
      %v3861 = vadd.f32 0.0, %v3860
      %3862 = vdwg.mxu0
      %3863 = vmatpush.bf16.msra.mxu0 0
      %3864 = vmatpush.bf16.msra.mxu0 0
      %3865 = vmatpush.bf16.msra.mxu0 0
      %3866 = vmatpush.bf16.msra.mxu0 0
      %3867 = vmatpush.bf16.msra.mxu0 0
      %3868 = vmatpush.bf16.msra.mxu0 0
      %3869 = vmatpush.bf16.msra.mxu0 %v3607
      %3870 = vmatpush.bf16.msra.mxu0 %v3591
      %3871 = vmatmul.bf16.gmra.mxu0 %v3649
      %v3872 = vpop.f32.mrf.mxu0
      %v3873 = vadd.f32 0.0, %v3872
      %v3874 = vpop.f32.mrf.mxu0
      %v3875 = vadd.f32 0.0, %v3874
      %3876 = vmatmul.bf16.gmra.mxu0 %v3652
      %v3877 = vpop.f32.mrf.mxu0
      %v3878 = vadd.f32 0.0, %v3877
      %v3879 = vpop.f32.mrf.mxu0
      %v3880 = vadd.f32 0.0, %v3879
      %3881 = vmatmul.bf16.gmra.mxu0 %v3655
      %v3882 = vpop.f32.mrf.mxu0
      %v3883 = vadd.f32 0.0, %v3882
      %v3884 = vpop.f32.mrf.mxu0
      %v3885 = vadd.f32 0.0, %v3884
      %3886 = vmatmul.bf16.gmra.mxu0 %v3658
      %v3887 = vpop.f32.mrf.mxu0
      %v3888 = vadd.f32 0.0, %v3887
      %v3889 = vpop.f32.mrf.mxu0
      %v3890 = vadd.f32 0.0, %v3889
      %3891 = vdwg.mxu0
      %3892 = vmatpush.bf16.msra.mxu0 0
      %3893 = vmatpush.bf16.msra.mxu0 0
      %3894 = vmatpush.bf16.msra.mxu0 0
      %3895 = vmatpush.bf16.msra.mxu0 0
      %3896 = vmatpush.bf16.msra.mxu0 0
      %3897 = vmatpush.bf16.msra.mxu0 0
      %3898 = vmatpush.bf16.msra.mxu0 %v3608
      %3899 = vmatpush.bf16.msra.mxu0 %v3592
      %3900 = vmatmul.bf16.gmra.mxu0 %v3649
      %v3901 = vpop.f32.mrf.mxu0
      %v3902 = vadd.f32 0.0, %v3901
      %v3903 = vpop.f32.mrf.mxu0
      %v3904 = vadd.f32 0.0, %v3903
      %3905 = vmatmul.bf16.gmra.mxu0 %v3652
      %v3906 = vpop.f32.mrf.mxu0
      %v3907 = vadd.f32 0.0, %v3906
      %v3908 = vpop.f32.mrf.mxu0
      %v3909 = vadd.f32 0.0, %v3908
      %3910 = vmatmul.bf16.gmra.mxu0 %v3655
      %v3911 = vpop.f32.mrf.mxu0
      %v3912 = vadd.f32 0.0, %v3911
      %v3913 = vpop.f32.mrf.mxu0
      %v3914 = vadd.f32 0.0, %v3913
      %3915 = vmatmul.bf16.gmra.mxu0 %v3658
      %v3916 = vpop.f32.mrf.mxu0
      %v3917 = vadd.f32 0.0, %v3916
      %v3918 = vpop.f32.mrf.mxu0
      %v3919 = vadd.f32 0.0, %v3918
      %3920 = vdwg.mxu0
      %3921 = vmatpush.bf16.msra.mxu0 0
      %3922 = vmatpush.bf16.msra.mxu0 0
      %3923 = vmatpush.bf16.msra.mxu0 0
      %3924 = vmatpush.bf16.msra.mxu0 0
      %3925 = vmatpush.bf16.msra.mxu0 0
      %3926 = vmatpush.bf16.msra.mxu0 0
      %3927 = vmatpush.bf16.msra.mxu0 %v3609
      %3928 = vmatpush.bf16.msra.mxu0 %v3593
      %3929 = vmatmul.bf16.gmra.mxu0 %v3649
      %v3930 = vpop.f32.mrf.mxu0
      %v3931 = vadd.f32 0.0, %v3930
      %v3932 = vpop.f32.mrf.mxu0
      %v3933 = vadd.f32 0.0, %v3932
      %3934 = vmatmul.bf16.gmra.mxu0 %v3652
      %v3935 = vpop.f32.mrf.mxu0
      %v3936 = vadd.f32 0.0, %v3935
      %v3937 = vpop.f32.mrf.mxu0
      %v3938 = vadd.f32 0.0, %v3937
      %3939 = vmatmul.bf16.gmra.mxu0 %v3655
      %v3940 = vpop.f32.mrf.mxu0
      %v3941 = vadd.f32 0.0, %v3940
      %v3942 = vpop.f32.mrf.mxu0
      %v3943 = vadd.f32 0.0, %v3942
      %3944 = vmatmul.bf16.gmra.mxu0 %v3658
      %v3945 = vpop.f32.mrf.mxu0
      %v3946 = vadd.f32 0.0, %v3945
      %v3947 = vpop.f32.mrf.mxu0
      %v3948 = vadd.f32 0.0, %v3947
      %3949 = vdwg.mxu0
      %3950 = vmatpush.bf16.msra.mxu0 0
      %3951 = vmatpush.bf16.msra.mxu0 0
      %3952 = vmatpush.bf16.msra.mxu0 0
      %3953 = vmatpush.bf16.msra.mxu0 0
      %3954 = vmatpush.bf16.msra.mxu0 0
      %3955 = vmatpush.bf16.msra.mxu0 0
      %3956 = vmatpush.bf16.msra.mxu0 %v3610
      %3957 = vmatpush.bf16.msra.mxu0 %v3594
      %3958 = vmatmul.bf16.gmra.mxu0 %v3649
      %v3959 = vpop.f32.mrf.mxu0
      %v3960 = vadd.f32 0.0, %v3959
      %v3961 = vpop.f32.mrf.mxu0
      %v3962 = vadd.f32 0.0, %v3961
      %3963 = vmatmul.bf16.gmra.mxu0 %v3652
      %v3964 = vpop.f32.mrf.mxu0
      %v3965 = vadd.f32 0.0, %v3964
      %v3966 = vpop.f32.mrf.mxu0
      %v3967 = vadd.f32 0.0, %v3966
      %3968 = vmatmul.bf16.gmra.mxu0 %v3655
      %v3969 = vpop.f32.mrf.mxu0
      %v3970 = vadd.f32 0.0, %v3969
      %v3971 = vpop.f32.mrf.mxu0
      %v3972 = vadd.f32 0.0, %v3971
      %3973 = vmatmul.bf16.gmra.mxu0 %v3658
      %v3974 = vpop.f32.mrf.mxu0
      %v3975 = vadd.f32 0.0, %v3974
      %v3976 = vpop.f32.mrf.mxu0
      %v3977 = vadd.f32 0.0, %v3976
      %3978 = vdwg.mxu0
      %3979 = vmatpush.bf16.msra.mxu0 0
      %3980 = vmatpush.bf16.msra.mxu0 0
      %3981 = vmatpush.bf16.msra.mxu0 0
      %3982 = vmatpush.bf16.msra.mxu0 0
      %3983 = vmatpush.bf16.msra.mxu0 0
      %3984 = vmatpush.bf16.msra.mxu0 0
      %3985 = vmatpush.bf16.msra.mxu0 %v3611
      %3986 = vmatpush.bf16.msra.mxu0 %v3595
      %3987 = vmatmul.bf16.gmra.mxu0 %v3649
      %v3988 = vpop.f32.mrf.mxu0
      %v3989 = vadd.f32 0.0, %v3988
      %v3990 = vpop.f32.mrf.mxu0
      %v3991 = vadd.f32 0.0, %v3990
      %3992 = vmatmul.bf16.gmra.mxu0 %v3652
      %v3993 = vpop.f32.mrf.mxu0
      %v3994 = vadd.f32 0.0, %v3993
      %v3995 = vpop.f32.mrf.mxu0
      %v3996 = vadd.f32 0.0, %v3995
      %3997 = vmatmul.bf16.gmra.mxu0 %v3655
      %v3998 = vpop.f32.mrf.mxu0
      %v3999 = vadd.f32 0.0, %v3998
      %v4000 = vpop.f32.mrf.mxu0
      %v4001 = vadd.f32 0.0, %v4000
      %4002 = vmatmul.bf16.gmra.mxu0 %v3658
      %v4003 = vpop.f32.mrf.mxu0
      %v4004 = vadd.f32 0.0, %v4003
      %v4005 = vpop.f32.mrf.mxu0
      %v4006 = vadd.f32 0.0, %v4005
      %4007 = vdwg.mxu0
      %4008 = vmatpush.bf16.msra.mxu0 0
      %4009 = vmatpush.bf16.msra.mxu0 0
      %4010 = vmatpush.bf16.msra.mxu0 0
      %4011 = vmatpush.bf16.msra.mxu0 0
      %4012 = vmatpush.bf16.msra.mxu0 0
      %4013 = vmatpush.bf16.msra.mxu0 0
      %4014 = vmatpush.bf16.msra.mxu0 %v3612
      %4015 = vmatpush.bf16.msra.mxu0 %v3596
      %4016 = vmatmul.bf16.gmra.mxu0 %v3649
      %v4017 = vpop.f32.mrf.mxu0
      %v4018 = vadd.f32 0.0, %v4017
      %v4019 = vpop.f32.mrf.mxu0
      %v4020 = vadd.f32 0.0, %v4019
      %4021 = vmatmul.bf16.gmra.mxu0 %v3652
      %v4022 = vpop.f32.mrf.mxu0
      %v4023 = vadd.f32 0.0, %v4022
      %v4024 = vpop.f32.mrf.mxu0
      %v4025 = vadd.f32 0.0, %v4024
      %4026 = vmatmul.bf16.gmra.mxu0 %v3655
      %v4027 = vpop.f32.mrf.mxu0
      %v4028 = vadd.f32 0.0, %v4027
      %v4029 = vpop.f32.mrf.mxu0
      %v4030 = vadd.f32 0.0, %v4029
      %4031 = vmatmul.bf16.gmra.mxu0 %v3658
      %v4032 = vpop.f32.mrf.mxu0
      %v4033 = vadd.f32 0.0, %v4032
      %v4034 = vpop.f32.mrf.mxu0
      %v4035 = vadd.f32 0.0, %v4034
      %4036 = vdwg.mxu0
      %4037 = vmatpush.bf16.msra.mxu0 0
      %4038 = vmatpush.bf16.msra.mxu0 0
      %4039 = vmatpush.bf16.msra.mxu0 0
      %4040 = vmatpush.bf16.msra.mxu0 0
      %4041 = vmatpush.bf16.msra.mxu0 0
      %4042 = vmatpush.bf16.msra.mxu0 0
      %4043 = vmatpush.bf16.msra.mxu0 %v3613
      %4044 = vmatpush.bf16.msra.mxu0 %v3597
      %4045 = vmatmul.bf16.gmra.mxu0 %v3649
      %v4046 = vpop.f32.mrf.mxu0
      %v4047 = vadd.f32 0.0, %v4046
      %v4048 = vpop.f32.mrf.mxu0
      %v4049 = vadd.f32 0.0, %v4048
      %4050 = vmatmul.bf16.gmra.mxu0 %v3652
      %v4051 = vpop.f32.mrf.mxu0
      %v4052 = vadd.f32 0.0, %v4051
      %v4053 = vpop.f32.mrf.mxu0
      %v4054 = vadd.f32 0.0, %v4053
      %4055 = vmatmul.bf16.gmra.mxu0 %v3655
      %v4056 = vpop.f32.mrf.mxu0
      %v4057 = vadd.f32 0.0, %v4056
      %v4058 = vpop.f32.mrf.mxu0
      %v4059 = vadd.f32 0.0, %v4058
      %4060 = vmatmul.bf16.gmra.mxu0 %v3658
      %v4061 = vpop.f32.mrf.mxu0
      %v4062 = vadd.f32 0.0, %v4061
      %v4063 = vpop.f32.mrf.mxu0
      %v4064 = vadd.f32 0.0, %v4063
      %4065 = vdwg.mxu0
      %4066 = vmatpush.bf16.msra.mxu0 0
      %4067 = vmatpush.bf16.msra.mxu0 0
      %4068 = vmatpush.bf16.msra.mxu0 0
      %4069 = vmatpush.bf16.msra.mxu0 0
      %4070 = vmatpush.bf16.msra.mxu0 0
      %4071 = vmatpush.bf16.msra.mxu0 0
      %4072 = vmatpush.bf16.msra.mxu0 %v3614
      %4073 = vmatpush.bf16.msra.mxu0 %v3598
      %4074 = vmatmul.bf16.gmra.mxu0 %v3649
      %v4075 = vpop.f32.mrf.mxu0
      %v4076 = vadd.f32 0.0, %v4075
      %v4077 = vpop.f32.mrf.mxu0
      %v4078 = vadd.f32 0.0, %v4077
      %4079 = vmatmul.bf16.gmra.mxu0 %v3652
      %v4080 = vpop.f32.mrf.mxu0
      %v4081 = vadd.f32 0.0, %v4080
      %v4082 = vpop.f32.mrf.mxu0
      %v4083 = vadd.f32 0.0, %v4082
      %4084 = vmatmul.bf16.gmra.mxu0 %v3655
      %v4085 = vpop.f32.mrf.mxu0
      %v4086 = vadd.f32 0.0, %v4085
      %v4087 = vpop.f32.mrf.mxu0
      %v4088 = vadd.f32 0.0, %v4087
      %4089 = vmatmul.bf16.gmra.mxu0 %v3658
      %v4090 = vpop.f32.mrf.mxu0
      %v4091 = vadd.f32 0.0, %v4090
      %v4092 = vpop.f32.mrf.mxu0
      %v4093 = vadd.f32 0.0, %v4092
      %4094 = vdwg.mxu0
      %4095 = vmatpush.bf16.msra.mxu0 0
      %4096 = vmatpush.bf16.msra.mxu0 0
      %4097 = vmatpush.bf16.msra.mxu0 0
      %4098 = vmatpush.bf16.msra.mxu0 0
      %4099 = vmatpush.bf16.msra.mxu0 0
      %4100 = vmatpush.bf16.msra.mxu0 0
      %4101 = vmatpush.bf16.msra.mxu0 %v3615
      %4102 = vmatpush.bf16.msra.mxu0 %v3599
      %4103 = vmatmul.bf16.gmra.mxu0 %v3649
      %v4104 = vpop.f32.mrf.mxu0
      %v4105 = vadd.f32 0.0, %v4104
      %v4106 = vpop.f32.mrf.mxu0
      %v4107 = vadd.f32 0.0, %v4106
      %4108 = vmatmul.bf16.gmra.mxu0 %v3652
      %v4109 = vpop.f32.mrf.mxu0
      %v4110 = vadd.f32 0.0, %v4109
      %v4111 = vpop.f32.mrf.mxu0
      %v4112 = vadd.f32 0.0, %v4111
      %4113 = vmatmul.bf16.gmra.mxu0 %v3655
      %v4114 = vpop.f32.mrf.mxu0
      %v4115 = vadd.f32 0.0, %v4114
      %v4116 = vpop.f32.mrf.mxu0
      %v4117 = vadd.f32 0.0, %v4116
      %4118 = vmatmul.bf16.gmra.mxu0 %v3658
      %v4119 = vpop.f32.mrf.mxu0
      %v4120 = vadd.f32 0.0, %v4119
      %v4121 = vpop.f32.mrf.mxu0
      %v4122 = vadd.f32 0.0, %v4121
      %4123 = vdwg.mxu0
      %vm4124 = vcmp.gt.f32.partialorder %v3670, 0.0
      %vm4125 = vcmp.gt.f32.partialorder %v3699, 0.0
      %vm4126 = vcmp.gt.f32.partialorder %v3672, 0.0
      %vm4127 = vcmp.gt.f32.partialorder %v3701, 0.0
      %vm4128 = vcmp.gt.f32.partialorder %v3675, 0.0
      %vm4129 = vcmp.gt.f32.partialorder %v3704, 0.0
      %vm4130 = vcmp.gt.f32.partialorder %v3677, 0.0
      %vm4131 = vcmp.gt.f32.partialorder %v3706, 0.0
      %v4132 = vadd.f32 %v3670, 1.0
      %v4133 = vadd.f32 %v3699, 1.0
      %v4134 = vadd.f32 %v3672, 1.0
      %v4135 = vadd.f32 %v3701, 1.0
      %v4136 = vadd.f32 %v3675, 1.0
      %v4137 = vadd.f32 %v3704, 1.0
      %v4138 = vadd.f32 %v3677, 1.0
      %v4139 = vadd.f32 %v3706, 1.0
      %v4140 = vmul.f32 %v3670, 1.442695
      %v4141 = vpow.pop %v4140
      %v4142 = vmul.f32 %v3699, 1.442695
      %v4143 = vpow.pop %v4142
      %v4144 = vmul.f32 %v3672, 1.442695
      %v4145 = vpow.pop %v4144
      %v4146 = vmul.f32 %v3701, 1.442695
      %v4147 = vpow.pop %v4146
      %v4148 = vmul.f32 %v3675, 1.442695
      %v4149 = vpow.pop %v4148
      %v4150 = vmul.f32 %v3704, 1.442695
      %v4151 = vpow.pop %v4150
      %v4152 = vmul.f32 %v3677, 1.442695
      %v4153 = vpow.pop %v4152
      %v4154 = vmul.f32 %v3706, 1.442695
      %v4155 = vpow.pop %v4154
      %v4156 = vsel %vm4124, %v4132, %v4141
      %v4157 = vsel %vm4125, %v4133, %v4143
      %v4158 = vsel %vm4126, %v4134, %v4145
      %v4159 = vsel %vm4127, %v4135, %v4147
      %v4160 = vsel %vm4128, %v4136, %v4149
      %v4161 = vsel %vm4129, %v4137, %v4151
      %v4162 = vsel %vm4130, %v4138, %v4153
      %v4163 = vsel %vm4131, %v4139, %v4155
      %v4164 = vpack.c.bf16 %v3682, %v3680
      %v4165 = vpack.c.bf16 %v3711, %v3709
      %v4166 = vpack.c.bf16 %v3687, %v3685
      %v4167 = vpack.c.bf16 %v3716, %v3714
      %v4168 = vpack.c.bf16 %v4158, %v4156
      %v4169 = vpack.c.bf16 %v4159, %v4157
      %v4170 = vpack.c.bf16 %v4162, %v4160
      %v4171 = vpack.c.bf16 %v4163, %v4161
      %4172 = vmatpush.bf16.xpose.msra.mxu0 0
      %4173 = vmatpush.bf16.xpose.msra.mxu0 0
      %4174 = vmatpush.bf16.xpose.msra.mxu0 0
      %4175 = vmatpush.bf16.xpose.msra.mxu0 0
      %4176 = vmatpush.bf16.xpose.msra.mxu0 0
      %4177 = vmatpush.bf16.xpose.msra.mxu0 0
      %4178 = vmatpush.bf16.xpose.msra.mxu0 %v4170
      %4179 = vmatpush.bf16.xpose.msra.mxu0 %v4168
      %4180 = vmatmul.bf16.gmra.mxu0 %v4164
      %v4181 = vpop.f32.mrf.mxu0
      %v4182 = vadd.f32 0.0, %v4181
      %v4183 = vpop.f32.mrf.mxu0
      %v4184 = vadd.f32 0.0, %v4183
      %4185 = vmatmul.bf16.gmra.mxu0 %v4166
      %v4186 = vpop.f32.mrf.mxu0
      %v4187 = vadd.f32 0.0, %v4186
      %v4188 = vpop.f32.mrf.mxu0
      %v4189 = vadd.f32 0.0, %v4188
      %4190 = vdwg.mxu0
      %4191 = vmatpush.bf16.xpose.msra.mxu0 0
      %4192 = vmatpush.bf16.xpose.msra.mxu0 0
      %4193 = vmatpush.bf16.xpose.msra.mxu0 0
      %4194 = vmatpush.bf16.xpose.msra.mxu0 0
      %4195 = vmatpush.bf16.xpose.msra.mxu0 0
      %4196 = vmatpush.bf16.xpose.msra.mxu0 0
      %4197 = vmatpush.bf16.xpose.msra.mxu0 %v4171
      %4198 = vmatpush.bf16.xpose.msra.mxu0 %v4169
      %4199 = vmatmul.bf16.gmra.mxu0 %v4165
      %v4200 = vpop.f32.mrf.mxu0
      %v4201 = vadd.f32 %v4182, %v4200
      %v4202 = vpop.f32.mrf.mxu0
      %v4203 = vadd.f32 %v4184, %v4202
      %4204 = vmatmul.bf16.gmra.mxu0 %v4167
      %v4205 = vpop.f32.mrf.mxu0
      %v4206 = vadd.f32 %v4187, %v4205
      %v4207 = vpop.f32.mrf.mxu0
      %v4208 = vadd.f32 %v4189, %v4207
      %4209 = vdwg.mxu0
      %v4210 = vadd.f32 %v4156, %v4157
      %4211 = vadd.xlane.f32.xlu0 %v4210
      %v4212 = vpop.xlane.xlu0 %4211
      %v4213 = vadd.f32 %v4158, %v4159
      %4214 = vadd.xlane.f32.xlu0 %v4213
      %v4215 = vpop.xlane.xlu0 %4214
      %v4216 = vadd.f32 %v4160, %v4161
      %4217 = vadd.xlane.f32.xlu0 %v4216
      %v4218 = vpop.xlane.xlu0 %4217
      %v4219 = vadd.f32 %v4162, %v4163
      %4220 = vadd.xlane.f32.xlu0 %v4219
      %v4221 = vpop.xlane.xlu0 %4220
      %v4222 = vmul.f32 %v4201, %v343
      %v4223 = vmul.f32 %v4203, %v344
      %v4224 = vmul.f32 %v4206, %v345
      %v4225 = vmul.f32 %v4208, %v346
      %v4226 = vpack.c.bf16 %v4223, %v4222
      %v4227 = vpack.c.bf16 %v4225, %v4224
      %v4229 = vsel %vm485, %v4226, 0
      %v4232 = vsel %vm485, %v4227, 0
      %4234 = vmatpush.bf16.msra.mxu0 0
      %4235 = vmatpush.bf16.msra.mxu0 0
      %4236 = vmatpush.bf16.msra.mxu0 0
      %4237 = vmatpush.bf16.msra.mxu0 0
      %4238 = vmatpush.bf16.msra.mxu0 0
      %4239 = vmatpush.bf16.msra.mxu0 0
      %4240 = vmatpush.bf16.msra.mxu0 %v811
      %4241 = vmatpush.bf16.msra.mxu0 %v809
      %4242 = vmatmul.bf16.gmra.mxu0 %v4229
      %v4243 = vpop.f32.mrf.mxu0
      %v4244 = vadd.f32 0.0, %v4243
      %v4245 = vpop.f32.mrf.mxu0
      %v4246 = vadd.f32 0.0, %v4245
      %4247 = vmatmul.bf16.gmra.mxu0 %v4232
      %v4248 = vpop.f32.mrf.mxu0
      %v4249 = vadd.f32 0.0, %v4248
      %v4250 = vpop.f32.mrf.mxu0
      %v4251 = vadd.f32 0.0, %v4250
      %4252 = vdwg.mxu0
      %4253 = vmatpush.bf16.msra.mxu0 0
      %4254 = vmatpush.bf16.msra.mxu0 0
      %4255 = vmatpush.bf16.msra.mxu0 0
      %4256 = vmatpush.bf16.msra.mxu0 0
      %4257 = vmatpush.bf16.msra.mxu0 0
      %4258 = vmatpush.bf16.msra.mxu0 0
      %4259 = vmatpush.bf16.msra.mxu0 %v812
      %4260 = vmatpush.bf16.msra.mxu0 %v810
      %4261 = vmatmul.bf16.gmra.mxu0 %v4229
      %v4262 = vpop.f32.mrf.mxu0
      %v4263 = vadd.f32 0.0, %v4262
      %v4264 = vpop.f32.mrf.mxu0
      %v4265 = vadd.f32 0.0, %v4264
      %4266 = vmatmul.bf16.gmra.mxu0 %v4232
      %v4267 = vpop.f32.mrf.mxu0
      %v4268 = vadd.f32 0.0, %v4267
      %v4269 = vpop.f32.mrf.mxu0
      %v4270 = vadd.f32 0.0, %v4269
      %4271 = vdwg.mxu0
      %v4272 = vmul.f32 %v801, %v4212
      %v4273 = vmul.f32 %v802, %v4212
      %v4274 = vmul.f32 %v803, %v4215
      %v4275 = vmul.f32 %v804, %v4215
      %v4276 = vmul.f32 %v805, %v4218
      %v4277 = vmul.f32 %v806, %v4218
      %v4278 = vmul.f32 %v807, %v4221
      %v4279 = vmul.f32 %v808, %v4221
      %v4280 = vpack.c.bf16 %v4274, %v4272
      %v4281 = vpack.c.bf16 %v4275, %v4273
      %v4282 = vpack.c.bf16 %v4278, %v4276
      %v4283 = vpack.c.bf16 %v4279, %v4277
      %v4285 = vsel %vm485, %v347, 0
      %v4288 = vsel %vm485, %v348, 0
      %4290 = vmatpush.bf16.msra.mxu0 0
      %4291 = vmatpush.bf16.msra.mxu0 0
      %4292 = vmatpush.bf16.msra.mxu0 0
      %4293 = vmatpush.bf16.msra.mxu0 0
      %4294 = vmatpush.bf16.msra.mxu0 0
      %4295 = vmatpush.bf16.msra.mxu0 0
      %4296 = vmatpush.bf16.msra.mxu0 %v4282
      %4297 = vmatpush.bf16.msra.mxu0 %v4280
      %4298 = vmatmul.bf16.gmra.mxu0 %v4285
      %v4299 = vpop.f32.mrf.mxu0
      %v4300 = vadd.f32 1e-06, %v4299
      %v4301 = vpop.f32.mrf.mxu0
      %v4302 = vadd.f32 1e-06, %v4301
      %4303 = vmatmul.bf16.gmra.mxu0 %v4288
      %v4304 = vpop.f32.mrf.mxu0
      %v4305 = vadd.f32 1e-06, %v4304
      %v4306 = vpop.f32.mrf.mxu0
      %v4307 = vadd.f32 1e-06, %v4306
      %4308 = vdwg.mxu0
      %4309 = vmatpush.bf16.msra.mxu0 0
      %4310 = vmatpush.bf16.msra.mxu0 0
      %4311 = vmatpush.bf16.msra.mxu0 0
      %4312 = vmatpush.bf16.msra.mxu0 0
      %4313 = vmatpush.bf16.msra.mxu0 0
      %4314 = vmatpush.bf16.msra.mxu0 0
      %4315 = vmatpush.bf16.msra.mxu0 %v4283
      %4316 = vmatpush.bf16.msra.mxu0 %v4281
      %4317 = vmatmul.bf16.gmra.mxu0 %v4285
      %v4318 = vpop.f32.mrf.mxu0
      %v4319 = vadd.f32 1e-06, %v4318
      %v4320 = vpop.f32.mrf.mxu0
      %v4321 = vadd.f32 1e-06, %v4320
      %4322 = vmatmul.bf16.gmra.mxu0 %v4288
      %v4323 = vpop.f32.mrf.mxu0
      %v4324 = vadd.f32 1e-06, %v4323
      %v4325 = vpop.f32.mrf.mxu0
      %v4326 = vadd.f32 1e-06, %v4325
      %4327 = vdwg.mxu0
      %v4328 = vrcp.pop %v4300
      %v4329 = vmul.f32 %v4300, %v4328
      %v4330 = vsub.f32 1.0, %v4329
      %v4331 = vmul.f32 %v4328, %v4330
      %v4332 = vadd.f32 %v4328, %v4331
      %vm4333 = vweird.f32 %v4300
      %vm4334 = vweird.f32 %v4328
      %vm4335 = vmor %vm4333, %vm4334
      %v4336 = vsel %vm4335, %v4328, %v4332
      %v4337 = vand.u32 2147483647, %v4300
      %vm4338 = vcmp.eq.f32.partialorder %v4337, 8.507059e+37
      %v4339 = vand.u32 %v4300, 2147483648
      %v4340 = vor.u32 1.1754944e-38, %v4339
      %v4341 = vsel %vm4338, %v4340, %v4336
      %v4342 = vmul.f32 %v4244, %v4341
      %v4343 = vrcp.pop %v4319
      %v4344 = vmul.f32 %v4319, %v4343
      %v4345 = vsub.f32 1.0, %v4344
      %v4346 = vmul.f32 %v4343, %v4345
      %v4347 = vadd.f32 %v4343, %v4346
      %vm4348 = vweird.f32 %v4319
      %vm4349 = vweird.f32 %v4343
      %vm4350 = vmor %vm4348, %vm4349
      %v4351 = vsel %vm4350, %v4343, %v4347
      %v4352 = vand.u32 2147483647, %v4319
      %vm4353 = vcmp.eq.f32.partialorder %v4352, 8.507059e+37
      %v4354 = vand.u32 %v4319, 2147483648
      %v4355 = vor.u32 1.1754944e-38, %v4354
      %v4356 = vsel %vm4353, %v4355, %v4351
      %v4357 = vmul.f32 %v4263, %v4356
      %v4358 = vrcp.pop %v4302
      %v4359 = vmul.f32 %v4302, %v4358
      %v4360 = vsub.f32 1.0, %v4359
      %v4361 = vmul.f32 %v4358, %v4360
      %v4362 = vadd.f32 %v4358, %v4361
      %vm4363 = vweird.f32 %v4302
      %vm4364 = vweird.f32 %v4358
      %vm4365 = vmor %vm4363, %vm4364
      %v4366 = vsel %vm4365, %v4358, %v4362
      %v4367 = vand.u32 2147483647, %v4302
      %vm4368 = vcmp.eq.f32.partialorder %v4367, 8.507059e+37
      %v4369 = vand.u32 %v4302, 2147483648
      %v4370 = vor.u32 1.1754944e-38, %v4369
      %v4371 = vsel %vm4368, %v4370, %v4366
      %v4372 = vmul.f32 %v4246, %v4371
      %v4373 = vrcp.pop %v4321
      %v4374 = vmul.f32 %v4321, %v4373
      %v4375 = vsub.f32 1.0, %v4374
      %v4376 = vmul.f32 %v4373, %v4375
      %v4377 = vadd.f32 %v4373, %v4376
      %vm4378 = vweird.f32 %v4321
      %vm4379 = vweird.f32 %v4373
      %vm4380 = vmor %vm4378, %vm4379
      %v4381 = vsel %vm4380, %v4373, %v4377
      %v4382 = vand.u32 2147483647, %v4321
      %vm4383 = vcmp.eq.f32.partialorder %v4382, 8.507059e+37
      %v4384 = vand.u32 %v4321, 2147483648
      %v4385 = vor.u32 1.1754944e-38, %v4384
      %v4386 = vsel %vm4383, %v4385, %v4381
      %v4387 = vmul.f32 %v4265, %v4386
      %v4388 = vrcp.pop %v4305
      %v4389 = vmul.f32 %v4305, %v4388
      %v4390 = vsub.f32 1.0, %v4389
      %v4391 = vmul.f32 %v4388, %v4390
      %v4392 = vadd.f32 %v4388, %v4391
      %vm4393 = vweird.f32 %v4305
      %vm4394 = vweird.f32 %v4388
      %vm4395 = vmor %vm4393, %vm4394
      %v4396 = vsel %vm4395, %v4388, %v4392
      %v4397 = vand.u32 2147483647, %v4305
      %vm4398 = vcmp.eq.f32.partialorder %v4397, 8.507059e+37
      %v4399 = vand.u32 %v4305, 2147483648
      %v4400 = vor.u32 1.1754944e-38, %v4399
      %v4401 = vsel %vm4398, %v4400, %v4396
      %v4402 = vmul.f32 %v4249, %v4401
      %v4403 = vrcp.pop %v4324
      %v4404 = vmul.f32 %v4324, %v4403
      %v4405 = vsub.f32 1.0, %v4404
      %v4406 = vmul.f32 %v4403, %v4405
      %v4407 = vadd.f32 %v4403, %v4406
      %vm4408 = vweird.f32 %v4324
      %vm4409 = vweird.f32 %v4403
      %vm4410 = vmor %vm4408, %vm4409
      %v4411 = vsel %vm4410, %v4403, %v4407
      %v4412 = vand.u32 2147483647, %v4324
      %vm4413 = vcmp.eq.f32.partialorder %v4412, 8.507059e+37
      %v4414 = vand.u32 %v4324, 2147483648
      %v4415 = vor.u32 1.1754944e-38, %v4414
      %v4416 = vsel %vm4413, %v4415, %v4411
      %v4417 = vmul.f32 %v4268, %v4416
      %v4418 = vrcp.pop %v4307
      %v4419 = vmul.f32 %v4307, %v4418
      %v4420 = vsub.f32 1.0, %v4419
      %v4421 = vmul.f32 %v4418, %v4420
      %v4422 = vadd.f32 %v4418, %v4421
      %vm4423 = vweird.f32 %v4307
      %vm4424 = vweird.f32 %v4418
      %vm4425 = vmor %vm4423, %vm4424
      %v4426 = vsel %vm4425, %v4418, %v4422
      %v4427 = vand.u32 2147483647, %v4307
      %vm4428 = vcmp.eq.f32.partialorder %v4427, 8.507059e+37
      %v4429 = vand.u32 %v4307, 2147483648
      %v4430 = vor.u32 1.1754944e-38, %v4429
      %v4431 = vsel %vm4428, %v4430, %v4426
      %v4432 = vmul.f32 %v4251, %v4431
      %v4433 = vrcp.pop %v4326
      %v4434 = vmul.f32 %v4326, %v4433
      %v4435 = vsub.f32 1.0, %v4434
      %v4436 = vmul.f32 %v4433, %v4435
      %v4437 = vadd.f32 %v4433, %v4436
      %vm4438 = vweird.f32 %v4326
      %vm4439 = vweird.f32 %v4433
      %vm4440 = vmor %vm4438, %vm4439
      %v4441 = vsel %vm4440, %v4433, %v4437
      %v4442 = vand.u32 2147483647, %v4326
      %vm4443 = vcmp.eq.f32.partialorder %v4442, 8.507059e+37
      %v4444 = vand.u32 %v4326, 2147483648
      %v4445 = vor.u32 1.1754944e-38, %v4444
      %v4446 = vsel %vm4443, %v4445, %v4441
      %v4447 = vmul.f32 %v4270, %v4446
      %v4448 = vpack.c.bf16 %v4357, %v4342
      %v4449 = vpack.c.bf16 %v4387, %v4372
      %v4450 = vpack.c.bf16 %v4417, %v4402
      %v4451 = vpack.c.bf16 %v4447, %v4432
      %4452 = vst [vmem:[#allocation3] sm:$0xff] %v4448
      %4453 = vst [vmem:[#allocation3 + $0x40] sm:$0xff] %v4449
      %4454 = vst [vmem:[#allocation3 + $0x80] sm:$0xff] %v4450
      %4455 = vst [vmem:[#allocation3 + $0xc0] sm:$0xff] %v4451
      %vm4456 = vcmp.gt.f32.partialorder %v3728, 0.0
      %vm4457 = vcmp.gt.f32.partialorder %v3757, 0.0
      %vm4458 = vcmp.gt.f32.partialorder %v3730, 0.0
      %vm4459 = vcmp.gt.f32.partialorder %v3759, 0.0
      %vm4460 = vcmp.gt.f32.partialorder %v3733, 0.0
      %vm4461 = vcmp.gt.f32.partialorder %v3762, 0.0
      %vm4462 = vcmp.gt.f32.partialorder %v3735, 0.0
      %vm4463 = vcmp.gt.f32.partialorder %v3764, 0.0
      %v4464 = vadd.f32 %v3728, 1.0
      %v4465 = vadd.f32 %v3757, 1.0
      %v4466 = vadd.f32 %v3730, 1.0
      %v4467 = vadd.f32 %v3759, 1.0
      %v4468 = vadd.f32 %v3733, 1.0
      %v4469 = vadd.f32 %v3762, 1.0
      %v4470 = vadd.f32 %v3735, 1.0
      %v4471 = vadd.f32 %v3764, 1.0
      %v4472 = vmul.f32 %v3728, 1.442695
      %v4473 = vpow.pop %v4472
      %v4474 = vmul.f32 %v3757, 1.442695
      %v4475 = vpow.pop %v4474
      %v4476 = vmul.f32 %v3730, 1.442695
      %v4477 = vpow.pop %v4476
      %v4478 = vmul.f32 %v3759, 1.442695
      %v4479 = vpow.pop %v4478
      %v4480 = vmul.f32 %v3733, 1.442695
      %v4481 = vpow.pop %v4480
      %v4482 = vmul.f32 %v3762, 1.442695
      %v4483 = vpow.pop %v4482
      %v4484 = vmul.f32 %v3735, 1.442695
      %v4485 = vpow.pop %v4484
      %v4486 = vmul.f32 %v3764, 1.442695
      %v4487 = vpow.pop %v4486
      %v4488 = vsel %vm4456, %v4464, %v4473
      %v4489 = vsel %vm4457, %v4465, %v4475
      %v4490 = vsel %vm4458, %v4466, %v4477
      %v4491 = vsel %vm4459, %v4467, %v4479
      %v4492 = vsel %vm4460, %v4468, %v4481
      %v4493 = vsel %vm4461, %v4469, %v4483
      %v4494 = vsel %vm4462, %v4470, %v4485
      %v4495 = vsel %vm4463, %v4471, %v4487
      %v4496 = vpack.c.bf16 %v3740, %v3738
      %v4497 = vpack.c.bf16 %v3769, %v3767
      %v4498 = vpack.c.bf16 %v3745, %v3743
      %v4499 = vpack.c.bf16 %v3774, %v3772
      %v4500 = vpack.c.bf16 %v4490, %v4488
      %v4501 = vpack.c.bf16 %v4491, %v4489
      %v4502 = vpack.c.bf16 %v4494, %v4492
      %v4503 = vpack.c.bf16 %v4495, %v4493
      %4504 = vmatpush.bf16.xpose.msra.mxu0 0
      %4505 = vmatpush.bf16.xpose.msra.mxu0 0
      %4506 = vmatpush.bf16.xpose.msra.mxu0 0
      %4507 = vmatpush.bf16.xpose.msra.mxu0 0
      %4508 = vmatpush.bf16.xpose.msra.mxu0 0
      %4509 = vmatpush.bf16.xpose.msra.mxu0 0
      %4510 = vmatpush.bf16.xpose.msra.mxu0 %v4502
      %4511 = vmatpush.bf16.xpose.msra.mxu0 %v4500
      %4512 = vmatmul.bf16.gmra.mxu0 %v4496
      %v4513 = vpop.f32.mrf.mxu0
      %v4514 = vadd.f32 0.0, %v4513
      %v4515 = vpop.f32.mrf.mxu0
      %v4516 = vadd.f32 0.0, %v4515
      %4517 = vmatmul.bf16.gmra.mxu0 %v4498
      %v4518 = vpop.f32.mrf.mxu0
      %v4519 = vadd.f32 0.0, %v4518
      %v4520 = vpop.f32.mrf.mxu0
      %v4521 = vadd.f32 0.0, %v4520
      %4522 = vdwg.mxu0
      %4523 = vmatpush.bf16.xpose.msra.mxu0 0
      %4524 = vmatpush.bf16.xpose.msra.mxu0 0
      %4525 = vmatpush.bf16.xpose.msra.mxu0 0
      %4526 = vmatpush.bf16.xpose.msra.mxu0 0
      %4527 = vmatpush.bf16.xpose.msra.mxu0 0
      %4528 = vmatpush.bf16.xpose.msra.mxu0 0
      %4529 = vmatpush.bf16.xpose.msra.mxu0 %v4503
      %4530 = vmatpush.bf16.xpose.msra.mxu0 %v4501
      %4531 = vmatmul.bf16.gmra.mxu0 %v4497
      %v4532 = vpop.f32.mrf.mxu0
      %v4533 = vadd.f32 %v4514, %v4532
      %v4534 = vpop.f32.mrf.mxu0
      %v4535 = vadd.f32 %v4516, %v4534
      %4536 = vmatmul.bf16.gmra.mxu0 %v4499
      %v4537 = vpop.f32.mrf.mxu0
      %v4538 = vadd.f32 %v4519, %v4537
      %v4539 = vpop.f32.mrf.mxu0
      %v4540 = vadd.f32 %v4521, %v4539
      %4541 = vdwg.mxu0
      %v4542 = vadd.f32 %v4488, %v4489
      %4543 = vadd.xlane.f32.xlu0 %v4542
      %v4544 = vpop.xlane.xlu0 %4543
      %v4545 = vadd.f32 %v4490, %v4491
      %4546 = vadd.xlane.f32.xlu0 %v4545
      %v4547 = vpop.xlane.xlu0 %4546
      %v4548 = vadd.f32 %v4492, %v4493
      %4549 = vadd.xlane.f32.xlu0 %v4548
      %v4550 = vpop.xlane.xlu0 %4549
      %v4551 = vadd.f32 %v4494, %v4495
      %4552 = vadd.xlane.f32.xlu0 %v4551
      %v4553 = vpop.xlane.xlu0 %4552
      %v4554 = vmul.f32 %v4533, %v343
      %v4555 = vmul.f32 %v4535, %v344
      %v4556 = vmul.f32 %v4538, %v345
      %v4557 = vmul.f32 %v4540, %v346
      %v4558 = vpack.c.bf16 %v4555, %v4554
      %v4559 = vpack.c.bf16 %v4557, %v4556
      %v4561 = vsel %vm485, %v4558, 0
      %v4564 = vsel %vm485, %v4559, 0
      %4566 = vmatpush.bf16.msra.mxu0 0
      %4567 = vmatpush.bf16.msra.mxu0 0
      %4568 = vmatpush.bf16.msra.mxu0 0
      %4569 = vmatpush.bf16.msra.mxu0 0
      %4570 = vmatpush.bf16.msra.mxu0 0
      %4571 = vmatpush.bf16.msra.mxu0 0
      %4572 = vmatpush.bf16.msra.mxu0 %v811
      %4573 = vmatpush.bf16.msra.mxu0 %v809
      %4574 = vmatmul.bf16.gmra.mxu0 %v4561
      %v4575 = vpop.f32.mrf.mxu0
      %v4576 = vadd.f32 0.0, %v4575
      %v4577 = vpop.f32.mrf.mxu0
      %v4578 = vadd.f32 0.0, %v4577
      %4579 = vmatmul.bf16.gmra.mxu0 %v4564
      %v4580 = vpop.f32.mrf.mxu0
      %v4581 = vadd.f32 0.0, %v4580
      %v4582 = vpop.f32.mrf.mxu0
      %v4583 = vadd.f32 0.0, %v4582
      %4584 = vdwg.mxu0
      %4585 = vmatpush.bf16.msra.mxu0 0
      %4586 = vmatpush.bf16.msra.mxu0 0
      %4587 = vmatpush.bf16.msra.mxu0 0
      %4588 = vmatpush.bf16.msra.mxu0 0
      %4589 = vmatpush.bf16.msra.mxu0 0
      %4590 = vmatpush.bf16.msra.mxu0 0
      %4591 = vmatpush.bf16.msra.mxu0 %v812
      %4592 = vmatpush.bf16.msra.mxu0 %v810
      %4593 = vmatmul.bf16.gmra.mxu0 %v4561
      %v4594 = vpop.f32.mrf.mxu0
      %v4595 = vadd.f32 0.0, %v4594
      %v4596 = vpop.f32.mrf.mxu0
      %v4597 = vadd.f32 0.0, %v4596
      %4598 = vmatmul.bf16.gmra.mxu0 %v4564
      %v4599 = vpop.f32.mrf.mxu0
      %v4600 = vadd.f32 0.0, %v4599
      %v4601 = vpop.f32.mrf.mxu0
      %v4602 = vadd.f32 0.0, %v4601
      %4603 = vdwg.mxu0
      %v4604 = vmul.f32 %v801, %v4544
      %v4605 = vmul.f32 %v802, %v4544
      %v4606 = vmul.f32 %v803, %v4547
      %v4607 = vmul.f32 %v804, %v4547
      %v4608 = vmul.f32 %v805, %v4550
      %v4609 = vmul.f32 %v806, %v4550
      %v4610 = vmul.f32 %v807, %v4553
      %v4611 = vmul.f32 %v808, %v4553
      %v4612 = vpack.c.bf16 %v4606, %v4604
      %v4613 = vpack.c.bf16 %v4607, %v4605
      %v4614 = vpack.c.bf16 %v4610, %v4608
      %v4615 = vpack.c.bf16 %v4611, %v4609
      %4616 = vmatpush.bf16.msra.mxu0 0
      %4617 = vmatpush.bf16.msra.mxu0 0
      %4618 = vmatpush.bf16.msra.mxu0 0
      %4619 = vmatpush.bf16.msra.mxu0 0
      %4620 = vmatpush.bf16.msra.mxu0 0
      %4621 = vmatpush.bf16.msra.mxu0 0
      %4622 = vmatpush.bf16.msra.mxu0 %v4614
      %4623 = vmatpush.bf16.msra.mxu0 %v4612
      %4624 = vmatmul.bf16.gmra.mxu0 %v4285
      %v4625 = vpop.f32.mrf.mxu0
      %v4626 = vadd.f32 1e-06, %v4625
      %v4627 = vpop.f32.mrf.mxu0
      %v4628 = vadd.f32 1e-06, %v4627
      %4629 = vmatmul.bf16.gmra.mxu0 %v4288
      %v4630 = vpop.f32.mrf.mxu0
      %v4631 = vadd.f32 1e-06, %v4630
      %v4632 = vpop.f32.mrf.mxu0
      %v4633 = vadd.f32 1e-06, %v4632
      %4634 = vdwg.mxu0
      %4635 = vmatpush.bf16.msra.mxu0 0
      %4636 = vmatpush.bf16.msra.mxu0 0
      %4637 = vmatpush.bf16.msra.mxu0 0
      %4638 = vmatpush.bf16.msra.mxu0 0
      %4639 = vmatpush.bf16.msra.mxu0 0
      %4640 = vmatpush.bf16.msra.mxu0 0
      %4641 = vmatpush.bf16.msra.mxu0 %v4615
      %4642 = vmatpush.bf16.msra.mxu0 %v4613
      %4643 = vmatmul.bf16.gmra.mxu0 %v4285
      %v4644 = vpop.f32.mrf.mxu0
      %v4645 = vadd.f32 1e-06, %v4644
      %v4646 = vpop.f32.mrf.mxu0
      %v4647 = vadd.f32 1e-06, %v4646
      %4648 = vmatmul.bf16.gmra.mxu0 %v4288
      %v4649 = vpop.f32.mrf.mxu0
      %v4650 = vadd.f32 1e-06, %v4649
      %v4651 = vpop.f32.mrf.mxu0
      %v4652 = vadd.f32 1e-06, %v4651
      %4653 = vdwg.mxu0
      %v4654 = vrcp.pop %v4626
      %v4655 = vmul.f32 %v4626, %v4654
      %v4656 = vsub.f32 1.0, %v4655
      %v4657 = vmul.f32 %v4654, %v4656
      %v4658 = vadd.f32 %v4654, %v4657
      %vm4659 = vweird.f32 %v4626
      %vm4660 = vweird.f32 %v4654
      %vm4661 = vmor %vm4659, %vm4660
      %v4662 = vsel %vm4661, %v4654, %v4658
      %v4663 = vand.u32 2147483647, %v4626
      %vm4664 = vcmp.eq.f32.partialorder %v4663, 8.507059e+37
      %v4665 = vand.u32 %v4626, 2147483648
      %v4666 = vor.u32 1.1754944e-38, %v4665
      %v4667 = vsel %vm4664, %v4666, %v4662
      %v4668 = vmul.f32 %v4576, %v4667
      %v4669 = vrcp.pop %v4645
      %v4670 = vmul.f32 %v4645, %v4669
      %v4671 = vsub.f32 1.0, %v4670
      %v4672 = vmul.f32 %v4669, %v4671
      %v4673 = vadd.f32 %v4669, %v4672
      %vm4674 = vweird.f32 %v4645
      %vm4675 = vweird.f32 %v4669
      %vm4676 = vmor %vm4674, %vm4675
      %v4677 = vsel %vm4676, %v4669, %v4673
      %v4678 = vand.u32 2147483647, %v4645
      %vm4679 = vcmp.eq.f32.partialorder %v4678, 8.507059e+37
      %v4680 = vand.u32 %v4645, 2147483648
      %v4681 = vor.u32 1.1754944e-38, %v4680
      %v4682 = vsel %vm4679, %v4681, %v4677
      %v4683 = vmul.f32 %v4595, %v4682
      %v4684 = vrcp.pop %v4628
      %v4685 = vmul.f32 %v4628, %v4684
      %v4686 = vsub.f32 1.0, %v4685
      %v4687 = vmul.f32 %v4684, %v4686
      %v4688 = vadd.f32 %v4684, %v4687
      %vm4689 = vweird.f32 %v4628
      %vm4690 = vweird.f32 %v4684
      %vm4691 = vmor %vm4689, %vm4690
      %v4692 = vsel %vm4691, %v4684, %v4688
      %v4693 = vand.u32 2147483647, %v4628
      %vm4694 = vcmp.eq.f32.partialorder %v4693, 8.507059e+37
      %v4695 = vand.u32 %v4628, 2147483648
      %v4696 = vor.u32 1.1754944e-38, %v4695
      %v4697 = vsel %vm4694, %v4696, %v4692
      %v4698 = vmul.f32 %v4578, %v4697
      %v4699 = vrcp.pop %v4647
      %v4700 = vmul.f32 %v4647, %v4699
      %v4701 = vsub.f32 1.0, %v4700
      %v4702 = vmul.f32 %v4699, %v4701
      %v4703 = vadd.f32 %v4699, %v4702
      %vm4704 = vweird.f32 %v4647
      %vm4705 = vweird.f32 %v4699
      %vm4706 = vmor %vm4704, %vm4705
      %v4707 = vsel %vm4706, %v4699, %v4703
      %v4708 = vand.u32 2147483647, %v4647
      %vm4709 = vcmp.eq.f32.partialorder %v4708, 8.507059e+37
      %v4710 = vand.u32 %v4647, 2147483648
      %v4711 = vor.u32 1.1754944e-38, %v4710
      %v4712 = vsel %vm4709, %v4711, %v4707
      %v4713 = vmul.f32 %v4597, %v4712
      %v4714 = vrcp.pop %v4631
      %v4715 = vmul.f32 %v4631, %v4714
      %v4716 = vsub.f32 1.0, %v4715
      %v4717 = vmul.f32 %v4714, %v4716
      %v4718 = vadd.f32 %v4714, %v4717
      %vm4719 = vweird.f32 %v4631
      %vm4720 = vweird.f32 %v4714
      %vm4721 = vmor %vm4719, %vm4720
      %v4722 = vsel %vm4721, %v4714, %v4718
      %v4723 = vand.u32 2147483647, %v4631
      %vm4724 = vcmp.eq.f32.partialorder %v4723, 8.507059e+37
      %v4725 = vand.u32 %v4631, 2147483648
      %v4726 = vor.u32 1.1754944e-38, %v4725
      %v4727 = vsel %vm4724, %v4726, %v4722
      %v4728 = vmul.f32 %v4581, %v4727
      %v4729 = vrcp.pop %v4650
      %v4730 = vmul.f32 %v4650, %v4729
      %v4731 = vsub.f32 1.0, %v4730
      %v4732 = vmul.f32 %v4729, %v4731
      %v4733 = vadd.f32 %v4729, %v4732
      %vm4734 = vweird.f32 %v4650
      %vm4735 = vweird.f32 %v4729
      %vm4736 = vmor %vm4734, %vm4735
      %v4737 = vsel %vm4736, %v4729, %v4733
      %v4738 = vand.u32 2147483647, %v4650
      %vm4739 = vcmp.eq.f32.partialorder %v4738, 8.507059e+37
      %v4740 = vand.u32 %v4650, 2147483648
      %v4741 = vor.u32 1.1754944e-38, %v4740
      %v4742 = vsel %vm4739, %v4741, %v4737
      %v4743 = vmul.f32 %v4600, %v4742
      %v4744 = vrcp.pop %v4633
      %v4745 = vmul.f32 %v4633, %v4744
      %v4746 = vsub.f32 1.0, %v4745
      %v4747 = vmul.f32 %v4744, %v4746
      %v4748 = vadd.f32 %v4744, %v4747
      %vm4749 = vweird.f32 %v4633
      %vm4750 = vweird.f32 %v4744
      %vm4751 = vmor %vm4749, %vm4750
      %v4752 = vsel %vm4751, %v4744, %v4748
      %v4753 = vand.u32 2147483647, %v4633
      %vm4754 = vcmp.eq.f32.partialorder %v4753, 8.507059e+37
      %v4755 = vand.u32 %v4633, 2147483648
      %v4756 = vor.u32 1.1754944e-38, %v4755
      %v4757 = vsel %vm4754, %v4756, %v4752
      %v4758 = vmul.f32 %v4583, %v4757
      %v4759 = vrcp.pop %v4652
      %v4760 = vmul.f32 %v4652, %v4759
      %v4761 = vsub.f32 1.0, %v4760
      %v4762 = vmul.f32 %v4759, %v4761
      %v4763 = vadd.f32 %v4759, %v4762
      %vm4764 = vweird.f32 %v4652
      %vm4765 = vweird.f32 %v4759
      %vm4766 = vmor %vm4764, %vm4765
      %v4767 = vsel %vm4766, %v4759, %v4763
      %v4768 = vand.u32 2147483647, %v4652
      %vm4769 = vcmp.eq.f32.partialorder %v4768, 8.507059e+37
      %v4770 = vand.u32 %v4652, 2147483648
      %v4771 = vor.u32 1.1754944e-38, %v4770
      %v4772 = vsel %vm4769, %v4771, %v4767
      %v4773 = vmul.f32 %v4602, %v4772
      %v4774 = vpack.c.bf16 %v4683, %v4668
      %v4775 = vpack.c.bf16 %v4713, %v4698
      %v4776 = vpack.c.bf16 %v4743, %v4728
      %v4777 = vpack.c.bf16 %v4773, %v4758
      %4778 = vst [vmem:[#allocation3 + $0x8] sm:$0xff] %v4774
      %4779 = vst [vmem:[#allocation3 + $0x48] sm:$0xff] %v4775
      %4780 = vst [vmem:[#allocation3 + $0x88] sm:$0xff] %v4776
      %4781 = vst [vmem:[#allocation3 + $0xc8] sm:$0xff] %v4777
      %vm4782 = vcmp.gt.f32.partialorder %v3786, 0.0
      %vm4783 = vcmp.gt.f32.partialorder %v3815, 0.0
      %vm4784 = vcmp.gt.f32.partialorder %v3788, 0.0
      %vm4785 = vcmp.gt.f32.partialorder %v3817, 0.0
      %vm4786 = vcmp.gt.f32.partialorder %v3791, 0.0
      %vm4787 = vcmp.gt.f32.partialorder %v3820, 0.0
      %vm4788 = vcmp.gt.f32.partialorder %v3793, 0.0
      %vm4789 = vcmp.gt.f32.partialorder %v3822, 0.0
      %v4790 = vadd.f32 %v3786, 1.0
      %v4791 = vadd.f32 %v3815, 1.0
      %v4792 = vadd.f32 %v3788, 1.0
      %v4793 = vadd.f32 %v3817, 1.0
      %v4794 = vadd.f32 %v3791, 1.0
      %v4795 = vadd.f32 %v3820, 1.0
      %v4796 = vadd.f32 %v3793, 1.0
      %v4797 = vadd.f32 %v3822, 1.0
      %v4798 = vmul.f32 %v3786, 1.442695
      %v4799 = vpow.pop %v4798
      %v4800 = vmul.f32 %v3815, 1.442695
      %v4801 = vpow.pop %v4800
      %v4802 = vmul.f32 %v3788, 1.442695
      %v4803 = vpow.pop %v4802
      %v4804 = vmul.f32 %v3817, 1.442695
      %v4805 = vpow.pop %v4804
      %v4806 = vmul.f32 %v3791, 1.442695
      %v4807 = vpow.pop %v4806
      %v4808 = vmul.f32 %v3820, 1.442695
      %v4809 = vpow.pop %v4808
      %v4810 = vmul.f32 %v3793, 1.442695
      %v4811 = vpow.pop %v4810
      %v4812 = vmul.f32 %v3822, 1.442695
      %v4813 = vpow.pop %v4812
      %v4814 = vsel %vm4782, %v4790, %v4799
      %v4815 = vsel %vm4783, %v4791, %v4801
      %v4816 = vsel %vm4784, %v4792, %v4803
      %v4817 = vsel %vm4785, %v4793, %v4805
      %v4818 = vsel %vm4786, %v4794, %v4807
      %v4819 = vsel %vm4787, %v4795, %v4809
      %v4820 = vsel %vm4788, %v4796, %v4811
      %v4821 = vsel %vm4789, %v4797, %v4813
      %v4822 = vpack.c.bf16 %v3798, %v3796
      %v4823 = vpack.c.bf16 %v3827, %v3825
      %v4824 = vpack.c.bf16 %v3803, %v3801
      %v4825 = vpack.c.bf16 %v3832, %v3830
      %v4826 = vpack.c.bf16 %v4816, %v4814
      %v4827 = vpack.c.bf16 %v4817, %v4815
      %v4828 = vpack.c.bf16 %v4820, %v4818
      %v4829 = vpack.c.bf16 %v4821, %v4819
      %4830 = vmatpush.bf16.xpose.msra.mxu0 0
      %4831 = vmatpush.bf16.xpose.msra.mxu0 0
      %4832 = vmatpush.bf16.xpose.msra.mxu0 0
      %4833 = vmatpush.bf16.xpose.msra.mxu0 0
      %4834 = vmatpush.bf16.xpose.msra.mxu0 0
      %4835 = vmatpush.bf16.xpose.msra.mxu0 0
      %4836 = vmatpush.bf16.xpose.msra.mxu0 %v4828
      %4837 = vmatpush.bf16.xpose.msra.mxu0 %v4826
      %4838 = vmatmul.bf16.gmra.mxu0 %v4822
      %v4839 = vpop.f32.mrf.mxu0
      %v4840 = vadd.f32 0.0, %v4839
      %v4841 = vpop.f32.mrf.mxu0
      %v4842 = vadd.f32 0.0, %v4841
      %4843 = vmatmul.bf16.gmra.mxu0 %v4824
      %v4844 = vpop.f32.mrf.mxu0
      %v4845 = vadd.f32 0.0, %v4844
      %v4846 = vpop.f32.mrf.mxu0
      %v4847 = vadd.f32 0.0, %v4846
      %4848 = vdwg.mxu0
      %4849 = vmatpush.bf16.xpose.msra.mxu0 0
      %4850 = vmatpush.bf16.xpose.msra.mxu0 0
      %4851 = vmatpush.bf16.xpose.msra.mxu0 0
      %4852 = vmatpush.bf16.xpose.msra.mxu0 0
      %4853 = vmatpush.bf16.xpose.msra.mxu0 0
      %4854 = vmatpush.bf16.xpose.msra.mxu0 0
      %4855 = vmatpush.bf16.xpose.msra.mxu0 %v4829
      %4856 = vmatpush.bf16.xpose.msra.mxu0 %v4827
      %4857 = vmatmul.bf16.gmra.mxu0 %v4823
      %v4858 = vpop.f32.mrf.mxu0
      %v4859 = vadd.f32 %v4840, %v4858
      %v4860 = vpop.f32.mrf.mxu0
      %v4861 = vadd.f32 %v4842, %v4860
      %4862 = vmatmul.bf16.gmra.mxu0 %v4825
      %v4863 = vpop.f32.mrf.mxu0
      %v4864 = vadd.f32 %v4845, %v4863
      %v4865 = vpop.f32.mrf.mxu0
      %v4866 = vadd.f32 %v4847, %v4865
      %4867 = vdwg.mxu0
      %v4868 = vadd.f32 %v4814, %v4815
      %4869 = vadd.xlane.f32.xlu0 %v4868
      %v4870 = vpop.xlane.xlu0 %4869
      %v4871 = vadd.f32 %v4816, %v4817
      %4872 = vadd.xlane.f32.xlu0 %v4871
      %v4873 = vpop.xlane.xlu0 %4872
      %v4874 = vadd.f32 %v4818, %v4819
      %4875 = vadd.xlane.f32.xlu0 %v4874
      %v4876 = vpop.xlane.xlu0 %4875
      %v4877 = vadd.f32 %v4820, %v4821
      %4878 = vadd.xlane.f32.xlu0 %v4877
      %v4879 = vpop.xlane.xlu0 %4878
      %v4880 = vmul.f32 %v4859, %v343
      %v4881 = vmul.f32 %v4861, %v344
      %v4882 = vmul.f32 %v4864, %v345
      %v4883 = vmul.f32 %v4866, %v346
      %v4884 = vpack.c.bf16 %v4881, %v4880
      %v4885 = vpack.c.bf16 %v4883, %v4882
      %v4887 = vsel %vm485, %v4884, 0
      %v4890 = vsel %vm485, %v4885, 0
      %4892 = vmatpush.bf16.msra.mxu0 0
      %4893 = vmatpush.bf16.msra.mxu0 0
      %4894 = vmatpush.bf16.msra.mxu0 0
      %4895 = vmatpush.bf16.msra.mxu0 0
      %4896 = vmatpush.bf16.msra.mxu0 0
      %4897 = vmatpush.bf16.msra.mxu0 0
      %4898 = vmatpush.bf16.msra.mxu0 %v811
      %4899 = vmatpush.bf16.msra.mxu0 %v809
      %4900 = vmatmul.bf16.gmra.mxu0 %v4887
      %v4901 = vpop.f32.mrf.mxu0
      %v4902 = vadd.f32 0.0, %v4901
      %v4903 = vpop.f32.mrf.mxu0
      %v4904 = vadd.f32 0.0, %v4903
      %4905 = vmatmul.bf16.gmra.mxu0 %v4890
      %v4906 = vpop.f32.mrf.mxu0
      %v4907 = vadd.f32 0.0, %v4906
      %v4908 = vpop.f32.mrf.mxu0
      %v4909 = vadd.f32 0.0, %v4908
      %4910 = vdwg.mxu0
      %4911 = vmatpush.bf16.msra.mxu0 0
      %4912 = vmatpush.bf16.msra.mxu0 0
      %4913 = vmatpush.bf16.msra.mxu0 0
      %4914 = vmatpush.bf16.msra.mxu0 0
      %4915 = vmatpush.bf16.msra.mxu0 0
      %4916 = vmatpush.bf16.msra.mxu0 0
      %4917 = vmatpush.bf16.msra.mxu0 %v812
      %4918 = vmatpush.bf16.msra.mxu0 %v810
      %4919 = vmatmul.bf16.gmra.mxu0 %v4887
      %v4920 = vpop.f32.mrf.mxu0
      %v4921 = vadd.f32 0.0, %v4920
      %v4922 = vpop.f32.mrf.mxu0
      %v4923 = vadd.f32 0.0, %v4922
      %4924 = vmatmul.bf16.gmra.mxu0 %v4890
      %v4925 = vpop.f32.mrf.mxu0
      %v4926 = vadd.f32 0.0, %v4925
      %v4927 = vpop.f32.mrf.mxu0
      %v4928 = vadd.f32 0.0, %v4927
      %4929 = vdwg.mxu0
      %v4930 = vmul.f32 %v801, %v4870
      %v4931 = vmul.f32 %v802, %v4870
      %v4932 = vmul.f32 %v803, %v4873
      %v4933 = vmul.f32 %v804, %v4873
      %v4934 = vmul.f32 %v805, %v4876
      %v4935 = vmul.f32 %v806, %v4876
      %v4936 = vmul.f32 %v807, %v4879
      %v4937 = vmul.f32 %v808, %v4879
      %v4938 = vpack.c.bf16 %v4932, %v4930
      %v4939 = vpack.c.bf16 %v4933, %v4931
      %v4940 = vpack.c.bf16 %v4936, %v4934
      %v4941 = vpack.c.bf16 %v4937, %v4935
      %4942 = vmatpush.bf16.msra.mxu0 0
      %4943 = vmatpush.bf16.msra.mxu0 0
      %4944 = vmatpush.bf16.msra.mxu0 0
      %4945 = vmatpush.bf16.msra.mxu0 0
      %4946 = vmatpush.bf16.msra.mxu0 0
      %4947 = vmatpush.bf16.msra.mxu0 0
      %4948 = vmatpush.bf16.msra.mxu0 %v4940
      %4949 = vmatpush.bf16.msra.mxu0 %v4938
      %4950 = vmatmul.bf16.gmra.mxu0 %v4285
      %v4951 = vpop.f32.mrf.mxu0
      %v4952 = vadd.f32 1e-06, %v4951
      %v4953 = vpop.f32.mrf.mxu0
      %v4954 = vadd.f32 1e-06, %v4953
      %4955 = vmatmul.bf16.gmra.mxu0 %v4288
      %v4956 = vpop.f32.mrf.mxu0
      %v4957 = vadd.f32 1e-06, %v4956
      %v4958 = vpop.f32.mrf.mxu0
      %v4959 = vadd.f32 1e-06, %v4958
      %4960 = vdwg.mxu0
      %4961 = vmatpush.bf16.msra.mxu0 0
      %4962 = vmatpush.bf16.msra.mxu0 0
      %4963 = vmatpush.bf16.msra.mxu0 0
      %4964 = vmatpush.bf16.msra.mxu0 0
      %4965 = vmatpush.bf16.msra.mxu0 0
      %4966 = vmatpush.bf16.msra.mxu0 0
      %4967 = vmatpush.bf16.msra.mxu0 %v4941
      %4968 = vmatpush.bf16.msra.mxu0 %v4939
      %4969 = vmatmul.bf16.gmra.mxu0 %v4285
      %v4970 = vpop.f32.mrf.mxu0
      %v4971 = vadd.f32 1e-06, %v4970
      %v4972 = vpop.f32.mrf.mxu0
      %v4973 = vadd.f32 1e-06, %v4972
      %4974 = vmatmul.bf16.gmra.mxu0 %v4288
      %v4975 = vpop.f32.mrf.mxu0
      %v4976 = vadd.f32 1e-06, %v4975
      %v4977 = vpop.f32.mrf.mxu0
      %v4978 = vadd.f32 1e-06, %v4977
      %4979 = vdwg.mxu0
      %v4980 = vrcp.pop %v4952
      %v4981 = vmul.f32 %v4952, %v4980
      %v4982 = vsub.f32 1.0, %v4981
      %v4983 = vmul.f32 %v4980, %v4982
      %v4984 = vadd.f32 %v4980, %v4983
      %vm4985 = vweird.f32 %v4952
      %vm4986 = vweird.f32 %v4980
      %vm4987 = vmor %vm4985, %vm4986
      %v4988 = vsel %vm4987, %v4980, %v4984
      %v4989 = vand.u32 2147483647, %v4952
      %vm4990 = vcmp.eq.f32.partialorder %v4989, 8.507059e+37
      %v4991 = vand.u32 %v4952, 2147483648
      %v4992 = vor.u32 1.1754944e-38, %v4991
      %v4993 = vsel %vm4990, %v4992, %v4988
      %v4994 = vmul.f32 %v4902, %v4993
      %v4995 = vrcp.pop %v4971
      %v4996 = vmul.f32 %v4971, %v4995
      %v4997 = vsub.f32 1.0, %v4996
      %v4998 = vmul.f32 %v4995, %v4997
      %v4999 = vadd.f32 %v4995, %v4998
      %vm5000 = vweird.f32 %v4971
      %vm5001 = vweird.f32 %v4995
      %vm5002 = vmor %vm5000, %vm5001
      %v5003 = vsel %vm5002, %v4995, %v4999
      %v5004 = vand.u32 2147483647, %v4971
      %vm5005 = vcmp.eq.f32.partialorder %v5004, 8.507059e+37
      %v5006 = vand.u32 %v4971, 2147483648
      %v5007 = vor.u32 1.1754944e-38, %v5006
      %v5008 = vsel %vm5005, %v5007, %v5003
      %v5009 = vmul.f32 %v4921, %v5008
      %v5010 = vrcp.pop %v4954
      %v5011 = vmul.f32 %v4954, %v5010
      %v5012 = vsub.f32 1.0, %v5011
      %v5013 = vmul.f32 %v5010, %v5012
      %v5014 = vadd.f32 %v5010, %v5013
      %vm5015 = vweird.f32 %v4954
      %vm5016 = vweird.f32 %v5010
      %vm5017 = vmor %vm5015, %vm5016
      %v5018 = vsel %vm5017, %v5010, %v5014
      %v5019 = vand.u32 2147483647, %v4954
      %vm5020 = vcmp.eq.f32.partialorder %v5019, 8.507059e+37
      %v5021 = vand.u32 %v4954, 2147483648
      %v5022 = vor.u32 1.1754944e-38, %v5021
      %v5023 = vsel %vm5020, %v5022, %v5018
      %v5024 = vmul.f32 %v4904, %v5023
      %v5025 = vrcp.pop %v4973
      %v5026 = vmul.f32 %v4973, %v5025
      %v5027 = vsub.f32 1.0, %v5026
      %v5028 = vmul.f32 %v5025, %v5027
      %v5029 = vadd.f32 %v5025, %v5028
      %vm5030 = vweird.f32 %v4973
      %vm5031 = vweird.f32 %v5025
      %vm5032 = vmor %vm5030, %vm5031
      %v5033 = vsel %vm5032, %v5025, %v5029
      %v5034 = vand.u32 2147483647, %v4973
      %vm5035 = vcmp.eq.f32.partialorder %v5034, 8.507059e+37
      %v5036 = vand.u32 %v4973, 2147483648
      %v5037 = vor.u32 1.1754944e-38, %v5036
      %v5038 = vsel %vm5035, %v5037, %v5033
      %v5039 = vmul.f32 %v4923, %v5038
      %v5040 = vrcp.pop %v4957
      %v5041 = vmul.f32 %v4957, %v5040
      %v5042 = vsub.f32 1.0, %v5041
      %v5043 = vmul.f32 %v5040, %v5042
      %v5044 = vadd.f32 %v5040, %v5043
      %vm5045 = vweird.f32 %v4957
      %vm5046 = vweird.f32 %v5040
      %vm5047 = vmor %vm5045, %vm5046
      %v5048 = vsel %vm5047, %v5040, %v5044
      %v5049 = vand.u32 2147483647, %v4957
      %vm5050 = vcmp.eq.f32.partialorder %v5049, 8.507059e+37
      %v5051 = vand.u32 %v4957, 2147483648
      %v5052 = vor.u32 1.1754944e-38, %v5051
      %v5053 = vsel %vm5050, %v5052, %v5048
      %v5054 = vmul.f32 %v4907, %v5053
      %v5055 = vrcp.pop %v4976
      %v5056 = vmul.f32 %v4976, %v5055
      %v5057 = vsub.f32 1.0, %v5056
      %v5058 = vmul.f32 %v5055, %v5057
      %v5059 = vadd.f32 %v5055, %v5058
      %vm5060 = vweird.f32 %v4976
      %vm5061 = vweird.f32 %v5055
      %vm5062 = vmor %vm5060, %vm5061
      %v5063 = vsel %vm5062, %v5055, %v5059
      %v5064 = vand.u32 2147483647, %v4976
      %vm5065 = vcmp.eq.f32.partialorder %v5064, 8.507059e+37
      %v5066 = vand.u32 %v4976, 2147483648
      %v5067 = vor.u32 1.1754944e-38, %v5066
      %v5068 = vsel %vm5065, %v5067, %v5063
      %v5069 = vmul.f32 %v4926, %v5068
      %v5070 = vrcp.pop %v4959
      %v5071 = vmul.f32 %v4959, %v5070
      %v5072 = vsub.f32 1.0, %v5071
      %v5073 = vmul.f32 %v5070, %v5072
      %v5074 = vadd.f32 %v5070, %v5073
      %vm5075 = vweird.f32 %v4959
      %vm5076 = vweird.f32 %v5070
      %vm5077 = vmor %vm5075, %vm5076
      %v5078 = vsel %vm5077, %v5070, %v5074
      %v5079 = vand.u32 2147483647, %v4959
      %vm5080 = vcmp.eq.f32.partialorder %v5079, 8.507059e+37
      %v5081 = vand.u32 %v4959, 2147483648
      %v5082 = vor.u32 1.1754944e-38, %v5081
      %v5083 = vsel %vm5080, %v5082, %v5078
      %v5084 = vmul.f32 %v4909, %v5083
      %v5085 = vrcp.pop %v4978
      %v5086 = vmul.f32 %v4978, %v5085
      %v5087 = vsub.f32 1.0, %v5086
      %v5088 = vmul.f32 %v5085, %v5087
      %v5089 = vadd.f32 %v5085, %v5088
      %vm5090 = vweird.f32 %v4978
      %vm5091 = vweird.f32 %v5085
      %vm5092 = vmor %vm5090, %vm5091
      %v5093 = vsel %vm5092, %v5085, %v5089
      %v5094 = vand.u32 2147483647, %v4978
      %vm5095 = vcmp.eq.f32.partialorder %v5094, 8.507059e+37
      %v5096 = vand.u32 %v4978, 2147483648
      %v5097 = vor.u32 1.1754944e-38, %v5096
      %v5098 = vsel %vm5095, %v5097, %v5093
      %v5099 = vmul.f32 %v4928, %v5098
      %v5100 = vpack.c.bf16 %v5009, %v4994
      %v5101 = vpack.c.bf16 %v5039, %v5024
      %v5102 = vpack.c.bf16 %v5069, %v5054
      %v5103 = vpack.c.bf16 %v5099, %v5084
      %5104 = vst [vmem:[#allocation3 + $0x10] sm:$0xff] %v5100
      %5105 = vst [vmem:[#allocation3 + $0x50] sm:$0xff] %v5101
      %5106 = vst [vmem:[#allocation3 + $0x90] sm:$0xff] %v5102
      %5107 = vst [vmem:[#allocation3 + $0xd0] sm:$0xff] %v5103
      %vm5108 = vcmp.gt.f32.partialorder %v3844, 0.0
      %vm5109 = vcmp.gt.f32.partialorder %v3873, 0.0
      %vm5110 = vcmp.gt.f32.partialorder %v3846, 0.0
      %vm5111 = vcmp.gt.f32.partialorder %v3875, 0.0
      %vm5112 = vcmp.gt.f32.partialorder %v3849, 0.0
      %vm5113 = vcmp.gt.f32.partialorder %v3878, 0.0
      %vm5114 = vcmp.gt.f32.partialorder %v3851, 0.0
      %vm5115 = vcmp.gt.f32.partialorder %v3880, 0.0
      %v5116 = vadd.f32 %v3844, 1.0
      %v5117 = vadd.f32 %v3873, 1.0
      %v5118 = vadd.f32 %v3846, 1.0
      %v5119 = vadd.f32 %v3875, 1.0
      %v5120 = vadd.f32 %v3849, 1.0
      %v5121 = vadd.f32 %v3878, 1.0
      %v5122 = vadd.f32 %v3851, 1.0
      %v5123 = vadd.f32 %v3880, 1.0
      %v5124 = vmul.f32 %v3844, 1.442695
      %v5125 = vpow.pop %v5124
      %v5126 = vmul.f32 %v3873, 1.442695
      %v5127 = vpow.pop %v5126
      %v5128 = vmul.f32 %v3846, 1.442695
      %v5129 = vpow.pop %v5128
      %v5130 = vmul.f32 %v3875, 1.442695
      %v5131 = vpow.pop %v5130
      %v5132 = vmul.f32 %v3849, 1.442695
      %v5133 = vpow.pop %v5132
      %v5134 = vmul.f32 %v3878, 1.442695
      %v5135 = vpow.pop %v5134
      %v5136 = vmul.f32 %v3851, 1.442695
      %v5137 = vpow.pop %v5136
      %v5138 = vmul.f32 %v3880, 1.442695
      %v5139 = vpow.pop %v5138
      %v5140 = vsel %vm5108, %v5116, %v5125
      %v5141 = vsel %vm5109, %v5117, %v5127
      %v5142 = vsel %vm5110, %v5118, %v5129
      %v5143 = vsel %vm5111, %v5119, %v5131
      %v5144 = vsel %vm5112, %v5120, %v5133
      %v5145 = vsel %vm5113, %v5121, %v5135
      %v5146 = vsel %vm5114, %v5122, %v5137
      %v5147 = vsel %vm5115, %v5123, %v5139
      %v5148 = vpack.c.bf16 %v3856, %v3854
      %v5149 = vpack.c.bf16 %v3885, %v3883
      %v5150 = vpack.c.bf16 %v3861, %v3859
      %v5151 = vpack.c.bf16 %v3890, %v3888
      %v5152 = vpack.c.bf16 %v5142, %v5140
      %v5153 = vpack.c.bf16 %v5143, %v5141
      %v5154 = vpack.c.bf16 %v5146, %v5144
      %v5155 = vpack.c.bf16 %v5147, %v5145
      %5156 = vmatpush.bf16.xpose.msra.mxu0 0
      %5157 = vmatpush.bf16.xpose.msra.mxu0 0
      %5158 = vmatpush.bf16.xpose.msra.mxu0 0
      %5159 = vmatpush.bf16.xpose.msra.mxu0 0
      %5160 = vmatpush.bf16.xpose.msra.mxu0 0
      %5161 = vmatpush.bf16.xpose.msra.mxu0 0
      %5162 = vmatpush.bf16.xpose.msra.mxu0 %v5154
      %5163 = vmatpush.bf16.xpose.msra.mxu0 %v5152
      %5164 = vmatmul.bf16.gmra.mxu0 %v5148
      %v5165 = vpop.f32.mrf.mxu0
      %v5166 = vadd.f32 0.0, %v5165
      %v5167 = vpop.f32.mrf.mxu0
      %v5168 = vadd.f32 0.0, %v5167
      %5169 = vmatmul.bf16.gmra.mxu0 %v5150
      %v5170 = vpop.f32.mrf.mxu0
      %v5171 = vadd.f32 0.0, %v5170
      %v5172 = vpop.f32.mrf.mxu0
      %v5173 = vadd.f32 0.0, %v5172
      %5174 = vdwg.mxu0
      %5175 = vmatpush.bf16.xpose.msra.mxu0 0
      %5176 = vmatpush.bf16.xpose.msra.mxu0 0
      %5177 = vmatpush.bf16.xpose.msra.mxu0 0
      %5178 = vmatpush.bf16.xpose.msra.mxu0 0
      %5179 = vmatpush.bf16.xpose.msra.mxu0 0
      %5180 = vmatpush.bf16.xpose.msra.mxu0 0
      %5181 = vmatpush.bf16.xpose.msra.mxu0 %v5155
      %5182 = vmatpush.bf16.xpose.msra.mxu0 %v5153
      %5183 = vmatmul.bf16.gmra.mxu0 %v5149
      %v5184 = vpop.f32.mrf.mxu0
      %v5185 = vadd.f32 %v5166, %v5184
      %v5186 = vpop.f32.mrf.mxu0
      %v5187 = vadd.f32 %v5168, %v5186
      %5188 = vmatmul.bf16.gmra.mxu0 %v5151
      %v5189 = vpop.f32.mrf.mxu0
      %v5190 = vadd.f32 %v5171, %v5189
      %v5191 = vpop.f32.mrf.mxu0
      %v5192 = vadd.f32 %v5173, %v5191
      %5193 = vdwg.mxu0
      %v5194 = vadd.f32 %v5140, %v5141
      %5195 = vadd.xlane.f32.xlu0 %v5194
      %v5196 = vpop.xlane.xlu0 %5195
      %v5197 = vadd.f32 %v5142, %v5143
      %5198 = vadd.xlane.f32.xlu0 %v5197
      %v5199 = vpop.xlane.xlu0 %5198
      %v5200 = vadd.f32 %v5144, %v5145
      %5201 = vadd.xlane.f32.xlu0 %v5200
      %v5202 = vpop.xlane.xlu0 %5201
      %v5203 = vadd.f32 %v5146, %v5147
      %5204 = vadd.xlane.f32.xlu0 %v5203
      %v5205 = vpop.xlane.xlu0 %5204
      %v5206 = vmul.f32 %v5185, %v343
      %v5207 = vmul.f32 %v5187, %v344
      %v5208 = vmul.f32 %v5190, %v345
      %v5209 = vmul.f32 %v5192, %v346
      %v5210 = vpack.c.bf16 %v5207, %v5206
      %v5211 = vpack.c.bf16 %v5209, %v5208
      %v5213 = vsel %vm485, %v5210, 0
      %v5216 = vsel %vm485, %v5211, 0
      %5218 = vmatpush.bf16.msra.mxu0 0
      %5219 = vmatpush.bf16.msra.mxu0 0
      %5220 = vmatpush.bf16.msra.mxu0 0
      %5221 = vmatpush.bf16.msra.mxu0 0
      %5222 = vmatpush.bf16.msra.mxu0 0
      %5223 = vmatpush.bf16.msra.mxu0 0
      %5224 = vmatpush.bf16.msra.mxu0 %v811
      %5225 = vmatpush.bf16.msra.mxu0 %v809
      %5226 = vmatmul.bf16.gmra.mxu0 %v5213
      %v5227 = vpop.f32.mrf.mxu0
      %v5228 = vadd.f32 0.0, %v5227
      %v5229 = vpop.f32.mrf.mxu0
      %v5230 = vadd.f32 0.0, %v5229
      %5231 = vmatmul.bf16.gmra.mxu0 %v5216
      %v5232 = vpop.f32.mrf.mxu0
      %v5233 = vadd.f32 0.0, %v5232
      %v5234 = vpop.f32.mrf.mxu0
      %v5235 = vadd.f32 0.0, %v5234
      %5236 = vdwg.mxu0
      %5237 = vmatpush.bf16.msra.mxu0 0
      %5238 = vmatpush.bf16.msra.mxu0 0
      %5239 = vmatpush.bf16.msra.mxu0 0
      %5240 = vmatpush.bf16.msra.mxu0 0
      %5241 = vmatpush.bf16.msra.mxu0 0
      %5242 = vmatpush.bf16.msra.mxu0 0
      %5243 = vmatpush.bf16.msra.mxu0 %v812
      %5244 = vmatpush.bf16.msra.mxu0 %v810
      %5245 = vmatmul.bf16.gmra.mxu0 %v5213
      %v5246 = vpop.f32.mrf.mxu0
      %v5247 = vadd.f32 0.0, %v5246
      %v5248 = vpop.f32.mrf.mxu0
      %v5249 = vadd.f32 0.0, %v5248
      %5250 = vmatmul.bf16.gmra.mxu0 %v5216
      %v5251 = vpop.f32.mrf.mxu0
      %v5252 = vadd.f32 0.0, %v5251
      %v5253 = vpop.f32.mrf.mxu0
      %v5254 = vadd.f32 0.0, %v5253
      %5255 = vdwg.mxu0
      %v5256 = vmul.f32 %v801, %v5196
      %v5257 = vmul.f32 %v802, %v5196
      %v5258 = vmul.f32 %v803, %v5199
      %v5259 = vmul.f32 %v804, %v5199
      %v5260 = vmul.f32 %v805, %v5202
      %v5261 = vmul.f32 %v806, %v5202
      %v5262 = vmul.f32 %v807, %v5205
      %v5263 = vmul.f32 %v808, %v5205
      %v5264 = vpack.c.bf16 %v5258, %v5256
      %v5265 = vpack.c.bf16 %v5259, %v5257
      %v5266 = vpack.c.bf16 %v5262, %v5260
      %v5267 = vpack.c.bf16 %v5263, %v5261
      %5268 = vmatpush.bf16.msra.mxu0 0
      %5269 = vmatpush.bf16.msra.mxu0 0
      %5270 = vmatpush.bf16.msra.mxu0 0
      %5271 = vmatpush.bf16.msra.mxu0 0
      %5272 = vmatpush.bf16.msra.mxu0 0
      %5273 = vmatpush.bf16.msra.mxu0 0
      %5274 = vmatpush.bf16.msra.mxu0 %v5266
      %5275 = vmatpush.bf16.msra.mxu0 %v5264
      %5276 = vmatmul.bf16.gmra.mxu0 %v4285
      %v5277 = vpop.f32.mrf.mxu0
      %v5278 = vadd.f32 1e-06, %v5277
      %v5279 = vpop.f32.mrf.mxu0
      %v5280 = vadd.f32 1e-06, %v5279
      %5281 = vmatmul.bf16.gmra.mxu0 %v4288
      %v5282 = vpop.f32.mrf.mxu0
      %v5283 = vadd.f32 1e-06, %v5282
      %v5284 = vpop.f32.mrf.mxu0
      %v5285 = vadd.f32 1e-06, %v5284
      %5286 = vdwg.mxu0
      %5287 = vmatpush.bf16.msra.mxu0 0
      %5288 = vmatpush.bf16.msra.mxu0 0
      %5289 = vmatpush.bf16.msra.mxu0 0
      %5290 = vmatpush.bf16.msra.mxu0 0
      %5291 = vmatpush.bf16.msra.mxu0 0
      %5292 = vmatpush.bf16.msra.mxu0 0
      %5293 = vmatpush.bf16.msra.mxu0 %v5267
      %5294 = vmatpush.bf16.msra.mxu0 %v5265
      %5295 = vmatmul.bf16.gmra.mxu0 %v4285
      %v5296 = vpop.f32.mrf.mxu0
      %v5297 = vadd.f32 1e-06, %v5296
      %v5298 = vpop.f32.mrf.mxu0
      %v5299 = vadd.f32 1e-06, %v5298
      %5300 = vmatmul.bf16.gmra.mxu0 %v4288
      %v5301 = vpop.f32.mrf.mxu0
      %v5302 = vadd.f32 1e-06, %v5301
      %v5303 = vpop.f32.mrf.mxu0
      %v5304 = vadd.f32 1e-06, %v5303
      %5305 = vdwg.mxu0
      %v5306 = vrcp.pop %v5278
      %v5307 = vmul.f32 %v5278, %v5306
      %v5308 = vsub.f32 1.0, %v5307
      %v5309 = vmul.f32 %v5306, %v5308
      %v5310 = vadd.f32 %v5306, %v5309
      %vm5311 = vweird.f32 %v5278
      %vm5312 = vweird.f32 %v5306
      %vm5313 = vmor %vm5311, %vm5312
      %v5314 = vsel %vm5313, %v5306, %v5310
      %v5315 = vand.u32 2147483647, %v5278
      %vm5316 = vcmp.eq.f32.partialorder %v5315, 8.507059e+37
      %v5317 = vand.u32 %v5278, 2147483648
      %v5318 = vor.u32 1.1754944e-38, %v5317
      %v5319 = vsel %vm5316, %v5318, %v5314
      %v5320 = vmul.f32 %v5228, %v5319
      %v5321 = vrcp.pop %v5297
      %v5322 = vmul.f32 %v5297, %v5321
      %v5323 = vsub.f32 1.0, %v5322
      %v5324 = vmul.f32 %v5321, %v5323
      %v5325 = vadd.f32 %v5321, %v5324
      %vm5326 = vweird.f32 %v5297
      %vm5327 = vweird.f32 %v5321
      %vm5328 = vmor %vm5326, %vm5327
      %v5329 = vsel %vm5328, %v5321, %v5325
      %v5330 = vand.u32 2147483647, %v5297
      %vm5331 = vcmp.eq.f32.partialorder %v5330, 8.507059e+37
      %v5332 = vand.u32 %v5297, 2147483648
      %v5333 = vor.u32 1.1754944e-38, %v5332
      %v5334 = vsel %vm5331, %v5333, %v5329
      %v5335 = vmul.f32 %v5247, %v5334
      %v5336 = vrcp.pop %v5280
      %v5337 = vmul.f32 %v5280, %v5336
      %v5338 = vsub.f32 1.0, %v5337
      %v5339 = vmul.f32 %v5336, %v5338
      %v5340 = vadd.f32 %v5336, %v5339
      %vm5341 = vweird.f32 %v5280
      %vm5342 = vweird.f32 %v5336
      %vm5343 = vmor %vm5341, %vm5342
      %v5344 = vsel %vm5343, %v5336, %v5340
      %v5345 = vand.u32 2147483647, %v5280
      %vm5346 = vcmp.eq.f32.partialorder %v5345, 8.507059e+37
      %v5347 = vand.u32 %v5280, 2147483648
      %v5348 = vor.u32 1.1754944e-38, %v5347
      %v5349 = vsel %vm5346, %v5348, %v5344
      %v5350 = vmul.f32 %v5230, %v5349
      %v5351 = vrcp.pop %v5299
      %v5352 = vmul.f32 %v5299, %v5351
      %v5353 = vsub.f32 1.0, %v5352
      %v5354 = vmul.f32 %v5351, %v5353
      %v5355 = vadd.f32 %v5351, %v5354
      %vm5356 = vweird.f32 %v5299
      %vm5357 = vweird.f32 %v5351
      %vm5358 = vmor %vm5356, %vm5357
      %v5359 = vsel %vm5358, %v5351, %v5355
      %v5360 = vand.u32 2147483647, %v5299
      %vm5361 = vcmp.eq.f32.partialorder %v5360, 8.507059e+37
      %v5362 = vand.u32 %v5299, 2147483648
      %v5363 = vor.u32 1.1754944e-38, %v5362
      %v5364 = vsel %vm5361, %v5363, %v5359
      %v5365 = vmul.f32 %v5249, %v5364
      %v5366 = vrcp.pop %v5283
      %v5367 = vmul.f32 %v5283, %v5366
      %v5368 = vsub.f32 1.0, %v5367
      %v5369 = vmul.f32 %v5366, %v5368
      %v5370 = vadd.f32 %v5366, %v5369
      %vm5371 = vweird.f32 %v5283
      %vm5372 = vweird.f32 %v5366
      %vm5373 = vmor %vm5371, %vm5372
      %v5374 = vsel %vm5373, %v5366, %v5370
      %v5375 = vand.u32 2147483647, %v5283
      %vm5376 = vcmp.eq.f32.partialorder %v5375, 8.507059e+37
      %v5377 = vand.u32 %v5283, 2147483648
      %v5378 = vor.u32 1.1754944e-38, %v5377
      %v5379 = vsel %vm5376, %v5378, %v5374
      %v5380 = vmul.f32 %v5233, %v5379
      %v5381 = vrcp.pop %v5302
      %v5382 = vmul.f32 %v5302, %v5381
      %v5383 = vsub.f32 1.0, %v5382
      %v5384 = vmul.f32 %v5381, %v5383
      %v5385 = vadd.f32 %v5381, %v5384
      %vm5386 = vweird.f32 %v5302
      %vm5387 = vweird.f32 %v5381
      %vm5388 = vmor %vm5386, %vm5387
      %v5389 = vsel %vm5388, %v5381, %v5385
      %v5390 = vand.u32 2147483647, %v5302
      %vm5391 = vcmp.eq.f32.partialorder %v5390, 8.507059e+37
      %v5392 = vand.u32 %v5302, 2147483648
      %v5393 = vor.u32 1.1754944e-38, %v5392
      %v5394 = vsel %vm5391, %v5393, %v5389
      %v5395 = vmul.f32 %v5252, %v5394
      %v5396 = vrcp.pop %v5285
      %v5397 = vmul.f32 %v5285, %v5396
      %v5398 = vsub.f32 1.0, %v5397
      %v5399 = vmul.f32 %v5396, %v5398
      %v5400 = vadd.f32 %v5396, %v5399
      %vm5401 = vweird.f32 %v5285
      %vm5402 = vweird.f32 %v5396
      %vm5403 = vmor %vm5401, %vm5402
      %v5404 = vsel %vm5403, %v5396, %v5400
      %v5405 = vand.u32 2147483647, %v5285
      %vm5406 = vcmp.eq.f32.partialorder %v5405, 8.507059e+37
      %v5407 = vand.u32 %v5285, 2147483648
      %v5408 = vor.u32 1.1754944e-38, %v5407
      %v5409 = vsel %vm5406, %v5408, %v5404
      %v5410 = vmul.f32 %v5235, %v5409
      %v5411 = vrcp.pop %v5304
      %v5412 = vmul.f32 %v5304, %v5411
      %v5413 = vsub.f32 1.0, %v5412
      %v5414 = vmul.f32 %v5411, %v5413
      %v5415 = vadd.f32 %v5411, %v5414
      %vm5416 = vweird.f32 %v5304
      %vm5417 = vweird.f32 %v5411
      %vm5418 = vmor %vm5416, %vm5417
      %v5419 = vsel %vm5418, %v5411, %v5415
      %v5420 = vand.u32 2147483647, %v5304
      %vm5421 = vcmp.eq.f32.partialorder %v5420, 8.507059e+37
      %v5422 = vand.u32 %v5304, 2147483648
      %v5423 = vor.u32 1.1754944e-38, %v5422
      %v5424 = vsel %vm5421, %v5423, %v5419
      %v5425 = vmul.f32 %v5254, %v5424
      %v5426 = vpack.c.bf16 %v5335, %v5320
      %v5427 = vpack.c.bf16 %v5365, %v5350
      %v5428 = vpack.c.bf16 %v5395, %v5380
      %v5429 = vpack.c.bf16 %v5425, %v5410
      %5430 = vst [vmem:[#allocation3 + $0x18] sm:$0xff] %v5426
      %5431 = vst [vmem:[#allocation3 + $0x58] sm:$0xff] %v5427
      %5432 = vst [vmem:[#allocation3 + $0x98] sm:$0xff] %v5428
      %5433 = vst [vmem:[#allocation3 + $0xd8] sm:$0xff] %v5429
      %vm5434 = vcmp.gt.f32.partialorder %v3902, 0.0
      %vm5435 = vcmp.gt.f32.partialorder %v3931, 0.0
      %vm5436 = vcmp.gt.f32.partialorder %v3904, 0.0
      %vm5437 = vcmp.gt.f32.partialorder %v3933, 0.0
      %vm5438 = vcmp.gt.f32.partialorder %v3907, 0.0
      %vm5439 = vcmp.gt.f32.partialorder %v3936, 0.0
      %vm5440 = vcmp.gt.f32.partialorder %v3909, 0.0
      %vm5441 = vcmp.gt.f32.partialorder %v3938, 0.0
      %v5442 = vadd.f32 %v3902, 1.0
      %v5443 = vadd.f32 %v3931, 1.0
      %v5444 = vadd.f32 %v3904, 1.0
      %v5445 = vadd.f32 %v3933, 1.0
      %v5446 = vadd.f32 %v3907, 1.0
      %v5447 = vadd.f32 %v3936, 1.0
      %v5448 = vadd.f32 %v3909, 1.0
      %v5449 = vadd.f32 %v3938, 1.0
      %v5450 = vmul.f32 %v3902, 1.442695
      %v5451 = vpow.pop %v5450
      %v5452 = vmul.f32 %v3931, 1.442695
      %v5453 = vpow.pop %v5452
      %v5454 = vmul.f32 %v3904, 1.442695
      %v5455 = vpow.pop %v5454
      %v5456 = vmul.f32 %v3933, 1.442695
      %v5457 = vpow.pop %v5456
      %v5458 = vmul.f32 %v3907, 1.442695
      %v5459 = vpow.pop %v5458
      %v5460 = vmul.f32 %v3936, 1.442695
      %v5461 = vpow.pop %v5460
      %v5462 = vmul.f32 %v3909, 1.442695
      %v5463 = vpow.pop %v5462
      %v5464 = vmul.f32 %v3938, 1.442695
      %v5465 = vpow.pop %v5464
      %v5466 = vsel %vm5434, %v5442, %v5451
      %v5467 = vsel %vm5435, %v5443, %v5453
      %v5468 = vsel %vm5436, %v5444, %v5455
      %v5469 = vsel %vm5437, %v5445, %v5457
      %v5470 = vsel %vm5438, %v5446, %v5459
      %v5471 = vsel %vm5439, %v5447, %v5461
      %v5472 = vsel %vm5440, %v5448, %v5463
      %v5473 = vsel %vm5441, %v5449, %v5465
      %v5474 = vpack.c.bf16 %v3914, %v3912
      %v5475 = vpack.c.bf16 %v3943, %v3941
      %v5476 = vpack.c.bf16 %v3919, %v3917
      %v5477 = vpack.c.bf16 %v3948, %v3946
      %v5478 = vpack.c.bf16 %v5468, %v5466
      %v5479 = vpack.c.bf16 %v5469, %v5467
      %v5480 = vpack.c.bf16 %v5472, %v5470
      %v5481 = vpack.c.bf16 %v5473, %v5471
      %5482 = vmatpush.bf16.xpose.msra.mxu0 0
      %5483 = vmatpush.bf16.xpose.msra.mxu0 0
      %5484 = vmatpush.bf16.xpose.msra.mxu0 0
      %5485 = vmatpush.bf16.xpose.msra.mxu0 0
      %5486 = vmatpush.bf16.xpose.msra.mxu0 0
      %5487 = vmatpush.bf16.xpose.msra.mxu0 0
      %5488 = vmatpush.bf16.xpose.msra.mxu0 %v5480
      %5489 = vmatpush.bf16.xpose.msra.mxu0 %v5478
      %5490 = vmatmul.bf16.gmra.mxu0 %v5474
      %v5491 = vpop.f32.mrf.mxu0
      %v5492 = vadd.f32 0.0, %v5491
      %v5493 = vpop.f32.mrf.mxu0
      %v5494 = vadd.f32 0.0, %v5493
      %5495 = vmatmul.bf16.gmra.mxu0 %v5476
      %v5496 = vpop.f32.mrf.mxu0
      %v5497 = vadd.f32 0.0, %v5496
      %v5498 = vpop.f32.mrf.mxu0
      %v5499 = vadd.f32 0.0, %v5498
      %5500 = vdwg.mxu0
      %5501 = vmatpush.bf16.xpose.msra.mxu0 0
      %5502 = vmatpush.bf16.xpose.msra.mxu0 0
      %5503 = vmatpush.bf16.xpose.msra.mxu0 0
      %5504 = vmatpush.bf16.xpose.msra.mxu0 0
      %5505 = vmatpush.bf16.xpose.msra.mxu0 0
      %5506 = vmatpush.bf16.xpose.msra.mxu0 0
      %5507 = vmatpush.bf16.xpose.msra.mxu0 %v5481
      %5508 = vmatpush.bf16.xpose.msra.mxu0 %v5479
      %5509 = vmatmul.bf16.gmra.mxu0 %v5475
      %v5510 = vpop.f32.mrf.mxu0
      %v5511 = vadd.f32 %v5492, %v5510
      %v5512 = vpop.f32.mrf.mxu0
      %v5513 = vadd.f32 %v5494, %v5512
      %5514 = vmatmul.bf16.gmra.mxu0 %v5477
      %v5515 = vpop.f32.mrf.mxu0
      %v5516 = vadd.f32 %v5497, %v5515
      %v5517 = vpop.f32.mrf.mxu0
      %v5518 = vadd.f32 %v5499, %v5517
      %5519 = vdwg.mxu0
      %v5520 = vadd.f32 %v5466, %v5467
      %5521 = vadd.xlane.f32.xlu0 %v5520
      %v5522 = vpop.xlane.xlu0 %5521
      %v5523 = vadd.f32 %v5468, %v5469
      %5524 = vadd.xlane.f32.xlu0 %v5523
      %v5525 = vpop.xlane.xlu0 %5524
      %v5526 = vadd.f32 %v5470, %v5471
      %5527 = vadd.xlane.f32.xlu0 %v5526
      %v5528 = vpop.xlane.xlu0 %5527
      %v5529 = vadd.f32 %v5472, %v5473
      %5530 = vadd.xlane.f32.xlu0 %v5529
      %v5531 = vpop.xlane.xlu0 %5530
      %v5532 = vmul.f32 %v5511, %v343
      %v5533 = vmul.f32 %v5513, %v344
      %v5534 = vmul.f32 %v5516, %v345
      %v5535 = vmul.f32 %v5518, %v346
      %v5536 = vpack.c.bf16 %v5533, %v5532
      %v5537 = vpack.c.bf16 %v5535, %v5534
      %v5539 = vsel %vm485, %v5536, 0
      %v5542 = vsel %vm485, %v5537, 0
      %5544 = vmatpush.bf16.msra.mxu0 0
      %5545 = vmatpush.bf16.msra.mxu0 0
      %5546 = vmatpush.bf16.msra.mxu0 0
      %5547 = vmatpush.bf16.msra.mxu0 0
      %5548 = vmatpush.bf16.msra.mxu0 0
      %5549 = vmatpush.bf16.msra.mxu0 0
      %5550 = vmatpush.bf16.msra.mxu0 %v811
      %5551 = vmatpush.bf16.msra.mxu0 %v809
      %5552 = vmatmul.bf16.gmra.mxu0 %v5539
      %v5553 = vpop.f32.mrf.mxu0
      %v5554 = vadd.f32 0.0, %v5553
      %v5555 = vpop.f32.mrf.mxu0
      %v5556 = vadd.f32 0.0, %v5555
      %5557 = vmatmul.bf16.gmra.mxu0 %v5542
      %v5558 = vpop.f32.mrf.mxu0
      %v5559 = vadd.f32 0.0, %v5558
      %v5560 = vpop.f32.mrf.mxu0
      %v5561 = vadd.f32 0.0, %v5560
      %5562 = vdwg.mxu0
      %5563 = vmatpush.bf16.msra.mxu0 0
      %5564 = vmatpush.bf16.msra.mxu0 0
      %5565 = vmatpush.bf16.msra.mxu0 0
      %5566 = vmatpush.bf16.msra.mxu0 0
      %5567 = vmatpush.bf16.msra.mxu0 0
      %5568 = vmatpush.bf16.msra.mxu0 0
      %5569 = vmatpush.bf16.msra.mxu0 %v812
      %5570 = vmatpush.bf16.msra.mxu0 %v810
      %5571 = vmatmul.bf16.gmra.mxu0 %v5539
      %v5572 = vpop.f32.mrf.mxu0
      %v5573 = vadd.f32 0.0, %v5572
      %v5574 = vpop.f32.mrf.mxu0
      %v5575 = vadd.f32 0.0, %v5574
      %5576 = vmatmul.bf16.gmra.mxu0 %v5542
      %v5577 = vpop.f32.mrf.mxu0
      %v5578 = vadd.f32 0.0, %v5577
      %v5579 = vpop.f32.mrf.mxu0
      %v5580 = vadd.f32 0.0, %v5579
      %5581 = vdwg.mxu0
      %v5582 = vmul.f32 %v801, %v5522
      %v5583 = vmul.f32 %v802, %v5522
      %v5584 = vmul.f32 %v803, %v5525
      %v5585 = vmul.f32 %v804, %v5525
      %v5586 = vmul.f32 %v805, %v5528
      %v5587 = vmul.f32 %v806, %v5528
      %v5588 = vmul.f32 %v807, %v5531
      %v5589 = vmul.f32 %v808, %v5531
      %v5590 = vpack.c.bf16 %v5584, %v5582
      %v5591 = vpack.c.bf16 %v5585, %v5583
      %v5592 = vpack.c.bf16 %v5588, %v5586
      %v5593 = vpack.c.bf16 %v5589, %v5587
      %5594 = vmatpush.bf16.msra.mxu0 0
      %5595 = vmatpush.bf16.msra.mxu0 0
      %5596 = vmatpush.bf16.msra.mxu0 0
      %5597 = vmatpush.bf16.msra.mxu0 0
      %5598 = vmatpush.bf16.msra.mxu0 0
      %5599 = vmatpush.bf16.msra.mxu0 0
      %5600 = vmatpush.bf16.msra.mxu0 %v5592
      %5601 = vmatpush.bf16.msra.mxu0 %v5590
      %5602 = vmatmul.bf16.gmra.mxu0 %v4285
      %v5603 = vpop.f32.mrf.mxu0
      %v5604 = vadd.f32 1e-06, %v5603
      %v5605 = vpop.f32.mrf.mxu0
      %v5606 = vadd.f32 1e-06, %v5605
      %5607 = vmatmul.bf16.gmra.mxu0 %v4288
      %v5608 = vpop.f32.mrf.mxu0
      %v5609 = vadd.f32 1e-06, %v5608
      %v5610 = vpop.f32.mrf.mxu0
      %v5611 = vadd.f32 1e-06, %v5610
      %5612 = vdwg.mxu0
      %5613 = vmatpush.bf16.msra.mxu0 0
      %5614 = vmatpush.bf16.msra.mxu0 0
      %5615 = vmatpush.bf16.msra.mxu0 0
      %5616 = vmatpush.bf16.msra.mxu0 0
      %5617 = vmatpush.bf16.msra.mxu0 0
      %5618 = vmatpush.bf16.msra.mxu0 0
      %5619 = vmatpush.bf16.msra.mxu0 %v5593
      %5620 = vmatpush.bf16.msra.mxu0 %v5591
      %5621 = vmatmul.bf16.gmra.mxu0 %v4285
      %v5622 = vpop.f32.mrf.mxu0
      %v5623 = vadd.f32 1e-06, %v5622
      %v5624 = vpop.f32.mrf.mxu0
      %v5625 = vadd.f32 1e-06, %v5624
      %5626 = vmatmul.bf16.gmra.mxu0 %v4288
      %v5627 = vpop.f32.mrf.mxu0
      %v5628 = vadd.f32 1e-06, %v5627
      %v5629 = vpop.f32.mrf.mxu0
      %v5630 = vadd.f32 1e-06, %v5629
      %5631 = vdwg.mxu0
      %v5632 = vrcp.pop %v5604
      %v5633 = vmul.f32 %v5604, %v5632
      %v5634 = vsub.f32 1.0, %v5633
      %v5635 = vmul.f32 %v5632, %v5634
      %v5636 = vadd.f32 %v5632, %v5635
      %vm5637 = vweird.f32 %v5604
      %vm5638 = vweird.f32 %v5632
      %vm5639 = vmor %vm5637, %vm5638
      %v5640 = vsel %vm5639, %v5632, %v5636
      %v5641 = vand.u32 2147483647, %v5604
      %vm5642 = vcmp.eq.f32.partialorder %v5641, 8.507059e+37
      %v5643 = vand.u32 %v5604, 2147483648
      %v5644 = vor.u32 1.1754944e-38, %v5643
      %v5645 = vsel %vm5642, %v5644, %v5640
      %v5646 = vmul.f32 %v5554, %v5645
      %v5647 = vrcp.pop %v5623
      %v5648 = vmul.f32 %v5623, %v5647
      %v5649 = vsub.f32 1.0, %v5648
      %v5650 = vmul.f32 %v5647, %v5649
      %v5651 = vadd.f32 %v5647, %v5650
      %vm5652 = vweird.f32 %v5623
      %vm5653 = vweird.f32 %v5647
      %vm5654 = vmor %vm5652, %vm5653
      %v5655 = vsel %vm5654, %v5647, %v5651
      %v5656 = vand.u32 2147483647, %v5623
      %vm5657 = vcmp.eq.f32.partialorder %v5656, 8.507059e+37
      %v5658 = vand.u32 %v5623, 2147483648
      %v5659 = vor.u32 1.1754944e-38, %v5658
      %v5660 = vsel %vm5657, %v5659, %v5655
      %v5661 = vmul.f32 %v5573, %v5660
      %v5662 = vrcp.pop %v5606
      %v5663 = vmul.f32 %v5606, %v5662
      %v5664 = vsub.f32 1.0, %v5663
      %v5665 = vmul.f32 %v5662, %v5664
      %v5666 = vadd.f32 %v5662, %v5665
      %vm5667 = vweird.f32 %v5606
      %vm5668 = vweird.f32 %v5662
      %vm5669 = vmor %vm5667, %vm5668
      %v5670 = vsel %vm5669, %v5662, %v5666
      %v5671 = vand.u32 2147483647, %v5606
      %vm5672 = vcmp.eq.f32.partialorder %v5671, 8.507059e+37
      %v5673 = vand.u32 %v5606, 2147483648
      %v5674 = vor.u32 1.1754944e-38, %v5673
      %v5675 = vsel %vm5672, %v5674, %v5670
      %v5676 = vmul.f32 %v5556, %v5675
      %v5677 = vrcp.pop %v5625
      %v5678 = vmul.f32 %v5625, %v5677
      %v5679 = vsub.f32 1.0, %v5678
      %v5680 = vmul.f32 %v5677, %v5679
      %v5681 = vadd.f32 %v5677, %v5680
      %vm5682 = vweird.f32 %v5625
      %vm5683 = vweird.f32 %v5677
      %vm5684 = vmor %vm5682, %vm5683
      %v5685 = vsel %vm5684, %v5677, %v5681
      %v5686 = vand.u32 2147483647, %v5625
      %vm5687 = vcmp.eq.f32.partialorder %v5686, 8.507059e+37
      %v5688 = vand.u32 %v5625, 2147483648
      %v5689 = vor.u32 1.1754944e-38, %v5688
      %v5690 = vsel %vm5687, %v5689, %v5685
      %v5691 = vmul.f32 %v5575, %v5690
      %v5692 = vrcp.pop %v5609
      %v5693 = vmul.f32 %v5609, %v5692
      %v5694 = vsub.f32 1.0, %v5693
      %v5695 = vmul.f32 %v5692, %v5694
      %v5696 = vadd.f32 %v5692, %v5695
      %vm5697 = vweird.f32 %v5609
      %vm5698 = vweird.f32 %v5692
      %vm5699 = vmor %vm5697, %vm5698
      %v5700 = vsel %vm5699, %v5692, %v5696
      %v5701 = vand.u32 2147483647, %v5609
      %vm5702 = vcmp.eq.f32.partialorder %v5701, 8.507059e+37
      %v5703 = vand.u32 %v5609, 2147483648
      %v5704 = vor.u32 1.1754944e-38, %v5703
      %v5705 = vsel %vm5702, %v5704, %v5700
      %v5706 = vmul.f32 %v5559, %v5705
      %v5707 = vrcp.pop %v5628
      %v5708 = vmul.f32 %v5628, %v5707
      %v5709 = vsub.f32 1.0, %v5708
      %v5710 = vmul.f32 %v5707, %v5709
      %v5711 = vadd.f32 %v5707, %v5710
      %vm5712 = vweird.f32 %v5628
      %vm5713 = vweird.f32 %v5707
      %vm5714 = vmor %vm5712, %vm5713
      %v5715 = vsel %vm5714, %v5707, %v5711
      %v5716 = vand.u32 2147483647, %v5628
      %vm5717 = vcmp.eq.f32.partialorder %v5716, 8.507059e+37
      %v5718 = vand.u32 %v5628, 2147483648
      %v5719 = vor.u32 1.1754944e-38, %v5718
      %v5720 = vsel %vm5717, %v5719, %v5715
      %v5721 = vmul.f32 %v5578, %v5720
      %v5722 = vrcp.pop %v5611
      %v5723 = vmul.f32 %v5611, %v5722
      %v5724 = vsub.f32 1.0, %v5723
      %v5725 = vmul.f32 %v5722, %v5724
      %v5726 = vadd.f32 %v5722, %v5725
      %vm5727 = vweird.f32 %v5611
      %vm5728 = vweird.f32 %v5722
      %vm5729 = vmor %vm5727, %vm5728
      %v5730 = vsel %vm5729, %v5722, %v5726
      %v5731 = vand.u32 2147483647, %v5611
      %vm5732 = vcmp.eq.f32.partialorder %v5731, 8.507059e+37
      %v5733 = vand.u32 %v5611, 2147483648
      %v5734 = vor.u32 1.1754944e-38, %v5733
      %v5735 = vsel %vm5732, %v5734, %v5730
      %v5736 = vmul.f32 %v5561, %v5735
      %v5737 = vrcp.pop %v5630
      %v5738 = vmul.f32 %v5630, %v5737
      %v5739 = vsub.f32 1.0, %v5738
      %v5740 = vmul.f32 %v5737, %v5739
      %v5741 = vadd.f32 %v5737, %v5740
      %vm5742 = vweird.f32 %v5630
      %vm5743 = vweird.f32 %v5737
      %vm5744 = vmor %vm5742, %vm5743
      %v5745 = vsel %vm5744, %v5737, %v5741
      %v5746 = vand.u32 2147483647, %v5630
      %vm5747 = vcmp.eq.f32.partialorder %v5746, 8.507059e+37
      %v5748 = vand.u32 %v5630, 2147483648
      %v5749 = vor.u32 1.1754944e-38, %v5748
      %v5750 = vsel %vm5747, %v5749, %v5745
      %v5751 = vmul.f32 %v5580, %v5750
      %v5752 = vpack.c.bf16 %v5661, %v5646
      %v5753 = vpack.c.bf16 %v5691, %v5676
      %v5754 = vpack.c.bf16 %v5721, %v5706
      %v5755 = vpack.c.bf16 %v5751, %v5736
      %5756 = vst [vmem:[#allocation3 + $0x20] sm:$0xff] %v5752
      %5757 = vst [vmem:[#allocation3 + $0x60] sm:$0xff] %v5753
      %5758 = vst [vmem:[#allocation3 + $0xa0] sm:$0xff] %v5754
      %5759 = vst [vmem:[#allocation3 + $0xe0] sm:$0xff] %v5755
      %vm5760 = vcmp.gt.f32.partialorder %v3960, 0.0
      %vm5761 = vcmp.gt.f32.partialorder %v3989, 0.0
      %vm5762 = vcmp.gt.f32.partialorder %v3962, 0.0
      %vm5763 = vcmp.gt.f32.partialorder %v3991, 0.0
      %vm5764 = vcmp.gt.f32.partialorder %v3965, 0.0
      %vm5765 = vcmp.gt.f32.partialorder %v3994, 0.0
      %vm5766 = vcmp.gt.f32.partialorder %v3967, 0.0
      %vm5767 = vcmp.gt.f32.partialorder %v3996, 0.0
      %v5768 = vadd.f32 %v3960, 1.0
      %v5769 = vadd.f32 %v3989, 1.0
      %v5770 = vadd.f32 %v3962, 1.0
      %v5771 = vadd.f32 %v3991, 1.0
      %v5772 = vadd.f32 %v3965, 1.0
      %v5773 = vadd.f32 %v3994, 1.0
      %v5774 = vadd.f32 %v3967, 1.0
      %v5775 = vadd.f32 %v3996, 1.0
      %v5776 = vmul.f32 %v3960, 1.442695
      %v5777 = vpow.pop %v5776
      %v5778 = vmul.f32 %v3989, 1.442695
      %v5779 = vpow.pop %v5778
      %v5780 = vmul.f32 %v3962, 1.442695
      %v5781 = vpow.pop %v5780
      %v5782 = vmul.f32 %v3991, 1.442695
      %v5783 = vpow.pop %v5782
      %v5784 = vmul.f32 %v3965, 1.442695
      %v5785 = vpow.pop %v5784
      %v5786 = vmul.f32 %v3994, 1.442695
      %v5787 = vpow.pop %v5786
      %v5788 = vmul.f32 %v3967, 1.442695
      %v5789 = vpow.pop %v5788
      %v5790 = vmul.f32 %v3996, 1.442695
      %v5791 = vpow.pop %v5790
      %v5792 = vsel %vm5760, %v5768, %v5777
      %v5793 = vsel %vm5761, %v5769, %v5779
      %v5794 = vsel %vm5762, %v5770, %v5781
      %v5795 = vsel %vm5763, %v5771, %v5783
      %v5796 = vsel %vm5764, %v5772, %v5785
      %v5797 = vsel %vm5765, %v5773, %v5787
      %v5798 = vsel %vm5766, %v5774, %v5789
      %v5799 = vsel %vm5767, %v5775, %v5791
      %v5800 = vpack.c.bf16 %v3972, %v3970
      %v5801 = vpack.c.bf16 %v4001, %v3999
      %v5802 = vpack.c.bf16 %v3977, %v3975
      %v5803 = vpack.c.bf16 %v4006, %v4004
      %v5804 = vpack.c.bf16 %v5794, %v5792
      %v5805 = vpack.c.bf16 %v5795, %v5793
      %v5806 = vpack.c.bf16 %v5798, %v5796
      %v5807 = vpack.c.bf16 %v5799, %v5797
      %5808 = vmatpush.bf16.xpose.msra.mxu0 0
      %5809 = vmatpush.bf16.xpose.msra.mxu0 0
      %5810 = vmatpush.bf16.xpose.msra.mxu0 0
      %5811 = vmatpush.bf16.xpose.msra.mxu0 0
      %5812 = vmatpush.bf16.xpose.msra.mxu0 0
      %5813 = vmatpush.bf16.xpose.msra.mxu0 0
      %5814 = vmatpush.bf16.xpose.msra.mxu0 %v5806
      %5815 = vmatpush.bf16.xpose.msra.mxu0 %v5804
      %5816 = vmatmul.bf16.gmra.mxu0 %v5800
      %v5817 = vpop.f32.mrf.mxu0
      %v5818 = vadd.f32 0.0, %v5817
      %v5819 = vpop.f32.mrf.mxu0
      %v5820 = vadd.f32 0.0, %v5819
      %5821 = vmatmul.bf16.gmra.mxu0 %v5802
      %v5822 = vpop.f32.mrf.mxu0
      %v5823 = vadd.f32 0.0, %v5822
      %v5824 = vpop.f32.mrf.mxu0
      %v5825 = vadd.f32 0.0, %v5824
      %5826 = vdwg.mxu0
      %5827 = vmatpush.bf16.xpose.msra.mxu0 0
      %5828 = vmatpush.bf16.xpose.msra.mxu0 0
      %5829 = vmatpush.bf16.xpose.msra.mxu0 0
      %5830 = vmatpush.bf16.xpose.msra.mxu0 0
      %5831 = vmatpush.bf16.xpose.msra.mxu0 0
      %5832 = vmatpush.bf16.xpose.msra.mxu0 0
      %5833 = vmatpush.bf16.xpose.msra.mxu0 %v5807
      %5834 = vmatpush.bf16.xpose.msra.mxu0 %v5805
      %5835 = vmatmul.bf16.gmra.mxu0 %v5801
      %v5836 = vpop.f32.mrf.mxu0
      %v5837 = vadd.f32 %v5818, %v5836
      %v5838 = vpop.f32.mrf.mxu0
      %v5839 = vadd.f32 %v5820, %v5838
      %5840 = vmatmul.bf16.gmra.mxu0 %v5803
      %v5841 = vpop.f32.mrf.mxu0
      %v5842 = vadd.f32 %v5823, %v5841
      %v5843 = vpop.f32.mrf.mxu0
      %v5844 = vadd.f32 %v5825, %v5843
      %5845 = vdwg.mxu0
      %v5846 = vadd.f32 %v5792, %v5793
      %5847 = vadd.xlane.f32.xlu0 %v5846
      %v5848 = vpop.xlane.xlu0 %5847
      %v5849 = vadd.f32 %v5794, %v5795
      %5850 = vadd.xlane.f32.xlu0 %v5849
      %v5851 = vpop.xlane.xlu0 %5850
      %v5852 = vadd.f32 %v5796, %v5797
      %5853 = vadd.xlane.f32.xlu0 %v5852
      %v5854 = vpop.xlane.xlu0 %5853
      %v5855 = vadd.f32 %v5798, %v5799
      %5856 = vadd.xlane.f32.xlu0 %v5855
      %v5857 = vpop.xlane.xlu0 %5856
      %v5858 = vmul.f32 %v5837, %v343
      %v5859 = vmul.f32 %v5839, %v344
      %v5860 = vmul.f32 %v5842, %v345
      %v5861 = vmul.f32 %v5844, %v346
      %v5862 = vpack.c.bf16 %v5859, %v5858
      %v5863 = vpack.c.bf16 %v5861, %v5860
      %v5865 = vsel %vm485, %v5862, 0
      %v5868 = vsel %vm485, %v5863, 0
      %5870 = vmatpush.bf16.msra.mxu0 0
      %5871 = vmatpush.bf16.msra.mxu0 0
      %5872 = vmatpush.bf16.msra.mxu0 0
      %5873 = vmatpush.bf16.msra.mxu0 0
      %5874 = vmatpush.bf16.msra.mxu0 0
      %5875 = vmatpush.bf16.msra.mxu0 0
      %5876 = vmatpush.bf16.msra.mxu0 %v811
      %5877 = vmatpush.bf16.msra.mxu0 %v809
      %5878 = vmatmul.bf16.gmra.mxu0 %v5865
      %v5879 = vpop.f32.mrf.mxu0
      %v5880 = vadd.f32 0.0, %v5879
      %v5881 = vpop.f32.mrf.mxu0
      %v5882 = vadd.f32 0.0, %v5881
      %5883 = vmatmul.bf16.gmra.mxu0 %v5868
      %v5884 = vpop.f32.mrf.mxu0
      %v5885 = vadd.f32 0.0, %v5884
      %v5886 = vpop.f32.mrf.mxu0
      %v5887 = vadd.f32 0.0, %v5886
      %5888 = vdwg.mxu0
      %5889 = vmatpush.bf16.msra.mxu0 0
      %5890 = vmatpush.bf16.msra.mxu0 0
      %5891 = vmatpush.bf16.msra.mxu0 0
      %5892 = vmatpush.bf16.msra.mxu0 0
      %5893 = vmatpush.bf16.msra.mxu0 0
      %5894 = vmatpush.bf16.msra.mxu0 0
      %5895 = vmatpush.bf16.msra.mxu0 %v812
      %5896 = vmatpush.bf16.msra.mxu0 %v810
      %5897 = vmatmul.bf16.gmra.mxu0 %v5865
      %v5898 = vpop.f32.mrf.mxu0
      %v5899 = vadd.f32 0.0, %v5898
      %v5900 = vpop.f32.mrf.mxu0
      %v5901 = vadd.f32 0.0, %v5900
      %5902 = vmatmul.bf16.gmra.mxu0 %v5868
      %v5903 = vpop.f32.mrf.mxu0
      %v5904 = vadd.f32 0.0, %v5903
      %v5905 = vpop.f32.mrf.mxu0
      %v5906 = vadd.f32 0.0, %v5905
      %5907 = vdwg.mxu0
      %v5908 = vmul.f32 %v801, %v5848
      %v5909 = vmul.f32 %v802, %v5848
      %v5910 = vmul.f32 %v803, %v5851
      %v5911 = vmul.f32 %v804, %v5851
      %v5912 = vmul.f32 %v805, %v5854
      %v5913 = vmul.f32 %v806, %v5854
      %v5914 = vmul.f32 %v807, %v5857
      %v5915 = vmul.f32 %v808, %v5857
      %v5916 = vpack.c.bf16 %v5910, %v5908
      %v5917 = vpack.c.bf16 %v5911, %v5909
      %v5918 = vpack.c.bf16 %v5914, %v5912
      %v5919 = vpack.c.bf16 %v5915, %v5913
      %5920 = vmatpush.bf16.msra.mxu0 0
      %5921 = vmatpush.bf16.msra.mxu0 0
      %5922 = vmatpush.bf16.msra.mxu0 0
      %5923 = vmatpush.bf16.msra.mxu0 0
      %5924 = vmatpush.bf16.msra.mxu0 0
      %5925 = vmatpush.bf16.msra.mxu0 0
      %5926 = vmatpush.bf16.msra.mxu0 %v5918
      %5927 = vmatpush.bf16.msra.mxu0 %v5916
      %5928 = vmatmul.bf16.gmra.mxu0 %v4285
      %v5929 = vpop.f32.mrf.mxu0
      %v5930 = vadd.f32 1e-06, %v5929
      %v5931 = vpop.f32.mrf.mxu0
      %v5932 = vadd.f32 1e-06, %v5931
      %5933 = vmatmul.bf16.gmra.mxu0 %v4288
      %v5934 = vpop.f32.mrf.mxu0
      %v5935 = vadd.f32 1e-06, %v5934
      %v5936 = vpop.f32.mrf.mxu0
      %v5937 = vadd.f32 1e-06, %v5936
      %5938 = vdwg.mxu0
      %5939 = vmatpush.bf16.msra.mxu0 0
      %5940 = vmatpush.bf16.msra.mxu0 0
      %5941 = vmatpush.bf16.msra.mxu0 0
      %5942 = vmatpush.bf16.msra.mxu0 0
      %5943 = vmatpush.bf16.msra.mxu0 0
      %5944 = vmatpush.bf16.msra.mxu0 0
      %5945 = vmatpush.bf16.msra.mxu0 %v5919
      %5946 = vmatpush.bf16.msra.mxu0 %v5917
      %5947 = vmatmul.bf16.gmra.mxu0 %v4285
      %v5948 = vpop.f32.mrf.mxu0
      %v5949 = vadd.f32 1e-06, %v5948
      %v5950 = vpop.f32.mrf.mxu0
      %v5951 = vadd.f32 1e-06, %v5950
      %5952 = vmatmul.bf16.gmra.mxu0 %v4288
      %v5953 = vpop.f32.mrf.mxu0
      %v5954 = vadd.f32 1e-06, %v5953
      %v5955 = vpop.f32.mrf.mxu0
      %v5956 = vadd.f32 1e-06, %v5955
      %5957 = vdwg.mxu0
      %v5958 = vrcp.pop %v5930
      %v5959 = vmul.f32 %v5930, %v5958
      %v5960 = vsub.f32 1.0, %v5959
      %v5961 = vmul.f32 %v5958, %v5960
      %v5962 = vadd.f32 %v5958, %v5961
      %vm5963 = vweird.f32 %v5930
      %vm5964 = vweird.f32 %v5958
      %vm5965 = vmor %vm5963, %vm5964
      %v5966 = vsel %vm5965, %v5958, %v5962
      %v5967 = vand.u32 2147483647, %v5930
      %vm5968 = vcmp.eq.f32.partialorder %v5967, 8.507059e+37
      %v5969 = vand.u32 %v5930, 2147483648
      %v5970 = vor.u32 1.1754944e-38, %v5969
      %v5971 = vsel %vm5968, %v5970, %v5966
      %v5972 = vmul.f32 %v5880, %v5971
      %v5973 = vrcp.pop %v5949
      %v5974 = vmul.f32 %v5949, %v5973
      %v5975 = vsub.f32 1.0, %v5974
      %v5976 = vmul.f32 %v5973, %v5975
      %v5977 = vadd.f32 %v5973, %v5976
      %vm5978 = vweird.f32 %v5949
      %vm5979 = vweird.f32 %v5973
      %vm5980 = vmor %vm5978, %vm5979
      %v5981 = vsel %vm5980, %v5973, %v5977
      %v5982 = vand.u32 2147483647, %v5949
      %vm5983 = vcmp.eq.f32.partialorder %v5982, 8.507059e+37
      %v5984 = vand.u32 %v5949, 2147483648
      %v5985 = vor.u32 1.1754944e-38, %v5984
      %v5986 = vsel %vm5983, %v5985, %v5981
      %v5987 = vmul.f32 %v5899, %v5986
      %v5988 = vrcp.pop %v5932
      %v5989 = vmul.f32 %v5932, %v5988
      %v5990 = vsub.f32 1.0, %v5989
      %v5991 = vmul.f32 %v5988, %v5990
      %v5992 = vadd.f32 %v5988, %v5991
      %vm5993 = vweird.f32 %v5932
      %vm5994 = vweird.f32 %v5988
      %vm5995 = vmor %vm5993, %vm5994
      %v5996 = vsel %vm5995, %v5988, %v5992
      %v5997 = vand.u32 2147483647, %v5932
      %vm5998 = vcmp.eq.f32.partialorder %v5997, 8.507059e+37
      %v5999 = vand.u32 %v5932, 2147483648
      %v6000 = vor.u32 1.1754944e-38, %v5999
      %v6001 = vsel %vm5998, %v6000, %v5996
      %v6002 = vmul.f32 %v5882, %v6001
      %v6003 = vrcp.pop %v5951
      %v6004 = vmul.f32 %v5951, %v6003
      %v6005 = vsub.f32 1.0, %v6004
      %v6006 = vmul.f32 %v6003, %v6005
      %v6007 = vadd.f32 %v6003, %v6006
      %vm6008 = vweird.f32 %v5951
      %vm6009 = vweird.f32 %v6003
      %vm6010 = vmor %vm6008, %vm6009
      %v6011 = vsel %vm6010, %v6003, %v6007
      %v6012 = vand.u32 2147483647, %v5951
      %vm6013 = vcmp.eq.f32.partialorder %v6012, 8.507059e+37
      %v6014 = vand.u32 %v5951, 2147483648
      %v6015 = vor.u32 1.1754944e-38, %v6014
      %v6016 = vsel %vm6013, %v6015, %v6011
      %v6017 = vmul.f32 %v5901, %v6016
      %v6018 = vrcp.pop %v5935
      %v6019 = vmul.f32 %v5935, %v6018
      %v6020 = vsub.f32 1.0, %v6019
      %v6021 = vmul.f32 %v6018, %v6020
      %v6022 = vadd.f32 %v6018, %v6021
      %vm6023 = vweird.f32 %v5935
      %vm6024 = vweird.f32 %v6018
      %vm6025 = vmor %vm6023, %vm6024
      %v6026 = vsel %vm6025, %v6018, %v6022
      %v6027 = vand.u32 2147483647, %v5935
      %vm6028 = vcmp.eq.f32.partialorder %v6027, 8.507059e+37
      %v6029 = vand.u32 %v5935, 2147483648
      %v6030 = vor.u32 1.1754944e-38, %v6029
      %v6031 = vsel %vm6028, %v6030, %v6026
      %v6032 = vmul.f32 %v5885, %v6031
      %v6033 = vrcp.pop %v5954
      %v6034 = vmul.f32 %v5954, %v6033
      %v6035 = vsub.f32 1.0, %v6034
      %v6036 = vmul.f32 %v6033, %v6035
      %v6037 = vadd.f32 %v6033, %v6036
      %vm6038 = vweird.f32 %v5954
      %vm6039 = vweird.f32 %v6033
      %vm6040 = vmor %vm6038, %vm6039
      %v6041 = vsel %vm6040, %v6033, %v6037
      %v6042 = vand.u32 2147483647, %v5954
      %vm6043 = vcmp.eq.f32.partialorder %v6042, 8.507059e+37
      %v6044 = vand.u32 %v5954, 2147483648
      %v6045 = vor.u32 1.1754944e-38, %v6044
      %v6046 = vsel %vm6043, %v6045, %v6041
      %v6047 = vmul.f32 %v5904, %v6046
      %v6048 = vrcp.pop %v5937
      %v6049 = vmul.f32 %v5937, %v6048
      %v6050 = vsub.f32 1.0, %v6049
      %v6051 = vmul.f32 %v6048, %v6050
      %v6052 = vadd.f32 %v6048, %v6051
      %vm6053 = vweird.f32 %v5937
      %vm6054 = vweird.f32 %v6048
      %vm6055 = vmor %vm6053, %vm6054
      %v6056 = vsel %vm6055, %v6048, %v6052
      %v6057 = vand.u32 2147483647, %v5937
      %vm6058 = vcmp.eq.f32.partialorder %v6057, 8.507059e+37
      %v6059 = vand.u32 %v5937, 2147483648
      %v6060 = vor.u32 1.1754944e-38, %v6059
      %v6061 = vsel %vm6058, %v6060, %v6056
      %v6062 = vmul.f32 %v5887, %v6061
      %v6063 = vrcp.pop %v5956
      %v6064 = vmul.f32 %v5956, %v6063
      %v6065 = vsub.f32 1.0, %v6064
      %v6066 = vmul.f32 %v6063, %v6065
      %v6067 = vadd.f32 %v6063, %v6066
      %vm6068 = vweird.f32 %v5956
      %vm6069 = vweird.f32 %v6063
      %vm6070 = vmor %vm6068, %vm6069
      %v6071 = vsel %vm6070, %v6063, %v6067
      %v6072 = vand.u32 2147483647, %v5956
      %vm6073 = vcmp.eq.f32.partialorder %v6072, 8.507059e+37
      %v6074 = vand.u32 %v5956, 2147483648
      %v6075 = vor.u32 1.1754944e-38, %v6074
      %v6076 = vsel %vm6073, %v6075, %v6071
      %v6077 = vmul.f32 %v5906, %v6076
      %v6078 = vpack.c.bf16 %v5987, %v5972
      %v6079 = vpack.c.bf16 %v6017, %v6002
      %v6080 = vpack.c.bf16 %v6047, %v6032
      %v6081 = vpack.c.bf16 %v6077, %v6062
      %6082 = vst [vmem:[#allocation3 + $0x28] sm:$0xff] %v6078
      %6083 = vst [vmem:[#allocation3 + $0x68] sm:$0xff] %v6079
      %6084 = vst [vmem:[#allocation3 + $0xa8] sm:$0xff] %v6080
      %6085 = vst [vmem:[#allocation3 + $0xe8] sm:$0xff] %v6081
      %vm6086 = vcmp.gt.f32.partialorder %v4018, 0.0
      %vm6087 = vcmp.gt.f32.partialorder %v4047, 0.0
      %vm6088 = vcmp.gt.f32.partialorder %v4020, 0.0
      %vm6089 = vcmp.gt.f32.partialorder %v4049, 0.0
      %vm6090 = vcmp.gt.f32.partialorder %v4023, 0.0
      %vm6091 = vcmp.gt.f32.partialorder %v4052, 0.0
      %vm6092 = vcmp.gt.f32.partialorder %v4025, 0.0
      %vm6093 = vcmp.gt.f32.partialorder %v4054, 0.0
      %v6094 = vadd.f32 %v4018, 1.0
      %v6095 = vadd.f32 %v4047, 1.0
      %v6096 = vadd.f32 %v4020, 1.0
      %v6097 = vadd.f32 %v4049, 1.0
      %v6098 = vadd.f32 %v4023, 1.0
      %v6099 = vadd.f32 %v4052, 1.0
      %v6100 = vadd.f32 %v4025, 1.0
      %v6101 = vadd.f32 %v4054, 1.0
      %v6102 = vmul.f32 %v4018, 1.442695
      %v6103 = vpow.pop %v6102
      %v6104 = vmul.f32 %v4047, 1.442695
      %v6105 = vpow.pop %v6104
      %v6106 = vmul.f32 %v4020, 1.442695
      %v6107 = vpow.pop %v6106
      %v6108 = vmul.f32 %v4049, 1.442695
      %v6109 = vpow.pop %v6108
      %v6110 = vmul.f32 %v4023, 1.442695
      %v6111 = vpow.pop %v6110
      %v6112 = vmul.f32 %v4052, 1.442695
      %v6113 = vpow.pop %v6112
      %v6114 = vmul.f32 %v4025, 1.442695
      %v6115 = vpow.pop %v6114
      %v6116 = vmul.f32 %v4054, 1.442695
      %v6117 = vpow.pop %v6116
      %v6118 = vsel %vm6086, %v6094, %v6103
      %v6119 = vsel %vm6087, %v6095, %v6105
      %v6120 = vsel %vm6088, %v6096, %v6107
      %v6121 = vsel %vm6089, %v6097, %v6109
      %v6122 = vsel %vm6090, %v6098, %v6111
      %v6123 = vsel %vm6091, %v6099, %v6113
      %v6124 = vsel %vm6092, %v6100, %v6115
      %v6125 = vsel %vm6093, %v6101, %v6117
      %v6126 = vpack.c.bf16 %v4030, %v4028
      %v6127 = vpack.c.bf16 %v4059, %v4057
      %v6128 = vpack.c.bf16 %v4035, %v4033
      %v6129 = vpack.c.bf16 %v4064, %v4062
      %v6130 = vpack.c.bf16 %v6120, %v6118
      %v6131 = vpack.c.bf16 %v6121, %v6119
      %v6132 = vpack.c.bf16 %v6124, %v6122
      %v6133 = vpack.c.bf16 %v6125, %v6123
      %6134 = vmatpush.bf16.xpose.msra.mxu0 0
      %6135 = vmatpush.bf16.xpose.msra.mxu0 0
      %6136 = vmatpush.bf16.xpose.msra.mxu0 0
      %6137 = vmatpush.bf16.xpose.msra.mxu0 0
      %6138 = vmatpush.bf16.xpose.msra.mxu0 0
      %6139 = vmatpush.bf16.xpose.msra.mxu0 0
      %6140 = vmatpush.bf16.xpose.msra.mxu0 %v6132
      %6141 = vmatpush.bf16.xpose.msra.mxu0 %v6130
      %6142 = vmatmul.bf16.gmra.mxu0 %v6126
      %v6143 = vpop.f32.mrf.mxu0
      %v6144 = vadd.f32 0.0, %v6143
      %v6145 = vpop.f32.mrf.mxu0
      %v6146 = vadd.f32 0.0, %v6145
      %6147 = vmatmul.bf16.gmra.mxu0 %v6128
      %v6148 = vpop.f32.mrf.mxu0
      %v6149 = vadd.f32 0.0, %v6148
      %v6150 = vpop.f32.mrf.mxu0
      %v6151 = vadd.f32 0.0, %v6150
      %6152 = vdwg.mxu0
      %6153 = vmatpush.bf16.xpose.msra.mxu0 0
      %6154 = vmatpush.bf16.xpose.msra.mxu0 0
      %6155 = vmatpush.bf16.xpose.msra.mxu0 0
      %6156 = vmatpush.bf16.xpose.msra.mxu0 0
      %6157 = vmatpush.bf16.xpose.msra.mxu0 0
      %6158 = vmatpush.bf16.xpose.msra.mxu0 0
      %6159 = vmatpush.bf16.xpose.msra.mxu0 %v6133
      %6160 = vmatpush.bf16.xpose.msra.mxu0 %v6131
      %6161 = vmatmul.bf16.gmra.mxu0 %v6127
      %v6162 = vpop.f32.mrf.mxu0
      %v6163 = vadd.f32 %v6144, %v6162
      %v6164 = vpop.f32.mrf.mxu0
      %v6165 = vadd.f32 %v6146, %v6164
      %6166 = vmatmul.bf16.gmra.mxu0 %v6129
      %v6167 = vpop.f32.mrf.mxu0
      %v6168 = vadd.f32 %v6149, %v6167
      %v6169 = vpop.f32.mrf.mxu0
      %v6170 = vadd.f32 %v6151, %v6169
      %6171 = vdwg.mxu0
      %v6172 = vadd.f32 %v6118, %v6119
      %6173 = vadd.xlane.f32.xlu0 %v6172
      %v6174 = vpop.xlane.xlu0 %6173
      %v6175 = vadd.f32 %v6120, %v6121
      %6176 = vadd.xlane.f32.xlu0 %v6175
      %v6177 = vpop.xlane.xlu0 %6176
      %v6178 = vadd.f32 %v6122, %v6123
      %6179 = vadd.xlane.f32.xlu0 %v6178
      %v6180 = vpop.xlane.xlu0 %6179
      %v6181 = vadd.f32 %v6124, %v6125
      %6182 = vadd.xlane.f32.xlu0 %v6181
      %v6183 = vpop.xlane.xlu0 %6182
      %v6184 = vmul.f32 %v6163, %v343
      %v6185 = vmul.f32 %v6165, %v344
      %v6186 = vmul.f32 %v6168, %v345
      %v6187 = vmul.f32 %v6170, %v346
      %v6188 = vpack.c.bf16 %v6185, %v6184
      %v6189 = vpack.c.bf16 %v6187, %v6186
      %v6191 = vsel %vm485, %v6188, 0
      %v6194 = vsel %vm485, %v6189, 0
      %6196 = vmatpush.bf16.msra.mxu0 0
      %6197 = vmatpush.bf16.msra.mxu0 0
      %6198 = vmatpush.bf16.msra.mxu0 0
      %6199 = vmatpush.bf16.msra.mxu0 0
      %6200 = vmatpush.bf16.msra.mxu0 0
      %6201 = vmatpush.bf16.msra.mxu0 0
      %6202 = vmatpush.bf16.msra.mxu0 %v811
      %6203 = vmatpush.bf16.msra.mxu0 %v809
      %6204 = vmatmul.bf16.gmra.mxu0 %v6191
      %v6205 = vpop.f32.mrf.mxu0
      %v6206 = vadd.f32 0.0, %v6205
      %v6207 = vpop.f32.mrf.mxu0
      %v6208 = vadd.f32 0.0, %v6207
      %6209 = vmatmul.bf16.gmra.mxu0 %v6194
      %v6210 = vpop.f32.mrf.mxu0
      %v6211 = vadd.f32 0.0, %v6210
      %v6212 = vpop.f32.mrf.mxu0
      %v6213 = vadd.f32 0.0, %v6212
      %6214 = vdwg.mxu0
      %6215 = vmatpush.bf16.msra.mxu0 0
      %6216 = vmatpush.bf16.msra.mxu0 0
      %6217 = vmatpush.bf16.msra.mxu0 0
      %6218 = vmatpush.bf16.msra.mxu0 0
      %6219 = vmatpush.bf16.msra.mxu0 0
      %6220 = vmatpush.bf16.msra.mxu0 0
      %6221 = vmatpush.bf16.msra.mxu0 %v812
      %6222 = vmatpush.bf16.msra.mxu0 %v810
      %6223 = vmatmul.bf16.gmra.mxu0 %v6191
      %v6224 = vpop.f32.mrf.mxu0
      %v6225 = vadd.f32 0.0, %v6224
      %v6226 = vpop.f32.mrf.mxu0
      %v6227 = vadd.f32 0.0, %v6226
      %6228 = vmatmul.bf16.gmra.mxu0 %v6194
      %v6229 = vpop.f32.mrf.mxu0
      %v6230 = vadd.f32 0.0, %v6229
      %v6231 = vpop.f32.mrf.mxu0
      %v6232 = vadd.f32 0.0, %v6231
      %6233 = vdwg.mxu0
      %v6234 = vmul.f32 %v801, %v6174
      %v6235 = vmul.f32 %v802, %v6174
      %v6236 = vmul.f32 %v803, %v6177
      %v6237 = vmul.f32 %v804, %v6177
      %v6238 = vmul.f32 %v805, %v6180
      %v6239 = vmul.f32 %v806, %v6180
      %v6240 = vmul.f32 %v807, %v6183
      %v6241 = vmul.f32 %v808, %v6183
      %v6242 = vpack.c.bf16 %v6236, %v6234
      %v6243 = vpack.c.bf16 %v6237, %v6235
      %v6244 = vpack.c.bf16 %v6240, %v6238
      %v6245 = vpack.c.bf16 %v6241, %v6239
      %6246 = vmatpush.bf16.msra.mxu0 0
      %6247 = vmatpush.bf16.msra.mxu0 0
      %6248 = vmatpush.bf16.msra.mxu0 0
      %6249 = vmatpush.bf16.msra.mxu0 0
      %6250 = vmatpush.bf16.msra.mxu0 0
      %6251 = vmatpush.bf16.msra.mxu0 0
      %6252 = vmatpush.bf16.msra.mxu0 %v6244
      %6253 = vmatpush.bf16.msra.mxu0 %v6242
      %6254 = vmatmul.bf16.gmra.mxu0 %v4285
      %v6255 = vpop.f32.mrf.mxu0
      %v6256 = vadd.f32 1e-06, %v6255
      %v6257 = vpop.f32.mrf.mxu0
      %v6258 = vadd.f32 1e-06, %v6257
      %6259 = vmatmul.bf16.gmra.mxu0 %v4288
      %v6260 = vpop.f32.mrf.mxu0
      %v6261 = vadd.f32 1e-06, %v6260
      %v6262 = vpop.f32.mrf.mxu0
      %v6263 = vadd.f32 1e-06, %v6262
      %6264 = vdwg.mxu0
      %6265 = vmatpush.bf16.msra.mxu0 0
      %6266 = vmatpush.bf16.msra.mxu0 0
      %6267 = vmatpush.bf16.msra.mxu0 0
      %6268 = vmatpush.bf16.msra.mxu0 0
      %6269 = vmatpush.bf16.msra.mxu0 0
      %6270 = vmatpush.bf16.msra.mxu0 0
      %6271 = vmatpush.bf16.msra.mxu0 %v6245
      %6272 = vmatpush.bf16.msra.mxu0 %v6243
      %6273 = vmatmul.bf16.gmra.mxu0 %v4285
      %v6274 = vpop.f32.mrf.mxu0
      %v6275 = vadd.f32 1e-06, %v6274
      %v6276 = vpop.f32.mrf.mxu0
      %v6277 = vadd.f32 1e-06, %v6276
      %6278 = vmatmul.bf16.gmra.mxu0 %v4288
      %v6279 = vpop.f32.mrf.mxu0
      %v6280 = vadd.f32 1e-06, %v6279
      %v6281 = vpop.f32.mrf.mxu0
      %v6282 = vadd.f32 1e-06, %v6281
      %6283 = vdwg.mxu0
      %v6284 = vrcp.pop %v6256
      %v6285 = vmul.f32 %v6256, %v6284
      %v6286 = vsub.f32 1.0, %v6285
      %v6287 = vmul.f32 %v6284, %v6286
      %v6288 = vadd.f32 %v6284, %v6287
      %vm6289 = vweird.f32 %v6256
      %vm6290 = vweird.f32 %v6284
      %vm6291 = vmor %vm6289, %vm6290
      %v6292 = vsel %vm6291, %v6284, %v6288
      %v6293 = vand.u32 2147483647, %v6256
      %vm6294 = vcmp.eq.f32.partialorder %v6293, 8.507059e+37
      %v6295 = vand.u32 %v6256, 2147483648
      %v6296 = vor.u32 1.1754944e-38, %v6295
      %v6297 = vsel %vm6294, %v6296, %v6292
      %v6298 = vmul.f32 %v6206, %v6297
      %v6299 = vrcp.pop %v6275
      %v6300 = vmul.f32 %v6275, %v6299
      %v6301 = vsub.f32 1.0, %v6300
      %v6302 = vmul.f32 %v6299, %v6301
      %v6303 = vadd.f32 %v6299, %v6302
      %vm6304 = vweird.f32 %v6275
      %vm6305 = vweird.f32 %v6299
      %vm6306 = vmor %vm6304, %vm6305
      %v6307 = vsel %vm6306, %v6299, %v6303
      %v6308 = vand.u32 2147483647, %v6275
      %vm6309 = vcmp.eq.f32.partialorder %v6308, 8.507059e+37
      %v6310 = vand.u32 %v6275, 2147483648
      %v6311 = vor.u32 1.1754944e-38, %v6310
      %v6312 = vsel %vm6309, %v6311, %v6307
      %v6313 = vmul.f32 %v6225, %v6312
      %v6314 = vrcp.pop %v6258
      %v6315 = vmul.f32 %v6258, %v6314
      %v6316 = vsub.f32 1.0, %v6315
      %v6317 = vmul.f32 %v6314, %v6316
      %v6318 = vadd.f32 %v6314, %v6317
      %vm6319 = vweird.f32 %v6258
      %vm6320 = vweird.f32 %v6314
      %vm6321 = vmor %vm6319, %vm6320
      %v6322 = vsel %vm6321, %v6314, %v6318
      %v6323 = vand.u32 2147483647, %v6258
      %vm6324 = vcmp.eq.f32.partialorder %v6323, 8.507059e+37
      %v6325 = vand.u32 %v6258, 2147483648
      %v6326 = vor.u32 1.1754944e-38, %v6325
      %v6327 = vsel %vm6324, %v6326, %v6322
      %v6328 = vmul.f32 %v6208, %v6327
      %v6329 = vrcp.pop %v6277
      %v6330 = vmul.f32 %v6277, %v6329
      %v6331 = vsub.f32 1.0, %v6330
      %v6332 = vmul.f32 %v6329, %v6331
      %v6333 = vadd.f32 %v6329, %v6332
      %vm6334 = vweird.f32 %v6277
      %vm6335 = vweird.f32 %v6329
      %vm6336 = vmor %vm6334, %vm6335
      %v6337 = vsel %vm6336, %v6329, %v6333
      %v6338 = vand.u32 2147483647, %v6277
      %vm6339 = vcmp.eq.f32.partialorder %v6338, 8.507059e+37
      %v6340 = vand.u32 %v6277, 2147483648
      %v6341 = vor.u32 1.1754944e-38, %v6340
      %v6342 = vsel %vm6339, %v6341, %v6337
      %v6343 = vmul.f32 %v6227, %v6342
      %v6344 = vrcp.pop %v6261
      %v6345 = vmul.f32 %v6261, %v6344
      %v6346 = vsub.f32 1.0, %v6345
      %v6347 = vmul.f32 %v6344, %v6346
      %v6348 = vadd.f32 %v6344, %v6347
      %vm6349 = vweird.f32 %v6261
      %vm6350 = vweird.f32 %v6344
      %vm6351 = vmor %vm6349, %vm6350
      %v6352 = vsel %vm6351, %v6344, %v6348
      %v6353 = vand.u32 2147483647, %v6261
      %vm6354 = vcmp.eq.f32.partialorder %v6353, 8.507059e+37
      %v6355 = vand.u32 %v6261, 2147483648
      %v6356 = vor.u32 1.1754944e-38, %v6355
      %v6357 = vsel %vm6354, %v6356, %v6352
      %v6358 = vmul.f32 %v6211, %v6357
      %v6359 = vrcp.pop %v6280
      %v6360 = vmul.f32 %v6280, %v6359
      %v6361 = vsub.f32 1.0, %v6360
      %v6362 = vmul.f32 %v6359, %v6361
      %v6363 = vadd.f32 %v6359, %v6362
      %vm6364 = vweird.f32 %v6280
      %vm6365 = vweird.f32 %v6359
      %vm6366 = vmor %vm6364, %vm6365
      %v6367 = vsel %vm6366, %v6359, %v6363
      %v6368 = vand.u32 2147483647, %v6280
      %vm6369 = vcmp.eq.f32.partialorder %v6368, 8.507059e+37
      %v6370 = vand.u32 %v6280, 2147483648
      %v6371 = vor.u32 1.1754944e-38, %v6370
      %v6372 = vsel %vm6369, %v6371, %v6367
      %v6373 = vmul.f32 %v6230, %v6372
      %v6374 = vrcp.pop %v6263
      %v6375 = vmul.f32 %v6263, %v6374
      %v6376 = vsub.f32 1.0, %v6375
      %v6377 = vmul.f32 %v6374, %v6376
      %v6378 = vadd.f32 %v6374, %v6377
      %vm6379 = vweird.f32 %v6263
      %vm6380 = vweird.f32 %v6374
      %vm6381 = vmor %vm6379, %vm6380
      %v6382 = vsel %vm6381, %v6374, %v6378
      %v6383 = vand.u32 2147483647, %v6263
      %vm6384 = vcmp.eq.f32.partialorder %v6383, 8.507059e+37
      %v6385 = vand.u32 %v6263, 2147483648
      %v6386 = vor.u32 1.1754944e-38, %v6385
      %v6387 = vsel %vm6384, %v6386, %v6382
      %v6388 = vmul.f32 %v6213, %v6387
      %v6389 = vrcp.pop %v6282
      %v6390 = vmul.f32 %v6282, %v6389
      %v6391 = vsub.f32 1.0, %v6390
      %v6392 = vmul.f32 %v6389, %v6391
      %v6393 = vadd.f32 %v6389, %v6392
      %vm6394 = vweird.f32 %v6282
      %vm6395 = vweird.f32 %v6389
      %vm6396 = vmor %vm6394, %vm6395
      %v6397 = vsel %vm6396, %v6389, %v6393
      %v6398 = vand.u32 2147483647, %v6282
      %vm6399 = vcmp.eq.f32.partialorder %v6398, 8.507059e+37
      %v6400 = vand.u32 %v6282, 2147483648
      %v6401 = vor.u32 1.1754944e-38, %v6400
      %v6402 = vsel %vm6399, %v6401, %v6397
      %v6403 = vmul.f32 %v6232, %v6402
      %v6404 = vpack.c.bf16 %v6313, %v6298
      %v6405 = vpack.c.bf16 %v6343, %v6328
      %v6406 = vpack.c.bf16 %v6373, %v6358
      %v6407 = vpack.c.bf16 %v6403, %v6388
      %6408 = vst [vmem:[#allocation3 + $0x30] sm:$0xff] %v6404
      %6409 = vst [vmem:[#allocation3 + $0x70] sm:$0xff] %v6405
      %6410 = vst [vmem:[#allocation3 + $0xb0] sm:$0xff] %v6406
      %6411 = vst [vmem:[#allocation3 + $0xf0] sm:$0xff] %v6407
      %vm6412 = vcmp.gt.f32.partialorder %v4076, 0.0
      %vm6413 = vcmp.gt.f32.partialorder %v4105, 0.0
      %vm6414 = vcmp.gt.f32.partialorder %v4078, 0.0
      %vm6415 = vcmp.gt.f32.partialorder %v4107, 0.0
      %vm6416 = vcmp.gt.f32.partialorder %v4081, 0.0
      %vm6417 = vcmp.gt.f32.partialorder %v4110, 0.0
      %vm6418 = vcmp.gt.f32.partialorder %v4083, 0.0
      %vm6419 = vcmp.gt.f32.partialorder %v4112, 0.0
      %v6420 = vadd.f32 %v4076, 1.0
      %v6421 = vadd.f32 %v4105, 1.0
      %v6422 = vadd.f32 %v4078, 1.0
      %v6423 = vadd.f32 %v4107, 1.0
      %v6424 = vadd.f32 %v4081, 1.0
      %v6425 = vadd.f32 %v4110, 1.0
      %v6426 = vadd.f32 %v4083, 1.0
      %v6427 = vadd.f32 %v4112, 1.0
      %v6428 = vmul.f32 %v4076, 1.442695
      %v6429 = vpow.pop %v6428
      %v6430 = vmul.f32 %v4105, 1.442695
      %v6431 = vpow.pop %v6430
      %v6432 = vmul.f32 %v4078, 1.442695
      %v6433 = vpow.pop %v6432
      %v6434 = vmul.f32 %v4107, 1.442695
      %v6435 = vpow.pop %v6434
      %v6436 = vmul.f32 %v4081, 1.442695
      %v6437 = vpow.pop %v6436
      %v6438 = vmul.f32 %v4110, 1.442695
      %v6439 = vpow.pop %v6438
      %v6440 = vmul.f32 %v4083, 1.442695
      %v6441 = vpow.pop %v6440
      %v6442 = vmul.f32 %v4112, 1.442695
      %v6443 = vpow.pop %v6442
      %v6444 = vsel %vm6412, %v6420, %v6429
      %v6445 = vsel %vm6413, %v6421, %v6431
      %v6446 = vsel %vm6414, %v6422, %v6433
      %v6447 = vsel %vm6415, %v6423, %v6435
      %v6448 = vsel %vm6416, %v6424, %v6437
      %v6449 = vsel %vm6417, %v6425, %v6439
      %v6450 = vsel %vm6418, %v6426, %v6441
      %v6451 = vsel %vm6419, %v6427, %v6443
      %v6452 = vpack.c.bf16 %v4088, %v4086
      %v6453 = vpack.c.bf16 %v4117, %v4115
      %v6454 = vpack.c.bf16 %v4093, %v4091
      %v6455 = vpack.c.bf16 %v4122, %v4120
      %v6456 = vpack.c.bf16 %v6446, %v6444
      %v6457 = vpack.c.bf16 %v6447, %v6445
      %v6458 = vpack.c.bf16 %v6450, %v6448
      %v6459 = vpack.c.bf16 %v6451, %v6449
      %6460 = vmatpush.bf16.xpose.msra.mxu0 0
      %6461 = vmatpush.bf16.xpose.msra.mxu0 0
      %6462 = vmatpush.bf16.xpose.msra.mxu0 0
      %6463 = vmatpush.bf16.xpose.msra.mxu0 0
      %6464 = vmatpush.bf16.xpose.msra.mxu0 0
      %6465 = vmatpush.bf16.xpose.msra.mxu0 0
      %6466 = vmatpush.bf16.xpose.msra.mxu0 %v6458
      %6467 = vmatpush.bf16.xpose.msra.mxu0 %v6456
      %6468 = vmatmul.bf16.gmra.mxu0 %v6452
      %v6469 = vpop.f32.mrf.mxu0
      %v6470 = vadd.f32 0.0, %v6469
      %v6471 = vpop.f32.mrf.mxu0
      %v6472 = vadd.f32 0.0, %v6471
      %6473 = vmatmul.bf16.gmra.mxu0 %v6454
      %v6474 = vpop.f32.mrf.mxu0
      %v6475 = vadd.f32 0.0, %v6474
      %v6476 = vpop.f32.mrf.mxu0
      %v6477 = vadd.f32 0.0, %v6476
      %6478 = vdwg.mxu0
      %6479 = vmatpush.bf16.xpose.msra.mxu0 0
      %6480 = vmatpush.bf16.xpose.msra.mxu0 0
      %6481 = vmatpush.bf16.xpose.msra.mxu0 0
      %6482 = vmatpush.bf16.xpose.msra.mxu0 0
      %6483 = vmatpush.bf16.xpose.msra.mxu0 0
      %6484 = vmatpush.bf16.xpose.msra.mxu0 0
      %6485 = vmatpush.bf16.xpose.msra.mxu0 %v6459
      %6486 = vmatpush.bf16.xpose.msra.mxu0 %v6457
      %6487 = vmatmul.bf16.gmra.mxu0 %v6453
      %v6488 = vpop.f32.mrf.mxu0
      %v6489 = vadd.f32 %v6470, %v6488
      %v6490 = vpop.f32.mrf.mxu0
      %v6491 = vadd.f32 %v6472, %v6490
      %6492 = vmatmul.bf16.gmra.mxu0 %v6455
      %v6493 = vpop.f32.mrf.mxu0
      %v6494 = vadd.f32 %v6475, %v6493
      %v6495 = vpop.f32.mrf.mxu0
      %v6496 = vadd.f32 %v6477, %v6495
      %6497 = vdwg.mxu0
      %v6498 = vadd.f32 %v6444, %v6445
      %6499 = vadd.xlane.f32.xlu0 %v6498
      %v6500 = vpop.xlane.xlu0 %6499
      %v6501 = vadd.f32 %v6446, %v6447
      %6502 = vadd.xlane.f32.xlu0 %v6501
      %v6503 = vpop.xlane.xlu0 %6502
      %v6504 = vadd.f32 %v6448, %v6449
      %6505 = vadd.xlane.f32.xlu0 %v6504
      %v6506 = vpop.xlane.xlu0 %6505
      %v6507 = vadd.f32 %v6450, %v6451
      %6508 = vadd.xlane.f32.xlu0 %v6507
      %v6509 = vpop.xlane.xlu0 %6508
      %v6510 = vmul.f32 %v6489, %v343
      %v6511 = vmul.f32 %v6491, %v344
      %v6512 = vmul.f32 %v6494, %v345
      %v6513 = vmul.f32 %v6496, %v346
      %v6514 = vpack.c.bf16 %v6511, %v6510
      %v6515 = vpack.c.bf16 %v6513, %v6512
      %v6517 = vsel %vm485, %v6514, 0
      %v6520 = vsel %vm485, %v6515, 0
      %6522 = vmatpush.bf16.msra.mxu0 0
      %6523 = vmatpush.bf16.msra.mxu0 0
      %6524 = vmatpush.bf16.msra.mxu0 0
      %6525 = vmatpush.bf16.msra.mxu0 0
      %6526 = vmatpush.bf16.msra.mxu0 0
      %6527 = vmatpush.bf16.msra.mxu0 0
      %6528 = vmatpush.bf16.msra.mxu0 %v811
      %6529 = vmatpush.bf16.msra.mxu0 %v809
      %6530 = vmatmul.bf16.gmra.mxu0 %v6517
      %v6531 = vpop.f32.mrf.mxu0
      %v6532 = vadd.f32 0.0, %v6531
      %v6533 = vpop.f32.mrf.mxu0
      %v6534 = vadd.f32 0.0, %v6533
      %6535 = vmatmul.bf16.gmra.mxu0 %v6520
      %v6536 = vpop.f32.mrf.mxu0
      %v6537 = vadd.f32 0.0, %v6536
      %v6538 = vpop.f32.mrf.mxu0
      %v6539 = vadd.f32 0.0, %v6538
      %6540 = vdwg.mxu0
      %6541 = vmatpush.bf16.msra.mxu0 0
      %6542 = vmatpush.bf16.msra.mxu0 0
      %6543 = vmatpush.bf16.msra.mxu0 0
      %6544 = vmatpush.bf16.msra.mxu0 0
      %6545 = vmatpush.bf16.msra.mxu0 0
      %6546 = vmatpush.bf16.msra.mxu0 0
      %6547 = vmatpush.bf16.msra.mxu0 %v812
      %6548 = vmatpush.bf16.msra.mxu0 %v810
      %6549 = vmatmul.bf16.gmra.mxu0 %v6517
      %v6550 = vpop.f32.mrf.mxu0
      %v6551 = vadd.f32 0.0, %v6550
      %v6552 = vpop.f32.mrf.mxu0
      %v6553 = vadd.f32 0.0, %v6552
      %6554 = vmatmul.bf16.gmra.mxu0 %v6520
      %v6555 = vpop.f32.mrf.mxu0
      %v6556 = vadd.f32 0.0, %v6555
      %v6557 = vpop.f32.mrf.mxu0
      %v6558 = vadd.f32 0.0, %v6557
      %6559 = vdwg.mxu0
      %v6560 = vmul.f32 %v801, %v6500
      %v6561 = vmul.f32 %v802, %v6500
      %v6562 = vmul.f32 %v803, %v6503
      %v6563 = vmul.f32 %v804, %v6503
      %v6564 = vmul.f32 %v805, %v6506
      %v6565 = vmul.f32 %v806, %v6506
      %v6566 = vmul.f32 %v807, %v6509
      %v6567 = vmul.f32 %v808, %v6509
      %v6568 = vpack.c.bf16 %v6562, %v6560
      %v6569 = vpack.c.bf16 %v6563, %v6561
      %v6570 = vpack.c.bf16 %v6566, %v6564
      %v6571 = vpack.c.bf16 %v6567, %v6565
      %6572 = vmatpush.bf16.msra.mxu0 0
      %6573 = vmatpush.bf16.msra.mxu0 0
      %6574 = vmatpush.bf16.msra.mxu0 0
      %6575 = vmatpush.bf16.msra.mxu0 0
      %6576 = vmatpush.bf16.msra.mxu0 0
      %6577 = vmatpush.bf16.msra.mxu0 0
      %6578 = vmatpush.bf16.msra.mxu0 %v6570
      %6579 = vmatpush.bf16.msra.mxu0 %v6568
      %6580 = vmatmul.bf16.gmra.mxu0 %v4285
      %v6581 = vpop.f32.mrf.mxu0
      %v6582 = vadd.f32 1e-06, %v6581
      %v6583 = vpop.f32.mrf.mxu0
      %v6584 = vadd.f32 1e-06, %v6583
      %6585 = vmatmul.bf16.gmra.mxu0 %v4288
      %v6586 = vpop.f32.mrf.mxu0
      %v6587 = vadd.f32 1e-06, %v6586
      %v6588 = vpop.f32.mrf.mxu0
      %v6589 = vadd.f32 1e-06, %v6588
      %6590 = vdwg.mxu0
      %6591 = vmatpush.bf16.msra.mxu0 0
      %6592 = vmatpush.bf16.msra.mxu0 0
      %6593 = vmatpush.bf16.msra.mxu0 0
      %6594 = vmatpush.bf16.msra.mxu0 0
      %6595 = vmatpush.bf16.msra.mxu0 0
      %6596 = vmatpush.bf16.msra.mxu0 0
      %6597 = vmatpush.bf16.msra.mxu0 %v6571
      %6598 = vmatpush.bf16.msra.mxu0 %v6569
      %6599 = vmatmul.bf16.gmra.mxu0 %v4285
      %v6600 = vpop.f32.mrf.mxu0
      %v6601 = vadd.f32 1e-06, %v6600
      %v6602 = vpop.f32.mrf.mxu0
      %v6603 = vadd.f32 1e-06, %v6602
      %6604 = vmatmul.bf16.gmra.mxu0 %v4288
      %v6605 = vpop.f32.mrf.mxu0
      %v6606 = vadd.f32 1e-06, %v6605
      %v6607 = vpop.f32.mrf.mxu0
      %v6608 = vadd.f32 1e-06, %v6607
      %6609 = vdwg.mxu0
      %v6610 = vrcp.pop %v6582
      %v6611 = vmul.f32 %v6582, %v6610
      %v6612 = vsub.f32 1.0, %v6611
      %v6613 = vmul.f32 %v6610, %v6612
      %v6614 = vadd.f32 %v6610, %v6613
      %vm6615 = vweird.f32 %v6582
      %vm6616 = vweird.f32 %v6610
      %vm6617 = vmor %vm6615, %vm6616
      %v6618 = vsel %vm6617, %v6610, %v6614
      %v6619 = vand.u32 2147483647, %v6582
      %vm6620 = vcmp.eq.f32.partialorder %v6619, 8.507059e+37
      %v6621 = vand.u32 %v6582, 2147483648
      %v6622 = vor.u32 1.1754944e-38, %v6621
      %v6623 = vsel %vm6620, %v6622, %v6618
      %v6624 = vmul.f32 %v6532, %v6623
      %v6625 = vrcp.pop %v6601
      %v6626 = vmul.f32 %v6601, %v6625
      %v6627 = vsub.f32 1.0, %v6626
      %v6628 = vmul.f32 %v6625, %v6627
      %v6629 = vadd.f32 %v6625, %v6628
      %vm6630 = vweird.f32 %v6601
      %vm6631 = vweird.f32 %v6625
      %vm6632 = vmor %vm6630, %vm6631
      %v6633 = vsel %vm6632, %v6625, %v6629
      %v6634 = vand.u32 2147483647, %v6601
      %vm6635 = vcmp.eq.f32.partialorder %v6634, 8.507059e+37
      %v6636 = vand.u32 %v6601, 2147483648
      %v6637 = vor.u32 1.1754944e-38, %v6636
      %v6638 = vsel %vm6635, %v6637, %v6633
      %v6639 = vmul.f32 %v6551, %v6638
      %v6640 = vrcp.pop %v6584
      %v6641 = vmul.f32 %v6584, %v6640
      %v6642 = vsub.f32 1.0, %v6641
      %v6643 = vmul.f32 %v6640, %v6642
      %v6644 = vadd.f32 %v6640, %v6643
      %vm6645 = vweird.f32 %v6584
      %vm6646 = vweird.f32 %v6640
      %vm6647 = vmor %vm6645, %vm6646
      %v6648 = vsel %vm6647, %v6640, %v6644
      %v6649 = vand.u32 2147483647, %v6584
      %vm6650 = vcmp.eq.f32.partialorder %v6649, 8.507059e+37
      %v6651 = vand.u32 %v6584, 2147483648
      %v6652 = vor.u32 1.1754944e-38, %v6651
      %v6653 = vsel %vm6650, %v6652, %v6648
      %v6654 = vmul.f32 %v6534, %v6653
      %v6655 = vrcp.pop %v6603
      %v6656 = vmul.f32 %v6603, %v6655
      %v6657 = vsub.f32 1.0, %v6656
      %v6658 = vmul.f32 %v6655, %v6657
      %v6659 = vadd.f32 %v6655, %v6658
      %vm6660 = vweird.f32 %v6603
      %vm6661 = vweird.f32 %v6655
      %vm6662 = vmor %vm6660, %vm6661
      %v6663 = vsel %vm6662, %v6655, %v6659
      %v6664 = vand.u32 2147483647, %v6603
      %vm6665 = vcmp.eq.f32.partialorder %v6664, 8.507059e+37
      %v6666 = vand.u32 %v6603, 2147483648
      %v6667 = vor.u32 1.1754944e-38, %v6666
      %v6668 = vsel %vm6665, %v6667, %v6663
      %v6669 = vmul.f32 %v6553, %v6668
      %v6670 = vrcp.pop %v6587
      %v6671 = vmul.f32 %v6587, %v6670
      %v6672 = vsub.f32 1.0, %v6671
      %v6673 = vmul.f32 %v6670, %v6672
      %v6674 = vadd.f32 %v6670, %v6673
      %vm6675 = vweird.f32 %v6587
      %vm6676 = vweird.f32 %v6670
      %vm6677 = vmor %vm6675, %vm6676
      %v6678 = vsel %vm6677, %v6670, %v6674
      %v6679 = vand.u32 2147483647, %v6587
      %vm6680 = vcmp.eq.f32.partialorder %v6679, 8.507059e+37
      %v6681 = vand.u32 %v6587, 2147483648
      %v6682 = vor.u32 1.1754944e-38, %v6681
      %v6683 = vsel %vm6680, %v6682, %v6678
      %v6684 = vmul.f32 %v6537, %v6683
      %v6685 = vrcp.pop %v6606
      %v6686 = vmul.f32 %v6606, %v6685
      %v6687 = vsub.f32 1.0, %v6686
      %v6688 = vmul.f32 %v6685, %v6687
      %v6689 = vadd.f32 %v6685, %v6688
      %vm6690 = vweird.f32 %v6606
      %vm6691 = vweird.f32 %v6685
      %vm6692 = vmor %vm6690, %vm6691
      %v6693 = vsel %vm6692, %v6685, %v6689
      %v6694 = vand.u32 2147483647, %v6606
      %vm6695 = vcmp.eq.f32.partialorder %v6694, 8.507059e+37
      %v6696 = vand.u32 %v6606, 2147483648
      %v6697 = vor.u32 1.1754944e-38, %v6696
      %v6698 = vsel %vm6695, %v6697, %v6693
      %v6699 = vmul.f32 %v6556, %v6698
      %v6700 = vrcp.pop %v6589
      %v6701 = vmul.f32 %v6589, %v6700
      %v6702 = vsub.f32 1.0, %v6701
      %v6703 = vmul.f32 %v6700, %v6702
      %v6704 = vadd.f32 %v6700, %v6703
      %vm6705 = vweird.f32 %v6589
      %vm6706 = vweird.f32 %v6700
      %vm6707 = vmor %vm6705, %vm6706
      %v6708 = vsel %vm6707, %v6700, %v6704
      %v6709 = vand.u32 2147483647, %v6589
      %vm6710 = vcmp.eq.f32.partialorder %v6709, 8.507059e+37
      %v6711 = vand.u32 %v6589, 2147483648
      %v6712 = vor.u32 1.1754944e-38, %v6711
      %v6713 = vsel %vm6710, %v6712, %v6708
      %v6714 = vmul.f32 %v6539, %v6713
      %v6715 = vrcp.pop %v6608
      %v6716 = vmul.f32 %v6608, %v6715
      %v6717 = vsub.f32 1.0, %v6716
      %v6718 = vmul.f32 %v6715, %v6717
      %v6719 = vadd.f32 %v6715, %v6718
      %vm6720 = vweird.f32 %v6608
      %vm6721 = vweird.f32 %v6715
      %vm6722 = vmor %vm6720, %vm6721
      %v6723 = vsel %vm6722, %v6715, %v6719
      %v6724 = vand.u32 2147483647, %v6608
      %vm6725 = vcmp.eq.f32.partialorder %v6724, 8.507059e+37
      %v6726 = vand.u32 %v6608, 2147483648
      %v6727 = vor.u32 1.1754944e-38, %v6726
      %v6728 = vsel %vm6725, %v6727, %v6723
      %v6729 = vmul.f32 %v6558, %v6728
      %v6730 = vpack.c.bf16 %v6639, %v6624
      %v6731 = vpack.c.bf16 %v6669, %v6654
      %v6732 = vpack.c.bf16 %v6699, %v6684
      %v6733 = vpack.c.bf16 %v6729, %v6714
      %6734 = vst [vmem:[#allocation3 + $0x38] sm:$0xff] %v6730
      %6735 = vst [vmem:[#allocation3 + $0x78] sm:$0xff] %v6731
      %6736 = vst [vmem:[#allocation3 + $0xb8] sm:$0xff] %v6732
      %6737 = vst [vmem:[#allocation3 + $0xf8] sm:$0xff] %v6733
      %v6738 = vld [vmem:[%s3 + $0x30] sm:$0xf]
      %v6739 = vld [vmem:[%s3 + $0x34] sm:$0xf]
      %v6740 = vld [vmem:[%s3 + $0x38] sm:$0xf]
      %v6741 = vld [vmem:[%s3 + $0x3c] sm:$0xf]
      %v6742 = vld [vmem:[#allocation3] sm:$0xff]
      %v6743 = vld [vmem:[#allocation3 + $0x8] sm:$0xff]
      %v6744 = vld [vmem:[#allocation3 + $0x10] sm:$0xff]
      %v6745 = vld [vmem:[#allocation3 + $0x18] sm:$0xff]
      %v6746 = vld [vmem:[#allocation3 + $0x20] sm:$0xff]
      %v6747 = vld [vmem:[#allocation3 + $0x28] sm:$0xff]
      %v6748 = vld [vmem:[#allocation3 + $0x30] sm:$0xff]
      %v6749 = vld [vmem:[#allocation3 + $0x38] sm:$0xff]
      %v6750 = vld [vmem:[#allocation3 + $0x40] sm:$0xff]
      %v6751 = vld [vmem:[#allocation3 + $0x48] sm:$0xff]
      %v6752 = vld [vmem:[#allocation3 + $0x50] sm:$0xff]
      %v6753 = vld [vmem:[#allocation3 + $0x58] sm:$0xff]
      %v6754 = vld [vmem:[#allocation3 + $0x60] sm:$0xff]
      %v6755 = vld [vmem:[#allocation3 + $0x68] sm:$0xff]
      %v6756 = vld [vmem:[#allocation3 + $0x70] sm:$0xff]
      %v6757 = vld [vmem:[#allocation3 + $0x78] sm:$0xff]
      %v6758 = vld [vmem:[#allocation3 + $0x80] sm:$0xff]
      %v6759 = vld [vmem:[#allocation3 + $0x88] sm:$0xff]
      %v6760 = vld [vmem:[#allocation3 + $0x90] sm:$0xff]
      %v6761 = vld [vmem:[#allocation3 + $0x98] sm:$0xff]
      %v6762 = vld [vmem:[#allocation3 + $0xa0] sm:$0xff]
      %v6763 = vld [vmem:[#allocation3 + $0xa8] sm:$0xff]
      %v6764 = vld [vmem:[#allocation3 + $0xb0] sm:$0xff]
      %v6765 = vld [vmem:[#allocation3 + $0xb8] sm:$0xff]
      %v6766 = vld [vmem:[#allocation3 + $0xc0] sm:$0xff]
      %v6767 = vld [vmem:[#allocation3 + $0xc8] sm:$0xff]
      %v6768 = vld [vmem:[#allocation3 + $0xd0] sm:$0xff]
      %v6769 = vld [vmem:[#allocation3 + $0xd8] sm:$0xff]
      %v6770 = vld [vmem:[#allocation3 + $0xe0] sm:$0xff]
      %v6771 = vld [vmem:[#allocation3 + $0xe8] sm:$0xff]
      %v6772 = vld [vmem:[#allocation3 + $0xf0] sm:$0xff]
      %v6773 = vld [vmem:[#allocation3 + $0xf8] sm:$0xff]
      %6774 = vset.pattern.permute.xlu0 6
      %6775 = vperm.xlu0 %6774, %v349
      %v6776 = vpop.permute.xlu0 %6775
      %6778 = vset.pattern.permute.xlu0 6
      %6779 = vperm.xlu0 %6778, %v350
      %v6780 = vpop.permute.xlu0 %6779
      %6782 = vset.pattern.permute.xlu0 6
      %6783 = vperm.xlu0 %6782, %v351
      %v6784 = vpop.permute.xlu0 %6783
      %6786 = vset.pattern.permute.xlu0 6
      %6787 = vperm.xlu0 %6786, %v352
      %v6788 = vpop.permute.xlu0 %6787
      %v6794 = vunpack.c.l.b16 %v6738
      %v6795 = vunpack.c.l.b16 %v6739
      %v6796 = vunpack.c.l.b16 %v6740
      %v6797 = vunpack.c.l.b16 %v6741
      %v6798 = vpack.c.b16 %v6795, %v6794
      %v6799 = vpack.c.b16 %v6797, %v6796
      %v6832 = vunpack.c.l.b16 %v6742
      %v6833 = vunpack.c.h.b16 %v6742
      %v6834 = vunpack.c.l.b16 %v6743
      %v6835 = vunpack.c.h.b16 %v6743
      %v6836 = vunpack.c.l.b16 %v6744
      %v6837 = vunpack.c.h.b16 %v6744
      %v6838 = vunpack.c.l.b16 %v6745
      %v6839 = vunpack.c.h.b16 %v6745
      %v6840 = vunpack.c.l.b16 %v6746
      %v6841 = vunpack.c.h.b16 %v6746
      %v6842 = vunpack.c.l.b16 %v6747
      %v6843 = vunpack.c.h.b16 %v6747
      %v6844 = vunpack.c.l.b16 %v6748
      %v6845 = vunpack.c.h.b16 %v6748
      %v6846 = vunpack.c.l.b16 %v6749
      %v6847 = vunpack.c.h.b16 %v6749
      %v6848 = vunpack.c.l.b16 %v6750
      %v6849 = vunpack.c.h.b16 %v6750
      %v6850 = vunpack.c.l.b16 %v6751
      %v6851 = vunpack.c.h.b16 %v6751
      %v6852 = vunpack.c.l.b16 %v6752
      %v6853 = vunpack.c.h.b16 %v6752
      %v6854 = vunpack.c.l.b16 %v6753
      %v6855 = vunpack.c.h.b16 %v6753
      %v6856 = vunpack.c.l.b16 %v6754
      %v6857 = vunpack.c.h.b16 %v6754
      %v6858 = vunpack.c.l.b16 %v6755
      %v6859 = vunpack.c.h.b16 %v6755
      %v6860 = vunpack.c.l.b16 %v6756
      %v6861 = vunpack.c.h.b16 %v6756
      %v6862 = vunpack.c.l.b16 %v6757
      %v6863 = vunpack.c.h.b16 %v6757
      %v6864 = vunpack.c.l.b16 %v6758
      %v6865 = vunpack.c.h.b16 %v6758
      %v6866 = vunpack.c.l.b16 %v6759
      %v6867 = vunpack.c.h.b16 %v6759
      %v6868 = vunpack.c.l.b16 %v6760
      %v6869 = vunpack.c.h.b16 %v6760
      %v6870 = vunpack.c.l.b16 %v6761
      %v6871 = vunpack.c.h.b16 %v6761
      %v6872 = vunpack.c.l.b16 %v6762
      %v6873 = vunpack.c.h.b16 %v6762
      %v6874 = vunpack.c.l.b16 %v6763
      %v6875 = vunpack.c.h.b16 %v6763
      %v6876 = vunpack.c.l.b16 %v6764
      %v6877 = vunpack.c.h.b16 %v6764
      %v6878 = vunpack.c.l.b16 %v6765
      %v6879 = vunpack.c.h.b16 %v6765
      %v6880 = vunpack.c.l.b16 %v6766
      %v6881 = vunpack.c.h.b16 %v6766
      %v6882 = vunpack.c.l.b16 %v6767
      %v6883 = vunpack.c.h.b16 %v6767
      %v6884 = vunpack.c.l.b16 %v6768
      %v6885 = vunpack.c.h.b16 %v6768
      %v6886 = vunpack.c.l.b16 %v6769
      %v6887 = vunpack.c.h.b16 %v6769
      %v6888 = vunpack.c.l.b16 %v6770
      %v6889 = vunpack.c.h.b16 %v6770
      %v6890 = vunpack.c.l.b16 %v6771
      %v6891 = vunpack.c.h.b16 %v6771
      %v6892 = vunpack.c.l.b16 %v6772
      %v6893 = vunpack.c.h.b16 %v6772
      %v6894 = vunpack.c.l.b16 %v6773
      %v6895 = vunpack.c.h.b16 %v6773
      %v6896 = vpack.c.b16 %v6848, %v6832
      %v6897 = vpack.c.b16 %v6849, %v6833
      %v6898 = vpack.c.b16 %v6850, %v6834
      %v6899 = vpack.c.b16 %v6851, %v6835
      %v6900 = vpack.c.b16 %v6852, %v6836
      %v6901 = vpack.c.b16 %v6853, %v6837
      %v6902 = vpack.c.b16 %v6854, %v6838
      %v6903 = vpack.c.b16 %v6855, %v6839
      %v6904 = vpack.c.b16 %v6856, %v6840
      %v6905 = vpack.c.b16 %v6857, %v6841
      %v6906 = vpack.c.b16 %v6858, %v6842
      %v6907 = vpack.c.b16 %v6859, %v6843
      %v6908 = vpack.c.b16 %v6860, %v6844
      %v6909 = vpack.c.b16 %v6861, %v6845
      %v6910 = vpack.c.b16 %v6862, %v6846
      %v6911 = vpack.c.b16 %v6863, %v6847
      %v6912 = vpack.c.b16 %v6880, %v6864
      %v6913 = vpack.c.b16 %v6881, %v6865
      %v6914 = vpack.c.b16 %v6882, %v6866
      %v6915 = vpack.c.b16 %v6883, %v6867
      %v6916 = vpack.c.b16 %v6884, %v6868
      %v6917 = vpack.c.b16 %v6885, %v6869
      %v6918 = vpack.c.b16 %v6886, %v6870
      %v6919 = vpack.c.b16 %v6887, %v6871
      %v6920 = vpack.c.b16 %v6888, %v6872
      %v6921 = vpack.c.b16 %v6889, %v6873
      %v6922 = vpack.c.b16 %v6890, %v6874
      %v6923 = vpack.c.b16 %v6891, %v6875
      %v6924 = vpack.c.b16 %v6892, %v6876
      %v6925 = vpack.c.b16 %v6893, %v6877
      %v6926 = vpack.c.b16 %v6894, %v6878
      %v6927 = vpack.c.b16 %v6895, %v6879
      %v6961 = vsel %vm485, %v6798, 0
      %v6964 = vsel %vm485, %v6799, 0
      %6966 = vmatpush.bf16.msra.mxu0 0
      %6967 = vmatpush.bf16.msra.mxu0 0
      %6968 = vmatpush.bf16.msra.mxu0 0
      %6969 = vmatpush.bf16.msra.mxu0 0
      %6970 = vmatpush.bf16.msra.mxu0 0
      %6971 = vmatpush.bf16.msra.mxu0 0
      %6972 = vmatpush.bf16.msra.mxu0 %v6912
      %6973 = vmatpush.bf16.msra.mxu0 %v6896
      %6974 = vmatmul.bf16.gmra.mxu0 %v6961
      %v6975 = vpop.f32.mrf.mxu0
      %v6976 = vadd.f32 %v6776, %v6975
      %v6977 = vpop.f32.mrf.mxu0
      %v6978 = vadd.f32 %v6780, %v6977
      %6979 = vmatmul.bf16.gmra.mxu0 %v6964
      %v6980 = vpop.f32.mrf.mxu0
      %v6981 = vadd.f32 %v6784, %v6980
      %v6982 = vpop.f32.mrf.mxu0
      %v6983 = vadd.f32 %v6788, %v6982
      %6984 = vdwg.mxu0
      %6985 = vmatpush.bf16.msra.mxu0 0
      %6986 = vmatpush.bf16.msra.mxu0 0
      %6987 = vmatpush.bf16.msra.mxu0 0
      %6988 = vmatpush.bf16.msra.mxu0 0
      %6989 = vmatpush.bf16.msra.mxu0 0
      %6990 = vmatpush.bf16.msra.mxu0 0
      %6991 = vmatpush.bf16.msra.mxu0 %v6913
      %6992 = vmatpush.bf16.msra.mxu0 %v6897
      %6993 = vmatmul.bf16.gmra.mxu0 %v6961
      %v6994 = vpop.f32.mrf.mxu0
      %v6995 = vadd.f32 %v6776, %v6994
      %v6996 = vpop.f32.mrf.mxu0
      %v6997 = vadd.f32 %v6780, %v6996
      %6998 = vmatmul.bf16.gmra.mxu0 %v6964
      %v6999 = vpop.f32.mrf.mxu0
      %v7000 = vadd.f32 %v6784, %v6999
      %v7001 = vpop.f32.mrf.mxu0
      %v7002 = vadd.f32 %v6788, %v7001
      %7003 = vdwg.mxu0
      %7004 = vmatpush.bf16.msra.mxu0 0
      %7005 = vmatpush.bf16.msra.mxu0 0
      %7006 = vmatpush.bf16.msra.mxu0 0
      %7007 = vmatpush.bf16.msra.mxu0 0
      %7008 = vmatpush.bf16.msra.mxu0 0
      %7009 = vmatpush.bf16.msra.mxu0 0
      %7010 = vmatpush.bf16.msra.mxu0 %v6914
      %7011 = vmatpush.bf16.msra.mxu0 %v6898
      %7012 = vmatmul.bf16.gmra.mxu0 %v6961
      %v7013 = vpop.f32.mrf.mxu0
      %v7014 = vadd.f32 %v6776, %v7013
      %v7015 = vpop.f32.mrf.mxu0
      %v7016 = vadd.f32 %v6780, %v7015
      %7017 = vmatmul.bf16.gmra.mxu0 %v6964
      %v7018 = vpop.f32.mrf.mxu0
      %v7019 = vadd.f32 %v6784, %v7018
      %v7020 = vpop.f32.mrf.mxu0
      %v7021 = vadd.f32 %v6788, %v7020
      %7022 = vdwg.mxu0
      %7023 = vmatpush.bf16.msra.mxu0 0
      %7024 = vmatpush.bf16.msra.mxu0 0
      %7025 = vmatpush.bf16.msra.mxu0 0
      %7026 = vmatpush.bf16.msra.mxu0 0
      %7027 = vmatpush.bf16.msra.mxu0 0
      %7028 = vmatpush.bf16.msra.mxu0 0
      %7029 = vmatpush.bf16.msra.mxu0 %v6915
      %7030 = vmatpush.bf16.msra.mxu0 %v6899
      %7031 = vmatmul.bf16.gmra.mxu0 %v6961
      %v7032 = vpop.f32.mrf.mxu0
      %v7033 = vadd.f32 %v6776, %v7032
      %v7034 = vpop.f32.mrf.mxu0
      %v7035 = vadd.f32 %v6780, %v7034
      %7036 = vmatmul.bf16.gmra.mxu0 %v6964
      %v7037 = vpop.f32.mrf.mxu0
      %v7038 = vadd.f32 %v6784, %v7037
      %v7039 = vpop.f32.mrf.mxu0
      %v7040 = vadd.f32 %v6788, %v7039
      %7041 = vdwg.mxu0
      %7042 = vmatpush.bf16.msra.mxu0 0
      %7043 = vmatpush.bf16.msra.mxu0 0
      %7044 = vmatpush.bf16.msra.mxu0 0
      %7045 = vmatpush.bf16.msra.mxu0 0
      %7046 = vmatpush.bf16.msra.mxu0 0
      %7047 = vmatpush.bf16.msra.mxu0 0
      %7048 = vmatpush.bf16.msra.mxu0 %v6916
      %7049 = vmatpush.bf16.msra.mxu0 %v6900
      %7050 = vmatmul.bf16.gmra.mxu0 %v6961
      %v7051 = vpop.f32.mrf.mxu0
      %v7052 = vadd.f32 %v6776, %v7051
      %v7053 = vpop.f32.mrf.mxu0
      %v7054 = vadd.f32 %v6780, %v7053
      %7055 = vmatmul.bf16.gmra.mxu0 %v6964
      %v7056 = vpop.f32.mrf.mxu0
      %v7057 = vadd.f32 %v6784, %v7056
      %v7058 = vpop.f32.mrf.mxu0
      %v7059 = vadd.f32 %v6788, %v7058
      %7060 = vdwg.mxu0
      %7061 = vmatpush.bf16.msra.mxu0 0
      %7062 = vmatpush.bf16.msra.mxu0 0
      %7063 = vmatpush.bf16.msra.mxu0 0
      %7064 = vmatpush.bf16.msra.mxu0 0
      %7065 = vmatpush.bf16.msra.mxu0 0
      %7066 = vmatpush.bf16.msra.mxu0 0
      %7067 = vmatpush.bf16.msra.mxu0 %v6917
      %7068 = vmatpush.bf16.msra.mxu0 %v6901
      %7069 = vmatmul.bf16.gmra.mxu0 %v6961
      %v7070 = vpop.f32.mrf.mxu0
      %v7071 = vadd.f32 %v6776, %v7070
      %v7072 = vpop.f32.mrf.mxu0
      %v7073 = vadd.f32 %v6780, %v7072
      %7074 = vmatmul.bf16.gmra.mxu0 %v6964
      %v7075 = vpop.f32.mrf.mxu0
      %v7076 = vadd.f32 %v6784, %v7075
      %v7077 = vpop.f32.mrf.mxu0
      %v7078 = vadd.f32 %v6788, %v7077
      %7079 = vdwg.mxu0
      %7080 = vmatpush.bf16.msra.mxu0 0
      %7081 = vmatpush.bf16.msra.mxu0 0
      %7082 = vmatpush.bf16.msra.mxu0 0
      %7083 = vmatpush.bf16.msra.mxu0 0
      %7084 = vmatpush.bf16.msra.mxu0 0
      %7085 = vmatpush.bf16.msra.mxu0 0
      %7086 = vmatpush.bf16.msra.mxu0 %v6918
      %7087 = vmatpush.bf16.msra.mxu0 %v6902
      %7088 = vmatmul.bf16.gmra.mxu0 %v6961
      %v7089 = vpop.f32.mrf.mxu0
      %v7090 = vadd.f32 %v6776, %v7089
      %v7091 = vpop.f32.mrf.mxu0
      %v7092 = vadd.f32 %v6780, %v7091
      %7093 = vmatmul.bf16.gmra.mxu0 %v6964
      %v7094 = vpop.f32.mrf.mxu0
      %v7095 = vadd.f32 %v6784, %v7094
      %v7096 = vpop.f32.mrf.mxu0
      %v7097 = vadd.f32 %v6788, %v7096
      %7098 = vdwg.mxu0
      %7099 = vmatpush.bf16.msra.mxu0 0
      %7100 = vmatpush.bf16.msra.mxu0 0
      %7101 = vmatpush.bf16.msra.mxu0 0
      %7102 = vmatpush.bf16.msra.mxu0 0
      %7103 = vmatpush.bf16.msra.mxu0 0
      %7104 = vmatpush.bf16.msra.mxu0 0
      %7105 = vmatpush.bf16.msra.mxu0 %v6919
      %7106 = vmatpush.bf16.msra.mxu0 %v6903
      %7107 = vmatmul.bf16.gmra.mxu0 %v6961
      %v7108 = vpop.f32.mrf.mxu0
      %v7109 = vadd.f32 %v6776, %v7108
      %v7110 = vpop.f32.mrf.mxu0
      %v7111 = vadd.f32 %v6780, %v7110
      %7112 = vmatmul.bf16.gmra.mxu0 %v6964
      %v7113 = vpop.f32.mrf.mxu0
      %v7114 = vadd.f32 %v6784, %v7113
      %v7115 = vpop.f32.mrf.mxu0
      %v7116 = vadd.f32 %v6788, %v7115
      %7117 = vdwg.mxu0
      %7118 = vmatpush.bf16.msra.mxu0 0
      %7119 = vmatpush.bf16.msra.mxu0 0
      %7120 = vmatpush.bf16.msra.mxu0 0
      %7121 = vmatpush.bf16.msra.mxu0 0
      %7122 = vmatpush.bf16.msra.mxu0 0
      %7123 = vmatpush.bf16.msra.mxu0 0
      %7124 = vmatpush.bf16.msra.mxu0 %v6920
      %7125 = vmatpush.bf16.msra.mxu0 %v6904
      %7126 = vmatmul.bf16.gmra.mxu0 %v6961
      %v7127 = vpop.f32.mrf.mxu0
      %v7128 = vadd.f32 %v6776, %v7127
      %v7129 = vpop.f32.mrf.mxu0
      %v7130 = vadd.f32 %v6780, %v7129
      %7131 = vmatmul.bf16.gmra.mxu0 %v6964
      %v7132 = vpop.f32.mrf.mxu0
      %v7133 = vadd.f32 %v6784, %v7132
      %v7134 = vpop.f32.mrf.mxu0
      %v7135 = vadd.f32 %v6788, %v7134
      %7136 = vdwg.mxu0
      %7137 = vmatpush.bf16.msra.mxu0 0
      %7138 = vmatpush.bf16.msra.mxu0 0
      %7139 = vmatpush.bf16.msra.mxu0 0
      %7140 = vmatpush.bf16.msra.mxu0 0
      %7141 = vmatpush.bf16.msra.mxu0 0
      %7142 = vmatpush.bf16.msra.mxu0 0
      %7143 = vmatpush.bf16.msra.mxu0 %v6921
      %7144 = vmatpush.bf16.msra.mxu0 %v6905
      %7145 = vmatmul.bf16.gmra.mxu0 %v6961
      %v7146 = vpop.f32.mrf.mxu0
      %v7147 = vadd.f32 %v6776, %v7146
      %v7148 = vpop.f32.mrf.mxu0
      %v7149 = vadd.f32 %v6780, %v7148
      %7150 = vmatmul.bf16.gmra.mxu0 %v6964
      %v7151 = vpop.f32.mrf.mxu0
      %v7152 = vadd.f32 %v6784, %v7151
      %v7153 = vpop.f32.mrf.mxu0
      %v7154 = vadd.f32 %v6788, %v7153
      %7155 = vdwg.mxu0
      %7156 = vmatpush.bf16.msra.mxu0 0
      %7157 = vmatpush.bf16.msra.mxu0 0
      %7158 = vmatpush.bf16.msra.mxu0 0
      %7159 = vmatpush.bf16.msra.mxu0 0
      %7160 = vmatpush.bf16.msra.mxu0 0
      %7161 = vmatpush.bf16.msra.mxu0 0
      %7162 = vmatpush.bf16.msra.mxu0 %v6922
      %7163 = vmatpush.bf16.msra.mxu0 %v6906
      %7164 = vmatmul.bf16.gmra.mxu0 %v6961
      %v7165 = vpop.f32.mrf.mxu0
      %v7166 = vadd.f32 %v6776, %v7165
      %v7167 = vpop.f32.mrf.mxu0
      %v7168 = vadd.f32 %v6780, %v7167
      %7169 = vmatmul.bf16.gmra.mxu0 %v6964
      %v7170 = vpop.f32.mrf.mxu0
      %v7171 = vadd.f32 %v6784, %v7170
      %v7172 = vpop.f32.mrf.mxu0
      %v7173 = vadd.f32 %v6788, %v7172
      %7174 = vdwg.mxu0
      %7175 = vmatpush.bf16.msra.mxu0 0
      %7176 = vmatpush.bf16.msra.mxu0 0
      %7177 = vmatpush.bf16.msra.mxu0 0
      %7178 = vmatpush.bf16.msra.mxu0 0
      %7179 = vmatpush.bf16.msra.mxu0 0
      %7180 = vmatpush.bf16.msra.mxu0 0
      %7181 = vmatpush.bf16.msra.mxu0 %v6923
      %7182 = vmatpush.bf16.msra.mxu0 %v6907
      %7183 = vmatmul.bf16.gmra.mxu0 %v6961
      %v7184 = vpop.f32.mrf.mxu0
      %v7185 = vadd.f32 %v6776, %v7184
      %v7186 = vpop.f32.mrf.mxu0
      %v7187 = vadd.f32 %v6780, %v7186
      %7188 = vmatmul.bf16.gmra.mxu0 %v6964
      %v7189 = vpop.f32.mrf.mxu0
      %v7190 = vadd.f32 %v6784, %v7189
      %v7191 = vpop.f32.mrf.mxu0
      %v7192 = vadd.f32 %v6788, %v7191
      %7193 = vdwg.mxu0
      %7194 = vmatpush.bf16.msra.mxu0 0
      %7195 = vmatpush.bf16.msra.mxu0 0
      %7196 = vmatpush.bf16.msra.mxu0 0
      %7197 = vmatpush.bf16.msra.mxu0 0
      %7198 = vmatpush.bf16.msra.mxu0 0
      %7199 = vmatpush.bf16.msra.mxu0 0
      %7200 = vmatpush.bf16.msra.mxu0 %v6924
      %7201 = vmatpush.bf16.msra.mxu0 %v6908
      %7202 = vmatmul.bf16.gmra.mxu0 %v6961
      %v7203 = vpop.f32.mrf.mxu0
      %v7204 = vadd.f32 %v6776, %v7203
      %v7205 = vpop.f32.mrf.mxu0
      %v7206 = vadd.f32 %v6780, %v7205
      %7207 = vmatmul.bf16.gmra.mxu0 %v6964
      %v7208 = vpop.f32.mrf.mxu0
      %v7209 = vadd.f32 %v6784, %v7208
      %v7210 = vpop.f32.mrf.mxu0
      %v7211 = vadd.f32 %v6788, %v7210
      %7212 = vdwg.mxu0
      %7213 = vmatpush.bf16.msra.mxu0 0
      %7214 = vmatpush.bf16.msra.mxu0 0
      %7215 = vmatpush.bf16.msra.mxu0 0
      %7216 = vmatpush.bf16.msra.mxu0 0
      %7217 = vmatpush.bf16.msra.mxu0 0
      %7218 = vmatpush.bf16.msra.mxu0 0
      %7219 = vmatpush.bf16.msra.mxu0 %v6925
      %7220 = vmatpush.bf16.msra.mxu0 %v6909
      %7221 = vmatmul.bf16.gmra.mxu0 %v6961
      %v7222 = vpop.f32.mrf.mxu0
      %v7223 = vadd.f32 %v6776, %v7222
      %v7224 = vpop.f32.mrf.mxu0
      %v7225 = vadd.f32 %v6780, %v7224
      %7226 = vmatmul.bf16.gmra.mxu0 %v6964
      %v7227 = vpop.f32.mrf.mxu0
      %v7228 = vadd.f32 %v6784, %v7227
      %v7229 = vpop.f32.mrf.mxu0
      %v7230 = vadd.f32 %v6788, %v7229
      %7231 = vdwg.mxu0
      %7232 = vmatpush.bf16.msra.mxu0 0
      %7233 = vmatpush.bf16.msra.mxu0 0
      %7234 = vmatpush.bf16.msra.mxu0 0
      %7235 = vmatpush.bf16.msra.mxu0 0
      %7236 = vmatpush.bf16.msra.mxu0 0
      %7237 = vmatpush.bf16.msra.mxu0 0
      %7238 = vmatpush.bf16.msra.mxu0 %v6926
      %7239 = vmatpush.bf16.msra.mxu0 %v6910
      %7240 = vmatmul.bf16.gmra.mxu0 %v6961
      %v7241 = vpop.f32.mrf.mxu0
      %v7242 = vadd.f32 %v6776, %v7241
      %v7243 = vpop.f32.mrf.mxu0
      %v7244 = vadd.f32 %v6780, %v7243
      %7245 = vmatmul.bf16.gmra.mxu0 %v6964
      %v7246 = vpop.f32.mrf.mxu0
      %v7247 = vadd.f32 %v6784, %v7246
      %v7248 = vpop.f32.mrf.mxu0
      %v7249 = vadd.f32 %v6788, %v7248
      %7250 = vdwg.mxu0
      %7251 = vmatpush.bf16.msra.mxu0 0
      %7252 = vmatpush.bf16.msra.mxu0 0
      %7253 = vmatpush.bf16.msra.mxu0 0
      %7254 = vmatpush.bf16.msra.mxu0 0
      %7255 = vmatpush.bf16.msra.mxu0 0
      %7256 = vmatpush.bf16.msra.mxu0 0
      %7257 = vmatpush.bf16.msra.mxu0 %v6927
      %7258 = vmatpush.bf16.msra.mxu0 %v6911
      %7259 = vmatmul.bf16.gmra.mxu0 %v6961
      %v7260 = vpop.f32.mrf.mxu0
      %v7261 = vadd.f32 %v6776, %v7260
      %v7262 = vpop.f32.mrf.mxu0
      %v7263 = vadd.f32 %v6780, %v7262
      %7264 = vmatmul.bf16.gmra.mxu0 %v6964
      %v7265 = vpop.f32.mrf.mxu0
      %v7266 = vadd.f32 %v6784, %v7265
      %v7267 = vpop.f32.mrf.mxu0
      %v7268 = vadd.f32 %v6788, %v7267
      %7269 = vdwg.mxu0
      %v7270 = vadd.f32 %v699, %v6976
      %v7271 = vadd.f32 %v700, %v6995
      %v7272 = vadd.f32 %v701, %v6978
      %v7273 = vadd.f32 %v702, %v6997
      %v7274 = vadd.f32 %v703, %v6981
      %v7275 = vadd.f32 %v704, %v7000
      %v7276 = vadd.f32 %v705, %v6983
      %v7277 = vadd.f32 %v706, %v7002
      %7278 = vst [vmem:[%s336] sm:$0xff] %v7270
      %7279 = vst [vmem:[%s336 + $0x8] sm:$0xff] %v7271
      %7280 = vst [vmem:[%s336 + $0x80] sm:$0xff] %v7272
      %7281 = vst [vmem:[%s336 + $0x88] sm:$0xff] %v7273
      %7282 = vst [vmem:[%s336 + $0x100] sm:$0xff] %v7274
      %7283 = vst [vmem:[%s336 + $0x108] sm:$0xff] %v7275
      %7284 = vst [vmem:[%s336 + $0x180] sm:$0xff] %v7276
      %7285 = vst [vmem:[%s336 + $0x188] sm:$0xff] %v7277
      %v7286 = vadd.f32 %v699, %v7014
      %v7287 = vadd.f32 %v700, %v7033
      %v7288 = vadd.f32 %v701, %v7016
      %v7289 = vadd.f32 %v702, %v7035
      %v7290 = vadd.f32 %v703, %v7019
      %v7291 = vadd.f32 %v704, %v7038
      %v7292 = vadd.f32 %v705, %v7021
      %v7293 = vadd.f32 %v706, %v7040
      %7294 = vst [vmem:[%s336 + $0x10] sm:$0xff] %v7286
      %7295 = vst [vmem:[%s336 + $0x18] sm:$0xff] %v7287
      %7296 = vst [vmem:[%s336 + $0x90] sm:$0xff] %v7288
      %7297 = vst [vmem:[%s336 + $0x98] sm:$0xff] %v7289
      %7298 = vst [vmem:[%s336 + $0x110] sm:$0xff] %v7290
      %7299 = vst [vmem:[%s336 + $0x118] sm:$0xff] %v7291
      %7300 = vst [vmem:[%s336 + $0x190] sm:$0xff] %v7292
      %7301 = vst [vmem:[%s336 + $0x198] sm:$0xff] %v7293
      %v7302 = vadd.f32 %v699, %v7052
      %v7303 = vadd.f32 %v700, %v7071
      %v7304 = vadd.f32 %v701, %v7054
      %v7305 = vadd.f32 %v702, %v7073
      %v7306 = vadd.f32 %v703, %v7057
      %v7307 = vadd.f32 %v704, %v7076
      %v7308 = vadd.f32 %v705, %v7059
      %v7309 = vadd.f32 %v706, %v7078
      %7310 = vst [vmem:[%s336 + $0x20] sm:$0xff] %v7302
      %7311 = vst [vmem:[%s336 + $0x28] sm:$0xff] %v7303
      %7312 = vst [vmem:[%s336 + $0xa0] sm:$0xff] %v7304
      %7313 = vst [vmem:[%s336 + $0xa8] sm:$0xff] %v7305
      %7314 = vst [vmem:[%s336 + $0x120] sm:$0xff] %v7306
      %7315 = vst [vmem:[%s336 + $0x128] sm:$0xff] %v7307
      %7316 = vst [vmem:[%s336 + $0x1a0] sm:$0xff] %v7308
      %7317 = vst [vmem:[%s336 + $0x1a8] sm:$0xff] %v7309
      %v7318 = vadd.f32 %v699, %v7090
      %v7319 = vadd.f32 %v700, %v7109
      %v7320 = vadd.f32 %v701, %v7092
      %v7321 = vadd.f32 %v702, %v7111
      %v7322 = vadd.f32 %v703, %v7095
      %v7323 = vadd.f32 %v704, %v7114
      %v7324 = vadd.f32 %v705, %v7097
      %v7325 = vadd.f32 %v706, %v7116
      %7326 = vst [vmem:[%s336 + $0x30] sm:$0xff] %v7318
      %7327 = vst [vmem:[%s336 + $0x38] sm:$0xff] %v7319
      %7328 = vst [vmem:[%s336 + $0xb0] sm:$0xff] %v7320
      %7329 = vst [vmem:[%s336 + $0xb8] sm:$0xff] %v7321
      %7330 = vst [vmem:[%s336 + $0x130] sm:$0xff] %v7322
      %7331 = vst [vmem:[%s336 + $0x138] sm:$0xff] %v7323
      %7332 = vst [vmem:[%s336 + $0x1b0] sm:$0xff] %v7324
      %7333 = vst [vmem:[%s336 + $0x1b8] sm:$0xff] %v7325
      %v7334 = vadd.f32 %v699, %v7128
      %v7335 = vadd.f32 %v700, %v7147
      %v7336 = vadd.f32 %v701, %v7130
      %v7337 = vadd.f32 %v702, %v7149
      %v7338 = vadd.f32 %v703, %v7133
      %v7339 = vadd.f32 %v704, %v7152
      %v7340 = vadd.f32 %v705, %v7135
      %v7341 = vadd.f32 %v706, %v7154
      %7342 = vst [vmem:[%s336 + $0x40] sm:$0xff] %v7334
      %7343 = vst [vmem:[%s336 + $0x48] sm:$0xff] %v7335
      %7344 = vst [vmem:[%s336 + $0xc0] sm:$0xff] %v7336
      %7345 = vst [vmem:[%s336 + $0xc8] sm:$0xff] %v7337
      %7346 = vst [vmem:[%s336 + $0x140] sm:$0xff] %v7338
      %7347 = vst [vmem:[%s336 + $0x148] sm:$0xff] %v7339
      %7348 = vst [vmem:[%s336 + $0x1c0] sm:$0xff] %v7340
      %7349 = vst [vmem:[%s336 + $0x1c8] sm:$0xff] %v7341
      %v7350 = vadd.f32 %v699, %v7166
      %v7351 = vadd.f32 %v700, %v7185
      %v7352 = vadd.f32 %v701, %v7168
      %v7353 = vadd.f32 %v702, %v7187
      %v7354 = vadd.f32 %v703, %v7171
      %v7355 = vadd.f32 %v704, %v7190
      %v7356 = vadd.f32 %v705, %v7173
      %v7357 = vadd.f32 %v706, %v7192
      %7358 = vst [vmem:[%s336 + $0x50] sm:$0xff] %v7350
      %7359 = vst [vmem:[%s336 + $0x58] sm:$0xff] %v7351
      %7360 = vst [vmem:[%s336 + $0xd0] sm:$0xff] %v7352
      %7361 = vst [vmem:[%s336 + $0xd8] sm:$0xff] %v7353
      %7362 = vst [vmem:[%s336 + $0x150] sm:$0xff] %v7354
      %7363 = vst [vmem:[%s336 + $0x158] sm:$0xff] %v7355
      %7364 = vst [vmem:[%s336 + $0x1d0] sm:$0xff] %v7356
      %7365 = vst [vmem:[%s336 + $0x1d8] sm:$0xff] %v7357
      %v7366 = vadd.f32 %v699, %v7204
      %v7367 = vadd.f32 %v700, %v7223
      %v7368 = vadd.f32 %v701, %v7206
      %v7369 = vadd.f32 %v702, %v7225
      %v7370 = vadd.f32 %v703, %v7209
      %v7371 = vadd.f32 %v704, %v7228
      %v7372 = vadd.f32 %v705, %v7211
      %v7373 = vadd.f32 %v706, %v7230
      %7374 = vst [vmem:[%s336 + $0x60] sm:$0xff] %v7366
      %7375 = vst [vmem:[%s336 + $0x68] sm:$0xff] %v7367
      %7376 = vst [vmem:[%s336 + $0xe0] sm:$0xff] %v7368
      %7377 = vst [vmem:[%s336 + $0xe8] sm:$0xff] %v7369
      %7378 = vst [vmem:[%s336 + $0x160] sm:$0xff] %v7370
      %7379 = vst [vmem:[%s336 + $0x168] sm:$0xff] %v7371
      %7380 = vst [vmem:[%s336 + $0x1e0] sm:$0xff] %v7372
      %7381 = vst [vmem:[%s336 + $0x1e8] sm:$0xff] %v7373
      %v7382 = vadd.f32 %v699, %v7242
      %v7383 = vadd.f32 %v700, %v7261
      %v7384 = vadd.f32 %v701, %v7244
      %v7385 = vadd.f32 %v702, %v7263
      %v7386 = vadd.f32 %v703, %v7247
      %v7387 = vadd.f32 %v704, %v7266
      %v7388 = vadd.f32 %v705, %v7249
      %v7389 = vadd.f32 %v706, %v7268
      %7390 = vst [vmem:[%s336 + $0x70] sm:$0xff] %v7382
      %7391 = vst [vmem:[%s336 + $0x78] sm:$0xff] %v7383
      %7392 = vst [vmem:[%s336 + $0xf0] sm:$0xff] %v7384
      %7393 = vst [vmem:[%s336 + $0xf8] sm:$0xff] %v7385
      %7394 = vst [vmem:[%s336 + $0x170] sm:$0xff] %v7386
      %7395 = vst [vmem:[%s336 + $0x178] sm:$0xff] %v7387
      %7396 = vst [vmem:[%s336 + $0x1f0] sm:$0xff] %v7388
      %7397 = vst [vmem:[%s336 + $0x1f8] sm:$0xff] %v7389
      %s7398 = smul.u32 16, %s23
      %p7399 = scmp.lt.s32.totalorder %s22, 1
      %s7400 = scalar_select %p7399, %s22, 1
      %p7401 = scmp.lt.s32.totalorder %s7398, 15
      %s7402 = scalar_select %p7401, %s7398, 15
      %s7403 = smul.addr %s7400, 64
      %s7404 = sadd.s32 %s7402, %s7403
      %s7405 = smul.addr %s7404, 8
      %s7406 = scalar_lea.vmem %s7, %s7405
      // Predicated region
      $region49: #{ptavitssg2_dn_features_forward.1} parent=47 // pred_check
        %p7407 = pneg %p209
      $region50: #{ptavitssg2_dn_features_forward.1} parent=47 // pred_check_branch
        %7409 = sbr.rel (%p7407) target = $region52
      $region51: #{ptavitssg2_dn_features_forward.1} parent=47 // pred_region
        %s7410 = smul.u32 16, %s23
      $region52: #{ptavitssg2_dn_features_forward.1} parent=47 // pred_fallthru
        _
    $region48: #{ptavitssg2_dn_features_forward.1} parent=5 // pred_fallthru
      _
    %p7411 = scmp.le.s32.totalorder 2, %s13
    // Predicated region
    $region53: #{ptavitssg2_dn_features_forward.1} parent=5 // pred_check
      %p7412 = pneg %p7411
    $region54: #{ptavitssg2_dn_features_forward.1} parent=5 // pred_check_branch
      %7414 = sbr.rel (%p7412) target = $region56
    $region55: #{ptavitssg2_dn_features_forward.1} parent=5 // pred_region
      %s7415 = ssub.s32 %s13, 2
      // Predicated region
      $region57: #{ptavitssg2_dn_features_forward.1} parent=55 // pred_check
        %p7416 = pneg %p215
      $region58: #{ptavitssg2_dn_features_forward.1} parent=55 // pred_check_branch
        %7418 = sbr.rel (%p7416) target = $region60
      $region59: #{ptavitssg2_dn_features_forward.1} parent=55 // pred_region
        %s7419 = smul.u32 16, %s25
        %p7420 = scmp.lt.s32.totalorder %s24, 1
        %s7421 = scalar_select %p7420, %s24, 1
        %p7422 = scmp.lt.s32.totalorder %s7419, 15
        %s7423 = scalar_select %p7422, %s7419, 15
        %s7424 = smul.addr %s7421, 64
        %s7425 = sadd.s32 %s7423, %s7424
        %s7426 = smul.addr %s7425, 8
        %s7427 = scalar_lea.vmem %s7, %s7426
      $region60: #{ptavitssg2_dn_features_forward.1} parent=55 // pred_fallthru
        _
    $region56: #{ptavitssg2_dn_features_forward.1} parent=5 // pred_fallthru
      _
  $region6: #{ptavitssg2_dn_features_forward.1} parent=0 // loop_footer
    %s17 = sadd.s32 1, %s13
  $region7: #{ptavitssg2_dn_features_forward.1} parent=0 // loop_footer_branch
    %12 = sbr.rel target = $region3
  $region8: #{ptavitssg2_dn_features_forward.1} parent=0 // loop_exit
    _

</llo_original>
